<compile_context>
chip_gen: v7x
topology: tpu7x:2x2x1
jax: 0.10.0
libtpu: 0.0.40
codegen_flags: <defaults>
</compile_context>

<pallas_src>
import functools

import jax
import jax.numpy as jnp
from jax.experimental import pallas as pl
from jax.experimental.pallas import tpu as pltpu


_NEG_BIG = 1e30          # finite "-inf" for masked positions
_NUM_LAYER_WEIGHTS = 20  # stacked per-layer weight tensors


# ----------------------------------------------------------------------------
# Shared math (used inside the Pallas kernel and by the pure-JAX reference)
# ----------------------------------------------------------------------------
def _mask_to_bias(mask):
    # {0,1} mask -> additive bias: 0 where keep, -1e30 where masked.
    return (mask.astype(jnp.float32) - 1.0) * _NEG_BIG


def _layernorm(x, gamma, beta, eps=1e-5):
    # Matches the custom PyTorch LayerNorm exactly: Bessel-corrected std and
    # division by (std + eps), NOT sqrt(var + eps).  Exact division (review).
    x = x.astype(jnp.float32)
    n = x.shape[-1]
    mean = jnp.mean(x, axis=-1, keepdims=True)
    diff = x - mean
    var = jnp.sum(diff * diff, axis=-1, keepdims=True) * (1.0 / (n - 1))
    std = jnp.sqrt(var)
    return gamma * diff / (std + eps) + beta


def _mha_core(q, k, v, bias, batch, num_heads, recip):
    # q: (batch*Tq, D) f32, k/v: (batch*S, D) f32 (post projection),
    # bias: (batch or 1, Tq, S) additive f32.
    D = q.shape[-1]
    hd = D // num_heads
    Tq = q.shape[0] // batch
    S = k.shape[0] // batch
    scaling = hd ** -0.5
    # Fold head scaling into q once; keep the batch dim LEADING so every einsum is
    # a canonical rank-3 batched matmul (robust Mosaic lowering, per flash pattern).
    q3 = (q * scaling).astype(jnp.bfloat16).reshape(batch, Tq, D)
    k3 = k.astype(jnp.bfloat16).reshape(batch, S, D)
    v3 = v.astype(jnp.bfloat16).reshape(batch, S, D)
    outs = []
    for h in range(num_heads):           # static lane-aligned head slices
        lo, hi = h * hd, (h + 1) * hd
        s = jnp.einsum('bqd,bkd->bqk', q3[:, :, lo:hi], k3[:, :, lo:hi],
                       preferred_element_type=jnp.float32)
        s = s + bias                      # mask bias shared by all heads
        m = jnp.max(s, axis=-1, keepdims=True)
        p = jnp.exp(s - m)
        attn = p * recip(jnp.sum(p, axis=-1, keepdims=True))
        outs.append(jnp.einsum('bqk,bkd->bqd', attn.astype(jnp.bfloat16),
                               v3[:, :, lo:hi],
                               preferred_element_type=jnp.float32))
    return jnp.concatenate(outs, axis=-1).reshape(batch * Tq, D)


def _decoder_layer(x, mem, tgt_bias, src_bias, w, batch, num_heads, recip):
    # x: (batch*T, D) f32 residual stream; mem: (batch*S, D) bf16.
    # pre_norm=True; dropout = identity (inference).
    (ln1_g, ln1_b, sa_wqkv, sa_bqkv, sa_wo, sa_bo,
     ln2_g, ln2_b, ca_wq, ca_bq, ca_wkv, ca_bkv, ca_wo, ca_bo,
     ln3_g, ln3_b, ff_w1, ff_b1, ff_w2, ff_b2) = w
    D = x.shape[-1]

    # --- self attention (fused QKV projection, M = batch*T fills the MXU) ---
    nx = _layernorm(x, ln1_g, ln1_b).astype(jnp.bfloat16)
    qkv = jnp.dot(nx, sa_wqkv, preferred_element_type=jnp.float32) + sa_bqkv
    a = _mha_core(qkv[:, :D], qkv[:, D:2 * D], qkv[:, 2 * D:],
                  tgt_bias, batch, num_heads, recip)
    x = x + jnp.dot(a.astype(jnp.bfloat16), sa_wo,
                    preferred_element_type=jnp.float32) + sa_bo

    # --- cross attention (fused KV projection on memory) ---
    nx = _layernorm(x, ln2_g, ln2_b).astype(jnp.bfloat16)
    q = jnp.dot(nx, ca_wq, preferred_element_type=jnp.float32) + ca_bq
    kv = jnp.dot(mem, ca_wkv, preferred_element_type=jnp.float32) + ca_bkv
    a = _mha_core(q, kv[:, :D], kv[:, D:], src_bias, batch, num_heads, recip)
    x = x + jnp.dot(a.astype(jnp.bfloat16), ca_wo,
                    preferred_element_type=jnp.float32) + ca_bo

    # --- feed forward ---
    nx = _layernorm(x, ln3_g, ln3_b).astype(jnp.bfloat16)
    h = jnp.maximum(jnp.dot(nx, ff_w1, preferred_element_type=jnp.float32) + ff_b1, 0.0)
    x = x + jnp.dot(h.astype(jnp.bfloat16), ff_w2,
                    preferred_element_type=jnp.float32) + ff_b2
    return x


# ----------------------------------------------------------------------------
# Pallas kernel: whole decoder stack, grid = (batch_tiles, layers)
# ----------------------------------------------------------------------------
def _decoder_kernel(*refs, num_heads):
    # refs = [x, memory, tgt_mask, src_mask, 20 stacked layer-weight refs,
    #         final_gamma, final_beta, out, acc, tgt_bias, src_bias]
    x_ref, mem_ref, tm_ref, sm_ref = refs[0:4]
    w_refs = refs[4:4 + _NUM_LAYER_WEIGHTS]
    fg_ref = refs[4 + _NUM_LAYER_WEIGHTS]
    fb_ref = refs[5 + _NUM_LAYER_WEIGHTS]
    out_ref = refs[6 + _NUM_LAYER_WEIGHTS]
    acc_ref, tgtb_ref, srcb_ref = refs[7 + _NUM_LAYER_WEIGHTS:]

    Bt, T, D = x_ref.shape
    S = mem_ref.shape[1]
    layer = pl.program_id(1)
    recip = lambda v: pl.reciprocal(v, approx=True)   # softmax denominator only

    @pl.when(layer == 0)
    def _():
        # Residual stream resident in f32 VMEM for the whole layer loop,
        # and mask->bias conversion hoisted out of the layer loop (done once).
        acc_ref[...] = x_ref[...].reshape(Bt * T, D).astype(jnp.float32)
        tgtb_ref[...] = _mask_to_bias(tm_ref[...])     # (1, T, T), batch-invariant
        srcb_ref[...] = _mask_to_bias(sm_ref[...])     # (Bt, T, S)

    w = [r[0] for r in w_refs]                         # drop the leading layer axis
    mem2d = mem_ref[...].reshape(Bt * S, D)
    x = _decoder_layer(acc_ref[...], mem2d, tgtb_ref[...], srcb_ref[...],
                       w, Bt, num_heads, recip)
    acc_ref[...] = x

    @pl.when(layer == pl.num_programs(1) - 1)
    def _():  # fused final LayerNorm + single lane-dense bf16 store
        y = _layernorm(x, fg_ref[...], fb_ref[...])
        out_ref[...] = y.reshape(Bt, T, D).astype(out_ref.dtype)


def decoder_forward(x, memory, source_mask, target_mask,
                    stacked_layer_weights, final_gamma, final_beta, num_heads,
                    batch_tile=None):
    """Full decoder stack in a single pallas_call.

    x: (B, T, D), memory: (B, S, D), source_mask: (B, T, S) int8,
    target_mask: (1, T, T) int8 (batch-invariant causal mask).
    batch_tile: rows per grid step; default B (weights streamed once total).
                On v7x use B // 2 so both TensorCores get a "parallel" tile.
    """
    B, T, D = x.shape
    S = memory.shape[1]
    L = stacked_layer_weights[0].shape[0]
    Bt = B if batch_tile is None else batch_tile
    assert B % Bt == 0
    nb = B // Bt

    in_specs = [
        pl.BlockSpec((Bt, T, D), lambda b, l: (b, 0, 0)),   # x (fetched once per tile)
        pl.BlockSpec((Bt, S, D), lambda b, l: (b, 0, 0)),   # memory
        pl.BlockSpec((1, T, T), lambda b, l: (0, 0, 0)),    # causal target mask (int8)
        pl.BlockSpec((Bt, T, S), lambda b, l: (b, 0, 0)),   # source mask (int8)
    ]
    for w in stacked_layer_weights:                         # per-layer weight slabs
        in_specs.append(pl.BlockSpec((1,) + w.shape[1:], lambda b, l: (l, 0, 0)))
    in_specs += [
        pl.BlockSpec(final_gamma.shape, lambda b, l: (0, 0)),
        pl.BlockSpec(final_beta.shape, lambda b, l: (0, 0)),
    ]

    return pl.pallas_call(
        functools.partial(_decoder_kernel, num_heads=num_heads),
        out_shape=jax.ShapeDtypeStruct((B, T, D), x.dtype),
        grid=(nb, L),
        in_specs=in_specs,
        out_specs=pl.BlockSpec((Bt, T, D), lambda b, l: (b, 0, 0)),
        scratch_shapes=[
            pltpu.VMEM((Bt * T, D), jnp.float32),   # residual stream accumulator
            pltpu.VMEM((1, T, T), jnp.float32),     # target-mask additive bias
            pltpu.VMEM((Bt, T, S), jnp.float32),    # source-mask additive bias
        ],
        compiler_params=pltpu.CompilerParams(
            dimension_semantics=("parallel", "arbitrary"),
            vmem_limit_bytes=64 * 1024 * 1024),
    )(x, memory, target_mask, source_mask, *stacked_layer_weights,
      final_gamma, final_beta)


# ----------------------------------------------------------------------------
# Deterministic parameter init (shapes follow the nn.Module; QKV / KV fused)
# ----------------------------------------------------------------------------
def _linear_params(key, d_in, d_out, scale=0.05):
    kw, kb = jax.random.split(key)
    w = (scale * jax.random.normal(kw, (d_in, d_out), jnp.float32)).astype(jnp.bfloat16)
    b = scale * jax.random.normal(kb, (1, d_out), jnp.float32)
    return w, b


def init_layer_params(key, embed_dim):
    D = embed_dim
    ks = jax.random.split(key, 10)
    ones = jnp.ones((1, D), jnp.float32)
    zeros = jnp.zeros((1, D), jnp.float32)
    wq, bq = _linear_params(ks[0], D, D)
    wk, bk = _linear_params(ks[1], D, D)
    wv, bv = _linear_params(ks[2], D, D)
    sa_wo, sa_bo = _linear_params(ks[3], D, D)
    cwq, cbq = _linear_params(ks[4], D, D)
    cwk, cbk = _linear_params(ks[5], D, D)
    cwv, cbv = _linear_params(ks[6], D, D)
    ca_wo, ca_bo = _linear_params(ks[7], D, D)
    ff_w1, ff_b1 = _linear_params(ks[8], D, 4 * D)
    ff_w2, ff_b2 = _linear_params(ks[9], 4 * D, D)
    return [
        ones, zeros,                                                         # norm_self_attn
        jnp.concatenate([wq, wk, wv], 1), jnp.concatenate([bq, bk, bv], 1),  # fused QKV
        sa_wo, sa_bo,
        ones, zeros,                                                         # norm_cross_attn
        cwq, cbq,
        jnp.concatenate([cwk, cwv], 1), jnp.concatenate([cbk, cbv], 1),      # fused KV
        ca_wo, ca_bo,
        ones, zeros,                                                         # norm_ff
        ff_w1, ff_b1, ff_w2, ff_b2,                                          # feed forward
    ]


# ----------------------------------------------------------------------------
# Pure-JAX reference (same math, no Pallas) for a correctness check
# ----------------------------------------------------------------------------
def decoder_forward_ref(x, memory, source_mask, target_mask,
                        layer_weights_list, final_gamma, final_beta, num_heads):
    B, T, D = x.shape
    S = memory.shape[1]
    recip = lambda v: 1.0 / v
    h = x.astype(jnp.float32).reshape(B * T, D)
    mem = memory.astype(jnp.bfloat16).reshape(B * S, D)
    tb = _mask_to_bias(target_mask)     # (1, T, T)
    sb = _mask_to_bias(source_mask)     # (B, T, S)
    for w in layer_weights_list:
        h = _decoder_layer(h, mem, tb, sb, w, B, num_heads, recip)
    y = _layernorm(h, final_gamma, final_beta)
    return y.reshape(B, T, D).astype(x.dtype)


# ----------------------------------------------------------------------------
if __name__ == "__main__":
    B, T, S, D, H, L = 2, 16, 16, 128, 4, 2  # batch, tgt len, src len, embed, heads, layers

    key = jax.random.PRNGKey(0)
    kx, km, kp = jax.random.split(key, 3)
    x = jax.random.normal(kx, (B, T, D), jnp.float32).astype(jnp.bfloat16)
    memory = jax.random.normal(km, (B, S, D), jnp.float32).astype(jnp.bfloat16)
    # batch-invariant causal target mask (1,T,T); full (all-ones) source mask — int8
    target_mask = jnp.tril(jnp.ones((T, T), jnp.int8))[None]
    source_mask = jnp.ones((B, T, S), jnp.int8)

    layer_keys = jax.random.split(kp, L)
    per_layer = [init_layer_params(layer_keys[l], D) for l in range(L)]
    stacked = [jnp.stack([per_layer[l][j] for l in range(L)])
               for j in range(_NUM_LAYER_WEIGHTS)]
    final_gamma = jnp.ones((1, D), jnp.float32)
    final_beta = jnp.zeros((1, D), jnp.float32)

    out = decoder_forward(x, memory, source_mask, target_mask,
                          stacked, final_gamma, final_beta, H)
    out = jax.block_until_ready(out)

    ref = decoder_forward_ref(x, memory, source_mask, target_mask,
                              per_layer, final_gamma, final_beta, H)
    assert out.shape == (B, T, D)
    err = jnp.max(jnp.abs(out.astype(jnp.float32) - ref.astype(jnp.float32)))
    assert jnp.allclose(out.astype(jnp.float32), ref.astype(jnp.float32),
                        atol=3e-2, rtol=3e-2), f"Pallas output mismatch vs reference (max err {err})"

    print("KERNEL_OK")
</pallas_src>

<mosaic_0001>
module attributes {stable_mosaic.version = 11 : i64} {
  func.func @_decoder_kernel(%arg0: i32, %arg1: i32, %arg2: memref<2x16x128xbf16, #tpu.memory_space<vmem>>, %arg3: memref<2x16x128xbf16, #tpu.memory_space<vmem>>, %arg4: memref<1x16x16xi8, #tpu.memory_space<vmem>>, %arg5: memref<2x16x16xi8, #tpu.memory_space<vmem>>, %arg6: memref<1x1x128xf32, #tpu.memory_space<vmem>>, %arg7: memref<1x1x128xf32, #tpu.memory_space<vmem>>, %arg8: memref<1x128x384xbf16, #tpu.memory_space<vmem>>, %arg9: memref<1x1x384xf32, #tpu.memory_space<vmem>>, %arg10: memref<1x128x128xbf16, #tpu.memory_space<vmem>>, %arg11: memref<1x1x128xf32, #tpu.memory_space<vmem>>, %arg12: memref<1x1x128xf32, #tpu.memory_space<vmem>>, %arg13: memref<1x1x128xf32, #tpu.memory_space<vmem>>, %arg14: memref<1x128x128xbf16, #tpu.memory_space<vmem>>, %arg15: memref<1x1x128xf32, #tpu.memory_space<vmem>>, %arg16: memref<1x128x256xbf16, #tpu.memory_space<vmem>>, %arg17: memref<1x1x256xf32, #tpu.memory_space<vmem>>, %arg18: memref<1x128x128xbf16, #tpu.memory_space<vmem>>, %arg19: memref<1x1x128xf32, #tpu.memory_space<vmem>>, %arg20: memref<1x1x128xf32, #tpu.memory_space<vmem>>, %arg21: memref<1x1x128xf32, #tpu.memory_space<vmem>>, %arg22: memref<1x128x512xbf16, #tpu.memory_space<vmem>>, %arg23: memref<1x1x512xf32, #tpu.memory_space<vmem>>, %arg24: memref<1x512x128xbf16, #tpu.memory_space<vmem>>, %arg25: memref<1x1x128xf32, #tpu.memory_space<vmem>>, %arg26: memref<1x128xf32, #tpu.memory_space<vmem>>, %arg27: memref<1x128xf32, #tpu.memory_space<vmem>>, %arg28: memref<2x16x128xbf16, #tpu.memory_space<vmem>>, %arg29: memref<32x128xf32, #tpu.memory_space<vmem>>, %arg30: memref<1x16x16xf32, #tpu.memory_space<vmem>>, %arg31: memref<2x16x16xf32, #tpu.memory_space<vmem>>) attributes {dimension_semantics = [#tpu.dimension_semantics<parallel>, #tpu.dimension_semantics<arbitrary>], iteration_bounds = array<i64: 1, 2>, scalar_prefetch = 0 : i64, scratch_operands = 3 : i64, tpu.core_type = #tpu.core_type<tc>, window_params = [{transform_indices = @transform_0, window_bounds = array<i64: 2, 16, 128>}, {transform_indices = @transform_1, window_bounds = array<i64: 2, 16, 128>}, {pipeline_mode = #tpu.pipeline_mode<synchronous>, transform_indices = @transform_2, window_bounds = array<i64: 1, 16, 16>}, {transform_indices = @transform_3, window_bounds = array<i64: 2, 16, 16>}, {transform_indices = @transform_4, window_bounds = array<i64: 1, 1, 128>}, {transform_indices = @transform_5, window_bounds = array<i64: 1, 1, 128>}, {transform_indices = @transform_6, window_bounds = array<i64: 1, 128, 384>}, {transform_indices = @transform_7, window_bounds = array<i64: 1, 1, 384>}, {transform_indices = @transform_8, window_bounds = array<i64: 1, 128, 128>}, {transform_indices = @transform_9, window_bounds = array<i64: 1, 1, 128>}, {transform_indices = @transform_10, window_bounds = array<i64: 1, 1, 128>}, {transform_indices = @transform_11, window_bounds = array<i64: 1, 1, 128>}, {transform_indices = @transform_12, window_bounds = array<i64: 1, 128, 128>}, {transform_indices = @transform_13, window_bounds = array<i64: 1, 1, 128>}, {transform_indices = @transform_14, window_bounds = array<i64: 1, 128, 256>}, {transform_indices = @transform_15, window_bounds = array<i64: 1, 1, 256>}, {transform_indices = @transform_16, window_bounds = array<i64: 1, 128, 128>}, {transform_indices = @transform_17, window_bounds = array<i64: 1, 1, 128>}, {transform_indices = @transform_18, window_bounds = array<i64: 1, 1, 128>}, {transform_indices = @transform_19, window_bounds = array<i64: 1, 1, 128>}, {transform_indices = @transform_20, window_bounds = array<i64: 1, 128, 512>}, {transform_indices = @transform_21, window_bounds = array<i64: 1, 1, 512>}, {transform_indices = @transform_22, window_bounds = array<i64: 1, 512, 128>}, {transform_indices = @transform_23, window_bounds = array<i64: 1, 1, 128>}, {pipeline_mode = #tpu.pipeline_mode<synchronous>, transform_indices = @transform_24, window_bounds = array<i64: 1, 128>}, {pipeline_mode = #tpu.pipeline_mode<synchronous>, transform_indices = @transform_25, window_bounds = array<i64: 1, 128>}, {transform_indices = @transform_26, window_bounds = array<i64: 2, 16, 128>}]} {
    %c0_i32 = arith.constant 0 : i32
    %0 = arith.cmpi eq, %arg1, %c0_i32 : i32
    %1 = arith.extui %0 : i1 to i32
    %c0_i32_0 = arith.constant 0 : i32
    %2 = arith.cmpi ne, %1, %c0_i32_0 : i32
    scf.if %2 {
      %c0_130 = arith.constant 0 : index
      %c0_131 = arith.constant 0 : index
      %c0_132 = arith.constant 0 : index
      %309 = vector.load %arg2[%c0_130, %c0_131, %c0_132] : memref<2x16x128xbf16, #tpu.memory_space<vmem>>, vector<2x16x128xbf16>
      %310 = vector.shape_cast %309 : vector<2x16x128xbf16> to vector<32x128xbf16>
      %311 = arith.extf %310 : vector<32x128xbf16> to vector<32x128xf32>
      %c0_133 = arith.constant 0 : index
      %c0_134 = arith.constant 0 : index
      %312 = vector.load %arg29[%c0_133, %c0_134] : memref<32x128xf32, #tpu.memory_space<vmem>>, vector<32x128xf32>
      tpu.vector_store %arg29[%c0_133, %c0_134], %311 {strides = array<i32>} : memref<32x128xf32, #tpu.memory_space<vmem>>, vector<32x128xf32>,
      %c0_135 = arith.constant 0 : index
      %c0_136 = arith.constant 0 : index
      %c0_137 = arith.constant 0 : index
      %313 = vector.load %arg4[%c0_135, %c0_136, %c0_137] : memref<1x16x16xi8, #tpu.memory_space<vmem>>, vector<1x16x16xi8>
      %314 = arith.sitofp %313 : vector<1x16x16xi8> to vector<1x16x16xf32>
      %cst_138 = arith.constant 1.000000e+00 : f32
      %315 = vector.broadcast %cst_138 : f32 to vector<1x16x16xf32>
      %316 = arith.subf %314, %315 : vector<1x16x16xf32>
      %cst_139 = arith.constant 1.000000e+30 : f32
      %317 = vector.broadcast %cst_139 : f32 to vector<1x16x16xf32>
      %318 = arith.mulf %316, %317 : vector<1x16x16xf32>
      %c0_140 = arith.constant 0 : index
      %c0_141 = arith.constant 0 : index
      %c0_142 = arith.constant 0 : index
      %319 = vector.load %arg30[%c0_140, %c0_141, %c0_142] : memref<1x16x16xf32, #tpu.memory_space<vmem>>, vector<1x16x16xf32>
      tpu.vector_store %arg30[%c0_140, %c0_141, %c0_142], %318 {strides = array<i32>} : memref<1x16x16xf32, #tpu.memory_space<vmem>>, vector<1x16x16xf32>,
      %c0_143 = arith.constant 0 : index
      %c0_144 = arith.constant 0 : index
      %c0_145 = arith.constant 0 : index
      %320 = vector.load %arg5[%c0_143, %c0_144, %c0_145] : memref<2x16x16xi8, #tpu.memory_space<vmem>>, vector<2x16x16xi8>
      %321 = arith.sitofp %320 : vector<2x16x16xi8> to vector<2x16x16xf32>
      %cst_146 = arith.constant 1.000000e+00 : f32
      %322 = vector.broadcast %cst_146 : f32 to vector<2x16x16xf32>
      %323 = arith.subf %321, %322 : vector<2x16x16xf32>
      %cst_147 = arith.constant 1.000000e+30 : f32
      %324 = vector.broadcast %cst_147 : f32 to vector<2x16x16xf32>
      %325 = arith.mulf %323, %324 : vector<2x16x16xf32>
      %c0_148 = arith.constant 0 : index
      %c0_149 = arith.constant 0 : index
      %c0_150 = arith.constant 0 : index
      %326 = vector.load %arg31[%c0_148, %c0_149, %c0_150] : memref<2x16x16xf32, #tpu.memory_space<vmem>>, vector<2x16x16xf32>
      tpu.vector_store %arg31[%c0_148, %c0_149, %c0_150], %325 {strides = array<i32>} : memref<2x16x16xf32, #tpu.memory_space<vmem>>, vector<2x16x16xf32>,
    } else {
    }
    %c0 = arith.constant 0 : index
    %c0_1 = arith.constant 0 : index
    %c0_2 = arith.constant 0 : index
    %3 = vector.load %arg6[%c0, %c0_1, %c0_2] : memref<1x1x128xf32, #tpu.memory_space<vmem>>, vector<1x1x128xf32>
    %4 = vector.shape_cast %3 : vector<1x1x128xf32> to vector<1x128xf32>
    %c0_3 = arith.constant 0 : index
    %c0_4 = arith.constant 0 : index
    %c0_5 = arith.constant 0 : index
    %5 = vector.load %arg7[%c0_3, %c0_4, %c0_5] : memref<1x1x128xf32, #tpu.memory_space<vmem>>, vector<1x1x128xf32>
    %6 = vector.shape_cast %5 : vector<1x1x128xf32> to vector<1x128xf32>
    %c0_6 = arith.constant 0 : index
    %c0_7 = arith.constant 0 : index
    %c0_8 = arith.constant 0 : index
    %7 = vector.load %arg8[%c0_6, %c0_7, %c0_8] : memref<1x128x384xbf16, #tpu.memory_space<vmem>>, vector<1x128x384xbf16>
    %8 = vector.shape_cast %7 : vector<1x128x384xbf16> to vector<128x384xbf16>
    %c0_9 = arith.constant 0 : index
    %c0_10 = arith.constant 0 : index
    %c0_11 = arith.constant 0 : index
    %9 = vector.load %arg9[%c0_9, %c0_10, %c0_11] : memref<1x1x384xf32, #tpu.memory_space<vmem>>, vector<1x1x384xf32>
    %10 = vector.shape_cast %9 : vector<1x1x384xf32> to vector<1x384xf32>
    %c0_12 = arith.constant 0 : index
    %c0_13 = arith.constant 0 : index
    %c0_14 = arith.constant 0 : index
    %11 = vector.load %arg10[%c0_12, %c0_13, %c0_14] : memref<1x128x128xbf16, #tpu.memory_space<vmem>>, vector<1x128x128xbf16>
    %12 = vector.shape_cast %11 : vector<1x128x128xbf16> to vector<128x128xbf16>
    %c0_15 = arith.constant 0 : index
    %c0_16 = arith.constant 0 : index
    %c0_17 = arith.constant 0 : index
    %13 = vector.load %arg11[%c0_15, %c0_16, %c0_17] : memref<1x1x128xf32, #tpu.memory_space<vmem>>, vector<1x1x128xf32>
    %14 = vector.shape_cast %13 : vector<1x1x128xf32> to vector<1x128xf32>
    %c0_18 = arith.constant 0 : index
    %c0_19 = arith.constant 0 : index
    %c0_20 = arith.constant 0 : index
    %15 = vector.load %arg12[%c0_18, %c0_19, %c0_20] : memref<1x1x128xf32, #tpu.memory_space<vmem>>, vector<1x1x128xf32>
    %16 = vector.shape_cast %15 : vector<1x1x128xf32> to vector<1x128xf32>
    %c0_21 = arith.constant 0 : index
    %c0_22 = arith.constant 0 : index
    %c0_23 = arith.constant 0 : index
    %17 = vector.load %arg13[%c0_21, %c0_22, %c0_23] : memref<1x1x128xf32, #tpu.memory_space<vmem>>, vector<1x1x128xf32>
    %18 = vector.shape_cast %17 : vector<1x1x128xf32> to vector<1x128xf32>
    %c0_24 = arith.constant 0 : index
    %c0_25 = arith.constant 0 : index
    %c0_26 = arith.constant 0 : index
    %19 = vector.load %arg14[%c0_24, %c0_25, %c0_26] : memref<1x128x128xbf16, #tpu.memory_space<vmem>>, vector<1x128x128xbf16>
    %20 = vector.shape_cast %19 : vector<1x128x128xbf16> to vector<128x128xbf16>
    %c0_27 = arith.constant 0 : index
    %c0_28 = arith.constant 0 : index
    %c0_29 = arith.constant 0 : index
    %21 = vector.load %arg15[%c0_27, %c0_28, %c0_29] : memref<1x1x128xf32, #tpu.memory_space<vmem>>, vector<1x1x128xf32>
    %22 = vector.shape_cast %21 : vector<1x1x128xf32> to vector<1x128xf32>
    %c0_30 = arith.constant 0 : index
    %c0_31 = arith.constant 0 : index
    %c0_32 = arith.constant 0 : index
    %23 = vector.load %arg16[%c0_30, %c0_31, %c0_32] : memref<1x128x256xbf16, #tpu.memory_space<vmem>>, vector<1x128x256xbf16>
    %24 = vector.shape_cast %23 : vector<1x128x256xbf16> to vector<128x256xbf16>
    %c0_33 = arith.constant 0 : index
    %c0_34 = arith.constant 0 : index
    %c0_35 = arith.constant 0 : index
    %25 = vector.load %arg17[%c0_33, %c0_34, %c0_35] : memref<1x1x256xf32, #tpu.memory_space<vmem>>, vector<1x1x256xf32>
    %26 = vector.shape_cast %25 : vector<1x1x256xf32> to vector<1x256xf32>
    %c0_36 = arith.constant 0 : index
    %c0_37 = arith.constant 0 : index
    %c0_38 = arith.constant 0 : index
    %27 = vector.load %arg18[%c0_36, %c0_37, %c0_38] : memref<1x128x128xbf16, #tpu.memory_space<vmem>>, vector<1x128x128xbf16>
    %28 = vector.shape_cast %27 : vector<1x128x128xbf16> to vector<128x128xbf16>
    %c0_39 = arith.constant 0 : index
    %c0_40 = arith.constant 0 : index
    %c0_41 = arith.constant 0 : index
    %29 = vector.load %arg19[%c0_39, %c0_40, %c0_41] : memref<1x1x128xf32, #tpu.memory_space<vmem>>, vector<1x1x128xf32>
    %30 = vector.shape_cast %29 : vector<1x1x128xf32> to vector<1x128xf32>
    %c0_42 = arith.constant 0 : index
    %c0_43 = arith.constant 0 : index
    %c0_44 = arith.constant 0 : index
    %31 = vector.load %arg20[%c0_42, %c0_43, %c0_44] : memref<1x1x128xf32, #tpu.memory_space<vmem>>, vector<1x1x128xf32>
    %32 = vector.shape_cast %31 : vector<1x1x128xf32> to vector<1x128xf32>
    %c0_45 = arith.constant 0 : index
    %c0_46 = arith.constant 0 : index
    %c0_47 = arith.constant 0 : index
    %33 = vector.load %arg21[%c0_45, %c0_46, %c0_47] : memref<1x1x128xf32, #tpu.memory_space<vmem>>, vector<1x1x128xf32>
    %34 = vector.shape_cast %33 : vector<1x1x128xf32> to vector<1x128xf32>
    %c0_48 = arith.constant 0 : index
    %c0_49 = arith.constant 0 : index
    %c0_50 = arith.constant 0 : index
    %35 = vector.load %arg22[%c0_48, %c0_49, %c0_50] : memref<1x128x512xbf16, #tpu.memory_space<vmem>>, vector<1x128x512xbf16>
    %36 = vector.shape_cast %35 : vector<1x128x512xbf16> to vector<128x512xbf16>
    %c0_51 = arith.constant 0 : index
    %c0_52 = arith.constant 0 : index
    %c0_53 = arith.constant 0 : index
    %37 = vector.load %arg23[%c0_51, %c0_52, %c0_53] : memref<1x1x512xf32, #tpu.memory_space<vmem>>, vector<1x1x512xf32>
    %38 = vector.shape_cast %37 : vector<1x1x512xf32> to vector<1x512xf32>
    %c0_54 = arith.constant 0 : index
    %c0_55 = arith.constant 0 : index
    %c0_56 = arith.constant 0 : index
    %39 = vector.load %arg24[%c0_54, %c0_55, %c0_56] : memref<1x512x128xbf16, #tpu.memory_space<vmem>>, vector<1x512x128xbf16>
    %40 = vector.shape_cast %39 : vector<1x512x128xbf16> to vector<512x128xbf16>
    %c0_57 = arith.constant 0 : index
    %c0_58 = arith.constant 0 : index
    %c0_59 = arith.constant 0 : index
    %41 = vector.load %arg25[%c0_57, %c0_58, %c0_59] : memref<1x1x128xf32, #tpu.memory_space<vmem>>, vector<1x1x128xf32>
    %42 = vector.shape_cast %41 : vector<1x1x128xf32> to vector<1x128xf32>
    %c0_60 = arith.constant 0 : index
    %c0_61 = arith.constant 0 : index
    %c0_62 = arith.constant 0 : index
    %43 = vector.load %arg3[%c0_60, %c0_61, %c0_62] : memref<2x16x128xbf16, #tpu.memory_space<vmem>>, vector<2x16x128xbf16>
    %44 = vector.shape_cast %43 : vector<2x16x128xbf16> to vector<32x128xbf16>
    %c0_63 = arith.constant 0 : index
    %c0_64 = arith.constant 0 : index
    %45 = vector.load %arg29[%c0_63, %c0_64] : memref<32x128xf32, #tpu.memory_space<vmem>>, vector<32x128xf32>
    %c0_65 = arith.constant 0 : index
    %c0_66 = arith.constant 0 : index
    %c0_67 = arith.constant 0 : index
    %46 = vector.load %arg30[%c0_65, %c0_66, %c0_67] : memref<1x16x16xf32, #tpu.memory_space<vmem>>, vector<1x16x16xf32>
    %c0_68 = arith.constant 0 : index
    %c0_69 = arith.constant 0 : index
    %c0_70 = arith.constant 0 : index
    %47 = vector.load %arg31[%c0_68, %c0_69, %c0_70] : memref<2x16x16xf32, #tpu.memory_space<vmem>>, vector<2x16x16xf32>
    %cst = arith.constant dense<0.000000e+00> : vector<32xf32>
    %48 = vector.multi_reduction <add>, %45, %cst [1] : vector<32x128xf32> to vector<32xf32>
    %49 = vector.shape_cast %48 : vector<32xf32> to vector<32x1xf32>
    %cst_71 = arith.constant 1.280000e+02 : f32
    %50 = vector.broadcast %cst_71 : f32 to vector<32x1xf32>
    %51 = arith.divf %49, %50 : vector<32x1xf32>
    %52 = vector.broadcast %51 : vector<32x1xf32> to vector<32x128xf32>
    %53 = arith.subf %45, %52 : vector<32x128xf32>
    %54 = arith.mulf %53, %53 : vector<32x128xf32>
    %cst_72 = arith.constant dense<0.000000e+00> : vector<32xf32>
    %55 = vector.multi_reduction <add>, %54, %cst_72 [1] : vector<32x128xf32> to vector<32xf32>
    %56 = vector.shape_cast %55 : vector<32xf32> to vector<32x1xf32>
    %cst_73 = arith.constant 0.00787401571 : f32
    %57 = vector.broadcast %cst_73 : f32 to vector<32x1xf32>
    %58 = arith.mulf %56, %57 : vector<32x1xf32>
    %59 = math.sqrt %58 : vector<32x1xf32>
    %60 = vector.broadcast %4 : vector<1x128xf32> to vector<32x128xf32>
    %61 = arith.mulf %60, %53 : vector<32x128xf32>
    %cst_74 = arith.constant 9.99999974E-6 : f32
    %62 = vector.broadcast %cst_74 : f32 to vector<32x1xf32>
    %63 = arith.addf %59, %62 : vector<32x1xf32>
    %64 = vector.broadcast %63 : vector<32x1xf32> to vector<32x128xf32>
    %65 = arith.divf %61, %64 : vector<32x128xf32>
    %66 = vector.broadcast %6 : vector<1x128xf32> to vector<32x128xf32>
    %67 = arith.addf %65, %66 : vector<32x128xf32>
    %68 = arith.truncf %67 : vector<32x128xf32> to vector<32x128xbf16>
    %cst_75 = arith.constant dense<0.000000e+00> : vector<32x384xf32>
    %69 = tpu.matmul %68, %8, %cst_75 {dimension_numbers = #tpu.dot_dimension_numbers<[1], [0], [0], [1], [0, 0, 1, 1], [], []>} : vector<32x128xbf16>, vector<128x384xbf16>, vector<32x384xf32> -> vector<32x384xf32>
    %70 = vector.broadcast %10 : vector<1x384xf32> to vector<32x384xf32>
    %71 = arith.addf %69, %70 : vector<32x384xf32>
    %72 = vector.extract_strided_slice %71 {offsets = [0, 0], sizes = [32, 128], strides = [1, 1]} : vector<32x384xf32> to vector<32x128xf32>
    %73 = vector.extract_strided_slice %71 {offsets = [0, 128], sizes = [32, 128], strides = [1, 1]} : vector<32x384xf32> to vector<32x128xf32>
    %74 = vector.extract_strided_slice %71 {offsets = [0, 256], sizes = [32, 128], strides = [1, 1]} : vector<32x384xf32> to vector<32x128xf32>
    %cst_76 = arith.constant 0.176776692 : f32
    %75 = vector.broadcast %cst_76 : f32 to vector<32x128xf32>
    %76 = arith.mulf %72, %75 : vector<32x128xf32>
    %77 = arith.truncf %76 : vector<32x128xf32> to vector<32x128xbf16>
    %78 = vector.shape_cast %77 : vector<32x128xbf16> to vector<2x16x128xbf16>
    %79 = arith.truncf %73 : vector<32x128xf32> to vector<32x128xbf16>
    %80 = vector.shape_cast %79 : vector<32x128xbf16> to vector<2x16x128xbf16>
    %81 = arith.truncf %74 : vector<32x128xf32> to vector<32x128xbf16>
    %82 = vector.shape_cast %81 : vector<32x128xbf16> to vector<2x16x128xbf16>
    %83 = vector.extract_strided_slice %78 {offsets = [0, 0, 0], sizes = [2, 16, 32], strides = [1, 1, 1]} : vector<2x16x128xbf16> to vector<2x16x32xbf16>
    %84 = vector.extract_strided_slice %80 {offsets = [0, 0, 0], sizes = [2, 16, 32], strides = [1, 1, 1]} : vector<2x16x128xbf16> to vector<2x16x32xbf16>
    "tpu.trace_start"() <{level = 10 : i32, message = "bqd,bkd->bqk"}> : () -> ()
    %cst_77 = arith.constant dense<0.000000e+00> : vector<2x16x16xf32>
    %85 = tpu.matmul %83, %84, %cst_77 {dimension_numbers = #tpu.dot_dimension_numbers<[2], [2], [1], [1], [0, 0, 0, 1, 1, 1], [0], [0]>} : vector<2x16x32xbf16>, vector<2x16x32xbf16>, vector<2x16x16xf32> -> vector<2x16x16xf32>
    "tpu.trace_stop"() : () -> ()
    %86 = vector.broadcast %46 : vector<1x16x16xf32> to vector<2x16x16xf32>
    %87 = arith.addf %85, %86 : vector<2x16x16xf32>
    %cst_78 = arith.constant dense<0xFF800000> : vector<2x16xf32>
    %88 = vector.multi_reduction <maximumf>, %87, %cst_78 [2] : vector<2x16x16xf32> to vector<2x16xf32>
    %89 = vector.shape_cast %88 : vector<2x16xf32> to vector<2x16x1xf32>
    %90 = vector.broadcast %89 : vector<2x16x1xf32> to vector<2x16x16xf32>
    %91 = arith.subf %87, %90 : vector<2x16x16xf32>
    %92 = math.exp %91 : vector<2x16x16xf32>
    %cst_79 = arith.constant dense<0.000000e+00> : vector<2x16xf32>
    %93 = vector.multi_reduction <add>, %92, %cst_79 [2] : vector<2x16x16xf32> to vector<2x16xf32>
    %94 = vector.shape_cast %93 : vector<2x16xf32> to vector<2x16x1xf32>
    %95 = tpu.reciprocal %94 {approx = true} : vector<2x16x1xf32> -> vector<2x16x1xf32>
    %96 = vector.broadcast %95 : vector<2x16x1xf32> to vector<2x16x16xf32>
    %97 = arith.mulf %92, %96 : vector<2x16x16xf32>
    %98 = arith.truncf %97 : vector<2x16x16xf32> to vector<2x16x16xbf16>
    %99 = vector.extract_strided_slice %82 {offsets = [0, 0, 0], sizes = [2, 16, 32], strides = [1, 1, 1]} : vector<2x16x128xbf16> to vector<2x16x32xbf16>
    "tpu.trace_start"() <{level = 10 : i32, message = "bqk,bkd->bqd"}> : () -> ()
    %cst_80 = arith.constant dense<0.000000e+00> : vector<2x16x32xf32>
    %100 = tpu.matmul %98, %99, %cst_80 {dimension_numbers = #tpu.dot_dimension_numbers<[2], [1], [1], [2], [0, 0, 0, 1, 1, 2], [0], [0]>} : vector<2x16x16xbf16>, vector<2x16x32xbf16>, vector<2x16x32xf32> -> vector<2x16x32xf32>
    "tpu.trace_stop"() : () -> ()
    %101 = vector.extract_strided_slice %78 {offsets = [0, 0, 32], sizes = [2, 16, 32], strides = [1, 1, 1]} : vector<2x16x128xbf16> to vector<2x16x32xbf16>
    %102 = vector.extract_strided_slice %80 {offsets = [0, 0, 32], sizes = [2, 16, 32], strides = [1, 1, 1]} : vector<2x16x128xbf16> to vector<2x16x32xbf16>
    "tpu.trace_start"() <{level = 10 : i32, message = "bqd,bkd->bqk"}> : () -> ()
    %cst_81 = arith.constant dense<0.000000e+00> : vector<2x16x16xf32>
    %103 = tpu.matmul %101, %102, %cst_81 {dimension_numbers = #tpu.dot_dimension_numbers<[2], [2], [1], [1], [0, 0, 0, 1, 1, 1], [0], [0]>} : vector<2x16x32xbf16>, vector<2x16x32xbf16>, vector<2x16x16xf32> -> vector<2x16x16xf32>
    "tpu.trace_stop"() : () -> ()
    %104 = vector.broadcast %46 : vector<1x16x16xf32> to vector<2x16x16xf32>
    %105 = arith.addf %103, %104 : vector<2x16x16xf32>
    %cst_82 = arith.constant dense<0xFF800000> : vector<2x16xf32>
    %106 = vector.multi_reduction <maximumf>, %105, %cst_82 [2] : vector<2x16x16xf32> to vector<2x16xf32>
    %107 = vector.shape_cast %106 : vector<2x16xf32> to vector<2x16x1xf32>
    %108 = vector.broadcast %107 : vector<2x16x1xf32> to vector<2x16x16xf32>
    %109 = arith.subf %105, %108 : vector<2x16x16xf32>
    %110 = math.exp %109 : vector<2x16x16xf32>
    %cst_83 = arith.constant dense<0.000000e+00> : vector<2x16xf32>
    %111 = vector.multi_reduction <add>, %110, %cst_83 [2] : vector<2x16x16xf32> to vector<2x16xf32>
    %112 = vector.shape_cast %111 : vector<2x16xf32> to vector<2x16x1xf32>
    %113 = tpu.reciprocal %112 {approx = true} : vector<2x16x1xf32> -> vector<2x16x1xf32>
    %114 = vector.broadcast %113 : vector<2x16x1xf32> to vector<2x16x16xf32>
    %115 = arith.mulf %110, %114 : vector<2x16x16xf32>
    %116 = arith.truncf %115 : vector<2x16x16xf32> to vector<2x16x16xbf16>
    %117 = vector.extract_strided_slice %82 {offsets = [0, 0, 32], sizes = [2, 16, 32], strides = [1, 1, 1]} : vector<2x16x128xbf16> to vector<2x16x32xbf16>
    "tpu.trace_start"() <{level = 10 : i32, message = "bqk,bkd->bqd"}> : () -> ()
    %cst_84 = arith.constant dense<0.000000e+00> : vector<2x16x32xf32>
    %118 = tpu.matmul %116, %117, %cst_84 {dimension_numbers = #tpu.dot_dimension_numbers<[2], [1], [1], [2], [0, 0, 0, 1, 1, 2], [0], [0]>} : vector<2x16x16xbf16>, vector<2x16x32xbf16>, vector<2x16x32xf32> -> vector<2x16x32xf32>
    "tpu.trace_stop"() : () -> ()
    %119 = vector.extract_strided_slice %78 {offsets = [0, 0, 64], sizes = [2, 16, 32], strides = [1, 1, 1]} : vector<2x16x128xbf16> to vector<2x16x32xbf16>
    %120 = vector.extract_strided_slice %80 {offsets = [0, 0, 64], sizes = [2, 16, 32], strides = [1, 1, 1]} : vector<2x16x128xbf16> to vector<2x16x32xbf16>
    "tpu.trace_start"() <{level = 10 : i32, message = "bqd,bkd->bqk"}> : () -> ()
    %cst_85 = arith.constant dense<0.000000e+00> : vector<2x16x16xf32>
    %121 = tpu.matmul %119, %120, %cst_85 {dimension_numbers = #tpu.dot_dimension_numbers<[2], [2], [1], [1], [0, 0, 0, 1, 1, 1], [0], [0]>} : vector<2x16x32xbf16>, vector<2x16x32xbf16>, vector<2x16x16xf32> -> vector<2x16x16xf32>
    "tpu.trace_stop"() : () -> ()
    %122 = vector.broadcast %46 : vector<1x16x16xf32> to vector<2x16x16xf32>
    %123 = arith.addf %121, %122 : vector<2x16x16xf32>
    %cst_86 = arith.constant dense<0xFF800000> : vector<2x16xf32>
    %124 = vector.multi_reduction <maximumf>, %123, %cst_86 [2] : vector<2x16x16xf32> to vector<2x16xf32>
    %125 = vector.shape_cast %124 : vector<2x16xf32> to vector<2x16x1xf32>
    %126 = vector.broadcast %125 : vector<2x16x1xf32> to vector<2x16x16xf32>
    %127 = arith.subf %123, %126 : vector<2x16x16xf32>
    %128 = math.exp %127 : vector<2x16x16xf32>
    %cst_87 = arith.constant dense<0.000000e+00> : vector<2x16xf32>
    %129 = vector.multi_reduction <add>, %128, %cst_87 [2] : vector<2x16x16xf32> to vector<2x16xf32>
    %130 = vector.shape_cast %129 : vector<2x16xf32> to vector<2x16x1xf32>
    %131 = tpu.reciprocal %130 {approx = true} : vector<2x16x1xf32> -> vector<2x16x1xf32>
    %132 = vector.broadcast %131 : vector<2x16x1xf32> to vector<2x16x16xf32>
    %133 = arith.mulf %128, %132 : vector<2x16x16xf32>
    %134 = arith.truncf %133 : vector<2x16x16xf32> to vector<2x16x16xbf16>
    %135 = vector.extract_strided_slice %82 {offsets = [0, 0, 64], sizes = [2, 16, 32], strides = [1, 1, 1]} : vector<2x16x128xbf16> to vector<2x16x32xbf16>
    "tpu.trace_start"() <{level = 10 : i32, message = "bqk,bkd->bqd"}> : () -> ()
    %cst_88 = arith.constant dense<0.000000e+00> : vector<2x16x32xf32>
    %136 = tpu.matmul %134, %135, %cst_88 {dimension_numbers = #tpu.dot_dimension_numbers<[2], [1], [1], [2], [0, 0, 0, 1, 1, 2], [0], [0]>} : vector<2x16x16xbf16>, vector<2x16x32xbf16>, vector<2x16x32xf32> -> vector<2x16x32xf32>
    "tpu.trace_stop"() : () -> ()
    %137 = vector.extract_strided_slice %78 {offsets = [0, 0, 96], sizes = [2, 16, 32], strides = [1, 1, 1]} : vector<2x16x128xbf16> to vector<2x16x32xbf16>
    %138 = vector.extract_strided_slice %80 {offsets = [0, 0, 96], sizes = [2, 16, 32], strides = [1, 1, 1]} : vector<2x16x128xbf16> to vector<2x16x32xbf16>
    "tpu.trace_start"() <{level = 10 : i32, message = "bqd,bkd->bqk"}> : () -> ()
    %cst_89 = arith.constant dense<0.000000e+00> : vector<2x16x16xf32>
    %139 = tpu.matmul %137, %138, %cst_89 {dimension_numbers = #tpu.dot_dimension_numbers<[2], [2], [1], [1], [0, 0, 0, 1, 1, 1], [0], [0]>} : vector<2x16x32xbf16>, vector<2x16x32xbf16>, vector<2x16x16xf32> -> vector<2x16x16xf32>
    "tpu.trace_stop"() : () -> ()
    %140 = vector.broadcast %46 : vector<1x16x16xf32> to vector<2x16x16xf32>
    %141 = arith.addf %139, %140 : vector<2x16x16xf32>
    %cst_90 = arith.constant dense<0xFF800000> : vector<2x16xf32>
    %142 = vector.multi_reduction <maximumf>, %141, %cst_90 [2] : vector<2x16x16xf32> to vector<2x16xf32>
    %143 = vector.shape_cast %142 : vector<2x16xf32> to vector<2x16x1xf32>
    %144 = vector.broadcast %143 : vector<2x16x1xf32> to vector<2x16x16xf32>
    %145 = arith.subf %141, %144 : vector<2x16x16xf32>
    %146 = math.exp %145 : vector<2x16x16xf32>
    %cst_91 = arith.constant dense<0.000000e+00> : vector<2x16xf32>
    %147 = vector.multi_reduction <add>, %146, %cst_91 [2] : vector<2x16x16xf32> to vector<2x16xf32>
    %148 = vector.shape_cast %147 : vector<2x16xf32> to vector<2x16x1xf32>
    %149 = tpu.reciprocal %148 {approx = true} : vector<2x16x1xf32> -> vector<2x16x1xf32>
    %150 = vector.broadcast %149 : vector<2x16x1xf32> to vector<2x16x16xf32>
    %151 = arith.mulf %146, %150 : vector<2x16x16xf32>
    %152 = arith.truncf %151 : vector<2x16x16xf32> to vector<2x16x16xbf16>
    %153 = vector.extract_strided_slice %82 {offsets = [0, 0, 96], sizes = [2, 16, 32], strides = [1, 1, 1]} : vector<2x16x128xbf16> to vector<2x16x32xbf16>
    "tpu.trace_start"() <{level = 10 : i32, message = "bqk,bkd->bqd"}> : () -> ()
    %cst_92 = arith.constant dense<0.000000e+00> : vector<2x16x32xf32>
    %154 = tpu.matmul %152, %153, %cst_92 {dimension_numbers = #tpu.dot_dimension_numbers<[2], [1], [1], [2], [0, 0, 0, 1, 1, 2], [0], [0]>} : vector<2x16x16xbf16>, vector<2x16x32xbf16>, vector<2x16x32xf32> -> vector<2x16x32xf32>
    "tpu.trace_stop"() : () -> ()
    %155 = tpu.concatenate %100, %118, %136, %154 in 2 : vector<2x16x32xf32>, vector<2x16x32xf32>, vector<2x16x32xf32>, vector<2x16x32xf32> -> vector<2x16x128xf32>
    %156 = vector.shape_cast %155 : vector<2x16x128xf32> to vector<32x128xf32>
    %157 = arith.truncf %156 : vector<32x128xf32> to vector<32x128xbf16>
    %cst_93 = arith.constant dense<0.000000e+00> : vector<32x128xf32>
    %158 = tpu.matmul %157, %12, %cst_93 {dimension_numbers = #tpu.dot_dimension_numbers<[1], [0], [0], [1], [0, 0, 1, 1], [], []>} : vector<32x128xbf16>, vector<128x128xbf16>, vector<32x128xf32> -> vector<32x128xf32>
    %159 = arith.addf %45, %158 : vector<32x128xf32>
    %160 = vector.broadcast %14 : vector<1x128xf32> to vector<32x128xf32>
    %161 = arith.addf %159, %160 : vector<32x128xf32>
    %cst_94 = arith.constant dense<0.000000e+00> : vector<32xf32>
    %162 = vector.multi_reduction <add>, %161, %cst_94 [1] : vector<32x128xf32> to vector<32xf32>
    %163 = vector.shape_cast %162 : vector<32xf32> to vector<32x1xf32>
    %cst_95 = arith.constant 1.280000e+02 : f32
    %164 = vector.broadcast %cst_95 : f32 to vector<32x1xf32>
    %165 = arith.divf %163, %164 : vector<32x1xf32>
    %166 = vector.broadcast %165 : vector<32x1xf32> to vector<32x128xf32>
    %167 = arith.subf %161, %166 : vector<32x128xf32>
    %168 = arith.mulf %167, %167 : vector<32x128xf32>
    %cst_96 = arith.constant dense<0.000000e+00> : vector<32xf32>
    %169 = vector.multi_reduction <add>, %168, %cst_96 [1] : vector<32x128xf32> to vector<32xf32>
    %170 = vector.shape_cast %169 : vector<32xf32> to vector<32x1xf32>
    %cst_97 = arith.constant 0.00787401571 : f32
    %171 = vector.broadcast %cst_97 : f32 to vector<32x1xf32>
    %172 = arith.mulf %170, %171 : vector<32x1xf32>
    %173 = math.sqrt %172 : vector<32x1xf32>
    %174 = vector.broadcast %16 : vector<1x128xf32> to vector<32x128xf32>
    %175 = arith.mulf %174, %167 : vector<32x128xf32>
    %cst_98 = arith.constant 9.99999974E-6 : f32
    %176 = vector.broadcast %cst_98 : f32 to vector<32x1xf32>
    %177 = arith.addf %173, %176 : vector<32x1xf32>
    %178 = vector.broadcast %177 : vector<32x1xf32> to vector<32x128xf32>
    %179 = arith.divf %175, %178 : vector<32x128xf32>
    %180 = vector.broadcast %18 : vector<1x128xf32> to vector<32x128xf32>
    %181 = arith.addf %179, %180 : vector<32x128xf32>
    %182 = arith.truncf %181 : vector<32x128xf32> to vector<32x128xbf16>
    %cst_99 = arith.constant dense<0.000000e+00> : vector<32x128xf32>
    %183 = tpu.matmul %182, %20, %cst_99 {dimension_numbers = #tpu.dot_dimension_numbers<[1], [0], [0], [1], [0, 0, 1, 1], [], []>} : vector<32x128xbf16>, vector<128x128xbf16>, vector<32x128xf32> -> vector<32x128xf32>
    %184 = vector.broadcast %22 : vector<1x128xf32> to vector<32x128xf32>
    %185 = arith.addf %183, %184 : vector<32x128xf32>
    %cst_100 = arith.constant dense<0.000000e+00> : vector<32x256xf32>
    %186 = tpu.matmul %44, %24, %cst_100 {dimension_numbers = #tpu.dot_dimension_numbers<[1], [0], [0], [1], [0, 0, 1, 1], [], []>} : vector<32x128xbf16>, vector<128x256xbf16>, vector<32x256xf32> -> vector<32x256xf32>
    %187 = vector.broadcast %26 : vector<1x256xf32> to vector<32x256xf32>
    %188 = arith.addf %186, %187 : vector<32x256xf32>
    %189 = vector.extract_strided_slice %188 {offsets = [0, 0], sizes = [32, 128], strides = [1, 1]} : vector<32x256xf32> to vector<32x128xf32>
    %190 = vector.extract_strided_slice %188 {offsets = [0, 128], sizes = [32, 128], strides = [1, 1]} : vector<32x256xf32> to vector<32x128xf32>
    %cst_101 = arith.constant 0.176776692 : f32
    %191 = vector.broadcast %cst_101 : f32 to vector<32x128xf32>
    %192 = arith.mulf %185, %191 : vector<32x128xf32>
    %193 = arith.truncf %192 : vector<32x128xf32> to vector<32x128xbf16>
    %194 = vector.shape_cast %193 : vector<32x128xbf16> to vector<2x16x128xbf16>
    %195 = arith.truncf %189 : vector<32x128xf32> to vector<32x128xbf16>
    %196 = vector.shape_cast %195 : vector<32x128xbf16> to vector<2x16x128xbf16>
    %197 = arith.truncf %190 : vector<32x128xf32> to vector<32x128xbf16>
    %198 = vector.shape_cast %197 : vector<32x128xbf16> to vector<2x16x128xbf16>
    %199 = vector.extract_strided_slice %194 {offsets = [0, 0, 0], sizes = [2, 16, 32], strides = [1, 1, 1]} : vector<2x16x128xbf16> to vector<2x16x32xbf16>
    %200 = vector.extract_strided_slice %196 {offsets = [0, 0, 0], sizes = [2, 16, 32], strides = [1, 1, 1]} : vector<2x16x128xbf16> to vector<2x16x32xbf16>
    "tpu.trace_start"() <{level = 10 : i32, message = "bqd,bkd->bqk"}> : () -> ()
    %cst_102 = arith.constant dense<0.000000e+00> : vector<2x16x16xf32>
    %201 = tpu.matmul %199, %200, %cst_102 {dimension_numbers = #tpu.dot_dimension_numbers<[2], [2], [1], [1], [0, 0, 0, 1, 1, 1], [0], [0]>} : vector<2x16x32xbf16>, vector<2x16x32xbf16>, vector<2x16x16xf32> -> vector<2x16x16xf32>
    "tpu.trace_stop"() : () -> ()
    %202 = arith.addf %201, %47 : vector<2x16x16xf32>
    %cst_103 = arith.constant dense<0xFF800000> : vector<2x16xf32>
    %203 = vector.multi_reduction <maximumf>, %202, %cst_103 [2] : vector<2x16x16xf32> to vector<2x16xf32>
    %204 = vector.shape_cast %203 : vector<2x16xf32> to vector<2x16x1xf32>
    %205 = vector.broadcast %204 : vector<2x16x1xf32> to vector<2x16x16xf32>
    %206 = arith.subf %202, %205 : vector<2x16x16xf32>
    %207 = math.exp %206 : vector<2x16x16xf32>
    %cst_104 = arith.constant dense<0.000000e+00> : vector<2x16xf32>
    %208 = vector.multi_reduction <add>, %207, %cst_104 [2] : vector<2x16x16xf32> to vector<2x16xf32>
    %209 = vector.shape_cast %208 : vector<2x16xf32> to vector<2x16x1xf32>
    %210 = tpu.reciprocal %209 {approx = true} : vector<2x16x1xf32> -> vector<2x16x1xf32>
    %211 = vector.broadcast %210 : vector<2x16x1xf32> to vector<2x16x16xf32>
    %212 = arith.mulf %207, %211 : vector<2x16x16xf32>
    %213 = arith.truncf %212 : vector<2x16x16xf32> to vector<2x16x16xbf16>
    %214 = vector.extract_strided_slice %198 {offsets = [0, 0, 0], sizes = [2, 16, 32], strides = [1, 1, 1]} : vector<2x16x128xbf16> to vector<2x16x32xbf16>
    "tpu.trace_start"() <{level = 10 : i32, message = "bqk,bkd->bqd"}> : () -> ()
    %cst_105 = arith.constant dense<0.000000e+00> : vector<2x16x32xf32>
    %215 = tpu.matmul %213, %214, %cst_105 {dimension_numbers = #tpu.dot_dimension_numbers<[2], [1], [1], [2], [0, 0, 0, 1, 1, 2], [0], [0]>} : vector<2x16x16xbf16>, vector<2x16x32xbf16>, vector<2x16x32xf32> -> vector<2x16x32xf32>
    "tpu.trace_stop"() : () -> ()
    %216 = vector.extract_strided_slice %194 {offsets = [0, 0, 32], sizes = [2, 16, 32], strides = [1, 1, 1]} : vector<2x16x128xbf16> to vector<2x16x32xbf16>
    %217 = vector.extract_strided_slice %196 {offsets = [0, 0, 32], sizes = [2, 16, 32], strides = [1, 1, 1]} : vector<2x16x128xbf16> to vector<2x16x32xbf16>
    "tpu.trace_start"() <{level = 10 : i32, message = "bqd,bkd->bqk"}> : () -> ()
    %cst_106 = arith.constant dense<0.000000e+00> : vector<2x16x16xf32>
    %218 = tpu.matmul %216, %217, %cst_106 {dimension_numbers = #tpu.dot_dimension_numbers<[2], [2], [1], [1], [0, 0, 0, 1, 1, 1], [0], [0]>} : vector<2x16x32xbf16>, vector<2x16x32xbf16>, vector<2x16x16xf32> -> vector<2x16x16xf32>
    "tpu.trace_stop"() : () -> ()
    %219 = arith.addf %218, %47 : vector<2x16x16xf32>
    %cst_107 = arith.constant dense<0xFF800000> : vector<2x16xf32>
    %220 = vector.multi_reduction <maximumf>, %219, %cst_107 [2] : vector<2x16x16xf32> to vector<2x16xf32>
    %221 = vector.shape_cast %220 : vector<2x16xf32> to vector<2x16x1xf32>
    %222 = vector.broadcast %221 : vector<2x16x1xf32> to vector<2x16x16xf32>
    %223 = arith.subf %219, %222 : vector<2x16x16xf32>
    %224 = math.exp %223 : vector<2x16x16xf32>
    %cst_108 = arith.constant dense<0.000000e+00> : vector<2x16xf32>
    %225 = vector.multi_reduction <add>, %224, %cst_108 [2] : vector<2x16x16xf32> to vector<2x16xf32>
    %226 = vector.shape_cast %225 : vector<2x16xf32> to vector<2x16x1xf32>
    %227 = tpu.reciprocal %226 {approx = true} : vector<2x16x1xf32> -> vector<2x16x1xf32>
    %228 = vector.broadcast %227 : vector<2x16x1xf32> to vector<2x16x16xf32>
    %229 = arith.mulf %224, %228 : vector<2x16x16xf32>
    %230 = arith.truncf %229 : vector<2x16x16xf32> to vector<2x16x16xbf16>
    %231 = vector.extract_strided_slice %198 {offsets = [0, 0, 32], sizes = [2, 16, 32], strides = [1, 1, 1]} : vector<2x16x128xbf16> to vector<2x16x32xbf16>
    "tpu.trace_start"() <{level = 10 : i32, message = "bqk,bkd->bqd"}> : () -> ()
    %cst_109 = arith.constant dense<0.000000e+00> : vector<2x16x32xf32>
    %232 = tpu.matmul %230, %231, %cst_109 {dimension_numbers = #tpu.dot_dimension_numbers<[2], [1], [1], [2], [0, 0, 0, 1, 1, 2], [0], [0]>} : vector<2x16x16xbf16>, vector<2x16x32xbf16>, vector<2x16x32xf32> -> vector<2x16x32xf32>
    "tpu.trace_stop"() : () -> ()
    %233 = vector.extract_strided_slice %194 {offsets = [0, 0, 64], sizes = [2, 16, 32], strides = [1, 1, 1]} : vector<2x16x128xbf16> to vector<2x16x32xbf16>
    %234 = vector.extract_strided_slice %196 {offsets = [0, 0, 64], sizes = [2, 16, 32], strides = [1, 1, 1]} : vector<2x16x128xbf16> to vector<2x16x32xbf16>
    "tpu.trace_start"() <{level = 10 : i32, message = "bqd,bkd->bqk"}> : () -> ()
    %cst_110 = arith.constant dense<0.000000e+00> : vector<2x16x16xf32>
    %235 = tpu.matmul %233, %234, %cst_110 {dimension_numbers = #tpu.dot_dimension_numbers<[2], [2], [1], [1], [0, 0, 0, 1, 1, 1], [0], [0]>} : vector<2x16x32xbf16>, vector<2x16x32xbf16>, vector<2x16x16xf32> -> vector<2x16x16xf32>
    "tpu.trace_stop"() : () -> ()
    %236 = arith.addf %235, %47 : vector<2x16x16xf32>
    %cst_111 = arith.constant dense<0xFF800000> : vector<2x16xf32>
    %237 = vector.multi_reduction <maximumf>, %236, %cst_111 [2] : vector<2x16x16xf32> to vector<2x16xf32>
    %238 = vector.shape_cast %237 : vector<2x16xf32> to vector<2x16x1xf32>
    %239 = vector.broadcast %238 : vector<2x16x1xf32> to vector<2x16x16xf32>
    %240 = arith.subf %236, %239 : vector<2x16x16xf32>
    %241 = math.exp %240 : vector<2x16x16xf32>
    %cst_112 = arith.constant dense<0.000000e+00> : vector<2x16xf32>
    %242 = vector.multi_reduction <add>, %241, %cst_112 [2] : vector<2x16x16xf32> to vector<2x16xf32>
    %243 = vector.shape_cast %242 : vector<2x16xf32> to vector<2x16x1xf32>
    %244 = tpu.reciprocal %243 {approx = true} : vector<2x16x1xf32> -> vector<2x16x1xf32>
    %245 = vector.broadcast %244 : vector<2x16x1xf32> to vector<2x16x16xf32>
    %246 = arith.mulf %241, %245 : vector<2x16x16xf32>
    %247 = arith.truncf %246 : vector<2x16x16xf32> to vector<2x16x16xbf16>
    %248 = vector.extract_strided_slice %198 {offsets = [0, 0, 64], sizes = [2, 16, 32], strides = [1, 1, 1]} : vector<2x16x128xbf16> to vector<2x16x32xbf16>
    "tpu.trace_start"() <{level = 10 : i32, message = "bqk,bkd->bqd"}> : () -> ()
    %cst_113 = arith.constant dense<0.000000e+00> : vector<2x16x32xf32>
    %249 = tpu.matmul %247, %248, %cst_113 {dimension_numbers = #tpu.dot_dimension_numbers<[2], [1], [1], [2], [0, 0, 0, 1, 1, 2], [0], [0]>} : vector<2x16x16xbf16>, vector<2x16x32xbf16>, vector<2x16x32xf32> -> vector<2x16x32xf32>
    "tpu.trace_stop"() : () -> ()
    %250 = vector.extract_strided_slice %194 {offsets = [0, 0, 96], sizes = [2, 16, 32], strides = [1, 1, 1]} : vector<2x16x128xbf16> to vector<2x16x32xbf16>
    %251 = vector.extract_strided_slice %196 {offsets = [0, 0, 96], sizes = [2, 16, 32], strides = [1, 1, 1]} : vector<2x16x128xbf16> to vector<2x16x32xbf16>
    "tpu.trace_start"() <{level = 10 : i32, message = "bqd,bkd->bqk"}> : () -> ()
    %cst_114 = arith.constant dense<0.000000e+00> : vector<2x16x16xf32>
    %252 = tpu.matmul %250, %251, %cst_114 {dimension_numbers = #tpu.dot_dimension_numbers<[2], [2], [1], [1], [0, 0, 0, 1, 1, 1], [0], [0]>} : vector<2x16x32xbf16>, vector<2x16x32xbf16>, vector<2x16x16xf32> -> vector<2x16x16xf32>
    "tpu.trace_stop"() : () -> ()
    %253 = arith.addf %252, %47 : vector<2x16x16xf32>
    %cst_115 = arith.constant dense<0xFF800000> : vector<2x16xf32>
    %254 = vector.multi_reduction <maximumf>, %253, %cst_115 [2] : vector<2x16x16xf32> to vector<2x16xf32>
    %255 = vector.shape_cast %254 : vector<2x16xf32> to vector<2x16x1xf32>
    %256 = vector.broadcast %255 : vector<2x16x1xf32> to vector<2x16x16xf32>
    %257 = arith.subf %253, %256 : vector<2x16x16xf32>
    %258 = math.exp %257 : vector<2x16x16xf32>
    %cst_116 = arith.constant dense<0.000000e+00> : vector<2x16xf32>
    %259 = vector.multi_reduction <add>, %258, %cst_116 [2] : vector<2x16x16xf32> to vector<2x16xf32>
    %260 = vector.shape_cast %259 : vector<2x16xf32> to vector<2x16x1xf32>
    %261 = tpu.reciprocal %260 {approx = true} : vector<2x16x1xf32> -> vector<2x16x1xf32>
    %262 = vector.broadcast %261 : vector<2x16x1xf32> to vector<2x16x16xf32>
    %263 = arith.mulf %258, %262 : vector<2x16x16xf32>
    %264 = arith.truncf %263 : vector<2x16x16xf32> to vector<2x16x16xbf16>
    %265 = vector.extract_strided_slice %198 {offsets = [0, 0, 96], sizes = [2, 16, 32], strides = [1, 1, 1]} : vector<2x16x128xbf16> to vector<2x16x32xbf16>
    "tpu.trace_start"() <{level = 10 : i32, message = "bqk,bkd->bqd"}> : () -> ()
    %cst_117 = arith.constant dense<0.000000e+00> : vector<2x16x32xf32>
    %266 = tpu.matmul %264, %265, %cst_117 {dimension_numbers = #tpu.dot_dimension_numbers<[2], [1], [1], [2], [0, 0, 0, 1, 1, 2], [0], [0]>} : vector<2x16x16xbf16>, vector<2x16x32xbf16>, vector<2x16x32xf32> -> vector<2x16x32xf32>
    "tpu.trace_stop"() : () -> ()
    %267 = tpu.concatenate %215, %232, %249, %266 in 2 : vector<2x16x32xf32>, vector<2x16x32xf32>, vector<2x16x32xf32>, vector<2x16x32xf32> -> vector<2x16x128xf32>
    %268 = vector.shape_cast %267 : vector<2x16x128xf32> to vector<32x128xf32>
    %269 = arith.truncf %268 : vector<32x128xf32> to vector<32x128xbf16>
    %cst_118 = arith.constant dense<0.000000e+00> : vector<32x128xf32>
    %270 = tpu.matmul %269, %28, %cst_118 {dimension_numbers = #tpu.dot_dimension_numbers<[1], [0], [0], [1], [0, 0, 1, 1], [], []>} : vector<32x128xbf16>, vector<128x128xbf16>, vector<32x128xf32> -> vector<32x128xf32>
    %271 = arith.addf %161, %270 : vector<32x128xf32>
    %272 = vector.broadcast %30 : vector<1x128xf32> to vector<32x128xf32>
    %273 = arith.addf %271, %272 : vector<32x128xf32>
    %cst_119 = arith.constant dense<0.000000e+00> : vector<32xf32>
    %274 = vector.multi_reduction <add>, %273, %cst_119 [1] : vector<32x128xf32> to vector<32xf32>
    %275 = vector.shape_cast %274 : vector<32xf32> to vector<32x1xf32>
    %cst_120 = arith.constant 1.280000e+02 : f32
    %276 = vector.broadcast %cst_120 : f32 to vector<32x1xf32>
    %277 = arith.divf %275, %276 : vector<32x1xf32>
    %278 = vector.broadcast %277 : vector<32x1xf32> to vector<32x128xf32>
    %279 = arith.subf %273, %278 : vector<32x128xf32>
    %280 = arith.mulf %279, %279 : vector<32x128xf32>
    %cst_121 = arith.constant dense<0.000000e+00> : vector<32xf32>
    %281 = vector.multi_reduction <add>, %280, %cst_121 [1] : vector<32x128xf32> to vector<32xf32>
    %282 = vector.shape_cast %281 : vector<32xf32> to vector<32x1xf32>
    %cst_122 = arith.constant 0.00787401571 : f32
    %283 = vector.broadcast %cst_122 : f32 to vector<32x1xf32>
    %284 = arith.mulf %282, %283 : vector<32x1xf32>
    %285 = math.sqrt %284 : vector<32x1xf32>
    %286 = vector.broadcast %32 : vector<1x128xf32> to vector<32x128xf32>
    %287 = arith.mulf %286, %279 : vector<32x128xf32>
    %cst_123 = arith.constant 9.99999974E-6 : f32
    %288 = vector.broadcast %cst_123 : f32 to vector<32x1xf32>
    %289 = arith.addf %285, %288 : vector<32x1xf32>
    %290 = vector.broadcast %289 : vector<32x1xf32> to vector<32x128xf32>
    %291 = arith.divf %287, %290 : vector<32x128xf32>
    %292 = vector.broadcast %34 : vector<1x128xf32> to vector<32x128xf32>
    %293 = arith.addf %291, %292 : vector<32x128xf32>
    %294 = arith.truncf %293 : vector<32x128xf32> to vector<32x128xbf16>
    %cst_124 = arith.constant dense<0.000000e+00> : vector<32x512xf32>
    %295 = tpu.matmul %294, %36, %cst_124 {dimension_numbers = #tpu.dot_dimension_numbers<[1], [0], [0], [1], [0, 0, 1, 1], [], []>} : vector<32x128xbf16>, vector<128x512xbf16>, vector<32x512xf32> -> vector<32x512xf32>
    %296 = vector.broadcast %38 : vector<1x512xf32> to vector<32x512xf32>
    %297 = arith.addf %295, %296 : vector<32x512xf32>
    %cst_125 = arith.constant 0.000000e+00 : f32
    %298 = vector.broadcast %cst_125 : f32 to vector<32x512xf32>
    %299 = arith.maximumf %297, %298 : vector<32x512xf32>
    %300 = arith.truncf %299 : vector<32x512xf32> to vector<32x512xbf16>
    %cst_126 = arith.constant dense<0.000000e+00> : vector<32x128xf32>
    %301 = tpu.matmul %300, %40, %cst_126 {dimension_numbers = #tpu.dot_dimension_numbers<[1], [0], [0], [1], [0, 0, 1, 1], [], []>} : vector<32x512xbf16>, vector<512x128xbf16>, vector<32x128xf32> -> vector<32x128xf32>
    %302 = arith.addf %273, %301 : vector<32x128xf32>
    %303 = vector.broadcast %42 : vector<1x128xf32> to vector<32x128xf32>
    %304 = arith.addf %302, %303 : vector<32x128xf32>
    %c0_127 = arith.constant 0 : index
    %c0_128 = arith.constant 0 : index
    %305 = vector.load %arg29[%c0_127, %c0_128] : memref<32x128xf32, #tpu.memory_space<vmem>>, vector<32x128xf32>
    tpu.vector_store %arg29[%c0_127, %c0_128], %304 {strides = array<i32>} : memref<32x128xf32, #tpu.memory_space<vmem>>, vector<32x128xf32>,
    %c1_i32 = arith.constant 1 : i32
    %306 = arith.cmpi eq, %arg1, %c1_i32 : i32
    %307 = arith.extui %306 : i1 to i32
    %c0_i32_129 = arith.constant 0 : i32
    %308 = arith.cmpi ne, %307, %c0_i32_129 : i32
    scf.if %308 {
      %c0_130 = arith.constant 0 : index
      %c0_131 = arith.constant 0 : index
      %309 = vector.load %arg26[%c0_130, %c0_131] : memref<1x128xf32, #tpu.memory_space<vmem>>, vector<1x128xf32>
      %c0_132 = arith.constant 0 : index
      %c0_133 = arith.constant 0 : index
      %310 = vector.load %arg27[%c0_132, %c0_133] : memref<1x128xf32, #tpu.memory_space<vmem>>, vector<1x128xf32>
      %cst_134 = arith.constant dense<0.000000e+00> : vector<32xf32>
      %311 = vector.multi_reduction <add>, %304, %cst_134 [1] : vector<32x128xf32> to vector<32xf32>
      %312 = vector.shape_cast %311 : vector<32xf32> to vector<32x1xf32>
      %cst_135 = arith.constant 1.280000e+02 : f32
      %313 = vector.broadcast %cst_135 : f32 to vector<32x1xf32>
      %314 = arith.divf %312, %313 : vector<32x1xf32>
      %315 = vector.broadcast %314 : vector<32x1xf32> to vector<32x128xf32>
      %316 = arith.subf %304, %315 : vector<32x128xf32>
      %317 = arith.mulf %316, %316 : vector<32x128xf32>
      %cst_136 = arith.constant dense<0.000000e+00> : vector<32xf32>
      %318 = vector.multi_reduction <add>, %317, %cst_136 [1] : vector<32x128xf32> to vector<32xf32>
      %319 = vector.shape_cast %318 : vector<32xf32> to vector<32x1xf32>
      %cst_137 = arith.constant 0.00787401571 : f32
      %320 = vector.broadcast %cst_137 : f32 to vector<32x1xf32>
      %321 = arith.mulf %319, %320 : vector<32x1xf32>
      %322 = math.sqrt %321 : vector<32x1xf32>
      %323 = vector.broadcast %309 : vector<1x128xf32> to vector<32x128xf32>
      %324 = arith.mulf %323, %316 : vector<32x128xf32>
      %cst_138 = arith.constant 9.99999974E-6 : f32
      %325 = vector.broadcast %cst_138 : f32 to vector<32x1xf32>
      %326 = arith.addf %322, %325 : vector<32x1xf32>
      %327 = vector.broadcast %326 : vector<32x1xf32> to vector<32x128xf32>
      %328 = arith.divf %324, %327 : vector<32x128xf32>
      %329 = vector.broadcast %310 : vector<1x128xf32> to vector<32x128xf32>
      %330 = arith.addf %328, %329 : vector<32x128xf32>
      %331 = vector.shape_cast %330 : vector<32x128xf32> to vector<2x16x128xf32>
      %332 = arith.truncf %331 : vector<2x16x128xf32> to vector<2x16x128xbf16>
      %c0_139 = arith.constant 0 : index
      %c0_140 = arith.constant 0 : index
      %c0_141 = arith.constant 0 : index
      %333 = vector.load %arg28[%c0_139, %c0_140, %c0_141] : memref<2x16x128xbf16, #tpu.memory_space<vmem>>, vector<2x16x128xbf16>
      tpu.vector_store %arg28[%c0_139, %c0_140, %c0_141], %332 {strides = array<i32>} : memref<2x16x128xbf16, #tpu.memory_space<vmem>>, vector<2x16x128xbf16>,
    } else {
    }
    return
  }
  func.func @transform_0(%arg0: i32, %arg1: i32) -> (i32, i32, i32) {
    %c0_i32 = arith.constant 0 : i32
    %c0_i32_0 = arith.constant 0 : i32
    %c0_i32_1 = arith.constant 0 : i32
    return %arg0, %c0_i32, %c0_i32_0 : i32, i32, i32
  }
  func.func @transform_1(%arg0: i32, %arg1: i32) -> (i32, i32, i32) {
    %c0_i32 = arith.constant 0 : i32
    %c0_i32_0 = arith.constant 0 : i32
    %c0_i32_1 = arith.constant 0 : i32
    return %arg0, %c0_i32, %c0_i32_0 : i32, i32, i32
  }
  func.func @transform_2(%arg0: i32, %arg1: i32) -> (i32, i32, i32) {
    %c0_i32 = arith.constant 0 : i32
    %c0_i32_0 = arith.constant 0 : i32
    %c0_i32_1 = arith.constant 0 : i32
    %c0_i32_2 = arith.constant 0 : i32
    return %c0_i32, %c0_i32_0, %c0_i32_1 : i32, i32, i32
  }
  func.func @transform_3(%arg0: i32, %arg1: i32) -> (i32, i32, i32) {
    %c0_i32 = arith.constant 0 : i32
    %c0_i32_0 = arith.constant 0 : i32
    %c0_i32_1 = arith.constant 0 : i32
    return %arg0, %c0_i32, %c0_i32_0 : i32, i32, i32
  }
  func.func @transform_4(%arg0: i32, %arg1: i32) -> (i32, i32, i32) {
    %c0_i32 = arith.constant 0 : i32
    %c0_i32_0 = arith.constant 0 : i32
    %c0_i32_1 = arith.constant 0 : i32
    return %arg1, %c0_i32, %c0_i32_0 : i32, i32, i32
  }
  func.func @transform_5(%arg0: i32, %arg1: i32) -> (i32, i32, i32) {
    %c0_i32 = arith.constant 0 : i32
    %c0_i32_0 = arith.constant 0 : i32
    %c0_i32_1 = arith.constant 0 : i32
    return %arg1, %c0_i32, %c0_i32_0 : i32, i32, i32
  }
  func.func @transform_6(%arg0: i32, %arg1: i32) -> (i32, i32, i32) {
    %c0_i32 = arith.constant 0 : i32
    %c0_i32_0 = arith.constant 0 : i32
    %c0_i32_1 = arith.constant 0 : i32
    return %arg1, %c0_i32, %c0_i32_0 : i32, i32, i32
  }
  func.func @transform_7(%arg0: i32, %arg1: i32) -> (i32, i32, i32) {
    %c0_i32 = arith.constant 0 : i32
    %c0_i32_0 = arith.constant 0 : i32
    %c0_i32_1 = arith.constant 0 : i32
    return %arg1, %c0_i32, %c0_i32_0 : i32, i32, i32
  }
  func.func @transform_8(%arg0: i32, %arg1: i32) -> (i32, i32, i32) {
    %c0_i32 = arith.constant 0 : i32
    %c0_i32_0 = arith.constant 0 : i32
    %c0_i32_1 = arith.constant 0 : i32
    return %arg1, %c0_i32, %c0_i32_0 : i32, i32, i32
  }
  func.func @transform_9(%arg0: i32, %arg1: i32) -> (i32, i32, i32) {
    %c0_i32 = arith.constant 0 : i32
    %c0_i32_0 = arith.constant 0 : i32
    %c0_i32_1 = arith.constant 0 : i32
    return %arg1, %c0_i32, %c0_i32_0 : i32, i32, i32
  }
  func.func @transform_10(%arg0: i32, %arg1: i32) -> (i32, i32, i32) {
    %c0_i32 = arith.constant 0 : i32
    %c0_i32_0 = arith.constant 0 : i32
    %c0_i32_1 = arith.constant 0 : i32
    return %arg1, %c0_i32, %c0_i32_0 : i32, i32, i32
  }
  func.func @transform_11(%arg0: i32, %arg1: i32) -> (i32, i32, i32) {
    %c0_i32 = arith.constant 0 : i32
    %c0_i32_0 = arith.constant 0 : i32
    %c0_i32_1 = arith.constant 0 : i32
    return %arg1, %c0_i32, %c0_i32_0 : i32, i32, i32
  }
  func.func @transform_12(%arg0: i32, %arg1: i32) -> (i32, i32, i32) {
    %c0_i32 = arith.constant 0 : i32
    %c0_i32_0 = arith.constant 0 : i32
    %c0_i32_1 = arith.constant 0 : i32
    return %arg1, %c0_i32, %c0_i32_0 : i32, i32, i32
  }
  func.func @transform_13(%arg0: i32, %arg1: i32) -> (i32, i32, i32) {
    %c0_i32 = arith.constant 0 : i32
    %c0_i32_0 = arith.constant 0 : i32
    %c0_i32_1 = arith.constant 0 : i32
    return %arg1, %c0_i32, %c0_i32_0 : i32, i32, i32
  }
  func.func @transform_14(%arg0: i32, %arg1: i32) -> (i32, i32, i32) {
    %c0_i32 = arith.constant 0 : i32
    %c0_i32_0 = arith.constant 0 : i32
    %c0_i32_1 = arith.constant 0 : i32
    return %arg1, %c0_i32, %c0_i32_0 : i32, i32, i32
  }
  func.func @transform_15(%arg0: i32, %arg1: i32) -> (i32, i32, i32) {
    %c0_i32 = arith.constant 0 : i32
    %c0_i32_0 = arith.constant 0 : i32
    %c0_i32_1 = arith.constant 0 : i32
    return %arg1, %c0_i32, %c0_i32_0 : i32, i32, i32
  }
  func.func @transform_16(%arg0: i32, %arg1: i32) -> (i32, i32, i32) {
    %c0_i32 = arith.constant 0 : i32
    %c0_i32_0 = arith.constant 0 : i32
    %c0_i32_1 = arith.constant 0 : i32
    return %arg1, %c0_i32, %c0_i32_0 : i32, i32, i32
  }
  func.func @transform_17(%arg0: i32, %arg1: i32) -> (i32, i32, i32) {
    %c0_i32 = arith.constant 0 : i32
    %c0_i32_0 = arith.constant 0 : i32
    %c0_i32_1 = arith.constant 0 : i32
    return %arg1, %c0_i32, %c0_i32_0 : i32, i32, i32
  }
  func.func @transform_18(%arg0: i32, %arg1: i32) -> (i32, i32, i32) {
    %c0_i32 = arith.constant 0 : i32
    %c0_i32_0 = arith.constant 0 : i32
    %c0_i32_1 = arith.constant 0 : i32
    return %arg1, %c0_i32, %c0_i32_0 : i32, i32, i32
  }
  func.func @transform_19(%arg0: i32, %arg1: i32) -> (i32, i32, i32) {
    %c0_i32 = arith.constant 0 : i32
    %c0_i32_0 = arith.constant 0 : i32
    %c0_i32_1 = arith.constant 0 : i32
    return %arg1, %c0_i32, %c0_i32_0 : i32, i32, i32
  }
  func.func @transform_20(%arg0: i32, %arg1: i32) -> (i32, i32, i32) {
    %c0_i32 = arith.constant 0 : i32
    %c0_i32_0 = arith.constant 0 : i32
    %c0_i32_1 = arith.constant 0 : i32
    return %arg1, %c0_i32, %c0_i32_0 : i32, i32, i32
  }
  func.func @transform_21(%arg0: i32, %arg1: i32) -> (i32, i32, i32) {
    %c0_i32 = arith.constant 0 : i32
    %c0_i32_0 = arith.constant 0 : i32
    %c0_i32_1 = arith.constant 0 : i32
    return %arg1, %c0_i32, %c0_i32_0 : i32, i32, i32
  }
  func.func @transform_22(%arg0: i32, %arg1: i32) -> (i32, i32, i32) {
    %c0_i32 = arith.constant 0 : i32
    %c0_i32_0 = arith.constant 0 : i32
    %c0_i32_1 = arith.constant 0 : i32
    return %arg1, %c0_i32, %c0_i32_0 : i32, i32, i32
  }
  func.func @transform_23(%arg0: i32, %arg1: i32) -> (i32, i32, i32) {
    %c0_i32 = arith.constant 0 : i32
    %c0_i32_0 = arith.constant 0 : i32
    %c0_i32_1 = arith.constant 0 : i32
    return %arg1, %c0_i32, %c0_i32_0 : i32, i32, i32
  }
  func.func @transform_24(%arg0: i32, %arg1: i32) -> (i32, i32) {
    %c0_i32 = arith.constant 0 : i32
    %c0_i32_0 = arith.constant 0 : i32
    %c0_i32_1 = arith.constant 0 : i32
    return %c0_i32, %c0_i32_0 : i32, i32
  }
  func.func @transform_25(%arg0: i32, %arg1: i32) -> (i32, i32) {
    %c0_i32 = arith.constant 0 : i32
    %c0_i32_0 = arith.constant 0 : i32
    %c0_i32_1 = arith.constant 0 : i32
    return %c0_i32, %c0_i32_0 : i32, i32
  }
  func.func @transform_26(%arg0: i32, %arg1: i32) -> (i32, i32, i32) {
    %c0_i32 = arith.constant 0 : i32
    %c0_i32_0 = arith.constant 0 : i32
    %c0_i32_1 = arith.constant 0 : i32
    return %arg0, %c0_i32, %c0_i32_0 : i32, i32, i32
  }
}

</mosaic_0001>

<llo_original>
// kernel: tpu_custom_call.1
$region0: #{tpu_custom_call.1}
  #allocation0 [shape = 'u32[]', space=smem, size = 0x4, offset = 0x4, fixed_abs, tag = 'smem constant byte address 0x4 - core index']
  #allocation1 [shape = 'u32[144,128]{1,0:T(1,128)}', space=vmem, size = 0x12000, scoped, tag = 'internal scratch']
  #allocation2 [shape = 'f32[32,128]{1,0:T(8,128)}', space=vmem, size = 0x4000, scoped, tag = 'scratch operand']
  #allocation3 [shape = 'f32[1,16,16]{2,1,0:T(8,128)}', space=vmem, size = 0x2000, scoped, tag = 'scratch operand']
  #allocation4 [shape = 'f32[2,16,16]{2,1,0:T(8,128)}', space=vmem, size = 0x4000, scoped, tag = 'scratch operand']
  %s0 = inlined_call_operand.hbm [shape: bf16[2,16,128], index: 0, kind: input, shape index: {}]
  %s1 = inlined_call_operand.hbm [shape: bf16[2,16,128], index: 1, kind: input, shape index: {}]
  %s2 = inlined_call_operand.hbm [shape: s8[1,16,16], index: 2, kind: input, shape index: {}]
  %s3 = inlined_call_operand.hbm [shape: s8[2,16,16], index: 3, kind: input, shape index: {}]
  %s4 = inlined_call_operand.hbm [shape: f32[2,1,128], index: 4, kind: input, shape index: {}]
  %s5 = inlined_call_operand.hbm [shape: f32[2,1,128], index: 5, kind: input, shape index: {}]
  %s6 = inlined_call_operand.hbm [shape: bf16[2,128,384], index: 6, kind: input, shape index: {}]
  %s7 = inlined_call_operand.hbm [shape: f32[2,1,384], index: 7, kind: input, shape index: {}]
  %s8 = inlined_call_operand.hbm [shape: bf16[2,128,128], index: 8, kind: input, shape index: {}]
  %s9 = inlined_call_operand.hbm [shape: f32[2,1,128], index: 9, kind: input, shape index: {}]
  %s10 = inlined_call_operand.hbm [shape: f32[2,1,128], index: 10, kind: input, shape index: {}]
  %s11 = inlined_call_operand.hbm [shape: f32[2,1,128], index: 11, kind: input, shape index: {}]
  %s12 = inlined_call_operand.hbm [shape: bf16[2,128,128], index: 12, kind: input, shape index: {}]
  %s13 = inlined_call_operand.hbm [shape: f32[2,1,128], index: 13, kind: input, shape index: {}]
  %s14 = inlined_call_operand.hbm [shape: bf16[2,128,256], index: 14, kind: input, shape index: {}]
  %s15 = inlined_call_operand.hbm [shape: f32[2,1,256], index: 15, kind: input, shape index: {}]
  %s16 = inlined_call_operand.hbm [shape: bf16[2,128,128], index: 16, kind: input, shape index: {}]
  %s17 = inlined_call_operand.hbm [shape: f32[2,1,128], index: 17, kind: input, shape index: {}]
  %s18 = inlined_call_operand.hbm [shape: f32[2,1,128], index: 18, kind: input, shape index: {}]
  %s19 = inlined_call_operand.hbm [shape: f32[2,1,128], index: 19, kind: input, shape index: {}]
  %s20 = inlined_call_operand.hbm [shape: bf16[2,128,512], index: 20, kind: input, shape index: {}]
  %s21 = inlined_call_operand.hbm [shape: f32[2,1,512], index: 21, kind: input, shape index: {}]
  %s22 = inlined_call_operand.hbm [shape: bf16[2,512,128], index: 22, kind: input, shape index: {}]
  %s23 = inlined_call_operand.hbm [shape: f32[2,1,128], index: 23, kind: input, shape index: {}]
  %s24 = inlined_call_operand.hbm [shape: f32[1,128], index: 24, kind: input, shape index: {}]
  %s25 = inlined_call_operand.hbm [shape: f32[1,128], index: 25, kind: input, shape index: {}]
  %s26 = inlined_call_operand.hbm [shape: bf16[2,16,128], index: 26, kind: output, shape index: {}]
  %s27 = sld [smem:[#allocation0]]
  $region249: #{tpu_custom_call.1} parent=0
    _
  %s29 = ssub.s32 1, %s27
  %s30 = scalar_select 0, %s29, %s27
  $region1: #{tpu_custom_call.1} parent=0
    #allocation5 [shape = 'u8[8192]{0}', space=vmem, size = 0x2000, scoped, tag = 'input window, operand 0, single buffered']
    #allocation6 [shape = 's32[2]{0}', space=sflag, size = 0x8, scoped, tag = 'scoped memory for tpu_custom_call.1']
    #allocation7 [shape = 's32[2]{0}', space=sflag, size = 0x8, scoped, tag = 'scoped memory for tpu_custom_call.1']
    #allocation8 [shape = 'u8[8192]{0}', space=vmem, size = 0x2000, scoped, tag = 'input window, operand 1, single buffered']
    #allocation9 [shape = 's32[1]{0}', space=sflag, size = 0x4, scoped, tag = 'scoped memory for tpu_custom_call.1']
    #allocation10 [shape = 'u8[2048]{0}', space=vmem, size = 0x800, scoped, tag = 'input window, operand 2, single buffered']
    #allocation11 [shape = 'u8[4096]{0}', space=vmem, size = 0x1000, scoped, tag = 'input window, operand 3, single buffered']
    #allocation12 [shape = 's32[1]{0}', space=sflag, size = 0x4, scoped, tag = 'scoped memory for tpu_custom_call.1']
    #allocation13 [shape = 'u8[1024]{0}', space=vmem, size = 0x400, scoped, tag = 'input window, operand 4']
    #allocation14 [shape = 'u8[1024]{0}', space=vmem, size = 0x400, scoped, tag = 'input window, operand 5']
    #allocation15 [shape = 'u8[196608]{0}', space=vmem, size = 0x30000, scoped, tag = 'input window, operand 6']
    #allocation16 [shape = 'u8[3072]{0}', space=vmem, size = 0xc00, scoped, tag = 'input window, operand 7']
    #allocation17 [shape = 'u8[65536]{0}', space=vmem, size = 0x10000, scoped, tag = 'input window, operand 8']
    #allocation18 [shape = 'u8[1024]{0}', space=vmem, size = 0x400, scoped, tag = 'input window, operand 9']
    #allocation19 [shape = 'u8[1024]{0}', space=vmem, size = 0x400, scoped, tag = 'input window, operand 10']
    #allocation20 [shape = 'u8[1024]{0}', space=vmem, size = 0x400, scoped, tag = 'input window, operand 11']
    #allocation21 [shape = 'u8[65536]{0}', space=vmem, size = 0x10000, scoped, tag = 'input window, operand 12']
    #allocation22 [shape = 'u8[1024]{0}', space=vmem, size = 0x400, scoped, tag = 'input window, operand 13']
    #allocation23 [shape = 'u8[131072]{0}', space=vmem, size = 0x20000, scoped, tag = 'input window, operand 14']
    #allocation24 [shape = 'u8[2048]{0}', space=vmem, size = 0x800, scoped, tag = 'input window, operand 15']
    #allocation25 [shape = 'u8[65536]{0}', space=vmem, size = 0x10000, scoped, tag = 'input window, operand 16']
    #allocation26 [shape = 'u8[1024]{0}', space=vmem, size = 0x400, scoped, tag = 'input window, operand 17']
    #allocation27 [shape = 'u8[1024]{0}', space=vmem, size = 0x400, scoped, tag = 'input window, operand 18']
    #allocation28 [shape = 'u8[1024]{0}', space=vmem, size = 0x400, scoped, tag = 'input window, operand 19']
    #allocation29 [shape = 'u8[262144]{0}', space=vmem, size = 0x40000, scoped, tag = 'input window, operand 20']
    #allocation30 [shape = 'u8[4096]{0}', space=vmem, size = 0x1000, scoped, tag = 'input window, operand 21']
    #allocation31 [shape = 'u8[262144]{0}', space=vmem, size = 0x40000, scoped, tag = 'input window, operand 22']
    #allocation32 [shape = 'u8[1024]{0}', space=vmem, size = 0x400, scoped, tag = 'input window, operand 23']
    #allocation33 [shape = 'u8[512]{0}', space=vmem, size = 0x400, scoped, tag = 'input window, operand 24, single buffered']
    #allocation34 [shape = 'u8[512]{0}', space=vmem, size = 0x400, scoped, tag = 'input window, operand 25, single buffered']
    #allocation35 [shape = 'u8[8192]{0}', space=vmem, size = 0x2000, scoped, tag = 'output window, operand 0, single buffered']
    %31 = vsyncpa [#allocation6], 0
    %32 = vsyncpa [#allocation9], 0
    %33 = vsyncpa [#allocation12], 0
    %34 = vsyncpa [#allocation7], 0
    loop: start=0, step=1, limit=4
    $region2: #{tpu_custom_call.1} parent=1 // loop_pre_header
      _
    $region3: #{tpu_custom_call.1} parent=1 // loop_header
      %s36 = sphi 0, %s40
      %p37 = scmp.ge.s32.totalorder %s36, 4
      %s43 = sphi 0, %s55
      %s44 = sphi 0, %s51
      %s45 = sphi 0, %s43
      %s46 = sphi 0, %s44
      %s47 = sphi 0, %s45
      %s48 = sphi 0, %s46
      %s58 = sphi 0, %s60
      %s61 = sphi 0, %s58
      %s62 = sphi 0, %s61
      %s78 = sphi 0, %s62
      %s84 = sphi 0, %s86
      %s87 = sphi 0, %s84
      %s88 = sphi 0, %s87
      %s104 = sphi 0, %s88
      %s108 = sphi 0, %s108
      %s110 = sphi 0, %s108
      %s111 = sphi 0, %s110
      %s125 = sphi 0, %s111
      %s131 = sphi 0, %s133
      %s134 = sphi 0, %s131
      %s135 = sphi 0, %s134
      %s151 = sphi 0, %s135
      %s157 = sphi 0, %s159
      %s160 = sphi 0, %s157
      %s161 = sphi 0, %s160
      %s177 = sphi 0, %s161
      %s183 = sphi 0, %s185
      %s186 = sphi 0, %s183
      %s187 = sphi 0, %s186
      %s203 = sphi 0, %s187
      %s209 = sphi 0, %s211
      %s212 = sphi 0, %s209
      %s213 = sphi 0, %s212
      %s229 = sphi 0, %s213
      %s235 = sphi 0, %s237
      %s238 = sphi 0, %s235
      %s239 = sphi 0, %s238
      %s255 = sphi 0, %s239
      %s261 = sphi 0, %s263
      %s264 = sphi 0, %s261
      %s265 = sphi 0, %s264
      %s281 = sphi 0, %s265
      %s287 = sphi 0, %s289
      %s290 = sphi 0, %s287
      %s291 = sphi 0, %s290
      %s307 = sphi 0, %s291
      %s313 = sphi 0, %s315
      %s316 = sphi 0, %s313
      %s317 = sphi 0, %s316
      %s333 = sphi 0, %s317
      %s339 = sphi 0, %s341
      %s342 = sphi 0, %s339
      %s343 = sphi 0, %s342
      %s359 = sphi 0, %s343
      %s365 = sphi 0, %s367
      %s368 = sphi 0, %s365
      %s369 = sphi 0, %s368
      %s385 = sphi 0, %s369
      %s391 = sphi 0, %s393
      %s394 = sphi 0, %s391
      %s395 = sphi 0, %s394
      %s411 = sphi 0, %s395
      %s417 = sphi 0, %s419
      %s420 = sphi 0, %s417
      %s421 = sphi 0, %s420
      %s437 = sphi 0, %s421
      %s443 = sphi 0, %s445
      %s446 = sphi 0, %s443
      %s447 = sphi 0, %s446
      %s463 = sphi 0, %s447
      %s469 = sphi 0, %s471
      %s472 = sphi 0, %s469
      %s473 = sphi 0, %s472
      %s489 = sphi 0, %s473
      %s495 = sphi 0, %s497
      %s498 = sphi 0, %s495
      %s499 = sphi 0, %s498
      %s515 = sphi 0, %s499
      %s521 = sphi 0, %s523
      %s524 = sphi 0, %s521
      %s525 = sphi 0, %s524
      %s541 = sphi 0, %s525
      %s547 = sphi 0, %s549
      %s550 = sphi 0, %s547
      %s551 = sphi 0, %s550
      %s567 = sphi 0, %s551
      %s573 = sphi 0, %s575
      %s576 = sphi 0, %s573
      %s577 = sphi 0, %s576
      %s593 = sphi 0, %s577
      %s599 = sphi 0, %s601
      %s602 = sphi 0, %s599
      %s603 = sphi 0, %s602
      %s619 = sphi 0, %s603
      %s625 = sphi 0, %s627
      %s628 = sphi 0, %s625
      %s629 = sphi 0, %s628
      %s645 = sphi 0, %s629
      %s651 = sphi 0, %s653
      %s654 = sphi 0, %s651
      %s655 = sphi 0, %s654
      %s671 = sphi 0, %s655
      %s675 = sphi 0, %s675
      %s677 = sphi 0, %s675
      %s678 = sphi 0, %s677
      %s692 = sphi 0, %s678
      %s696 = sphi 0, %s696
      %s698 = sphi 0, %s696
      %s699 = sphi 0, %s698
      %s713 = sphi 0, %s699
      %s719 = sphi 0, %s721
      %s722 = sphi 0, %s719
      %s723 = sphi 0, %s722
      %s739 = sphi 0, %s723
    $region4: #{tpu_custom_call.1} parent=1 // loop_header_branch
      %39 = sbr.rel (%p37) target = $region8
    $region5: #{tpu_custom_call.1} parent=1 // loop_body
      %s41 = ssub.s32 %s36, 1
      %s42 = ssub.s32 %s36, 2
      %s49 = sadd.s32 1, %s44
      %p50 = scmp.ge.s32.totalorder %s49, 2
      %s51 = scalar_select %p50, 0, %s49
      %s52 = sadd.s32 1, %s43
      %s53 = scalar_select %p50, %s52, %s43
      %p54 = scmp.ge.s32.totalorder %s53, 1
      %s55 = scalar_select %p54, 0, %s53
      %s56 = ssub.s32 %s43, %s55
      %p57 = scmp.eq.s32.totalorder %s56, 0
      %s59 = sadd.s32 %s58, 1
      %s60 = scalar_select %p57, %s58, %s59
      %p63 = pneg %p57
      %p64 = scmp.eq.s32.totalorder %s36, 1
      %p65 = por %p63, %p64
      %p66 = scmp.ne.s32.totalorder %s58, %s61
      %p67 = scmp.eq.s32.totalorder %s36, 0
      %p68 = por %p66, %p67
      %p69 = scmp.ne.s32.totalorder %s58, %s61
      %p70 = scmp.eq.s32.totalorder %s41, 1
      %p71 = por %p69, %p70
      %p72 = scmp.ne.s32.totalorder %s61, %s62
      %p73 = scmp.eq.s32.totalorder %s41, 0
      %p74 = por %p72, %p73
      %p75 = scmp.ne.s32.totalorder %s61, %s62
      %p76 = scmp.eq.s32.totalorder %s42, 1
      %p77 = por %p75, %p76
      %p79 = scmp.ne.s32.totalorder %s62, %s78
      %p80 = scmp.eq.s32.totalorder %s42, 0
      %p81 = por %p79, %p80
      %s82 = ssub.s32 %s43, %s55
      %p83 = scmp.eq.s32.totalorder %s82, 0
      %s85 = sadd.s32 %s84, 1
      %s86 = scalar_select %p83, %s84, %s85
      %p89 = pneg %p83
      %p90 = scmp.eq.s32.totalorder %s36, 1
      %p91 = por %p89, %p90
      %p92 = scmp.ne.s32.totalorder %s84, %s87
      %p93 = scmp.eq.s32.totalorder %s36, 0
      %p94 = por %p92, %p93
      %p95 = scmp.ne.s32.totalorder %s84, %s87
      %p96 = scmp.eq.s32.totalorder %s41, 1
      %p97 = por %p95, %p96
      %p98 = scmp.ne.s32.totalorder %s87, %s88
      %p99 = scmp.eq.s32.totalorder %s41, 0
      %p100 = por %p98, %p99
      %p101 = scmp.ne.s32.totalorder %s87, %s88
      %p102 = scmp.eq.s32.totalorder %s42, 1
      %p103 = por %p101, %p102
      %p105 = scmp.ne.s32.totalorder %s88, %s104
      %p106 = scmp.eq.s32.totalorder %s42, 0
      %p107 = por %p105, %p106
      %s109 = sadd.s32 %s108, 1
      %p112 = scmp.eq.s32.totalorder %s36, 1
      %p113 = scmp.ne.s32.totalorder %s108, %s110
      %p114 = scmp.eq.s32.totalorder %s36, 0
      %p115 = por %p113, %p114
      %p116 = scmp.ne.s32.totalorder %s108, %s110
      %p117 = scmp.eq.s32.totalorder %s41, 1
      %p118 = por %p116, %p117
      %p119 = scmp.ne.s32.totalorder %s110, %s111
      %p120 = scmp.eq.s32.totalorder %s41, 0
      %p121 = por %p119, %p120
      %p122 = scmp.ne.s32.totalorder %s110, %s111
      %p123 = scmp.eq.s32.totalorder %s42, 1
      %p124 = por %p122, %p123
      %p126 = scmp.ne.s32.totalorder %s111, %s125
      %p127 = scmp.eq.s32.totalorder %s42, 0
      %p128 = por %p126, %p127
      %s129 = ssub.s32 %s43, %s55
      %p130 = scmp.eq.s32.totalorder %s129, 0
      %s132 = sadd.s32 %s131, 1
      %s133 = scalar_select %p130, %s131, %s132
      %p136 = pneg %p130
      %p137 = scmp.eq.s32.totalorder %s36, 1
      %p138 = por %p136, %p137
      %p139 = scmp.ne.s32.totalorder %s131, %s134
      %p140 = scmp.eq.s32.totalorder %s36, 0
      %p141 = por %p139, %p140
      %p142 = scmp.ne.s32.totalorder %s131, %s134
      %p143 = scmp.eq.s32.totalorder %s41, 1
      %p144 = por %p142, %p143
      %p145 = scmp.ne.s32.totalorder %s134, %s135
      %p146 = scmp.eq.s32.totalorder %s41, 0
      %p147 = por %p145, %p146
      %p148 = scmp.ne.s32.totalorder %s134, %s135
      %p149 = scmp.eq.s32.totalorder %s42, 1
      %p150 = por %p148, %p149
      %p152 = scmp.ne.s32.totalorder %s135, %s151
      %p153 = scmp.eq.s32.totalorder %s42, 0
      %p154 = por %p152, %p153
      %s155 = ssub.s32 %s44, %s51
      %p156 = scmp.eq.s32.totalorder %s155, 0
      %s158 = sadd.s32 %s157, 1
      %s159 = scalar_select %p156, %s157, %s158
      %p162 = pneg %p156
      %p163 = scmp.eq.s32.totalorder %s36, 1
      %p164 = por %p162, %p163
      %p165 = scmp.ne.s32.totalorder %s157, %s160
      %p166 = scmp.eq.s32.totalorder %s36, 0
      %p167 = por %p165, %p166
      %p168 = scmp.ne.s32.totalorder %s157, %s160
      %p169 = scmp.eq.s32.totalorder %s41, 1
      %p170 = por %p168, %p169
      %p171 = scmp.ne.s32.totalorder %s160, %s161
      %p172 = scmp.eq.s32.totalorder %s41, 0
      %p173 = por %p171, %p172
      %p174 = scmp.ne.s32.totalorder %s160, %s161
      %p175 = scmp.eq.s32.totalorder %s42, 1
      %p176 = por %p174, %p175
      %p178 = scmp.ne.s32.totalorder %s161, %s177
      %p179 = scmp.eq.s32.totalorder %s42, 0
      %p180 = por %p178, %p179
      %s181 = ssub.s32 %s44, %s51
      %p182 = scmp.eq.s32.totalorder %s181, 0
      %s184 = sadd.s32 %s183, 1
      %s185 = scalar_select %p182, %s183, %s184
      %p188 = pneg %p182
      %p189 = scmp.eq.s32.totalorder %s36, 1
      %p190 = por %p188, %p189
      %p191 = scmp.ne.s32.totalorder %s183, %s186
      %p192 = scmp.eq.s32.totalorder %s36, 0
      %p193 = por %p191, %p192
      %p194 = scmp.ne.s32.totalorder %s183, %s186
      %p195 = scmp.eq.s32.totalorder %s41, 1
      %p196 = por %p194, %p195
      %p197 = scmp.ne.s32.totalorder %s186, %s187
      %p198 = scmp.eq.s32.totalorder %s41, 0
      %p199 = por %p197, %p198
      %p200 = scmp.ne.s32.totalorder %s186, %s187
      %p201 = scmp.eq.s32.totalorder %s42, 1
      %p202 = por %p200, %p201
      %p204 = scmp.ne.s32.totalorder %s187, %s203
      %p205 = scmp.eq.s32.totalorder %s42, 0
      %p206 = por %p204, %p205
      %s207 = ssub.s32 %s44, %s51
      %p208 = scmp.eq.s32.totalorder %s207, 0
      %s210 = sadd.s32 %s209, 1
      %s211 = scalar_select %p208, %s209, %s210
      %p214 = pneg %p208
      %p215 = scmp.eq.s32.totalorder %s36, 1
      %p216 = por %p214, %p215
      %p217 = scmp.ne.s32.totalorder %s209, %s212
      %p218 = scmp.eq.s32.totalorder %s36, 0
      %p219 = por %p217, %p218
      %p220 = scmp.ne.s32.totalorder %s209, %s212
      %p221 = scmp.eq.s32.totalorder %s41, 1
      %p222 = por %p220, %p221
      %p223 = scmp.ne.s32.totalorder %s212, %s213
      %p224 = scmp.eq.s32.totalorder %s41, 0
      %p225 = por %p223, %p224
      %p226 = scmp.ne.s32.totalorder %s212, %s213
      %p227 = scmp.eq.s32.totalorder %s42, 1
      %p228 = por %p226, %p227
      %p230 = scmp.ne.s32.totalorder %s213, %s229
      %p231 = scmp.eq.s32.totalorder %s42, 0
      %p232 = por %p230, %p231
      %s233 = ssub.s32 %s44, %s51
      %p234 = scmp.eq.s32.totalorder %s233, 0
      %s236 = sadd.s32 %s235, 1
      %s237 = scalar_select %p234, %s235, %s236
      %p240 = pneg %p234
      %p241 = scmp.eq.s32.totalorder %s36, 1
      %p242 = por %p240, %p241
      %p243 = scmp.ne.s32.totalorder %s235, %s238
      %p244 = scmp.eq.s32.totalorder %s36, 0
      %p245 = por %p243, %p244
      %p246 = scmp.ne.s32.totalorder %s235, %s238
      %p247 = scmp.eq.s32.totalorder %s41, 1
      %p248 = por %p246, %p247
      %p249 = scmp.ne.s32.totalorder %s238, %s239
      %p250 = scmp.eq.s32.totalorder %s41, 0
      %p251 = por %p249, %p250
      %p252 = scmp.ne.s32.totalorder %s238, %s239
      %p253 = scmp.eq.s32.totalorder %s42, 1
      %p254 = por %p252, %p253
      %p256 = scmp.ne.s32.totalorder %s239, %s255
      %p257 = scmp.eq.s32.totalorder %s42, 0
      %p258 = por %p256, %p257
      %s259 = ssub.s32 %s44, %s51
      %p260 = scmp.eq.s32.totalorder %s259, 0
      %s262 = sadd.s32 %s261, 1
      %s263 = scalar_select %p260, %s261, %s262
      %p266 = pneg %p260
      %p267 = scmp.eq.s32.totalorder %s36, 1
      %p268 = por %p266, %p267
      %p269 = scmp.ne.s32.totalorder %s261, %s264
      %p270 = scmp.eq.s32.totalorder %s36, 0
      %p271 = por %p269, %p270
      %p272 = scmp.ne.s32.totalorder %s261, %s264
      %p273 = scmp.eq.s32.totalorder %s41, 1
      %p274 = por %p272, %p273
      %p275 = scmp.ne.s32.totalorder %s264, %s265
      %p276 = scmp.eq.s32.totalorder %s41, 0
      %p277 = por %p275, %p276
      %p278 = scmp.ne.s32.totalorder %s264, %s265
      %p279 = scmp.eq.s32.totalorder %s42, 1
      %p280 = por %p278, %p279
      %p282 = scmp.ne.s32.totalorder %s265, %s281
      %p283 = scmp.eq.s32.totalorder %s42, 0
      %p284 = por %p282, %p283
      %s285 = ssub.s32 %s44, %s51
      %p286 = scmp.eq.s32.totalorder %s285, 0
      %s288 = sadd.s32 %s287, 1
      %s289 = scalar_select %p286, %s287, %s288
      %p292 = pneg %p286
      %p293 = scmp.eq.s32.totalorder %s36, 1
      %p294 = por %p292, %p293
      %p295 = scmp.ne.s32.totalorder %s287, %s290
      %p296 = scmp.eq.s32.totalorder %s36, 0
      %p297 = por %p295, %p296
      %p298 = scmp.ne.s32.totalorder %s287, %s290
      %p299 = scmp.eq.s32.totalorder %s41, 1
      %p300 = por %p298, %p299
      %p301 = scmp.ne.s32.totalorder %s290, %s291
      %p302 = scmp.eq.s32.totalorder %s41, 0
      %p303 = por %p301, %p302
      %p304 = scmp.ne.s32.totalorder %s290, %s291
      %p305 = scmp.eq.s32.totalorder %s42, 1
      %p306 = por %p304, %p305
      %p308 = scmp.ne.s32.totalorder %s291, %s307
      %p309 = scmp.eq.s32.totalorder %s42, 0
      %p310 = por %p308, %p309
      %s311 = ssub.s32 %s44, %s51
      %p312 = scmp.eq.s32.totalorder %s311, 0
      %s314 = sadd.s32 %s313, 1
      %s315 = scalar_select %p312, %s313, %s314
      %p318 = pneg %p312
      %p319 = scmp.eq.s32.totalorder %s36, 1
      %p320 = por %p318, %p319
      %p321 = scmp.ne.s32.totalorder %s313, %s316
      %p322 = scmp.eq.s32.totalorder %s36, 0
      %p323 = por %p321, %p322
      %p324 = scmp.ne.s32.totalorder %s313, %s316
      %p325 = scmp.eq.s32.totalorder %s41, 1
      %p326 = por %p324, %p325
      %p327 = scmp.ne.s32.totalorder %s316, %s317
      %p328 = scmp.eq.s32.totalorder %s41, 0
      %p329 = por %p327, %p328
      %p330 = scmp.ne.s32.totalorder %s316, %s317
      %p331 = scmp.eq.s32.totalorder %s42, 1
      %p332 = por %p330, %p331
      %p334 = scmp.ne.s32.totalorder %s317, %s333
      %p335 = scmp.eq.s32.totalorder %s42, 0
      %p336 = por %p334, %p335
      %s337 = ssub.s32 %s44, %s51
      %p338 = scmp.eq.s32.totalorder %s337, 0
      %s340 = sadd.s32 %s339, 1
      %s341 = scalar_select %p338, %s339, %s340
      %p344 = pneg %p338
      %p345 = scmp.eq.s32.totalorder %s36, 1
      %p346 = por %p344, %p345
      %p347 = scmp.ne.s32.totalorder %s339, %s342
      %p348 = scmp.eq.s32.totalorder %s36, 0
      %p349 = por %p347, %p348
      %p350 = scmp.ne.s32.totalorder %s339, %s342
      %p351 = scmp.eq.s32.totalorder %s41, 1
      %p352 = por %p350, %p351
      %p353 = scmp.ne.s32.totalorder %s342, %s343
      %p354 = scmp.eq.s32.totalorder %s41, 0
      %p355 = por %p353, %p354
      %p356 = scmp.ne.s32.totalorder %s342, %s343
      %p357 = scmp.eq.s32.totalorder %s42, 1
      %p358 = por %p356, %p357
      %p360 = scmp.ne.s32.totalorder %s343, %s359
      %p361 = scmp.eq.s32.totalorder %s42, 0
      %p362 = por %p360, %p361
      %s363 = ssub.s32 %s44, %s51
      %p364 = scmp.eq.s32.totalorder %s363, 0
      %s366 = sadd.s32 %s365, 1
      %s367 = scalar_select %p364, %s365, %s366
      %p370 = pneg %p364
      %p371 = scmp.eq.s32.totalorder %s36, 1
      %p372 = por %p370, %p371
      %p373 = scmp.ne.s32.totalorder %s365, %s368
      %p374 = scmp.eq.s32.totalorder %s36, 0
      %p375 = por %p373, %p374
      %p376 = scmp.ne.s32.totalorder %s365, %s368
      %p377 = scmp.eq.s32.totalorder %s41, 1
      %p378 = por %p376, %p377
      %p379 = scmp.ne.s32.totalorder %s368, %s369
      %p380 = scmp.eq.s32.totalorder %s41, 0
      %p381 = por %p379, %p380
      %p382 = scmp.ne.s32.totalorder %s368, %s369
      %p383 = scmp.eq.s32.totalorder %s42, 1
      %p384 = por %p382, %p383
      %p386 = scmp.ne.s32.totalorder %s369, %s385
      %p387 = scmp.eq.s32.totalorder %s42, 0
      %p388 = por %p386, %p387
      %s389 = ssub.s32 %s44, %s51
      %p390 = scmp.eq.s32.totalorder %s389, 0
      %s392 = sadd.s32 %s391, 1
      %s393 = scalar_select %p390, %s391, %s392
      %p396 = pneg %p390
      %p397 = scmp.eq.s32.totalorder %s36, 1
      %p398 = por %p396, %p397
      %p399 = scmp.ne.s32.totalorder %s391, %s394
      %p400 = scmp.eq.s32.totalorder %s36, 0
      %p401 = por %p399, %p400
      %p402 = scmp.ne.s32.totalorder %s391, %s394
      %p403 = scmp.eq.s32.totalorder %s41, 1
      %p404 = por %p402, %p403
      %p405 = scmp.ne.s32.totalorder %s394, %s395
      %p406 = scmp.eq.s32.totalorder %s41, 0
      %p407 = por %p405, %p406
      %p408 = scmp.ne.s32.totalorder %s394, %s395
      %p409 = scmp.eq.s32.totalorder %s42, 1
      %p410 = por %p408, %p409
      %p412 = scmp.ne.s32.totalorder %s395, %s411
      %p413 = scmp.eq.s32.totalorder %s42, 0
      %p414 = por %p412, %p413
      %s415 = ssub.s32 %s44, %s51
      %p416 = scmp.eq.s32.totalorder %s415, 0
      %s418 = sadd.s32 %s417, 1
      %s419 = scalar_select %p416, %s417, %s418
      %p422 = pneg %p416
      %p423 = scmp.eq.s32.totalorder %s36, 1
      %p424 = por %p422, %p423
      %p425 = scmp.ne.s32.totalorder %s417, %s420
      %p426 = scmp.eq.s32.totalorder %s36, 0
      %p427 = por %p425, %p426
      %p428 = scmp.ne.s32.totalorder %s417, %s420
      %p429 = scmp.eq.s32.totalorder %s41, 1
      %p430 = por %p428, %p429
      %p431 = scmp.ne.s32.totalorder %s420, %s421
      %p432 = scmp.eq.s32.totalorder %s41, 0
      %p433 = por %p431, %p432
      %p434 = scmp.ne.s32.totalorder %s420, %s421
      %p435 = scmp.eq.s32.totalorder %s42, 1
      %p436 = por %p434, %p435
      %p438 = scmp.ne.s32.totalorder %s421, %s437
      %p439 = scmp.eq.s32.totalorder %s42, 0
      %p440 = por %p438, %p439
      %s441 = ssub.s32 %s44, %s51
      %p442 = scmp.eq.s32.totalorder %s441, 0
      %s444 = sadd.s32 %s443, 1
      %s445 = scalar_select %p442, %s443, %s444
      %p448 = pneg %p442
      %p449 = scmp.eq.s32.totalorder %s36, 1
      %p450 = por %p448, %p449
      %p451 = scmp.ne.s32.totalorder %s443, %s446
      %p452 = scmp.eq.s32.totalorder %s36, 0
      %p453 = por %p451, %p452
      %p454 = scmp.ne.s32.totalorder %s443, %s446
      %p455 = scmp.eq.s32.totalorder %s41, 1
      %p456 = por %p454, %p455
      %p457 = scmp.ne.s32.totalorder %s446, %s447
      %p458 = scmp.eq.s32.totalorder %s41, 0
      %p459 = por %p457, %p458
      %p460 = scmp.ne.s32.totalorder %s446, %s447
      %p461 = scmp.eq.s32.totalorder %s42, 1
      %p462 = por %p460, %p461
      %p464 = scmp.ne.s32.totalorder %s447, %s463
      %p465 = scmp.eq.s32.totalorder %s42, 0
      %p466 = por %p464, %p465
      %s467 = ssub.s32 %s44, %s51
      %p468 = scmp.eq.s32.totalorder %s467, 0
      %s470 = sadd.s32 %s469, 1
      %s471 = scalar_select %p468, %s469, %s470
      %p474 = pneg %p468
      %p475 = scmp.eq.s32.totalorder %s36, 1
      %p476 = por %p474, %p475
      %p477 = scmp.ne.s32.totalorder %s469, %s472
      %p478 = scmp.eq.s32.totalorder %s36, 0
      %p479 = por %p477, %p478
      %p480 = scmp.ne.s32.totalorder %s469, %s472
      %p481 = scmp.eq.s32.totalorder %s41, 1
      %p482 = por %p480, %p481
      %p483 = scmp.ne.s32.totalorder %s472, %s473
      %p484 = scmp.eq.s32.totalorder %s41, 0
      %p485 = por %p483, %p484
      %p486 = scmp.ne.s32.totalorder %s472, %s473
      %p487 = scmp.eq.s32.totalorder %s42, 1
      %p488 = por %p486, %p487
      %p490 = scmp.ne.s32.totalorder %s473, %s489
      %p491 = scmp.eq.s32.totalorder %s42, 0
      %p492 = por %p490, %p491
      %s493 = ssub.s32 %s44, %s51
      %p494 = scmp.eq.s32.totalorder %s493, 0
      %s496 = sadd.s32 %s495, 1
      %s497 = scalar_select %p494, %s495, %s496
      %p500 = pneg %p494
      %p501 = scmp.eq.s32.totalorder %s36, 1
      %p502 = por %p500, %p501
      %p503 = scmp.ne.s32.totalorder %s495, %s498
      %p504 = scmp.eq.s32.totalorder %s36, 0
      %p505 = por %p503, %p504
      %p506 = scmp.ne.s32.totalorder %s495, %s498
      %p507 = scmp.eq.s32.totalorder %s41, 1
      %p508 = por %p506, %p507
      %p509 = scmp.ne.s32.totalorder %s498, %s499
      %p510 = scmp.eq.s32.totalorder %s41, 0
      %p511 = por %p509, %p510
      %p512 = scmp.ne.s32.totalorder %s498, %s499
      %p513 = scmp.eq.s32.totalorder %s42, 1
      %p514 = por %p512, %p513
      %p516 = scmp.ne.s32.totalorder %s499, %s515
      %p517 = scmp.eq.s32.totalorder %s42, 0
      %p518 = por %p516, %p517
      %s519 = ssub.s32 %s44, %s51
      %p520 = scmp.eq.s32.totalorder %s519, 0
      %s522 = sadd.s32 %s521, 1
      %s523 = scalar_select %p520, %s521, %s522
      %p526 = pneg %p520
      %p527 = scmp.eq.s32.totalorder %s36, 1
      %p528 = por %p526, %p527
      %p529 = scmp.ne.s32.totalorder %s521, %s524
      %p530 = scmp.eq.s32.totalorder %s36, 0
      %p531 = por %p529, %p530
      %p532 = scmp.ne.s32.totalorder %s521, %s524
      %p533 = scmp.eq.s32.totalorder %s41, 1
      %p534 = por %p532, %p533
      %p535 = scmp.ne.s32.totalorder %s524, %s525
      %p536 = scmp.eq.s32.totalorder %s41, 0
      %p537 = por %p535, %p536
      %p538 = scmp.ne.s32.totalorder %s524, %s525
      %p539 = scmp.eq.s32.totalorder %s42, 1
      %p540 = por %p538, %p539
      %p542 = scmp.ne.s32.totalorder %s525, %s541
      %p543 = scmp.eq.s32.totalorder %s42, 0
      %p544 = por %p542, %p543
      %s545 = ssub.s32 %s44, %s51
      %p546 = scmp.eq.s32.totalorder %s545, 0
      %s548 = sadd.s32 %s547, 1
      %s549 = scalar_select %p546, %s547, %s548
      %p552 = pneg %p546
      %p553 = scmp.eq.s32.totalorder %s36, 1
      %p554 = por %p552, %p553
      %p555 = scmp.ne.s32.totalorder %s547, %s550
      %p556 = scmp.eq.s32.totalorder %s36, 0
      %p557 = por %p555, %p556
      %p558 = scmp.ne.s32.totalorder %s547, %s550
      %p559 = scmp.eq.s32.totalorder %s41, 1
      %p560 = por %p558, %p559
      %p561 = scmp.ne.s32.totalorder %s550, %s551
      %p562 = scmp.eq.s32.totalorder %s41, 0
      %p563 = por %p561, %p562
      %p564 = scmp.ne.s32.totalorder %s550, %s551
      %p565 = scmp.eq.s32.totalorder %s42, 1
      %p566 = por %p564, %p565
      %p568 = scmp.ne.s32.totalorder %s551, %s567
      %p569 = scmp.eq.s32.totalorder %s42, 0
      %p570 = por %p568, %p569
      %s571 = ssub.s32 %s44, %s51
      %p572 = scmp.eq.s32.totalorder %s571, 0
      %s574 = sadd.s32 %s573, 1
      %s575 = scalar_select %p572, %s573, %s574
      %p578 = pneg %p572
      %p579 = scmp.eq.s32.totalorder %s36, 1
      %p580 = por %p578, %p579
      %p581 = scmp.ne.s32.totalorder %s573, %s576
      %p582 = scmp.eq.s32.totalorder %s36, 0
      %p583 = por %p581, %p582
      %p584 = scmp.ne.s32.totalorder %s573, %s576
      %p585 = scmp.eq.s32.totalorder %s41, 1
      %p586 = por %p584, %p585
      %p587 = scmp.ne.s32.totalorder %s576, %s577
      %p588 = scmp.eq.s32.totalorder %s41, 0
      %p589 = por %p587, %p588
      %p590 = scmp.ne.s32.totalorder %s576, %s577
      %p591 = scmp.eq.s32.totalorder %s42, 1
      %p592 = por %p590, %p591
      %p594 = scmp.ne.s32.totalorder %s577, %s593
      %p595 = scmp.eq.s32.totalorder %s42, 0
      %p596 = por %p594, %p595
      %s597 = ssub.s32 %s44, %s51
      %p598 = scmp.eq.s32.totalorder %s597, 0
      %s600 = sadd.s32 %s599, 1
      %s601 = scalar_select %p598, %s599, %s600
      %p604 = pneg %p598
      %p605 = scmp.eq.s32.totalorder %s36, 1
      %p606 = por %p604, %p605
      %p607 = scmp.ne.s32.totalorder %s599, %s602
      %p608 = scmp.eq.s32.totalorder %s36, 0
      %p609 = por %p607, %p608
      %p610 = scmp.ne.s32.totalorder %s599, %s602
      %p611 = scmp.eq.s32.totalorder %s41, 1
      %p612 = por %p610, %p611
      %p613 = scmp.ne.s32.totalorder %s602, %s603
      %p614 = scmp.eq.s32.totalorder %s41, 0
      %p615 = por %p613, %p614
      %p616 = scmp.ne.s32.totalorder %s602, %s603
      %p617 = scmp.eq.s32.totalorder %s42, 1
      %p618 = por %p616, %p617
      %p620 = scmp.ne.s32.totalorder %s603, %s619
      %p621 = scmp.eq.s32.totalorder %s42, 0
      %p622 = por %p620, %p621
      %s623 = ssub.s32 %s44, %s51
      %p624 = scmp.eq.s32.totalorder %s623, 0
      %s626 = sadd.s32 %s625, 1
      %s627 = scalar_select %p624, %s625, %s626
      %p630 = pneg %p624
      %p631 = scmp.eq.s32.totalorder %s36, 1
      %p632 = por %p630, %p631
      %p633 = scmp.ne.s32.totalorder %s625, %s628
      %p634 = scmp.eq.s32.totalorder %s36, 0
      %p635 = por %p633, %p634
      %p636 = scmp.ne.s32.totalorder %s625, %s628
      %p637 = scmp.eq.s32.totalorder %s41, 1
      %p638 = por %p636, %p637
      %p639 = scmp.ne.s32.totalorder %s628, %s629
      %p640 = scmp.eq.s32.totalorder %s41, 0
      %p641 = por %p639, %p640
      %p642 = scmp.ne.s32.totalorder %s628, %s629
      %p643 = scmp.eq.s32.totalorder %s42, 1
      %p644 = por %p642, %p643
      %p646 = scmp.ne.s32.totalorder %s629, %s645
      %p647 = scmp.eq.s32.totalorder %s42, 0
      %p648 = por %p646, %p647
      %s649 = ssub.s32 %s44, %s51
      %p650 = scmp.eq.s32.totalorder %s649, 0
      %s652 = sadd.s32 %s651, 1
      %s653 = scalar_select %p650, %s651, %s652
      %p656 = pneg %p650
      %p657 = scmp.eq.s32.totalorder %s36, 1
      %p658 = por %p656, %p657
      %p659 = scmp.ne.s32.totalorder %s651, %s654
      %p660 = scmp.eq.s32.totalorder %s36, 0
      %p661 = por %p659, %p660
      %p662 = scmp.ne.s32.totalorder %s651, %s654
      %p663 = scmp.eq.s32.totalorder %s41, 1
      %p664 = por %p662, %p663
      %p665 = scmp.ne.s32.totalorder %s654, %s655
      %p666 = scmp.eq.s32.totalorder %s41, 0
      %p667 = por %p665, %p666
      %p668 = scmp.ne.s32.totalorder %s654, %s655
      %p669 = scmp.eq.s32.totalorder %s42, 1
      %p670 = por %p668, %p669
      %p672 = scmp.ne.s32.totalorder %s655, %s671
      %p673 = scmp.eq.s32.totalorder %s42, 0
      %p674 = por %p672, %p673
      %s676 = sadd.s32 %s675, 1
      %p679 = scmp.eq.s32.totalorder %s36, 1
      %p680 = scmp.ne.s32.totalorder %s675, %s677
      %p681 = scmp.eq.s32.totalorder %s36, 0
      %p682 = por %p680, %p681
      %p683 = scmp.ne.s32.totalorder %s675, %s677
      %p684 = scmp.eq.s32.totalorder %s41, 1
      %p685 = por %p683, %p684
      %p686 = scmp.ne.s32.totalorder %s677, %s678
      %p687 = scmp.eq.s32.totalorder %s41, 0
      %p688 = por %p686, %p687
      %p689 = scmp.ne.s32.totalorder %s677, %s678
      %p690 = scmp.eq.s32.totalorder %s42, 1
      %p691 = por %p689, %p690
      %p693 = scmp.ne.s32.totalorder %s678, %s692
      %p694 = scmp.eq.s32.totalorder %s42, 0
      %p695 = por %p693, %p694
      %s697 = sadd.s32 %s696, 1
      %p700 = scmp.eq.s32.totalorder %s36, 1
      %p701 = scmp.ne.s32.totalorder %s696, %s698
      %p702 = scmp.eq.s32.totalorder %s36, 0
      %p703 = por %p701, %p702
      %p704 = scmp.ne.s32.totalorder %s696, %s698
      %p705 = scmp.eq.s32.totalorder %s41, 1
      %p706 = por %p704, %p705
      %p707 = scmp.ne.s32.totalorder %s698, %s699
      %p708 = scmp.eq.s32.totalorder %s41, 0
      %p709 = por %p707, %p708
      %p710 = scmp.ne.s32.totalorder %s698, %s699
      %p711 = scmp.eq.s32.totalorder %s42, 1
      %p712 = por %p710, %p711
      %p714 = scmp.ne.s32.totalorder %s699, %s713
      %p715 = scmp.eq.s32.totalorder %s42, 0
      %p716 = por %p714, %p715
      %s717 = ssub.s32 %s43, %s55
      %p718 = scmp.eq.s32.totalorder %s717, 0
      %s720 = sadd.s32 %s719, 1
      %s721 = scalar_select %p718, %s719, %s720
      %p724 = pneg %p718
      %p725 = scmp.eq.s32.totalorder %s36, 1
      %p726 = por %p724, %p725
      %p727 = scmp.ne.s32.totalorder %s719, %s722
      %p728 = scmp.eq.s32.totalorder %s36, 0
      %p729 = por %p727, %p728
      %p730 = scmp.ne.s32.totalorder %s719, %s722
      %p731 = scmp.eq.s32.totalorder %s41, 1
      %p732 = por %p730, %p731
      %p733 = scmp.ne.s32.totalorder %s722, %s723
      %p734 = scmp.eq.s32.totalorder %s41, 0
      %p735 = por %p733, %p734
      %p736 = scmp.ne.s32.totalorder %s722, %s723
      %p737 = scmp.eq.s32.totalorder %s42, 1
      %p738 = por %p736, %p737
      %p740 = scmp.ne.s32.totalorder %s723, %s739
      %p741 = scmp.eq.s32.totalorder %s42, 0
      %p742 = por %p740, %p741
      %p743 = scmp.le.s32.totalorder 1, %s36
      %p744 = scmp.lt.s32.totalorder %s36, 3
      %p745 = pnand %p743, %p744
      %p746 = pneg %p745
      // Predicated region
      $region9: #{tpu_custom_call.1} parent=5 // pred_check
        _
      $region10: #{tpu_custom_call.1} parent=5 // pred_check_branch
        %748 = sbr.rel (%p745) target = $region12
      $region11: #{tpu_custom_call.1} parent=5 // pred_region
        %s749 = ssub.s32 %s36, 1
        // Predicated region
        $region13: #{tpu_custom_call.1} parent=11 // pred_check
          %p750 = pneg %p74
        $region14: #{tpu_custom_call.1} parent=11 // pred_check_branch
          %752 = sbr.rel (%p750) target = $region16
        $region15: #{tpu_custom_call.1} parent=11 // pred_region
          %s753 = smul.u32 2, %s45
          %s755 = ssub.s32 256, 256
          %756 = vsyncadd [#allocation6], %s755
          %s757 = smul.addr %s753, 2
          %s758 = smul.addr %s757, 64
          %s759 = scalar_lea.hbm %s0, %s758
          %s760 = sshll.u32 [#allocation5], 4
          %s761 = int_to_ptr.vmem [resolvable:$true] %s760
          %766 = dma.hbm_to_vmem [thread:$0]  %s759, 256, %s761, [#allocation6], 64, 64, 4
        $region16: #{tpu_custom_call.1} parent=11 // pred_fallthru
          _
        // Predicated region
        $region17: #{tpu_custom_call.1} parent=11 // pred_check
          %p767 = pneg %p100
        $region18: #{tpu_custom_call.1} parent=11 // pred_check_branch
          %769 = sbr.rel (%p767) target = $region20
        $region19: #{tpu_custom_call.1} parent=11 // pred_region
          %s770 = smul.u32 2, %s45
          %s772 = ssub.s32 256, 256
          %773 = vsyncadd [#allocation9], %s772
          %s774 = smul.addr %s770, 2
          %s775 = smul.addr %s774, 64
          %s776 = scalar_lea.hbm %s1, %s775
          %s777 = sshll.u32 [#allocation8], 4
          %s778 = int_to_ptr.vmem [resolvable:$true] %s777
          %783 = dma.hbm_to_vmem [thread:$0]  %s776, 256, %s778, [#allocation9], 64, 64, 4
        $region20: #{tpu_custom_call.1} parent=11 // pred_fallthru
          _
        // Predicated region
        $region21: #{tpu_custom_call.1} parent=11 // pred_check
          %p784 = pneg %p121
        $region22: #{tpu_custom_call.1} parent=11 // pred_check_branch
          %786 = sbr.rel (%p784) target = $region24
        $region23: #{tpu_custom_call.1} parent=11 // pred_region
          %s788 = ssub.s32 64, 64
          %789 = vsyncadd [#allocation9], %s788
          %s790 = sshll.u32 [#allocation10], 4
          %s791 = int_to_ptr.vmem [resolvable:$true] %s790
          %796 = dma.hbm_to_vmem [thread:$0]  %s2, 64, %s791, [#allocation9], 32, 32, 2
        $region24: #{tpu_custom_call.1} parent=11 // pred_fallthru
          _
        // Predicated region
        $region25: #{tpu_custom_call.1} parent=11 // pred_check
          %p797 = pneg %p147
        $region26: #{tpu_custom_call.1} parent=11 // pred_check_branch
          %799 = sbr.rel (%p797) target = $region28
        $region27: #{tpu_custom_call.1} parent=11 // pred_region
          %s800 = smul.u32 2, %s45
          %s802 = ssub.s32 128, 128
          %803 = vsyncadd [#allocation12], %s802
          %s804 = smul.addr %s800, 2
          %s805 = smul.addr %s804, 32
          %s806 = scalar_lea.hbm %s3, %s805
          %s807 = sshll.u32 [#allocation11], 4
          %s808 = int_to_ptr.vmem [resolvable:$true] %s807
          %813 = dma.hbm_to_vmem [thread:$0]  %s806, 128, %s808, [#allocation12], 32, 32, 2
        $region28: #{tpu_custom_call.1} parent=11 // pred_fallthru
          _
        // Predicated region
        $region29: #{tpu_custom_call.1} parent=11 // pred_check
          %p814 = pneg %p688
        $region30: #{tpu_custom_call.1} parent=11 // pred_check_branch
          %816 = sbr.rel (%p814) target = $region32
        $region31: #{tpu_custom_call.1} parent=11 // pred_region
          %s818 = ssub.s32 16, 16
          %819 = vsyncadd [#allocation9], %s818
          %s821 = sshll.u32 [#allocation33], 4
          %s822 = int_to_ptr.vmem [resolvable:$true] %s821
          %824 = dma.hbm_to_vmem [thread:$0]  %s24, 16, %s822, [#allocation9]
        $region32: #{tpu_custom_call.1} parent=11 // pred_fallthru
          _
        // Predicated region
        $region33: #{tpu_custom_call.1} parent=11 // pred_check
          %p825 = pneg %p709
        $region34: #{tpu_custom_call.1} parent=11 // pred_check_branch
          %827 = sbr.rel (%p825) target = $region36
        $region35: #{tpu_custom_call.1} parent=11 // pred_region
          %s829 = ssub.s32 16, 16
          %830 = vsyncadd [#allocation12], %s829
          %s832 = sshll.u32 [#allocation34], 4
          %s833 = int_to_ptr.vmem [resolvable:$true] %s832
          %835 = dma.hbm_to_vmem [thread:$0]  %s25, 16, %s833, [#allocation12]
        $region36: #{tpu_custom_call.1} parent=11 // pred_fallthru
          _
      $region12: #{tpu_custom_call.1} parent=5 // pred_fallthru
        _
      %p836 = scmp.lt.s32.totalorder %s36, 2
      // Predicated region
      $region37: #{tpu_custom_call.1} parent=5 // pred_check
        %p837 = pneg %p836
      $region38: #{tpu_custom_call.1} parent=5 // pred_check_branch
        %839 = sbr.rel (%p837) target = $region40
      $region39: #{tpu_custom_call.1} parent=5 // pred_region
        // Predicated region
        $region41: #{tpu_custom_call.1} parent=39 // pred_check
          %p840 = pneg %p167
        $region42: #{tpu_custom_call.1} parent=39 // pred_check_branch
          %842 = sbr.rel (%p840) target = $region44
        $region43: #{tpu_custom_call.1} parent=39 // pred_region
          %s843 = sand.u32 %s36, 1
          %s844 = scalar_lea.sflag [#allocation6], %s843
          %s845 = sand.u32 %s157, 1
          %s846 = scalar_lea.vmem [#allocation13], %s845
          %s848 = ssub.s32 16, 16
          %849 = vsyncadd %s844, %s848
          %s850 = smul.addr %s44, 16
          %s851 = scalar_lea.hbm %s4, %s850
          %s853 = sshll.u32 %s846, 4
          %s854 = int_to_ptr.vmem [resolvable:$true] %s853
          %856 = dma.hbm_to_vmem [thread:$0]  %s851, 16, %s854, %s844
        $region44: #{tpu_custom_call.1} parent=39 // pred_fallthru
          _
        // Predicated region
        $region45: #{tpu_custom_call.1} parent=39 // pred_check
          %p857 = pneg %p193
        $region46: #{tpu_custom_call.1} parent=39 // pred_check_branch
          %859 = sbr.rel (%p857) target = $region48
        $region47: #{tpu_custom_call.1} parent=39 // pred_region
          %s860 = sand.u32 %s36, 1
          %s861 = scalar_lea.sflag [#allocation6], %s860
          %s862 = sand.u32 %s183, 1
          %s863 = scalar_lea.vmem [#allocation14], %s862
          %s865 = ssub.s32 16, 16
          %866 = vsyncadd %s861, %s865
          %s867 = smul.addr %s44, 16
          %s868 = scalar_lea.hbm %s5, %s867
          %s870 = sshll.u32 %s863, 4
          %s871 = int_to_ptr.vmem [resolvable:$true] %s870
          %873 = dma.hbm_to_vmem [thread:$0]  %s868, 16, %s871, %s861
        $region48: #{tpu_custom_call.1} parent=39 // pred_fallthru
          _
        // Predicated region
        $region49: #{tpu_custom_call.1} parent=39 // pred_check
          %p874 = pneg %p219
        $region50: #{tpu_custom_call.1} parent=39 // pred_check_branch
          %876 = sbr.rel (%p874) target = $region52
        $region51: #{tpu_custom_call.1} parent=39 // pred_region
          %s877 = sand.u32 %s36, 1
          %s878 = scalar_lea.sflag [#allocation6], %s877
          %s879 = sand.u32 %s209, 1
          %s880 = smul.addr %s879, 192
          %s881 = scalar_lea.vmem [#allocation15], %s880
          %s883 = ssub.s32 3072, 3072
          %884 = vsyncadd %s878, %s883
          %s885 = smul.addr %s44, 48
          %s886 = smul.addr %s885, 64
          %s887 = scalar_lea.hbm %s6, %s886
          %s888 = sshll.u32 %s881, 4
          %s889 = int_to_ptr.vmem [resolvable:$true] %s888
          %894 = dma.hbm_to_vmem [thread:$0]  %s887, 3072, %s889, %s878, 192, 192, 12
        $region52: #{tpu_custom_call.1} parent=39 // pred_fallthru
          _
        // Predicated region
        $region53: #{tpu_custom_call.1} parent=39 // pred_check
          %p895 = pneg %p245
        $region54: #{tpu_custom_call.1} parent=39 // pred_check_branch
          %897 = sbr.rel (%p895) target = $region56
        $region55: #{tpu_custom_call.1} parent=39 // pred_region
          %s898 = sand.u32 %s36, 1
          %s899 = scalar_lea.sflag [#allocation6], %s898
          %s900 = sand.u32 %s235, 1
          %s901 = smul.addr %s900, 3
          %s902 = scalar_lea.vmem [#allocation16], %s901
          %s904 = ssub.s32 48, 48
          %905 = vsyncadd %s899, %s904
          %s906 = smul.addr %s44, 3
          %s907 = smul.addr %s906, 16
          %s908 = scalar_lea.hbm %s7, %s907
          %s910 = sshll.u32 %s902, 4
          %s911 = int_to_ptr.vmem [resolvable:$true] %s910
          %913 = dma.hbm_to_vmem [thread:$0]  %s908, 48, %s911, %s899
        $region56: #{tpu_custom_call.1} parent=39 // pred_fallthru
          _
        // Predicated region
        $region57: #{tpu_custom_call.1} parent=39 // pred_check
          %p914 = pneg %p271
        $region58: #{tpu_custom_call.1} parent=39 // pred_check_branch
          %916 = sbr.rel (%p914) target = $region60
        $region59: #{tpu_custom_call.1} parent=39 // pred_region
          %s917 = sand.u32 %s36, 1
          %s918 = scalar_lea.sflag [#allocation6], %s917
          %s919 = sand.u32 %s261, 1
          %s920 = smul.addr %s919, 64
          %s921 = scalar_lea.vmem [#allocation17], %s920
          %s923 = ssub.s32 1024, 1024
          %924 = vsyncadd %s918, %s923
          %s925 = smul.addr %s44, 16
          %s926 = smul.addr %s925, 64
          %s927 = scalar_lea.hbm %s8, %s926
          %s928 = sshll.u32 %s921, 4
          %s929 = int_to_ptr.vmem [resolvable:$true] %s928
          %934 = dma.hbm_to_vmem [thread:$0]  %s927, 1024, %s929, %s918, 64, 64, 4
        $region60: #{tpu_custom_call.1} parent=39 // pred_fallthru
          _
        // Predicated region
        $region61: #{tpu_custom_call.1} parent=39 // pred_check
          %p935 = pneg %p297
        $region62: #{tpu_custom_call.1} parent=39 // pred_check_branch
          %937 = sbr.rel (%p935) target = $region64
        $region63: #{tpu_custom_call.1} parent=39 // pred_region
          %s938 = sand.u32 %s36, 1
          %s939 = scalar_lea.sflag [#allocation6], %s938
          %s940 = sand.u32 %s287, 1
          %s941 = scalar_lea.vmem [#allocation18], %s940
          %s943 = ssub.s32 16, 16
          %944 = vsyncadd %s939, %s943
          %s945 = smul.addr %s44, 16
          %s946 = scalar_lea.hbm %s9, %s945
          %s948 = sshll.u32 %s941, 4
          %s949 = int_to_ptr.vmem [resolvable:$true] %s948
          %951 = dma.hbm_to_vmem [thread:$0]  %s946, 16, %s949, %s939
        $region64: #{tpu_custom_call.1} parent=39 // pred_fallthru
          _
        // Predicated region
        $region65: #{tpu_custom_call.1} parent=39 // pred_check
          %p952 = pneg %p323
        $region66: #{tpu_custom_call.1} parent=39 // pred_check_branch
          %954 = sbr.rel (%p952) target = $region68
        $region67: #{tpu_custom_call.1} parent=39 // pred_region
          %s955 = sand.u32 %s36, 1
          %s956 = scalar_lea.sflag [#allocation6], %s955
          %s957 = sand.u32 %s313, 1
          %s958 = scalar_lea.vmem [#allocation19], %s957
          %s960 = ssub.s32 16, 16
          %961 = vsyncadd %s956, %s960
          %s962 = smul.addr %s44, 16
          %s963 = scalar_lea.hbm %s10, %s962
          %s965 = sshll.u32 %s958, 4
          %s966 = int_to_ptr.vmem [resolvable:$true] %s965
          %968 = dma.hbm_to_vmem [thread:$0]  %s963, 16, %s966, %s956
        $region68: #{tpu_custom_call.1} parent=39 // pred_fallthru
          _
        // Predicated region
        $region69: #{tpu_custom_call.1} parent=39 // pred_check
          %p969 = pneg %p349
        $region70: #{tpu_custom_call.1} parent=39 // pred_check_branch
          %971 = sbr.rel (%p969) target = $region72
        $region71: #{tpu_custom_call.1} parent=39 // pred_region
          %s972 = sand.u32 %s36, 1
          %s973 = scalar_lea.sflag [#allocation6], %s972
          %s974 = sand.u32 %s339, 1
          %s975 = scalar_lea.vmem [#allocation20], %s974
          %s977 = ssub.s32 16, 16
          %978 = vsyncadd %s973, %s977
          %s979 = smul.addr %s44, 16
          %s980 = scalar_lea.hbm %s11, %s979
          %s982 = sshll.u32 %s975, 4
          %s983 = int_to_ptr.vmem [resolvable:$true] %s982
          %985 = dma.hbm_to_vmem [thread:$0]  %s980, 16, %s983, %s973
        $region72: #{tpu_custom_call.1} parent=39 // pred_fallthru
          _
        // Predicated region
        $region73: #{tpu_custom_call.1} parent=39 // pred_check
          %p986 = pneg %p375
        $region74: #{tpu_custom_call.1} parent=39 // pred_check_branch
          %988 = sbr.rel (%p986) target = $region76
        $region75: #{tpu_custom_call.1} parent=39 // pred_region
          %s989 = sand.u32 %s36, 1
          %s990 = scalar_lea.sflag [#allocation6], %s989
          %s991 = sand.u32 %s365, 1
          %s992 = smul.addr %s991, 64
          %s993 = scalar_lea.vmem [#allocation21], %s992
          %s995 = ssub.s32 1024, 1024
          %996 = vsyncadd %s990, %s995
          %s997 = smul.addr %s44, 16
          %s998 = smul.addr %s997, 64
          %s999 = scalar_lea.hbm %s12, %s998
          %s1000 = sshll.u32 %s993, 4
          %s1001 = int_to_ptr.vmem [resolvable:$true] %s1000
          %1006 = dma.hbm_to_vmem [thread:$0]  %s999, 1024, %s1001, %s990, 64, 64, 4
        $region76: #{tpu_custom_call.1} parent=39 // pred_fallthru
          _
        // Predicated region
        $region77: #{tpu_custom_call.1} parent=39 // pred_check
          %p1007 = pneg %p401
        $region78: #{tpu_custom_call.1} parent=39 // pred_check_branch
          %1009 = sbr.rel (%p1007) target = $region80
        $region79: #{tpu_custom_call.1} parent=39 // pred_region
          %s1010 = sand.u32 %s36, 1
          %s1011 = scalar_lea.sflag [#allocation6], %s1010
          %s1012 = sand.u32 %s391, 1
          %s1013 = scalar_lea.vmem [#allocation22], %s1012
          %s1015 = ssub.s32 16, 16
          %1016 = vsyncadd %s1011, %s1015
          %s1017 = smul.addr %s44, 16
          %s1018 = scalar_lea.hbm %s13, %s1017
          %s1020 = sshll.u32 %s1013, 4
          %s1021 = int_to_ptr.vmem [resolvable:$true] %s1020
          %1023 = dma.hbm_to_vmem [thread:$0]  %s1018, 16, %s1021, %s1011
        $region80: #{tpu_custom_call.1} parent=39 // pred_fallthru
          _
        // Predicated region
        $region81: #{tpu_custom_call.1} parent=39 // pred_check
          %p1024 = pneg %p427
        $region82: #{tpu_custom_call.1} parent=39 // pred_check_branch
          %1026 = sbr.rel (%p1024) target = $region84
        $region83: #{tpu_custom_call.1} parent=39 // pred_region
          %s1027 = sand.u32 %s36, 1
          %s1028 = scalar_lea.sflag [#allocation6], %s1027
          %s1029 = sand.u32 %s417, 1
          %s1030 = smul.addr %s1029, 128
          %s1031 = scalar_lea.vmem [#allocation23], %s1030
          %s1033 = ssub.s32 2048, 2048
          %1034 = vsyncadd %s1028, %s1033
          %s1035 = smul.addr %s44, 32
          %s1036 = smul.addr %s1035, 64
          %s1037 = scalar_lea.hbm %s14, %s1036
          %s1038 = sshll.u32 %s1031, 4
          %s1039 = int_to_ptr.vmem [resolvable:$true] %s1038
          %1044 = dma.hbm_to_vmem [thread:$0]  %s1037, 2048, %s1039, %s1028, 128, 128, 8
        $region84: #{tpu_custom_call.1} parent=39 // pred_fallthru
          _
        // Predicated region
        $region85: #{tpu_custom_call.1} parent=39 // pred_check
          %p1045 = pneg %p453
        $region86: #{tpu_custom_call.1} parent=39 // pred_check_branch
          %1047 = sbr.rel (%p1045) target = $region88
        $region87: #{tpu_custom_call.1} parent=39 // pred_region
          %s1048 = sand.u32 %s36, 1
          %s1049 = scalar_lea.sflag [#allocation6], %s1048
          %s1050 = sand.u32 %s443, 1
          %s1051 = smul.addr %s1050, 2
          %s1052 = scalar_lea.vmem [#allocation24], %s1051
          %s1054 = ssub.s32 32, 32
          %1055 = vsyncadd %s1049, %s1054
          %s1056 = smul.addr %s44, 2
          %s1057 = smul.addr %s1056, 16
          %s1058 = scalar_lea.hbm %s15, %s1057
          %s1060 = sshll.u32 %s1052, 4
          %s1061 = int_to_ptr.vmem [resolvable:$true] %s1060
          %1063 = dma.hbm_to_vmem [thread:$0]  %s1058, 32, %s1061, %s1049
        $region88: #{tpu_custom_call.1} parent=39 // pred_fallthru
          _
        // Predicated region
        $region89: #{tpu_custom_call.1} parent=39 // pred_check
          %p1064 = pneg %p479
        $region90: #{tpu_custom_call.1} parent=39 // pred_check_branch
          %1066 = sbr.rel (%p1064) target = $region92
        $region91: #{tpu_custom_call.1} parent=39 // pred_region
          %s1067 = sand.u32 %s36, 1
          %s1068 = scalar_lea.sflag [#allocation6], %s1067
          %s1069 = sand.u32 %s469, 1
          %s1070 = smul.addr %s1069, 64
          %s1071 = scalar_lea.vmem [#allocation25], %s1070
          %s1073 = ssub.s32 1024, 1024
          %1074 = vsyncadd %s1068, %s1073
          %s1075 = smul.addr %s44, 16
          %s1076 = smul.addr %s1075, 64
          %s1077 = scalar_lea.hbm %s16, %s1076
          %s1078 = sshll.u32 %s1071, 4
          %s1079 = int_to_ptr.vmem [resolvable:$true] %s1078
          %1084 = dma.hbm_to_vmem [thread:$0]  %s1077, 1024, %s1079, %s1068, 64, 64, 4
        $region92: #{tpu_custom_call.1} parent=39 // pred_fallthru
          _
        // Predicated region
        $region93: #{tpu_custom_call.1} parent=39 // pred_check
          %p1085 = pneg %p505
        $region94: #{tpu_custom_call.1} parent=39 // pred_check_branch
          %1087 = sbr.rel (%p1085) target = $region96
        $region95: #{tpu_custom_call.1} parent=39 // pred_region
          %s1088 = sand.u32 %s36, 1
          %s1089 = scalar_lea.sflag [#allocation6], %s1088
          %s1090 = sand.u32 %s495, 1
          %s1091 = scalar_lea.vmem [#allocation26], %s1090
          %s1093 = ssub.s32 16, 16
          %1094 = vsyncadd %s1089, %s1093
          %s1095 = smul.addr %s44, 16
          %s1096 = scalar_lea.hbm %s17, %s1095
          %s1098 = sshll.u32 %s1091, 4
          %s1099 = int_to_ptr.vmem [resolvable:$true] %s1098
          %1101 = dma.hbm_to_vmem [thread:$0]  %s1096, 16, %s1099, %s1089
        $region96: #{tpu_custom_call.1} parent=39 // pred_fallthru
          _
        // Predicated region
        $region97: #{tpu_custom_call.1} parent=39 // pred_check
          %p1102 = pneg %p531
        $region98: #{tpu_custom_call.1} parent=39 // pred_check_branch
          %1104 = sbr.rel (%p1102) target = $region100
        $region99: #{tpu_custom_call.1} parent=39 // pred_region
          %s1105 = sand.u32 %s36, 1
          %s1106 = scalar_lea.sflag [#allocation6], %s1105
          %s1107 = sand.u32 %s521, 1
          %s1108 = scalar_lea.vmem [#allocation27], %s1107
          %s1110 = ssub.s32 16, 16
          %1111 = vsyncadd %s1106, %s1110
          %s1112 = smul.addr %s44, 16
          %s1113 = scalar_lea.hbm %s18, %s1112
          %s1115 = sshll.u32 %s1108, 4
          %s1116 = int_to_ptr.vmem [resolvable:$true] %s1115
          %1118 = dma.hbm_to_vmem [thread:$0]  %s1113, 16, %s1116, %s1106
        $region100: #{tpu_custom_call.1} parent=39 // pred_fallthru
          _
        // Predicated region
        $region101: #{tpu_custom_call.1} parent=39 // pred_check
          %p1119 = pneg %p557
        $region102: #{tpu_custom_call.1} parent=39 // pred_check_branch
          %1121 = sbr.rel (%p1119) target = $region104
        $region103: #{tpu_custom_call.1} parent=39 // pred_region
          %s1122 = sand.u32 %s36, 1
          %s1123 = scalar_lea.sflag [#allocation6], %s1122
          %s1124 = sand.u32 %s547, 1
          %s1125 = scalar_lea.vmem [#allocation28], %s1124
          %s1127 = ssub.s32 16, 16
          %1128 = vsyncadd %s1123, %s1127
          %s1129 = smul.addr %s44, 16
          %s1130 = scalar_lea.hbm %s19, %s1129
          %s1132 = sshll.u32 %s1125, 4
          %s1133 = int_to_ptr.vmem [resolvable:$true] %s1132
          %1135 = dma.hbm_to_vmem [thread:$0]  %s1130, 16, %s1133, %s1123
        $region104: #{tpu_custom_call.1} parent=39 // pred_fallthru
          _
        // Predicated region
        $region105: #{tpu_custom_call.1} parent=39 // pred_check
          %p1136 = pneg %p583
        $region106: #{tpu_custom_call.1} parent=39 // pred_check_branch
          %1138 = sbr.rel (%p1136) target = $region108
        $region107: #{tpu_custom_call.1} parent=39 // pred_region
          %s1139 = sand.u32 %s36, 1
          %s1140 = scalar_lea.sflag [#allocation6], %s1139
          %s1141 = sand.u32 %s573, 1
          %s1142 = smul.addr %s1141, 256
          %s1143 = scalar_lea.vmem [#allocation29], %s1142
          %s1145 = ssub.s32 4096, 4096
          %1146 = vsyncadd %s1140, %s1145
          %s1147 = smul.addr %s44, 64
          %s1148 = smul.addr %s1147, 64
          %s1149 = scalar_lea.hbm %s20, %s1148
          %s1150 = sshll.u32 %s1143, 4
          %s1151 = int_to_ptr.vmem [resolvable:$true] %s1150
          %1156 = dma.hbm_to_vmem [thread:$0]  %s1149, 4096, %s1151, %s1140, 256, 256, 16
        $region108: #{tpu_custom_call.1} parent=39 // pred_fallthru
          _
        // Predicated region
        $region109: #{tpu_custom_call.1} parent=39 // pred_check
          %p1157 = pneg %p609
        $region110: #{tpu_custom_call.1} parent=39 // pred_check_branch
          %1159 = sbr.rel (%p1157) target = $region112
        $region111: #{tpu_custom_call.1} parent=39 // pred_region
          %s1160 = sand.u32 %s36, 1
          %s1161 = scalar_lea.sflag [#allocation6], %s1160
          %s1162 = sand.u32 %s599, 1
          %s1163 = smul.addr %s1162, 4
          %s1164 = scalar_lea.vmem [#allocation30], %s1163
          %s1166 = ssub.s32 64, 64
          %1167 = vsyncadd %s1161, %s1166
          %s1168 = smul.addr %s44, 4
          %s1169 = smul.addr %s1168, 16
          %s1170 = scalar_lea.hbm %s21, %s1169
          %s1172 = sshll.u32 %s1164, 4
          %s1173 = int_to_ptr.vmem [resolvable:$true] %s1172
          %1175 = dma.hbm_to_vmem [thread:$0]  %s1170, 64, %s1173, %s1161
        $region112: #{tpu_custom_call.1} parent=39 // pred_fallthru
          _
        // Predicated region
        $region113: #{tpu_custom_call.1} parent=39 // pred_check
          %p1176 = pneg %p635
        $region114: #{tpu_custom_call.1} parent=39 // pred_check_branch
          %1178 = sbr.rel (%p1176) target = $region116
        $region115: #{tpu_custom_call.1} parent=39 // pred_region
          %s1179 = sand.u32 %s36, 1
          %s1180 = scalar_lea.sflag [#allocation6], %s1179
          %s1181 = sand.u32 %s625, 1
          %s1182 = smul.addr %s1181, 256
          %s1183 = scalar_lea.vmem [#allocation31], %s1182
          %s1185 = ssub.s32 4096, 4096
          %1186 = vsyncadd %s1180, %s1185
          %s1187 = smul.addr %s44, 64
          %s1188 = smul.addr %s1187, 64
          %s1189 = scalar_lea.hbm %s22, %s1188
          %s1190 = sshll.u32 %s1183, 4
          %s1191 = int_to_ptr.vmem [resolvable:$true] %s1190
          %1196 = dma.hbm_to_vmem [thread:$0]  %s1189, 4096, %s1191, %s1180, 64, 64, 4
        $region116: #{tpu_custom_call.1} parent=39 // pred_fallthru
          _
        // Predicated region
        $region117: #{tpu_custom_call.1} parent=39 // pred_check
          %p1197 = pneg %p661
        $region118: #{tpu_custom_call.1} parent=39 // pred_check_branch
          %1199 = sbr.rel (%p1197) target = $region120
        $region119: #{tpu_custom_call.1} parent=39 // pred_region
          %s1200 = sand.u32 %s36, 1
          %s1201 = scalar_lea.sflag [#allocation6], %s1200
          %s1202 = sand.u32 %s651, 1
          %s1203 = scalar_lea.vmem [#allocation32], %s1202
          %s1205 = ssub.s32 16, 16
          %1206 = vsyncadd %s1201, %s1205
          %s1207 = smul.addr %s44, 16
          %s1208 = scalar_lea.hbm %s23, %s1207
          %s1210 = sshll.u32 %s1203, 4
          %s1211 = int_to_ptr.vmem [resolvable:$true] %s1210
          %1213 = dma.hbm_to_vmem [thread:$0]  %s1208, 16, %s1211, %s1201
        $region120: #{tpu_custom_call.1} parent=39 // pred_fallthru
          _
      $region40: #{tpu_custom_call.1} parent=5 // pred_fallthru
        _
      %p1214 = scmp.le.s32.totalorder 1, %s36
      %p1215 = scmp.lt.s32.totalorder %s36, 3
      %p1216 = pnand %p1214, %p1215
      %p1217 = pneg %p1216
      // Predicated region
      $region121: #{tpu_custom_call.1} parent=5 // pred_check
        _
      $region122: #{tpu_custom_call.1} parent=5 // pred_check_branch
        %1219 = sbr.rel (%p1216) target = $region124
      $region123: #{tpu_custom_call.1} parent=5 // pred_region
        %s1220 = ssub.s32 %s36, 1
        // Predicated region
        $region125: #{tpu_custom_call.1} parent=123 // pred_check
          %p1221 = pneg %p74
        $region126: #{tpu_custom_call.1} parent=123 // pred_check_branch
          %1223 = sbr.rel (%p1221) target = $region128
        $region127: #{tpu_custom_call.1} parent=123 // pred_region
          %1224 = dma.done [#allocation6], 256
        $region128: #{tpu_custom_call.1} parent=123 // pred_fallthru
          _
        // Predicated region
        $region129: #{tpu_custom_call.1} parent=123 // pred_check
          %p1225 = pneg %p100
        $region130: #{tpu_custom_call.1} parent=123 // pred_check_branch
          %1227 = sbr.rel (%p1225) target = $region132
        $region131: #{tpu_custom_call.1} parent=123 // pred_region
          %1228 = dma.done [#allocation9], 256
        $region132: #{tpu_custom_call.1} parent=123 // pred_fallthru
          _
        // Predicated region
        $region133: #{tpu_custom_call.1} parent=123 // pred_check
          %p1229 = pneg %p121
        $region134: #{tpu_custom_call.1} parent=123 // pred_check_branch
          %1231 = sbr.rel (%p1229) target = $region136
        $region135: #{tpu_custom_call.1} parent=123 // pred_region
          %1232 = dma.done [#allocation9], 64
        $region136: #{tpu_custom_call.1} parent=123 // pred_fallthru
          _
        // Predicated region
        $region137: #{tpu_custom_call.1} parent=123 // pred_check
          %p1233 = pneg %p147
        $region138: #{tpu_custom_call.1} parent=123 // pred_check_branch
          %1235 = sbr.rel (%p1233) target = $region140
        $region139: #{tpu_custom_call.1} parent=123 // pred_region
          %1236 = dma.done [#allocation12], 128
        $region140: #{tpu_custom_call.1} parent=123 // pred_fallthru
          _
        %s1237 = sand.u32 %s41, 1
        %s1238 = scalar_lea.sflag [#allocation6], %s1237
        %s1239 = sand.u32 %s160, 1
        %s1240 = scalar_lea.vmem [#allocation13], %s1239
        // Predicated region
        $region141: #{tpu_custom_call.1} parent=123 // pred_check
          %p1241 = pneg %p173
        $region142: #{tpu_custom_call.1} parent=123 // pred_check_branch
          %1243 = sbr.rel (%p1241) target = $region144
        $region143: #{tpu_custom_call.1} parent=123 // pred_region
          %1244 = dma.done %s1238, 16
        $region144: #{tpu_custom_call.1} parent=123 // pred_fallthru
          _
        %s1245 = sand.u32 %s41, 1
        %s1246 = scalar_lea.sflag [#allocation6], %s1245
        %s1247 = sand.u32 %s186, 1
        %s1248 = scalar_lea.vmem [#allocation14], %s1247
        // Predicated region
        $region145: #{tpu_custom_call.1} parent=123 // pred_check
          %p1249 = pneg %p199
        $region146: #{tpu_custom_call.1} parent=123 // pred_check_branch
          %1251 = sbr.rel (%p1249) target = $region148
        $region147: #{tpu_custom_call.1} parent=123 // pred_region
          %1252 = dma.done %s1246, 16
        $region148: #{tpu_custom_call.1} parent=123 // pred_fallthru
          _
        %s1253 = sand.u32 %s41, 1
        %s1254 = scalar_lea.sflag [#allocation6], %s1253
        %s1255 = sand.u32 %s212, 1
        %s1256 = smul.addr %s1255, 192
        %s1257 = scalar_lea.vmem [#allocation15], %s1256
        // Predicated region
        $region149: #{tpu_custom_call.1} parent=123 // pred_check
          %p1258 = pneg %p225
        $region150: #{tpu_custom_call.1} parent=123 // pred_check_branch
          %1260 = sbr.rel (%p1258) target = $region152
        $region151: #{tpu_custom_call.1} parent=123 // pred_region
          %1261 = dma.done %s1254, 3072
        $region152: #{tpu_custom_call.1} parent=123 // pred_fallthru
          _
        %s1262 = sand.u32 %s41, 1
        %s1263 = scalar_lea.sflag [#allocation6], %s1262
        %s1264 = sand.u32 %s238, 1
        %s1265 = smul.addr %s1264, 3
        %s1266 = scalar_lea.vmem [#allocation16], %s1265
        // Predicated region
        $region153: #{tpu_custom_call.1} parent=123 // pred_check
          %p1267 = pneg %p251
        $region154: #{tpu_custom_call.1} parent=123 // pred_check_branch
          %1269 = sbr.rel (%p1267) target = $region156
        $region155: #{tpu_custom_call.1} parent=123 // pred_region
          %1270 = dma.done %s1263, 48
        $region156: #{tpu_custom_call.1} parent=123 // pred_fallthru
          _
        %s1271 = sand.u32 %s41, 1
        %s1272 = scalar_lea.sflag [#allocation6], %s1271
        %s1273 = sand.u32 %s264, 1
        %s1274 = smul.addr %s1273, 64
        %s1275 = scalar_lea.vmem [#allocation17], %s1274
        // Predicated region
        $region157: #{tpu_custom_call.1} parent=123 // pred_check
          %p1276 = pneg %p277
        $region158: #{tpu_custom_call.1} parent=123 // pred_check_branch
          %1278 = sbr.rel (%p1276) target = $region160
        $region159: #{tpu_custom_call.1} parent=123 // pred_region
          %1279 = dma.done %s1272, 1024
        $region160: #{tpu_custom_call.1} parent=123 // pred_fallthru
          _
        %s1280 = sand.u32 %s41, 1
        %s1281 = scalar_lea.sflag [#allocation6], %s1280
        %s1282 = sand.u32 %s290, 1
        %s1283 = scalar_lea.vmem [#allocation18], %s1282
        // Predicated region
        $region161: #{tpu_custom_call.1} parent=123 // pred_check
          %p1284 = pneg %p303
        $region162: #{tpu_custom_call.1} parent=123 // pred_check_branch
          %1286 = sbr.rel (%p1284) target = $region164
        $region163: #{tpu_custom_call.1} parent=123 // pred_region
          %1287 = dma.done %s1281, 16
        $region164: #{tpu_custom_call.1} parent=123 // pred_fallthru
          _
        %s1288 = sand.u32 %s41, 1
        %s1289 = scalar_lea.sflag [#allocation6], %s1288
        %s1290 = sand.u32 %s316, 1
        %s1291 = scalar_lea.vmem [#allocation19], %s1290
        // Predicated region
        $region165: #{tpu_custom_call.1} parent=123 // pred_check
          %p1292 = pneg %p329
        $region166: #{tpu_custom_call.1} parent=123 // pred_check_branch
          %1294 = sbr.rel (%p1292) target = $region168
        $region167: #{tpu_custom_call.1} parent=123 // pred_region
          %1295 = dma.done %s1289, 16
        $region168: #{tpu_custom_call.1} parent=123 // pred_fallthru
          _
        %s1296 = sand.u32 %s41, 1
        %s1297 = scalar_lea.sflag [#allocation6], %s1296
        %s1298 = sand.u32 %s342, 1
        %s1299 = scalar_lea.vmem [#allocation20], %s1298
        // Predicated region
        $region169: #{tpu_custom_call.1} parent=123 // pred_check
          %p1300 = pneg %p355
        $region170: #{tpu_custom_call.1} parent=123 // pred_check_branch
          %1302 = sbr.rel (%p1300) target = $region172
        $region171: #{tpu_custom_call.1} parent=123 // pred_region
          %1303 = dma.done %s1297, 16
        $region172: #{tpu_custom_call.1} parent=123 // pred_fallthru
          _
        %s1304 = sand.u32 %s41, 1
        %s1305 = scalar_lea.sflag [#allocation6], %s1304
        %s1306 = sand.u32 %s368, 1
        %s1307 = smul.addr %s1306, 64
        %s1308 = scalar_lea.vmem [#allocation21], %s1307
        // Predicated region
        $region173: #{tpu_custom_call.1} parent=123 // pred_check
          %p1309 = pneg %p381
        $region174: #{tpu_custom_call.1} parent=123 // pred_check_branch
          %1311 = sbr.rel (%p1309) target = $region176
        $region175: #{tpu_custom_call.1} parent=123 // pred_region
          %1312 = dma.done %s1305, 1024
        $region176: #{tpu_custom_call.1} parent=123 // pred_fallthru
          _
        %s1313 = sand.u32 %s41, 1
        %s1314 = scalar_lea.sflag [#allocation6], %s1313
        %s1315 = sand.u32 %s394, 1
        %s1316 = scalar_lea.vmem [#allocation22], %s1315
        // Predicated region
        $region177: #{tpu_custom_call.1} parent=123 // pred_check
          %p1317 = pneg %p407
        $region178: #{tpu_custom_call.1} parent=123 // pred_check_branch
          %1319 = sbr.rel (%p1317) target = $region180
        $region179: #{tpu_custom_call.1} parent=123 // pred_region
          %1320 = dma.done %s1314, 16
        $region180: #{tpu_custom_call.1} parent=123 // pred_fallthru
          _
        %s1321 = sand.u32 %s41, 1
        %s1322 = scalar_lea.sflag [#allocation6], %s1321
        %s1323 = sand.u32 %s420, 1
        %s1324 = smul.addr %s1323, 128
        %s1325 = scalar_lea.vmem [#allocation23], %s1324
        // Predicated region
        $region181: #{tpu_custom_call.1} parent=123 // pred_check
          %p1326 = pneg %p433
        $region182: #{tpu_custom_call.1} parent=123 // pred_check_branch
          %1328 = sbr.rel (%p1326) target = $region184
        $region183: #{tpu_custom_call.1} parent=123 // pred_region
          %1329 = dma.done %s1322, 2048
        $region184: #{tpu_custom_call.1} parent=123 // pred_fallthru
          _
        %s1330 = sand.u32 %s41, 1
        %s1331 = scalar_lea.sflag [#allocation6], %s1330
        %s1332 = sand.u32 %s446, 1
        %s1333 = smul.addr %s1332, 2
        %s1334 = scalar_lea.vmem [#allocation24], %s1333
        // Predicated region
        $region185: #{tpu_custom_call.1} parent=123 // pred_check
          %p1335 = pneg %p459
        $region186: #{tpu_custom_call.1} parent=123 // pred_check_branch
          %1337 = sbr.rel (%p1335) target = $region188
        $region187: #{tpu_custom_call.1} parent=123 // pred_region
          %1338 = dma.done %s1331, 32
        $region188: #{tpu_custom_call.1} parent=123 // pred_fallthru
          _
        %s1339 = sand.u32 %s41, 1
        %s1340 = scalar_lea.sflag [#allocation6], %s1339
        %s1341 = sand.u32 %s472, 1
        %s1342 = smul.addr %s1341, 64
        %s1343 = scalar_lea.vmem [#allocation25], %s1342
        // Predicated region
        $region189: #{tpu_custom_call.1} parent=123 // pred_check
          %p1344 = pneg %p485
        $region190: #{tpu_custom_call.1} parent=123 // pred_check_branch
          %1346 = sbr.rel (%p1344) target = $region192
        $region191: #{tpu_custom_call.1} parent=123 // pred_region
          %1347 = dma.done %s1340, 1024
        $region192: #{tpu_custom_call.1} parent=123 // pred_fallthru
          _
        %s1348 = sand.u32 %s41, 1
        %s1349 = scalar_lea.sflag [#allocation6], %s1348
        %s1350 = sand.u32 %s498, 1
        %s1351 = scalar_lea.vmem [#allocation26], %s1350
        // Predicated region
        $region193: #{tpu_custom_call.1} parent=123 // pred_check
          %p1352 = pneg %p511
        $region194: #{tpu_custom_call.1} parent=123 // pred_check_branch
          %1354 = sbr.rel (%p1352) target = $region196
        $region195: #{tpu_custom_call.1} parent=123 // pred_region
          %1355 = dma.done %s1349, 16
        $region196: #{tpu_custom_call.1} parent=123 // pred_fallthru
          _
        %s1356 = sand.u32 %s41, 1
        %s1357 = scalar_lea.sflag [#allocation6], %s1356
        %s1358 = sand.u32 %s524, 1
        %s1359 = scalar_lea.vmem [#allocation27], %s1358
        // Predicated region
        $region197: #{tpu_custom_call.1} parent=123 // pred_check
          %p1360 = pneg %p537
        $region198: #{tpu_custom_call.1} parent=123 // pred_check_branch
          %1362 = sbr.rel (%p1360) target = $region200
        $region199: #{tpu_custom_call.1} parent=123 // pred_region
          %1363 = dma.done %s1357, 16
        $region200: #{tpu_custom_call.1} parent=123 // pred_fallthru
          _
        %s1364 = sand.u32 %s41, 1
        %s1365 = scalar_lea.sflag [#allocation6], %s1364
        %s1366 = sand.u32 %s550, 1
        %s1367 = scalar_lea.vmem [#allocation28], %s1366
        // Predicated region
        $region201: #{tpu_custom_call.1} parent=123 // pred_check
          %p1368 = pneg %p563
        $region202: #{tpu_custom_call.1} parent=123 // pred_check_branch
          %1370 = sbr.rel (%p1368) target = $region204
        $region203: #{tpu_custom_call.1} parent=123 // pred_region
          %1371 = dma.done %s1365, 16
        $region204: #{tpu_custom_call.1} parent=123 // pred_fallthru
          _
        %s1372 = sand.u32 %s41, 1
        %s1373 = scalar_lea.sflag [#allocation6], %s1372
        %s1374 = sand.u32 %s576, 1
        %s1375 = smul.addr %s1374, 256
        %s1376 = scalar_lea.vmem [#allocation29], %s1375
        // Predicated region
        $region205: #{tpu_custom_call.1} parent=123 // pred_check
          %p1377 = pneg %p589
        $region206: #{tpu_custom_call.1} parent=123 // pred_check_branch
          %1379 = sbr.rel (%p1377) target = $region208
        $region207: #{tpu_custom_call.1} parent=123 // pred_region
          %1380 = dma.done %s1373, 4096
        $region208: #{tpu_custom_call.1} parent=123 // pred_fallthru
          _
        %s1381 = sand.u32 %s41, 1
        %s1382 = scalar_lea.sflag [#allocation6], %s1381
        %s1383 = sand.u32 %s602, 1
        %s1384 = smul.addr %s1383, 4
        %s1385 = scalar_lea.vmem [#allocation30], %s1384
        // Predicated region
        $region209: #{tpu_custom_call.1} parent=123 // pred_check
          %p1386 = pneg %p615
        $region210: #{tpu_custom_call.1} parent=123 // pred_check_branch
          %1388 = sbr.rel (%p1386) target = $region212
        $region211: #{tpu_custom_call.1} parent=123 // pred_region
          %1389 = dma.done %s1382, 64
        $region212: #{tpu_custom_call.1} parent=123 // pred_fallthru
          _
        %s1390 = sand.u32 %s41, 1
        %s1391 = scalar_lea.sflag [#allocation6], %s1390
        %s1392 = sand.u32 %s628, 1
        %s1393 = smul.addr %s1392, 256
        %s1394 = scalar_lea.vmem [#allocation31], %s1393
        // Predicated region
        $region213: #{tpu_custom_call.1} parent=123 // pred_check
          %p1395 = pneg %p641
        $region214: #{tpu_custom_call.1} parent=123 // pred_check_branch
          %1397 = sbr.rel (%p1395) target = $region216
        $region215: #{tpu_custom_call.1} parent=123 // pred_region
          %1398 = dma.done %s1391, 4096
        $region216: #{tpu_custom_call.1} parent=123 // pred_fallthru
          _
        %s1399 = sand.u32 %s41, 1
        %s1400 = scalar_lea.sflag [#allocation6], %s1399
        %s1401 = sand.u32 %s654, 1
        %s1402 = scalar_lea.vmem [#allocation32], %s1401
        // Predicated region
        $region217: #{tpu_custom_call.1} parent=123 // pred_check
          %p1403 = pneg %p667
        $region218: #{tpu_custom_call.1} parent=123 // pred_check_branch
          %1405 = sbr.rel (%p1403) target = $region220
        $region219: #{tpu_custom_call.1} parent=123 // pred_region
          %1406 = dma.done %s1400, 16
        $region220: #{tpu_custom_call.1} parent=123 // pred_fallthru
          _
        // Predicated region
        $region221: #{tpu_custom_call.1} parent=123 // pred_check
          %p1407 = pneg %p688
        $region222: #{tpu_custom_call.1} parent=123 // pred_check_branch
          %1409 = sbr.rel (%p1407) target = $region224
        $region223: #{tpu_custom_call.1} parent=123 // pred_region
          %1410 = dma.done [#allocation9], 16
        $region224: #{tpu_custom_call.1} parent=123 // pred_fallthru
          _
        // Predicated region
        $region225: #{tpu_custom_call.1} parent=123 // pred_check
          %p1411 = pneg %p709
        $region226: #{tpu_custom_call.1} parent=123 // pred_check_branch
          %1413 = sbr.rel (%p1411) target = $region228
        $region227: #{tpu_custom_call.1} parent=123 // pred_region
          %1414 = dma.done [#allocation12], 16
        $region228: #{tpu_custom_call.1} parent=123 // pred_fallthru
          _
        %p1415 = pneg %p74
        %p1416 = pneg %p71
        %p1417 = pneg %p100
        %p1418 = pneg %p97
        %p1419 = pneg %p121
        %p1420 = pneg %p118
        %p1421 = pneg %p147
        %p1422 = pneg %p144
        %s1423 = sand.u32 %s41, 1
        %s1424 = scalar_lea.sflag [#allocation6], %s1423
        %s1425 = sand.u32 %s160, 1
        %s1426 = scalar_lea.vmem [#allocation13], %s1425
        %p1427 = pneg %p173
        %p1428 = pneg %p170
        %s1429 = sand.u32 %s41, 1
        %s1430 = scalar_lea.sflag [#allocation6], %s1429
        %s1431 = sand.u32 %s186, 1
        %s1432 = scalar_lea.vmem [#allocation14], %s1431
        %p1433 = pneg %p199
        %p1434 = pneg %p196
        %s1435 = sand.u32 %s41, 1
        %s1436 = scalar_lea.sflag [#allocation6], %s1435
        %s1437 = sand.u32 %s212, 1
        %s1438 = smul.addr %s1437, 192
        %s1439 = scalar_lea.vmem [#allocation15], %s1438
        %p1440 = pneg %p225
        %p1441 = pneg %p222
        %s1442 = sand.u32 %s41, 1
        %s1443 = scalar_lea.sflag [#allocation6], %s1442
        %s1444 = sand.u32 %s238, 1
        %s1445 = smul.addr %s1444, 3
        %s1446 = scalar_lea.vmem [#allocation16], %s1445
        %p1447 = pneg %p251
        %p1448 = pneg %p248
        %s1449 = sand.u32 %s41, 1
        %s1450 = scalar_lea.sflag [#allocation6], %s1449
        %s1451 = sand.u32 %s264, 1
        %s1452 = smul.addr %s1451, 64
        %s1453 = scalar_lea.vmem [#allocation17], %s1452
        %p1454 = pneg %p277
        %p1455 = pneg %p274
        %s1456 = sand.u32 %s41, 1
        %s1457 = scalar_lea.sflag [#allocation6], %s1456
        %s1458 = sand.u32 %s290, 1
        %s1459 = scalar_lea.vmem [#allocation18], %s1458
        %p1460 = pneg %p303
        %p1461 = pneg %p300
        %s1462 = sand.u32 %s41, 1
        %s1463 = scalar_lea.sflag [#allocation6], %s1462
        %s1464 = sand.u32 %s316, 1
        %s1465 = scalar_lea.vmem [#allocation19], %s1464
        %p1466 = pneg %p329
        %p1467 = pneg %p326
        %s1468 = sand.u32 %s41, 1
        %s1469 = scalar_lea.sflag [#allocation6], %s1468
        %s1470 = sand.u32 %s342, 1
        %s1471 = scalar_lea.vmem [#allocation20], %s1470
        %p1472 = pneg %p355
        %p1473 = pneg %p352
        %s1474 = sand.u32 %s41, 1
        %s1475 = scalar_lea.sflag [#allocation6], %s1474
        %s1476 = sand.u32 %s368, 1
        %s1477 = smul.addr %s1476, 64
        %s1478 = scalar_lea.vmem [#allocation21], %s1477
        %p1479 = pneg %p381
        %p1480 = pneg %p378
        %s1481 = sand.u32 %s41, 1
        %s1482 = scalar_lea.sflag [#allocation6], %s1481
        %s1483 = sand.u32 %s394, 1
        %s1484 = scalar_lea.vmem [#allocation22], %s1483
        %p1485 = pneg %p407
        %p1486 = pneg %p404
        %s1487 = sand.u32 %s41, 1
        %s1488 = scalar_lea.sflag [#allocation6], %s1487
        %s1489 = sand.u32 %s420, 1
        %s1490 = smul.addr %s1489, 128
        %s1491 = scalar_lea.vmem [#allocation23], %s1490
        %p1492 = pneg %p433
        %p1493 = pneg %p430
        %s1494 = sand.u32 %s41, 1
        %s1495 = scalar_lea.sflag [#allocation6], %s1494
        %s1496 = sand.u32 %s446, 1
        %s1497 = smul.addr %s1496, 2
        %s1498 = scalar_lea.vmem [#allocation24], %s1497
        %p1499 = pneg %p459
        %p1500 = pneg %p456
        %s1501 = sand.u32 %s41, 1
        %s1502 = scalar_lea.sflag [#allocation6], %s1501
        %s1503 = sand.u32 %s472, 1
        %s1504 = smul.addr %s1503, 64
        %s1505 = scalar_lea.vmem [#allocation25], %s1504
        %p1506 = pneg %p485
        %p1507 = pneg %p482
        %s1508 = sand.u32 %s41, 1
        %s1509 = scalar_lea.sflag [#allocation6], %s1508
        %s1510 = sand.u32 %s498, 1
        %s1511 = scalar_lea.vmem [#allocation26], %s1510
        %p1512 = pneg %p511
        %p1513 = pneg %p508
        %s1514 = sand.u32 %s41, 1
        %s1515 = scalar_lea.sflag [#allocation6], %s1514
        %s1516 = sand.u32 %s524, 1
        %s1517 = scalar_lea.vmem [#allocation27], %s1516
        %p1518 = pneg %p537
        %p1519 = pneg %p534
        %s1520 = sand.u32 %s41, 1
        %s1521 = scalar_lea.sflag [#allocation6], %s1520
        %s1522 = sand.u32 %s550, 1
        %s1523 = scalar_lea.vmem [#allocation28], %s1522
        %p1524 = pneg %p563
        %p1525 = pneg %p560
        %s1526 = sand.u32 %s41, 1
        %s1527 = scalar_lea.sflag [#allocation6], %s1526
        %s1528 = sand.u32 %s576, 1
        %s1529 = smul.addr %s1528, 256
        %s1530 = scalar_lea.vmem [#allocation29], %s1529
        %p1531 = pneg %p589
        %p1532 = pneg %p586
        %s1533 = sand.u32 %s41, 1
        %s1534 = scalar_lea.sflag [#allocation6], %s1533
        %s1535 = sand.u32 %s602, 1
        %s1536 = smul.addr %s1535, 4
        %s1537 = scalar_lea.vmem [#allocation30], %s1536
        %p1538 = pneg %p615
        %p1539 = pneg %p612
        %s1540 = sand.u32 %s41, 1
        %s1541 = scalar_lea.sflag [#allocation6], %s1540
        %s1542 = sand.u32 %s628, 1
        %s1543 = smul.addr %s1542, 256
        %s1544 = scalar_lea.vmem [#allocation31], %s1543
        %p1545 = pneg %p641
        %p1546 = pneg %p638
        %s1547 = sand.u32 %s41, 1
        %s1548 = scalar_lea.sflag [#allocation6], %s1547
        %s1549 = sand.u32 %s654, 1
        %s1550 = scalar_lea.vmem [#allocation32], %s1549
        %p1551 = pneg %p667
        %p1552 = pneg %p664
        %p1553 = pneg %p688
        %p1554 = pneg %p685
        %p1555 = pneg %p709
        %p1556 = pneg %p706
        %p1557 = pneg %p735
        %p1558 = pneg %p732
        %s1559 = smul.u32 2, %s45
        %s1560 = smul.u32 2, %s45
        %s1561 = smul.u32 2, %s45
        %s1562 = smul.u32 2, %s45
        %p1564 = scmp.eq.s32.totalorder %s46, 0
        // Predicated region
        $region229: #{tpu_custom_call.1} parent=123 // pred_check
          %p1565 = pneg %p1564
        $region230: #{tpu_custom_call.1} parent=123 // pred_check_branch
          %1567 = sbr.rel (%p1565) target = $region232
        $region231: #{tpu_custom_call.1} parent=123 // pred_region
          %v1568 = vld [vmem:[#allocation5] sm:$0xf]
          %v1569 = vld [vmem:[#allocation5 + $0x4] sm:$0xf]
          %v1570 = vld [vmem:[#allocation5 + $0x8] sm:$0xf]
          %v1571 = vld [vmem:[#allocation5 + $0xc] sm:$0xf]
          %v1572 = vunpack.c.l.bf16 %v1568
          %v1573 = vunpack.c.l.bf16 %v1569
          %v1574 = vunpack.c.l.bf16 %v1570
          %v1575 = vunpack.c.l.bf16 %v1571
          %1576 = vst [vmem:[#allocation2] sm:$0xff] %v1572
          %1577 = vst [vmem:[#allocation2 + $0x8] sm:$0xff] %v1573
          %1578 = vst [vmem:[#allocation2 + $0x10] sm:$0xff] %v1574
          %1579 = vst [vmem:[#allocation2 + $0x18] sm:$0xff] %v1575
          %v1580 = vld [vmem:[#allocation10] sm:$0x3]
          %v1581 = vld [vmem:[#allocation10 + $0x2] sm:$0x3]
          %v1582 = vunpack.c.0.s8 %v1580
          %v1583 = vunpack.c.0.s8 %v1581
          %v1584 = vcvt.s32.f32 %v1582
          %v1585 = vcvt.s32.f32 %v1583
          %v1586 = vsub.f32 %v1584, 1.0
          %v1587 = vsub.f32 %v1585, 1.0
          %v1588 = vmul.f32 %v1586, 1e+30
          %v1589 = vmul.f32 %v1587, 1e+30
          %vm1590 = vcmask 130048
          %1591 = vst.msk [vmem:[#allocation3] sm:$0xff] %vm1590, %v1588
          %1592 = vst.msk [vmem:[#allocation3 + $0x8] sm:$0xff] %vm1590, %v1589
          %v1593 = vld [vmem:[#allocation11] sm:$0x3]
          %v1594 = vld [vmem:[#allocation11 + $0x2] sm:$0x3]
          %v1595 = vld [vmem:[#allocation11 + $0x4] sm:$0x3]
          %v1596 = vld [vmem:[#allocation11 + $0x6] sm:$0x3]
          %v1597 = vunpack.c.0.s8 %v1593
          %v1598 = vunpack.c.0.s8 %v1594
          %v1599 = vunpack.c.0.s8 %v1595
          %v1600 = vunpack.c.0.s8 %v1596
          %v1601 = vcvt.s32.f32 %v1597
          %v1602 = vcvt.s32.f32 %v1598
          %v1603 = vcvt.s32.f32 %v1599
          %v1604 = vcvt.s32.f32 %v1600
          %v1605 = vsub.f32 %v1601, 1.0
          %v1606 = vsub.f32 %v1602, 1.0
          %v1607 = vsub.f32 %v1603, 1.0
          %v1608 = vsub.f32 %v1604, 1.0
          %v1609 = vmul.f32 %v1605, 1e+30
          %v1610 = vmul.f32 %v1606, 1e+30
          %v1611 = vmul.f32 %v1607, 1e+30
          %v1612 = vmul.f32 %v1608, 1e+30
          %1613 = vst.msk [vmem:[#allocation4] sm:$0xff] %vm1590, %v1609
          %1614 = vst.msk [vmem:[#allocation4 + $0x8] sm:$0xff] %vm1590, %v1610
          %1615 = vst.msk [vmem:[#allocation4 + $0x10] sm:$0xff] %vm1590, %v1611
          %1616 = vst.msk [vmem:[#allocation4 + $0x18] sm:$0xff] %vm1590, %v1612
        $region232: #{tpu_custom_call.1} parent=123 // pred_fallthru
          _
        %v1617 = vld [vmem:[%s1240] sm:$0x1]
        %v1618 = vld [vmem:[%s1248] sm:$0x1]
        %v1619 = vld [vmem:[%s1257] sm:$0xff]
        %v1620 = vld [vmem:[%s1257 + $0x8] sm:$0xf]
        %v1621 = vld [vmem:[%s1257 + $0xc] sm:$0xff]
        %v1622 = vld [vmem:[%s1257 + $0x14] sm:$0xf]
        %v1623 = vld [vmem:[%s1257 + $0x18] sm:$0xff]
        %v1624 = vld [vmem:[%s1257 + $0x20] sm:$0xf]
        %v1625 = vld [vmem:[%s1257 + $0x24] sm:$0xff]
        %v1626 = vld [vmem:[%s1257 + $0x2c] sm:$0xf]
        %v1627 = vld [vmem:[%s1257 + $0x30] sm:$0xff]
        %v1628 = vld [vmem:[%s1257 + $0x38] sm:$0xf]
        %v1629 = vld [vmem:[%s1257 + $0x3c] sm:$0xff]
        %v1630 = vld [vmem:[%s1257 + $0x44] sm:$0xf]
        %v1631 = vld [vmem:[%s1257 + $0x48] sm:$0xff]
        %v1632 = vld [vmem:[%s1257 + $0x50] sm:$0xf]
        %v1633 = vld [vmem:[%s1257 + $0x54] sm:$0xff]
        %v1634 = vld [vmem:[%s1257 + $0x5c] sm:$0xf]
        %v1635 = vld [vmem:[%s1257 + $0x60] sm:$0xff]
        %v1636 = vld [vmem:[%s1257 + $0x68] sm:$0xf]
        %v1637 = vld [vmem:[%s1257 + $0x6c] sm:$0xff]
        %v1638 = vld [vmem:[%s1257 + $0x74] sm:$0xf]
        %v1639 = vld [vmem:[%s1257 + $0x78] sm:$0xff]
        %v1640 = vld [vmem:[%s1257 + $0x80] sm:$0xf]
        %v1641 = vld [vmem:[%s1257 + $0x84] sm:$0xff]
        %v1642 = vld [vmem:[%s1257 + $0x8c] sm:$0xf]
        %v1643 = vld [vmem:[%s1257 + $0x90] sm:$0xff]
        %v1644 = vld [vmem:[%s1257 + $0x98] sm:$0xf]
        %v1645 = vld [vmem:[%s1257 + $0x9c] sm:$0xff]
        %v1646 = vld [vmem:[%s1257 + $0xa4] sm:$0xf]
        %v1647 = vld [vmem:[%s1257 + $0xa8] sm:$0xff]
        %v1648 = vld [vmem:[%s1257 + $0xb0] sm:$0xf]
        %v1649 = vld [vmem:[%s1257 + $0xb4] sm:$0xff]
        %v1650 = vld [vmem:[%s1257 + $0xbc] sm:$0xf]
        %v1651 = vld [vmem:[%s1266] sm:$0x7]
        %v1652 = vld [vmem:[%s1275] sm:$0xf]
        %v1653 = vld [vmem:[%s1275 + $0x4] sm:$0xf]
        %v1654 = vld [vmem:[%s1275 + $0x8] sm:$0xf]
        %v1655 = vld [vmem:[%s1275 + $0xc] sm:$0xf]
        %v1656 = vld [vmem:[%s1275 + $0x10] sm:$0xf]
        %v1657 = vld [vmem:[%s1275 + $0x14] sm:$0xf]
        %v1658 = vld [vmem:[%s1275 + $0x18] sm:$0xf]
        %v1659 = vld [vmem:[%s1275 + $0x1c] sm:$0xf]
        %v1660 = vld [vmem:[%s1275 + $0x20] sm:$0xf]
        %v1661 = vld [vmem:[%s1275 + $0x24] sm:$0xf]
        %v1662 = vld [vmem:[%s1275 + $0x28] sm:$0xf]
        %v1663 = vld [vmem:[%s1275 + $0x2c] sm:$0xf]
        %v1664 = vld [vmem:[%s1275 + $0x30] sm:$0xf]
        %v1665 = vld [vmem:[%s1275 + $0x34] sm:$0xf]
        %v1666 = vld [vmem:[%s1275 + $0x38] sm:$0xf]
        %v1667 = vld [vmem:[%s1275 + $0x3c] sm:$0xf]
        %v1668 = vld [vmem:[%s1283] sm:$0x1]
        %v1669 = vld [vmem:[%s1291] sm:$0x1]
        %v1670 = vld [vmem:[%s1299] sm:$0x1]
        %v1671 = vld [vmem:[%s1308] sm:$0xf]
        %v1672 = vld [vmem:[%s1308 + $0x4] sm:$0xf]
        %v1673 = vld [vmem:[%s1308 + $0x8] sm:$0xf]
        %v1674 = vld [vmem:[%s1308 + $0xc] sm:$0xf]
        %v1675 = vld [vmem:[%s1308 + $0x10] sm:$0xf]
        %v1676 = vld [vmem:[%s1308 + $0x14] sm:$0xf]
        %v1677 = vld [vmem:[%s1308 + $0x18] sm:$0xf]
        %v1678 = vld [vmem:[%s1308 + $0x1c] sm:$0xf]
        %v1679 = vld [vmem:[%s1308 + $0x20] sm:$0xf]
        %v1680 = vld [vmem:[%s1308 + $0x24] sm:$0xf]
        %v1681 = vld [vmem:[%s1308 + $0x28] sm:$0xf]
        %v1682 = vld [vmem:[%s1308 + $0x2c] sm:$0xf]
        %v1683 = vld [vmem:[%s1308 + $0x30] sm:$0xf]
        %v1684 = vld [vmem:[%s1308 + $0x34] sm:$0xf]
        %v1685 = vld [vmem:[%s1308 + $0x38] sm:$0xf]
        %v1686 = vld [vmem:[%s1308 + $0x3c] sm:$0xf]
        %v1687 = vld [vmem:[%s1316] sm:$0x1]
        %v1688 = vld [vmem:[%s1325] sm:$0xff]
        %v1689 = vld [vmem:[%s1325 + $0x8] sm:$0xff]
        %v1690 = vld [vmem:[%s1325 + $0x10] sm:$0xff]
        %v1691 = vld [vmem:[%s1325 + $0x18] sm:$0xff]
        %v1692 = vld [vmem:[%s1325 + $0x20] sm:$0xff]
        %v1693 = vld [vmem:[%s1325 + $0x28] sm:$0xff]
        %v1694 = vld [vmem:[%s1325 + $0x30] sm:$0xff]
        %v1695 = vld [vmem:[%s1325 + $0x38] sm:$0xff]
        %v1696 = vld [vmem:[%s1325 + $0x40] sm:$0xff]
        %v1697 = vld [vmem:[%s1325 + $0x48] sm:$0xff]
        %v1698 = vld [vmem:[%s1325 + $0x50] sm:$0xff]
        %v1699 = vld [vmem:[%s1325 + $0x58] sm:$0xff]
        %v1700 = vld [vmem:[%s1325 + $0x60] sm:$0xff]
        %v1701 = vld [vmem:[%s1325 + $0x68] sm:$0xff]
        %v1702 = vld [vmem:[%s1325 + $0x70] sm:$0xff]
        %v1703 = vld [vmem:[%s1325 + $0x78] sm:$0xff]
        %v1704 = vld [vmem:[%s1334] sm:$0x3]
        %v1705 = vld [vmem:[%s1343] sm:$0xf]
        %v1706 = vld [vmem:[%s1343 + $0x4] sm:$0xf]
        %v1707 = vld [vmem:[%s1343 + $0x8] sm:$0xf]
        %v1708 = vld [vmem:[%s1343 + $0xc] sm:$0xf]
        %v1709 = vld [vmem:[%s1343 + $0x10] sm:$0xf]
        %v1710 = vld [vmem:[%s1343 + $0x14] sm:$0xf]
        %v1711 = vld [vmem:[%s1343 + $0x18] sm:$0xf]
        %v1712 = vld [vmem:[%s1343 + $0x1c] sm:$0xf]
        %v1713 = vld [vmem:[%s1343 + $0x20] sm:$0xf]
        %v1714 = vld [vmem:[%s1343 + $0x24] sm:$0xf]
        %v1715 = vld [vmem:[%s1343 + $0x28] sm:$0xf]
        %v1716 = vld [vmem:[%s1343 + $0x2c] sm:$0xf]
        %v1717 = vld [vmem:[%s1343 + $0x30] sm:$0xf]
        %v1718 = vld [vmem:[%s1343 + $0x34] sm:$0xf]
        %v1719 = vld [vmem:[%s1343 + $0x38] sm:$0xf]
        %v1720 = vld [vmem:[%s1343 + $0x3c] sm:$0xf]
        %v1721 = vld [vmem:[%s1351] sm:$0x1]
        %v1722 = vld [vmem:[%s1359] sm:$0x1]
        %v1723 = vld [vmem:[%s1367] sm:$0x1]
        %v1724 = vld [vmem:[%s1376] sm:$0xff]
        %v1725 = vld [vmem:[%s1376 + $0x8] sm:$0xff]
        %v1726 = vld [vmem:[%s1376 + $0x10] sm:$0xff]
        %v1727 = vld [vmem:[%s1376 + $0x18] sm:$0xff]
        %v1728 = vld [vmem:[%s1376 + $0x20] sm:$0xff]
        %v1729 = vld [vmem:[%s1376 + $0x28] sm:$0xff]
        %v1730 = vld [vmem:[%s1376 + $0x30] sm:$0xff]
        %v1731 = vld [vmem:[%s1376 + $0x38] sm:$0xff]
        %v1732 = vld [vmem:[%s1376 + $0x40] sm:$0xff]
        %v1733 = vld [vmem:[%s1376 + $0x48] sm:$0xff]
        %v1734 = vld [vmem:[%s1376 + $0x50] sm:$0xff]
        %v1735 = vld [vmem:[%s1376 + $0x58] sm:$0xff]
        %v1736 = vld [vmem:[%s1376 + $0x60] sm:$0xff]
        %v1737 = vld [vmem:[%s1376 + $0x68] sm:$0xff]
        %v1738 = vld [vmem:[%s1376 + $0x70] sm:$0xff]
        %v1739 = vld [vmem:[%s1376 + $0x78] sm:$0xff]
        %v1740 = vld [vmem:[%s1376 + $0x80] sm:$0xff]
        %v1741 = vld [vmem:[%s1376 + $0x88] sm:$0xff]
        %v1742 = vld [vmem:[%s1376 + $0x90] sm:$0xff]
        %v1743 = vld [vmem:[%s1376 + $0x98] sm:$0xff]
        %v1744 = vld [vmem:[%s1376 + $0xa0] sm:$0xff]
        %v1745 = vld [vmem:[%s1376 + $0xa8] sm:$0xff]
        %v1746 = vld [vmem:[%s1376 + $0xb0] sm:$0xff]
        %v1747 = vld [vmem:[%s1376 + $0xb8] sm:$0xff]
        %v1748 = vld [vmem:[%s1376 + $0xc0] sm:$0xff]
        %v1749 = vld [vmem:[%s1376 + $0xc8] sm:$0xff]
        %v1750 = vld [vmem:[%s1376 + $0xd0] sm:$0xff]
        %v1751 = vld [vmem:[%s1376 + $0xd8] sm:$0xff]
        %v1752 = vld [vmem:[%s1376 + $0xe0] sm:$0xff]
        %v1753 = vld [vmem:[%s1376 + $0xe8] sm:$0xff]
        %v1754 = vld [vmem:[%s1376 + $0xf0] sm:$0xff]
        %v1755 = vld [vmem:[%s1376 + $0xf8] sm:$0xff]
        %v1756 = vld [vmem:[%s1385] sm:$0xf]
        %v1757 = vld [vmem:[%s1394] sm:$0xf]
        %v1758 = vld [vmem:[%s1394 + $0x4] sm:$0xf]
        %v1759 = vld [vmem:[%s1394 + $0x8] sm:$0xf]
        %v1760 = vld [vmem:[%s1394 + $0xc] sm:$0xf]
        %v1761 = vld [vmem:[%s1394 + $0x10] sm:$0xf]
        %v1762 = vld [vmem:[%s1394 + $0x14] sm:$0xf]
        %v1763 = vld [vmem:[%s1394 + $0x18] sm:$0xf]
        %v1764 = vld [vmem:[%s1394 + $0x1c] sm:$0xf]
        %v1765 = vld [vmem:[%s1394 + $0x20] sm:$0xf]
        %v1766 = vld [vmem:[%s1394 + $0x24] sm:$0xf]
        %v1767 = vld [vmem:[%s1394 + $0x28] sm:$0xf]
        %v1768 = vld [vmem:[%s1394 + $0x2c] sm:$0xf]
        %v1769 = vld [vmem:[%s1394 + $0x30] sm:$0xf]
        %v1770 = vld [vmem:[%s1394 + $0x34] sm:$0xf]
        %v1771 = vld [vmem:[%s1394 + $0x38] sm:$0xf]
        %v1772 = vld [vmem:[%s1394 + $0x3c] sm:$0xf]
        %v1773 = vld [vmem:[%s1394 + $0x40] sm:$0xf]
        %v1774 = vld [vmem:[%s1394 + $0x44] sm:$0xf]
        %v1775 = vld [vmem:[%s1394 + $0x48] sm:$0xf]
        %v1776 = vld [vmem:[%s1394 + $0x4c] sm:$0xf]
        %v1777 = vld [vmem:[%s1394 + $0x50] sm:$0xf]
        %v1778 = vld [vmem:[%s1394 + $0x54] sm:$0xf]
        %v1779 = vld [vmem:[%s1394 + $0x58] sm:$0xf]
        %v1780 = vld [vmem:[%s1394 + $0x5c] sm:$0xf]
        %v1781 = vld [vmem:[%s1394 + $0x60] sm:$0xf]
        %v1782 = vld [vmem:[%s1394 + $0x64] sm:$0xf]
        %v1783 = vld [vmem:[%s1394 + $0x68] sm:$0xf]
        %v1784 = vld [vmem:[%s1394 + $0x6c] sm:$0xf]
        %v1785 = vld [vmem:[%s1394 + $0x70] sm:$0xf]
        %v1786 = vld [vmem:[%s1394 + $0x74] sm:$0xf]
        %v1787 = vld [vmem:[%s1394 + $0x78] sm:$0xf]
        %v1788 = vld [vmem:[%s1394 + $0x7c] sm:$0xf]
        %v1789 = vld [vmem:[%s1394 + $0x80] sm:$0xf]
        %v1790 = vld [vmem:[%s1394 + $0x84] sm:$0xf]
        %v1791 = vld [vmem:[%s1394 + $0x88] sm:$0xf]
        %v1792 = vld [vmem:[%s1394 + $0x8c] sm:$0xf]
        %v1793 = vld [vmem:[%s1394 + $0x90] sm:$0xf]
        %v1794 = vld [vmem:[%s1394 + $0x94] sm:$0xf]
        %v1795 = vld [vmem:[%s1394 + $0x98] sm:$0xf]
        %v1796 = vld [vmem:[%s1394 + $0x9c] sm:$0xf]
        %v1797 = vld [vmem:[%s1394 + $0xa0] sm:$0xf]
        %v1798 = vld [vmem:[%s1394 + $0xa4] sm:$0xf]
        %v1799 = vld [vmem:[%s1394 + $0xa8] sm:$0xf]
        %v1800 = vld [vmem:[%s1394 + $0xac] sm:$0xf]
        %v1801 = vld [vmem:[%s1394 + $0xb0] sm:$0xf]
        %v1802 = vld [vmem:[%s1394 + $0xb4] sm:$0xf]
        %v1803 = vld [vmem:[%s1394 + $0xb8] sm:$0xf]
        %v1804 = vld [vmem:[%s1394 + $0xbc] sm:$0xf]
        %v1805 = vld [vmem:[%s1394 + $0xc0] sm:$0xf]
        %v1806 = vld [vmem:[%s1394 + $0xc4] sm:$0xf]
        %v1807 = vld [vmem:[%s1394 + $0xc8] sm:$0xf]
        %v1808 = vld [vmem:[%s1394 + $0xcc] sm:$0xf]
        %v1809 = vld [vmem:[%s1394 + $0xd0] sm:$0xf]
        %v1810 = vld [vmem:[%s1394 + $0xd4] sm:$0xf]
        %v1811 = vld [vmem:[%s1394 + $0xd8] sm:$0xf]
        %v1812 = vld [vmem:[%s1394 + $0xdc] sm:$0xf]
        %v1813 = vld [vmem:[%s1394 + $0xe0] sm:$0xf]
        %v1814 = vld [vmem:[%s1394 + $0xe4] sm:$0xf]
        %v1815 = vld [vmem:[%s1394 + $0xe8] sm:$0xf]
        %v1816 = vld [vmem:[%s1394 + $0xec] sm:$0xf]
        %v1817 = vld [vmem:[%s1394 + $0xf0] sm:$0xf]
        %v1818 = vld [vmem:[%s1394 + $0xf4] sm:$0xf]
        %v1819 = vld [vmem:[%s1394 + $0xf8] sm:$0xf]
        %v1820 = vld [vmem:[%s1394 + $0xfc] sm:$0xf]
        %v1821 = vld [vmem:[%s1402] sm:$0x1]
        %v1822 = vld [vmem:[#allocation8] sm:$0xf]
        %v1823 = vld [vmem:[#allocation8 + $0x4] sm:$0xf]
        %v1824 = vld [vmem:[#allocation8 + $0x8] sm:$0xf]
        %v1825 = vld [vmem:[#allocation8 + $0xc] sm:$0xf]
        %v1826 = vld [vmem:[#allocation2] sm:$0xff]
        %v1827 = vld [vmem:[#allocation2 + $0x8] sm:$0xff]
        %v1828 = vld [vmem:[#allocation2 + $0x10] sm:$0xff]
        %v1829 = vld [vmem:[#allocation2 + $0x18] sm:$0xff]
        %v1830 = vld [vmem:[#allocation3] sm:$0xff]
        %v1831 = vld [vmem:[#allocation3 + $0x8] sm:$0xff]
        %v1832 = vld [vmem:[#allocation4] sm:$0xff]
        %v1833 = vld [vmem:[#allocation4 + $0x8] sm:$0xff]
        %v1834 = vld [vmem:[#allocation4 + $0x10] sm:$0xff]
        %v1835 = vld [vmem:[#allocation4 + $0x18] sm:$0xff]
        %1836 = vadd.xlane.f32.xlu0 %v1826
        %v1837 = vpop.xlane.xlu0 %1836
        %1838 = vadd.xlane.f32.xlu0 %v1827
        %v1839 = vpop.xlane.xlu0 %1838
        %1840 = vadd.xlane.f32.xlu0 %v1828
        %v1841 = vpop.xlane.xlu0 %1840
        %1842 = vadd.xlane.f32.xlu0 %v1829
        %v1843 = vpop.xlane.xlu0 %1842
        %v1844 = vrcp.pop 128.0
        %v1845 = vmul.f32 %v1837, %v1844
        %v1846 = vmul.f32 %v1839, %v1844
        %v1847 = vmul.f32 %v1841, %v1844
        %v1848 = vmul.f32 %v1843, %v1844
        %v1849 = vsub.f32 %v1826, %v1845
        %v1850 = vsub.f32 %v1827, %v1846
        %v1851 = vsub.f32 %v1828, %v1847
        %v1852 = vsub.f32 %v1829, %v1848
        %v1853 = vmul.f32 %v1849, %v1849
        %v1854 = vmul.f32 %v1850, %v1850
        %v1855 = vmul.f32 %v1851, %v1851
        %v1856 = vmul.f32 %v1852, %v1852
        %1857 = vadd.xlane.f32.xlu0 %v1853
        %v1858 = vpop.xlane.xlu0 %1857
        %1859 = vadd.xlane.f32.xlu0 %v1854
        %v1860 = vpop.xlane.xlu0 %1859
        %1861 = vadd.xlane.f32.xlu0 %v1855
        %v1862 = vpop.xlane.xlu0 %1861
        %1863 = vadd.xlane.f32.xlu0 %v1856
        %v1864 = vpop.xlane.xlu0 %1863
        %v1865 = vmul.f32 %v1858, 0.007874016
        %v1866 = vmul.f32 %v1860, 0.007874016
        %v1867 = vmul.f32 %v1862, 0.007874016
        %v1868 = vmul.f32 %v1864, 0.007874016
        %v1869 = vrsqrt.pop %v1865
        %v1870 = vmul.f32 %v1865, %v1869
        %vm1871 = vcmp.eq.f32.partialorder %v1865, inf
        %v1872 = vsel %vm1871, %v1865, %v1870
        %vm1873 = vcmp.eq.f32.partialorder %v1865, 0.0
        %v1874 = vand.u32 %v1865, 2147483648
        %v1875 = vsel %vm1873, %v1874, %v1872
        %v1876 = vrsqrt.pop %v1866
        %v1877 = vmul.f32 %v1866, %v1876
        %vm1878 = vcmp.eq.f32.partialorder %v1866, inf
        %v1879 = vsel %vm1878, %v1866, %v1877
        %vm1880 = vcmp.eq.f32.partialorder %v1866, 0.0
        %v1881 = vand.u32 %v1866, 2147483648
        %v1882 = vsel %vm1880, %v1881, %v1879
        %v1883 = vrsqrt.pop %v1867
        %v1884 = vmul.f32 %v1867, %v1883
        %vm1885 = vcmp.eq.f32.partialorder %v1867, inf
        %v1886 = vsel %vm1885, %v1867, %v1884
        %vm1887 = vcmp.eq.f32.partialorder %v1867, 0.0
        %v1888 = vand.u32 %v1867, 2147483648
        %v1889 = vsel %vm1887, %v1888, %v1886
        %v1890 = vrsqrt.pop %v1868
        %v1891 = vmul.f32 %v1868, %v1890
        %vm1892 = vcmp.eq.f32.partialorder %v1868, inf
        %v1893 = vsel %vm1892, %v1868, %v1891
        %vm1894 = vcmp.eq.f32.partialorder %v1868, 0.0
        %v1895 = vand.u32 %v1868, 2147483648
        %v1896 = vsel %vm1894, %v1895, %v1893
        %v1898 = vlaneseq
        %v1899 = vshrl.u32 %v1898, 7
        %v1900 = vsub.s32 0, %v1899
        %v1901 = vrot.slane %v1617, %v1900
        %v1903 = vmul.f32 %v1901, %v1849
        %v1904 = vmul.f32 %v1901, %v1850
        %v1905 = vmul.f32 %v1901, %v1851
        %v1906 = vmul.f32 %v1901, %v1852
        %v1907 = vadd.f32 %v1875, 1e-05
        %v1908 = vadd.f32 %v1882, 1e-05
        %v1909 = vadd.f32 %v1889, 1e-05
        %v1910 = vadd.f32 %v1896, 1e-05
        %v1911 = vrcp.pop %v1907
        %v1912 = vmul.f32 %v1903, %v1911
        %v1913 = vrcp.pop %v1908
        %v1914 = vmul.f32 %v1904, %v1913
        %v1915 = vrcp.pop %v1909
        %v1916 = vmul.f32 %v1905, %v1915
        %v1917 = vrcp.pop %v1910
        %v1918 = vmul.f32 %v1906, %v1917
        %v1920 = vlaneseq
        %v1921 = vshrl.u32 %v1920, 7
        %v1922 = vsub.s32 0, %v1921
        %v1923 = vrot.slane %v1618, %v1922
        %v1925 = vadd.f32 %v1912, %v1923
        %v1926 = vadd.f32 %v1914, %v1923
        %v1927 = vadd.f32 %v1916, %v1923
        %v1928 = vadd.f32 %v1918, %v1923
        %v1929 = vpack.c.bf16 %v1926, %v1925
        %v1930 = vpack.c.bf16 %v1928, %v1927
        %v1932 = vlaneseq
        %v1933 = vshrl.u32 %v1932, 7
        %v1934 = vsub.s32 0, %v1933
        %v1935 = vrot.slane %v1651, %v1934
        %v1936 = vlaneseq
        %v1937 = vshrl.u32 %v1936, 7
        %v1938 = vsub.s32 1, %v1937
        %v1939 = vrot.slane %v1651, %v1938
        %v1940 = vlaneseq
        %v1941 = vshrl.u32 %v1940, 7
        %v1942 = vsub.s32 2, %v1941
        %v1943 = vrot.slane %v1651, %v1942
        %v1979 = vunpack.c.l.b16 %v1619
        %v1980 = vunpack.c.h.b16 %v1619
        %v1981 = vunpack.c.l.b16 %v1620
        %v1982 = vunpack.c.l.b16 %v1621
        %v1983 = vunpack.c.h.b16 %v1621
        %v1984 = vunpack.c.l.b16 %v1622
        %v1985 = vunpack.c.l.b16 %v1623
        %v1986 = vunpack.c.h.b16 %v1623
        %v1987 = vunpack.c.l.b16 %v1624
        %v1988 = vunpack.c.l.b16 %v1625
        %v1989 = vunpack.c.h.b16 %v1625
        %v1990 = vunpack.c.l.b16 %v1626
        %v1991 = vunpack.c.l.b16 %v1627
        %v1992 = vunpack.c.h.b16 %v1627
        %v1993 = vunpack.c.l.b16 %v1628
        %v1994 = vunpack.c.l.b16 %v1629
        %v1995 = vunpack.c.h.b16 %v1629
        %v1996 = vunpack.c.l.b16 %v1630
        %v1997 = vunpack.c.l.b16 %v1631
        %v1998 = vunpack.c.h.b16 %v1631
        %v1999 = vunpack.c.l.b16 %v1632
        %v2000 = vunpack.c.l.b16 %v1633
        %v2001 = vunpack.c.h.b16 %v1633
        %v2002 = vunpack.c.l.b16 %v1634
        %v2003 = vunpack.c.l.b16 %v1635
        %v2004 = vunpack.c.h.b16 %v1635
        %v2005 = vunpack.c.l.b16 %v1636
        %v2006 = vunpack.c.l.b16 %v1637
        %v2007 = vunpack.c.h.b16 %v1637
        %v2008 = vunpack.c.l.b16 %v1638
        %v2009 = vunpack.c.l.b16 %v1639
        %v2010 = vunpack.c.h.b16 %v1639
        %v2011 = vunpack.c.l.b16 %v1640
        %v2012 = vunpack.c.l.b16 %v1641
        %v2013 = vunpack.c.h.b16 %v1641
        %v2014 = vunpack.c.l.b16 %v1642
        %v2015 = vunpack.c.l.b16 %v1643
        %v2016 = vunpack.c.h.b16 %v1643
        %v2017 = vunpack.c.l.b16 %v1644
        %v2018 = vunpack.c.l.b16 %v1645
        %v2019 = vunpack.c.h.b16 %v1645
        %v2020 = vunpack.c.l.b16 %v1646
        %v2021 = vunpack.c.l.b16 %v1647
        %v2022 = vunpack.c.h.b16 %v1647
        %v2023 = vunpack.c.l.b16 %v1648
        %v2024 = vunpack.c.l.b16 %v1649
        %v2025 = vunpack.c.h.b16 %v1649
        %v2026 = vunpack.c.l.b16 %v1650
        %v2027 = vpack.c.b16 %v1982, %v1979
        %v2028 = vpack.c.b16 %v1983, %v1980
        %v2029 = vpack.c.b16 %v1984, %v1981
        %v2030 = vpack.c.b16 %v1988, %v1985
        %v2031 = vpack.c.b16 %v1989, %v1986
        %v2032 = vpack.c.b16 %v1990, %v1987
        %v2033 = vpack.c.b16 %v1994, %v1991
        %v2034 = vpack.c.b16 %v1995, %v1992
        %v2035 = vpack.c.b16 %v1996, %v1993
        %v2036 = vpack.c.b16 %v2000, %v1997
        %v2037 = vpack.c.b16 %v2001, %v1998
        %v2038 = vpack.c.b16 %v2002, %v1999
        %v2039 = vpack.c.b16 %v2006, %v2003
        %v2040 = vpack.c.b16 %v2007, %v2004
        %v2041 = vpack.c.b16 %v2008, %v2005
        %v2042 = vpack.c.b16 %v2012, %v2009
        %v2043 = vpack.c.b16 %v2013, %v2010
        %v2044 = vpack.c.b16 %v2014, %v2011
        %v2045 = vpack.c.b16 %v2018, %v2015
        %v2046 = vpack.c.b16 %v2019, %v2016
        %v2047 = vpack.c.b16 %v2020, %v2017
        %v2048 = vpack.c.b16 %v2024, %v2021
        %v2049 = vpack.c.b16 %v2025, %v2022
        %v2050 = vpack.c.b16 %v2026, %v2023
        %2075 = vmatprep.subr.bf16.mxu0 %v2028
        %2076 = vmatpush1.bf16.msra.mxu0 %v2027
        %2077 = vmatprep.subr.bf16.mxu0 %v2031
        %2078 = vmatpush1.bf16.msra.mxu0 %v2030
        %2079 = vmatprep.subr.bf16.mxu0 %v2034
        %2080 = vmatpush1.bf16.msra.mxu0 %v2033
        %2081 = vmatprep.subr.bf16.mxu0 %v2037
        %2082 = vmatpush1.bf16.msra.mxu0 %v2036
        %2083 = vmatprep.subr.bf16.mxu0 %v2040
        %2084 = vmatpush1.bf16.msra.mxu0 %v2039
        %2085 = vmatprep.subr.bf16.mxu0 %v2043
        %2086 = vmatpush1.bf16.msra.mxu0 %v2042
        %2087 = vmatprep.subr.bf16.mxu0 %v2046
        %2088 = vmatpush1.bf16.msra.mxu0 %v2045
        %2089 = vmatprep.subr.bf16.mxu0 %v2049
        %2090 = vmatpush1.bf16.msra.mxu0 %v2048
        %2091 = vmatprep.subr.bf16.mxu0 0
        %2092 = vmatpush1.bf16.msra.mxu0 0
        %2093 = vmatprep.subr.bf16.mxu0 0
        %2094 = vmatpush1.bf16.msra.mxu0 0
        %2095 = vmatprep.subr.bf16.mxu0 0
        %2096 = vmatpush1.bf16.msra.mxu0 0
        %2097 = vmatprep.subr.bf16.mxu0 0
        %2098 = vmatpush1.bf16.msra.mxu0 0
        %2099 = vmatprep.subr.bf16.mxu0 0
        %2100 = vmatpush1.bf16.msra.mxu0 0
        %2101 = vmatprep.subr.bf16.mxu0 0
        %2102 = vmatpush1.bf16.msra.mxu0 0
        %2103 = vmatprep.subr.bf16.mxu0 0
        %2104 = vmatpush1.bf16.msra.mxu0 0
        %2105 = vmatprep.subr.bf16.mxu0 0
        %2106 = vmatpush1.bf16.msra.mxu0 0
        %2107 = vmatprep.mubr.bf16.mxu0 0
        %2108 = vmatmul.mubr.bf16.gmra.mrb[0].mxu0 %v1929
        %v2109 = vpop.f32.mrb[0].mxu0
        %v2110 = vadd.f32 %v1935, %v2109
        %v2111 = vpop.f32.mrb[0].mxu0
        %v2112 = vadd.f32 %v1939, %v2111
        %v2113 = vpop.f32.mrb[0].mxu0
        %v2114 = vadd.f32 %v1935, %v2113
        %v2115 = vpop.f32.mrb[0].mxu0
        %v2116 = vadd.f32 %v1939, %v2115
        %2117 = vmatprep.mubr.bf16.mxu0 0
        %2118 = vmatmul.mubr.bf16.gmra.mrb[0].mxu0 %v1930
        %v2119 = vpop.f32.mrb[0].mxu0
        %v2120 = vadd.f32 %v1935, %v2119
        %v2121 = vpop.f32.mrb[0].mxu0
        %v2122 = vadd.f32 %v1939, %v2121
        %v2123 = vpop.f32.mrb[0].mxu0
        %v2124 = vadd.f32 %v1935, %v2123
        %v2125 = vpop.f32.mrb[0].mxu0
        %v2126 = vadd.f32 %v1939, %v2125
        %2127 = vdwg.mxu0
        %2128 = vmatprep.subr.bf16.mxu0 0
        %2129 = vmatpush1.bf16.msra.mxu0 %v2029
        %2130 = vmatprep.subr.bf16.mxu0 0
        %2131 = vmatpush1.bf16.msra.mxu0 %v2032
        %2132 = vmatprep.subr.bf16.mxu0 0
        %2133 = vmatpush1.bf16.msra.mxu0 %v2035
        %2134 = vmatprep.subr.bf16.mxu0 0
        %2135 = vmatpush1.bf16.msra.mxu0 %v2038
        %2136 = vmatprep.subr.bf16.mxu0 0
        %2137 = vmatpush1.bf16.msra.mxu0 %v2041
        %2138 = vmatprep.subr.bf16.mxu0 0
        %2139 = vmatpush1.bf16.msra.mxu0 %v2044
        %2140 = vmatprep.subr.bf16.mxu0 0
        %2141 = vmatpush1.bf16.msra.mxu0 %v2047
        %2142 = vmatprep.subr.bf16.mxu0 0
        %2143 = vmatpush1.bf16.msra.mxu0 %v2050
        %2144 = vmatprep.subr.bf16.mxu0 0
        %2145 = vmatpush1.bf16.msra.mxu0 0
        %2146 = vmatprep.subr.bf16.mxu0 0
        %2147 = vmatpush1.bf16.msra.mxu0 0
        %2148 = vmatprep.subr.bf16.mxu0 0
        %2149 = vmatpush1.bf16.msra.mxu0 0
        %2150 = vmatprep.subr.bf16.mxu0 0
        %2151 = vmatpush1.bf16.msra.mxu0 0
        %2152 = vmatprep.subr.bf16.mxu0 0
        %2153 = vmatpush1.bf16.msra.mxu0 0
        %2154 = vmatprep.subr.bf16.mxu0 0
        %2155 = vmatpush1.bf16.msra.mxu0 0
        %2156 = vmatprep.subr.bf16.mxu0 0
        %2157 = vmatpush1.bf16.msra.mxu0 0
        %2158 = vmatprep.subr.bf16.mxu0 0
        %2159 = vmatpush1.bf16.msra.mxu0 0
        %2160 = vmatprep.mubr.bf16.mxu0 0
        %2161 = vmatmul.mubr.bf16.gmra.mrb[0].mxu0 %v1929
        %v2162 = vpop.f32.mrb[0].mxu0
        %v2163 = vadd.f32 %v1943, %v2162
        %v2164 = vpop.f32.mrb[0].mxu0
        %v2165 = vpop.f32.mrb[0].mxu0
        %v2166 = vadd.f32 %v1943, %v2165
        %v2167 = vpop.f32.mrb[0].mxu0
        %2168 = vmatprep.mubr.bf16.mxu0 0
        %2169 = vmatmul.mubr.bf16.gmra.mrb[0].mxu0 %v1930
        %v2170 = vpop.f32.mrb[0].mxu0
        %v2171 = vadd.f32 %v1943, %v2170
        %v2172 = vpop.f32.mrb[0].mxu0
        %v2173 = vpop.f32.mrb[0].mxu0
        %v2174 = vadd.f32 %v1943, %v2173
        %v2175 = vpop.f32.mrb[0].mxu0
        %2176 = vdwg.mxu0
        %v2177 = vmul.f32 %v2110, 0.17677669
        %v2178 = vmul.f32 %v2114, 0.17677669
        %v2179 = vmul.f32 %v2120, 0.17677669
        %v2180 = vmul.f32 %v2124, 0.17677669
        %v2181 = vpack.c.bf16 %v2178, %v2177
        %v2182 = vpack.c.bf16 %v2180, %v2179
        %v2183 = vpack.c.bf16 %v2116, %v2112
        %v2184 = vpack.c.bf16 %v2126, %v2122
        %v2185 = vpack.c.bf16 %v2166, %v2163
        %v2186 = vpack.c.bf16 %v2174, %v2171
        %vm2187 = vcmask 261120
        %v2189 = vsel %vm2187, %v2181, 0
        %v2192 = vsel %vm2187, %v2183, 0
        %2194 = vmatprep.subr.bf16.mxu0 0
        %2195 = vmatpush1.bf16.xpose.msra.mxu0 %v2192
        %2196 = vmatprep.subr.bf16.mxu0 0
        %2197 = vmatpush1.bf16.xpose.msra.mxu0 0
        %2198 = vmatprep.subr.bf16.mxu0 0
        %2199 = vmatpush1.bf16.xpose.msra.mxu0 0
        %2200 = vmatprep.subr.bf16.mxu0 0
        %2201 = vmatpush1.bf16.xpose.msra.mxu0 0
        %2202 = vmatprep.subr.bf16.mxu0 0
        %2203 = vmatpush1.bf16.xpose.msra.mxu0 0
        %2204 = vmatprep.subr.bf16.mxu0 0
        %2205 = vmatpush1.bf16.xpose.msra.mxu0 0
        %2206 = vmatprep.subr.bf16.mxu0 0
        %2207 = vmatpush1.bf16.xpose.msra.mxu0 0
        %2208 = vmatprep.subr.bf16.mxu0 0
        %2209 = vmatpush1.bf16.xpose.msra.mxu0 0
        %2210 = vmatprep.subr.bf16.mxu0 0
        %2211 = vmatpush1.bf16.xpose.msra.mxu0 0
        %2212 = vmatprep.subr.bf16.mxu0 0
        %2213 = vmatpush1.bf16.xpose.msra.mxu0 0
        %2214 = vmatprep.subr.bf16.mxu0 0
        %2215 = vmatpush1.bf16.xpose.msra.mxu0 0
        %2216 = vmatprep.subr.bf16.mxu0 0
        %2217 = vmatpush1.bf16.xpose.msra.mxu0 0
        %2218 = vmatprep.subr.bf16.mxu0 0
        %2219 = vmatpush1.bf16.xpose.msra.mxu0 0
        %2220 = vmatprep.subr.bf16.mxu0 0
        %2221 = vmatpush1.bf16.xpose.msra.mxu0 0
        %2222 = vmatprep.subr.bf16.mxu0 0
        %2223 = vmatpush1.bf16.xpose.msra.mxu0 0
        %2224 = vmatprep.subr.bf16.mxu0 0
        %2225 = vmatpush1.bf16.xpose.msra.mxu0 0
        %2226 = vmatprep.mubr.bf16.mxu0 0
        %2227 = vmatmul.mubr.bf16.gmra.mrb[0].mxu0 %v2189
        %v2228 = vpop.f32.mrb[0].mxu0
        %v2229 = vadd.f32 %v1830, %v2228
        %v2230 = vpop.f32.mrb[0].mxu0
        %v2231 = vpop.f32.mrb[0].mxu0
        %v2232 = vadd.f32 %v1831, %v2231
        %v2233 = vpop.f32.mrb[0].mxu0
        %2234 = vdwg.mxu0
        %v2236 = vsel %vm2187, %v2182, 0
        %v2239 = vsel %vm2187, %v2184, 0
        %2241 = vmatprep.subr.bf16.mxu0 0
        %2242 = vmatpush1.bf16.xpose.msra.mxu0 %v2239
        %2243 = vmatprep.subr.bf16.mxu0 0
        %2244 = vmatpush1.bf16.xpose.msra.mxu0 0
        %2245 = vmatprep.subr.bf16.mxu0 0
        %2246 = vmatpush1.bf16.xpose.msra.mxu0 0
        %2247 = vmatprep.subr.bf16.mxu0 0
        %2248 = vmatpush1.bf16.xpose.msra.mxu0 0
        %2249 = vmatprep.subr.bf16.mxu0 0
        %2250 = vmatpush1.bf16.xpose.msra.mxu0 0
        %2251 = vmatprep.subr.bf16.mxu0 0
        %2252 = vmatpush1.bf16.xpose.msra.mxu0 0
        %2253 = vmatprep.subr.bf16.mxu0 0
        %2254 = vmatpush1.bf16.xpose.msra.mxu0 0
        %2255 = vmatprep.subr.bf16.mxu0 0
        %2256 = vmatpush1.bf16.xpose.msra.mxu0 0
        %2257 = vmatprep.subr.bf16.mxu0 0
        %2258 = vmatpush1.bf16.xpose.msra.mxu0 0
        %2259 = vmatprep.subr.bf16.mxu0 0
        %2260 = vmatpush1.bf16.xpose.msra.mxu0 0
        %2261 = vmatprep.subr.bf16.mxu0 0
        %2262 = vmatpush1.bf16.xpose.msra.mxu0 0
        %2263 = vmatprep.subr.bf16.mxu0 0
        %2264 = vmatpush1.bf16.xpose.msra.mxu0 0
        %2265 = vmatprep.subr.bf16.mxu0 0
        %2266 = vmatpush1.bf16.xpose.msra.mxu0 0
        %2267 = vmatprep.subr.bf16.mxu0 0
        %2268 = vmatpush1.bf16.xpose.msra.mxu0 0
        %2269 = vmatprep.subr.bf16.mxu0 0
        %2270 = vmatpush1.bf16.xpose.msra.mxu0 0
        %2271 = vmatprep.subr.bf16.mxu0 0
        %2272 = vmatpush1.bf16.xpose.msra.mxu0 0
        %2273 = vmatprep.mubr.bf16.mxu0 0
        %2274 = vmatmul.mubr.bf16.gmra.mrb[0].mxu0 %v2236
        %v2275 = vpop.f32.mrb[0].mxu0
        %v2276 = vadd.f32 %v1830, %v2275
        %v2277 = vpop.f32.mrb[0].mxu0
        %v2278 = vpop.f32.mrb[0].mxu0
        %v2279 = vadd.f32 %v1831, %v2278
        %v2280 = vpop.f32.mrb[0].mxu0
        %2281 = vdwg.mxu0
        %vm2282 = vcmask 130048
        %v2283 = vsel %vm2282, %v2229, -inf
        %2284 = vmax.xlane.f32.xlu0 %v2283
        %v2285 = vpop.xlane.xlu0 %2284
        %v2286 = vsel %vm2282, %v2232, -inf
        %2287 = vmax.xlane.f32.xlu0 %v2286
        %v2288 = vpop.xlane.xlu0 %2287
        %v2289 = vsel %vm2282, %v2276, -inf
        %2290 = vmax.xlane.f32.xlu0 %v2289
        %v2291 = vpop.xlane.xlu0 %2290
        %v2292 = vsel %vm2282, %v2279, -inf
        %2293 = vmax.xlane.f32.xlu0 %v2292
        %v2294 = vpop.xlane.xlu0 %2293
        %v2295 = vsub.f32 %v2229, %v2285
        %v2296 = vsub.f32 %v2232, %v2288
        %v2297 = vsub.f32 %v2276, %v2291
        %v2298 = vsub.f32 %v2279, %v2294
        %v2299 = vmul.f32 %v2295, 1.442695
        %v2300 = vpow.pop %v2299
        %v2301 = vmul.f32 %v2296, 1.442695
        %v2302 = vpow.pop %v2301
        %v2303 = vmul.f32 %v2297, 1.442695
        %v2304 = vpow.pop %v2303
        %v2305 = vmul.f32 %v2298, 1.442695
        %v2306 = vpow.pop %v2305
        %v2307 = vsel %vm2282, %v2300, 0.0
        %2308 = vadd.xlane.f32.xlu0 %v2307
        %v2309 = vpop.xlane.xlu0 %2308
        %v2310 = vsel %vm2282, %v2302, 0.0
        %2311 = vadd.xlane.f32.xlu0 %v2310
        %v2312 = vpop.xlane.xlu0 %2311
        %v2313 = vsel %vm2282, %v2304, 0.0
        %2314 = vadd.xlane.f32.xlu0 %v2313
        %v2315 = vpop.xlane.xlu0 %2314
        %v2316 = vsel %vm2282, %v2306, 0.0
        %2317 = vadd.xlane.f32.xlu0 %v2316
        %v2318 = vpop.xlane.xlu0 %2317
        %v2319 = vrcp.pop %v2309
        %v2320 = vrcp.pop %v2312
        %v2321 = vrcp.pop %v2315
        %v2322 = vrcp.pop %v2318
        %v2323 = vmul.f32 %v2300, %v2319
        %v2324 = vmul.f32 %v2302, %v2320
        %v2325 = vmul.f32 %v2304, %v2321
        %v2326 = vmul.f32 %v2306, %v2322
        %v2327 = vpack.c.bf16 %v2324, %v2323
        %v2328 = vpack.c.bf16 %v2326, %v2325
        %v2330 = vsel %vm2282, %v2327, 0
        %2332 = vmatprep.subr.bf16.mxu0 0
        %2333 = vmatpush1.bf16.msra.mxu0 %v2185
        %2334 = vmatprep.subr.bf16.mxu0 0
        %2335 = vmatpush1.bf16.msra.mxu0 0
        %2336 = vmatprep.subr.bf16.mxu0 0
        %2337 = vmatpush1.bf16.msra.mxu0 0
        %2338 = vmatprep.subr.bf16.mxu0 0
        %2339 = vmatpush1.bf16.msra.mxu0 0
        %2340 = vmatprep.subr.bf16.mxu0 0
        %2341 = vmatpush1.bf16.msra.mxu0 0
        %2342 = vmatprep.subr.bf16.mxu0 0
        %2343 = vmatpush1.bf16.msra.mxu0 0
        %2344 = vmatprep.subr.bf16.mxu0 0
        %2345 = vmatpush1.bf16.msra.mxu0 0
        %2346 = vmatprep.subr.bf16.mxu0 0
        %2347 = vmatpush1.bf16.msra.mxu0 0
        %2348 = vmatprep.subr.bf16.mxu0 0
        %2349 = vmatpush1.bf16.msra.mxu0 0
        %2350 = vmatprep.subr.bf16.mxu0 0
        %2351 = vmatpush1.bf16.msra.mxu0 0
        %2352 = vmatprep.subr.bf16.mxu0 0
        %2353 = vmatpush1.bf16.msra.mxu0 0
        %2354 = vmatprep.subr.bf16.mxu0 0
        %2355 = vmatpush1.bf16.msra.mxu0 0
        %2356 = vmatprep.subr.bf16.mxu0 0
        %2357 = vmatpush1.bf16.msra.mxu0 0
        %2358 = vmatprep.subr.bf16.mxu0 0
        %2359 = vmatpush1.bf16.msra.mxu0 0
        %2360 = vmatprep.subr.bf16.mxu0 0
        %2361 = vmatpush1.bf16.msra.mxu0 0
        %2362 = vmatprep.subr.bf16.mxu0 0
        %2363 = vmatpush1.bf16.msra.mxu0 0
        %2364 = vmatprep.mubr.bf16.mxu0 0
        %2365 = vmatmul.mubr.bf16.gmra.mrb[0].mxu0 %v2330
        %v2366 = vpop.f32.mrb[0].mxu0
        %v2367 = vadd.f32 0.0, %v2366
        %v2368 = vpop.f32.mrb[0].mxu0
        %v2369 = vpop.f32.mrb[0].mxu0
        %v2370 = vadd.f32 0.0, %v2369
        %v2371 = vpop.f32.mrb[0].mxu0
        %2372 = vdwg.mxu0
        %v2374 = vsel %vm2282, %v2328, 0
        %2376 = vmatprep.subr.bf16.mxu0 0
        %2377 = vmatpush1.bf16.msra.mxu0 %v2186
        %2378 = vmatprep.subr.bf16.mxu0 0
        %2379 = vmatpush1.bf16.msra.mxu0 0
        %2380 = vmatprep.subr.bf16.mxu0 0
        %2381 = vmatpush1.bf16.msra.mxu0 0
        %2382 = vmatprep.subr.bf16.mxu0 0
        %2383 = vmatpush1.bf16.msra.mxu0 0
        %2384 = vmatprep.subr.bf16.mxu0 0
        %2385 = vmatpush1.bf16.msra.mxu0 0
        %2386 = vmatprep.subr.bf16.mxu0 0
        %2387 = vmatpush1.bf16.msra.mxu0 0
        %2388 = vmatprep.subr.bf16.mxu0 0
        %2389 = vmatpush1.bf16.msra.mxu0 0
        %2390 = vmatprep.subr.bf16.mxu0 0
        %2391 = vmatpush1.bf16.msra.mxu0 0
        %2392 = vmatprep.subr.bf16.mxu0 0
        %2393 = vmatpush1.bf16.msra.mxu0 0
        %2394 = vmatprep.subr.bf16.mxu0 0
        %2395 = vmatpush1.bf16.msra.mxu0 0
        %2396 = vmatprep.subr.bf16.mxu0 0
        %2397 = vmatpush1.bf16.msra.mxu0 0
        %2398 = vmatprep.subr.bf16.mxu0 0
        %2399 = vmatpush1.bf16.msra.mxu0 0
        %2400 = vmatprep.subr.bf16.mxu0 0
        %2401 = vmatpush1.bf16.msra.mxu0 0
        %2402 = vmatprep.subr.bf16.mxu0 0
        %2403 = vmatpush1.bf16.msra.mxu0 0
        %2404 = vmatprep.subr.bf16.mxu0 0
        %2405 = vmatpush1.bf16.msra.mxu0 0
        %2406 = vmatprep.subr.bf16.mxu0 0
        %2407 = vmatpush1.bf16.msra.mxu0 0
        %2408 = vmatprep.mubr.bf16.mxu0 0
        %2409 = vmatmul.mubr.bf16.gmra.mrb[0].mxu0 %v2374
        %v2410 = vpop.f32.mrb[0].mxu0
        %v2411 = vadd.f32 0.0, %v2410
        %v2412 = vpop.f32.mrb[0].mxu0
        %v2413 = vpop.f32.mrb[0].mxu0
        %v2414 = vadd.f32 0.0, %v2413
        %v2415 = vpop.f32.mrb[0].mxu0
        %2416 = vdwg.mxu0
        %2418 = vrot.lane.b32.xlu0 %v2181, 96
        %v2419 = vpop.permute.xlu0 %2418
        %2421 = vrot.lane.b32.xlu0 %v2183, 96
        %v2422 = vpop.permute.xlu0 %2421
        %v2424 = vsel %vm2187, %v2419, 0
        %v2427 = vsel %vm2187, %v2422, 0
        %2429 = vmatprep.subr.bf16.mxu0 0
        %2430 = vmatpush1.bf16.xpose.msra.mxu0 %v2427
        %2431 = vmatprep.subr.bf16.mxu0 0
        %2432 = vmatpush1.bf16.xpose.msra.mxu0 0
        %2433 = vmatprep.subr.bf16.mxu0 0
        %2434 = vmatpush1.bf16.xpose.msra.mxu0 0
        %2435 = vmatprep.subr.bf16.mxu0 0
        %2436 = vmatpush1.bf16.xpose.msra.mxu0 0
        %2437 = vmatprep.subr.bf16.mxu0 0
        %2438 = vmatpush1.bf16.xpose.msra.mxu0 0
        %2439 = vmatprep.subr.bf16.mxu0 0
        %2440 = vmatpush1.bf16.xpose.msra.mxu0 0
        %2441 = vmatprep.subr.bf16.mxu0 0
        %2442 = vmatpush1.bf16.xpose.msra.mxu0 0
        %2443 = vmatprep.subr.bf16.mxu0 0
        %2444 = vmatpush1.bf16.xpose.msra.mxu0 0
        %2445 = vmatprep.subr.bf16.mxu0 0
        %2446 = vmatpush1.bf16.xpose.msra.mxu0 0
        %2447 = vmatprep.subr.bf16.mxu0 0
        %2448 = vmatpush1.bf16.xpose.msra.mxu0 0
        %2449 = vmatprep.subr.bf16.mxu0 0
        %2450 = vmatpush1.bf16.xpose.msra.mxu0 0
        %2451 = vmatprep.subr.bf16.mxu0 0
        %2452 = vmatpush1.bf16.xpose.msra.mxu0 0
        %2453 = vmatprep.subr.bf16.mxu0 0
        %2454 = vmatpush1.bf16.xpose.msra.mxu0 0
        %2455 = vmatprep.subr.bf16.mxu0 0
        %2456 = vmatpush1.bf16.xpose.msra.mxu0 0
        %2457 = vmatprep.subr.bf16.mxu0 0
        %2458 = vmatpush1.bf16.xpose.msra.mxu0 0
        %2459 = vmatprep.subr.bf16.mxu0 0
        %2460 = vmatpush1.bf16.xpose.msra.mxu0 0
        %2461 = vmatprep.mubr.bf16.mxu0 0
        %2462 = vmatmul.mubr.bf16.gmra.mrb[0].mxu0 %v2424
        %v2463 = vpop.f32.mrb[0].mxu0
        %v2464 = vadd.f32 %v1830, %v2463
        %v2465 = vpop.f32.mrb[0].mxu0
        %v2466 = vpop.f32.mrb[0].mxu0
        %v2467 = vadd.f32 %v1831, %v2466
        %v2468 = vpop.f32.mrb[0].mxu0
        %2469 = vdwg.mxu0
        %2471 = vrot.lane.b32.xlu0 %v2182, 96
        %v2472 = vpop.permute.xlu0 %2471
        %2474 = vrot.lane.b32.xlu0 %v2184, 96
        %v2475 = vpop.permute.xlu0 %2474
        %v2477 = vsel %vm2187, %v2472, 0
        %v2480 = vsel %vm2187, %v2475, 0
        %2482 = vmatprep.subr.bf16.mxu0 0
        %2483 = vmatpush1.bf16.xpose.msra.mxu0 %v2480
        %2484 = vmatprep.subr.bf16.mxu0 0
        %2485 = vmatpush1.bf16.xpose.msra.mxu0 0
        %2486 = vmatprep.subr.bf16.mxu0 0
        %2487 = vmatpush1.bf16.xpose.msra.mxu0 0
        %2488 = vmatprep.subr.bf16.mxu0 0
        %2489 = vmatpush1.bf16.xpose.msra.mxu0 0
        %2490 = vmatprep.subr.bf16.mxu0 0
        %2491 = vmatpush1.bf16.xpose.msra.mxu0 0
        %2492 = vmatprep.subr.bf16.mxu0 0
        %2493 = vmatpush1.bf16.xpose.msra.mxu0 0
        %2494 = vmatprep.subr.bf16.mxu0 0
        %2495 = vmatpush1.bf16.xpose.msra.mxu0 0
        %2496 = vmatprep.subr.bf16.mxu0 0
        %2497 = vmatpush1.bf16.xpose.msra.mxu0 0
        %2498 = vmatprep.subr.bf16.mxu0 0
        %2499 = vmatpush1.bf16.xpose.msra.mxu0 0
        %2500 = vmatprep.subr.bf16.mxu0 0
        %2501 = vmatpush1.bf16.xpose.msra.mxu0 0
        %2502 = vmatprep.subr.bf16.mxu0 0
        %2503 = vmatpush1.bf16.xpose.msra.mxu0 0
        %2504 = vmatprep.subr.bf16.mxu0 0
        %2505 = vmatpush1.bf16.xpose.msra.mxu0 0
        %2506 = vmatprep.subr.bf16.mxu0 0
        %2507 = vmatpush1.bf16.xpose.msra.mxu0 0
        %2508 = vmatprep.subr.bf16.mxu0 0
        %2509 = vmatpush1.bf16.xpose.msra.mxu0 0
        %2510 = vmatprep.subr.bf16.mxu0 0
        %2511 = vmatpush1.bf16.xpose.msra.mxu0 0
        %2512 = vmatprep.subr.bf16.mxu0 0
        %2513 = vmatpush1.bf16.xpose.msra.mxu0 0
        %2514 = vmatprep.mubr.bf16.mxu0 0
        %2515 = vmatmul.mubr.bf16.gmra.mrb[0].mxu0 %v2477
        %v2516 = vpop.f32.mrb[0].mxu0
        %v2517 = vadd.f32 %v1830, %v2516
        %v2518 = vpop.f32.mrb[0].mxu0
        %v2519 = vpop.f32.mrb[0].mxu0
        %v2520 = vadd.f32 %v1831, %v2519
        %v2521 = vpop.f32.mrb[0].mxu0
        %2522 = vdwg.mxu0
        %v2523 = vsel %vm2282, %v2464, -inf
        %2524 = vmax.xlane.f32.xlu0 %v2523
        %v2525 = vpop.xlane.xlu0 %2524
        %v2526 = vsel %vm2282, %v2467, -inf
        %2527 = vmax.xlane.f32.xlu0 %v2526
        %v2528 = vpop.xlane.xlu0 %2527
        %v2529 = vsel %vm2282, %v2517, -inf
        %2530 = vmax.xlane.f32.xlu0 %v2529
        %v2531 = vpop.xlane.xlu0 %2530
        %v2532 = vsel %vm2282, %v2520, -inf
        %2533 = vmax.xlane.f32.xlu0 %v2532
        %v2534 = vpop.xlane.xlu0 %2533
        %v2535 = vsub.f32 %v2464, %v2525
        %v2536 = vsub.f32 %v2467, %v2528
        %v2537 = vsub.f32 %v2517, %v2531
        %v2538 = vsub.f32 %v2520, %v2534
        %v2539 = vmul.f32 %v2535, 1.442695
        %v2540 = vpow.pop %v2539
        %v2541 = vmul.f32 %v2536, 1.442695
        %v2542 = vpow.pop %v2541
        %v2543 = vmul.f32 %v2537, 1.442695
        %v2544 = vpow.pop %v2543
        %v2545 = vmul.f32 %v2538, 1.442695
        %v2546 = vpow.pop %v2545
        %v2547 = vsel %vm2282, %v2540, 0.0
        %2548 = vadd.xlane.f32.xlu0 %v2547
        %v2549 = vpop.xlane.xlu0 %2548
        %v2550 = vsel %vm2282, %v2542, 0.0
        %2551 = vadd.xlane.f32.xlu0 %v2550
        %v2552 = vpop.xlane.xlu0 %2551
        %v2553 = vsel %vm2282, %v2544, 0.0
        %2554 = vadd.xlane.f32.xlu0 %v2553
        %v2555 = vpop.xlane.xlu0 %2554
        %v2556 = vsel %vm2282, %v2546, 0.0
        %2557 = vadd.xlane.f32.xlu0 %v2556
        %v2558 = vpop.xlane.xlu0 %2557
        %v2559 = vrcp.pop %v2549
        %v2560 = vrcp.pop %v2552
        %v2561 = vrcp.pop %v2555
        %v2562 = vrcp.pop %v2558
        %v2563 = vmul.f32 %v2540, %v2559
        %v2564 = vmul.f32 %v2542, %v2560
        %v2565 = vmul.f32 %v2544, %v2561
        %v2566 = vmul.f32 %v2546, %v2562
        %v2567 = vpack.c.bf16 %v2564, %v2563
        %v2568 = vpack.c.bf16 %v2566, %v2565
        %2570 = vrot.lane.b32.xlu0 %v2185, 96
        %v2571 = vpop.permute.xlu0 %2570
        %v2574 = vsel %vm2282, %v2567, 0
        %2576 = vmatprep.subr.bf16.mxu0 0
        %2577 = vmatpush1.bf16.msra.mxu0 %v2571
        %2578 = vmatprep.subr.bf16.mxu0 0
        %2579 = vmatpush1.bf16.msra.mxu0 0
        %2580 = vmatprep.subr.bf16.mxu0 0
        %2581 = vmatpush1.bf16.msra.mxu0 0
        %2582 = vmatprep.subr.bf16.mxu0 0
        %2583 = vmatpush1.bf16.msra.mxu0 0
        %2584 = vmatprep.subr.bf16.mxu0 0
        %2585 = vmatpush1.bf16.msra.mxu0 0
        %2586 = vmatprep.subr.bf16.mxu0 0
        %2587 = vmatpush1.bf16.msra.mxu0 0
        %2588 = vmatprep.subr.bf16.mxu0 0
        %2589 = vmatpush1.bf16.msra.mxu0 0
        %2590 = vmatprep.subr.bf16.mxu0 0
        %2591 = vmatpush1.bf16.msra.mxu0 0
        %2592 = vmatprep.subr.bf16.mxu0 0
        %2593 = vmatpush1.bf16.msra.mxu0 0
        %2594 = vmatprep.subr.bf16.mxu0 0
        %2595 = vmatpush1.bf16.msra.mxu0 0
        %2596 = vmatprep.subr.bf16.mxu0 0
        %2597 = vmatpush1.bf16.msra.mxu0 0
        %2598 = vmatprep.subr.bf16.mxu0 0
        %2599 = vmatpush1.bf16.msra.mxu0 0
        %2600 = vmatprep.subr.bf16.mxu0 0
        %2601 = vmatpush1.bf16.msra.mxu0 0
        %2602 = vmatprep.subr.bf16.mxu0 0
        %2603 = vmatpush1.bf16.msra.mxu0 0
        %2604 = vmatprep.subr.bf16.mxu0 0
        %2605 = vmatpush1.bf16.msra.mxu0 0
        %2606 = vmatprep.subr.bf16.mxu0 0
        %2607 = vmatpush1.bf16.msra.mxu0 0
        %2608 = vmatprep.mubr.bf16.mxu0 0
        %2609 = vmatmul.mubr.bf16.gmra.mrb[0].mxu0 %v2574
        %v2610 = vpop.f32.mrb[0].mxu0
        %v2611 = vadd.f32 0.0, %v2610
        %v2612 = vpop.f32.mrb[0].mxu0
        %v2613 = vpop.f32.mrb[0].mxu0
        %v2614 = vadd.f32 0.0, %v2613
        %v2615 = vpop.f32.mrb[0].mxu0
        %2616 = vdwg.mxu0
        %2618 = vrot.lane.b32.xlu0 %v2186, 96
        %v2619 = vpop.permute.xlu0 %2618
        %v2622 = vsel %vm2282, %v2568, 0
        %2624 = vmatprep.subr.bf16.mxu0 0
        %2625 = vmatpush1.bf16.msra.mxu0 %v2619
        %2626 = vmatprep.subr.bf16.mxu0 0
        %2627 = vmatpush1.bf16.msra.mxu0 0
        %2628 = vmatprep.subr.bf16.mxu0 0
        %2629 = vmatpush1.bf16.msra.mxu0 0
        %2630 = vmatprep.subr.bf16.mxu0 0
        %2631 = vmatpush1.bf16.msra.mxu0 0
        %2632 = vmatprep.subr.bf16.mxu0 0
        %2633 = vmatpush1.bf16.msra.mxu0 0
        %2634 = vmatprep.subr.bf16.mxu0 0
        %2635 = vmatpush1.bf16.msra.mxu0 0
        %2636 = vmatprep.subr.bf16.mxu0 0
        %2637 = vmatpush1.bf16.msra.mxu0 0
        %2638 = vmatprep.subr.bf16.mxu0 0
        %2639 = vmatpush1.bf16.msra.mxu0 0
        %2640 = vmatprep.subr.bf16.mxu0 0
        %2641 = vmatpush1.bf16.msra.mxu0 0
        %2642 = vmatprep.subr.bf16.mxu0 0
        %2643 = vmatpush1.bf16.msra.mxu0 0
        %2644 = vmatprep.subr.bf16.mxu0 0
        %2645 = vmatpush1.bf16.msra.mxu0 0
        %2646 = vmatprep.subr.bf16.mxu0 0
        %2647 = vmatpush1.bf16.msra.mxu0 0
        %2648 = vmatprep.subr.bf16.mxu0 0
        %2649 = vmatpush1.bf16.msra.mxu0 0
        %2650 = vmatprep.subr.bf16.mxu0 0
        %2651 = vmatpush1.bf16.msra.mxu0 0
        %2652 = vmatprep.subr.bf16.mxu0 0
        %2653 = vmatpush1.bf16.msra.mxu0 0
        %2654 = vmatprep.subr.bf16.mxu0 0
        %2655 = vmatpush1.bf16.msra.mxu0 0
        %2656 = vmatprep.mubr.bf16.mxu0 0
        %2657 = vmatmul.mubr.bf16.gmra.mrb[0].mxu0 %v2622
        %v2658 = vpop.f32.mrb[0].mxu0
        %v2659 = vadd.f32 0.0, %v2658
        %v2660 = vpop.f32.mrb[0].mxu0
        %v2661 = vpop.f32.mrb[0].mxu0
        %v2662 = vadd.f32 0.0, %v2661
        %v2663 = vpop.f32.mrb[0].mxu0
        %2664 = vdwg.mxu0
        %2665 = vrot.lane.b32.xlu0 %v2181, 64
        %v2666 = vpop.permute.xlu0 %2665
        %2667 = vrot.lane.b32.xlu0 %v2183, 64
        %v2668 = vpop.permute.xlu0 %2667
        %v2670 = vsel %vm2187, %v2666, 0
        %v2673 = vsel %vm2187, %v2668, 0
        %2675 = vmatprep.subr.bf16.mxu0 0
        %2676 = vmatpush1.bf16.xpose.msra.mxu0 %v2673
        %2677 = vmatprep.subr.bf16.mxu0 0
        %2678 = vmatpush1.bf16.xpose.msra.mxu0 0
        %2679 = vmatprep.subr.bf16.mxu0 0
        %2680 = vmatpush1.bf16.xpose.msra.mxu0 0
        %2681 = vmatprep.subr.bf16.mxu0 0
        %2682 = vmatpush1.bf16.xpose.msra.mxu0 0
        %2683 = vmatprep.subr.bf16.mxu0 0
        %2684 = vmatpush1.bf16.xpose.msra.mxu0 0
        %2685 = vmatprep.subr.bf16.mxu0 0
        %2686 = vmatpush1.bf16.xpose.msra.mxu0 0
        %2687 = vmatprep.subr.bf16.mxu0 0
        %2688 = vmatpush1.bf16.xpose.msra.mxu0 0
        %2689 = vmatprep.subr.bf16.mxu0 0
        %2690 = vmatpush1.bf16.xpose.msra.mxu0 0
        %2691 = vmatprep.subr.bf16.mxu0 0
        %2692 = vmatpush1.bf16.xpose.msra.mxu0 0
        %2693 = vmatprep.subr.bf16.mxu0 0
        %2694 = vmatpush1.bf16.xpose.msra.mxu0 0
        %2695 = vmatprep.subr.bf16.mxu0 0
        %2696 = vmatpush1.bf16.xpose.msra.mxu0 0
        %2697 = vmatprep.subr.bf16.mxu0 0
        %2698 = vmatpush1.bf16.xpose.msra.mxu0 0
        %2699 = vmatprep.subr.bf16.mxu0 0
        %2700 = vmatpush1.bf16.xpose.msra.mxu0 0
        %2701 = vmatprep.subr.bf16.mxu0 0
        %2702 = vmatpush1.bf16.xpose.msra.mxu0 0
        %2703 = vmatprep.subr.bf16.mxu0 0
        %2704 = vmatpush1.bf16.xpose.msra.mxu0 0
        %2705 = vmatprep.subr.bf16.mxu0 0
        %2706 = vmatpush1.bf16.xpose.msra.mxu0 0
        %2707 = vmatprep.mubr.bf16.mxu0 0
        %2708 = vmatmul.mubr.bf16.gmra.mrb[0].mxu0 %v2670
        %v2709 = vpop.f32.mrb[0].mxu0
        %v2710 = vadd.f32 %v1830, %v2709
        %v2711 = vpop.f32.mrb[0].mxu0
        %v2712 = vpop.f32.mrb[0].mxu0
        %v2713 = vadd.f32 %v1831, %v2712
        %v2714 = vpop.f32.mrb[0].mxu0
        %2715 = vdwg.mxu0
        %2716 = vrot.lane.b32.xlu0 %v2182, 64
        %v2717 = vpop.permute.xlu0 %2716
        %2718 = vrot.lane.b32.xlu0 %v2184, 64
        %v2719 = vpop.permute.xlu0 %2718
        %v2721 = vsel %vm2187, %v2717, 0
        %v2724 = vsel %vm2187, %v2719, 0
        %2726 = vmatprep.subr.bf16.mxu0 0
        %2727 = vmatpush1.bf16.xpose.msra.mxu0 %v2724
        %2728 = vmatprep.subr.bf16.mxu0 0
        %2729 = vmatpush1.bf16.xpose.msra.mxu0 0
        %2730 = vmatprep.subr.bf16.mxu0 0
        %2731 = vmatpush1.bf16.xpose.msra.mxu0 0
        %2732 = vmatprep.subr.bf16.mxu0 0
        %2733 = vmatpush1.bf16.xpose.msra.mxu0 0
        %2734 = vmatprep.subr.bf16.mxu0 0
        %2735 = vmatpush1.bf16.xpose.msra.mxu0 0
        %2736 = vmatprep.subr.bf16.mxu0 0
        %2737 = vmatpush1.bf16.xpose.msra.mxu0 0
        %2738 = vmatprep.subr.bf16.mxu0 0
        %2739 = vmatpush1.bf16.xpose.msra.mxu0 0
        %2740 = vmatprep.subr.bf16.mxu0 0
        %2741 = vmatpush1.bf16.xpose.msra.mxu0 0
        %2742 = vmatprep.subr.bf16.mxu0 0
        %2743 = vmatpush1.bf16.xpose.msra.mxu0 0
        %2744 = vmatprep.subr.bf16.mxu0 0
        %2745 = vmatpush1.bf16.xpose.msra.mxu0 0
        %2746 = vmatprep.subr.bf16.mxu0 0
        %2747 = vmatpush1.bf16.xpose.msra.mxu0 0
        %2748 = vmatprep.subr.bf16.mxu0 0
        %2749 = vmatpush1.bf16.xpose.msra.mxu0 0
        %2750 = vmatprep.subr.bf16.mxu0 0
        %2751 = vmatpush1.bf16.xpose.msra.mxu0 0
        %2752 = vmatprep.subr.bf16.mxu0 0
        %2753 = vmatpush1.bf16.xpose.msra.mxu0 0
        %2754 = vmatprep.subr.bf16.mxu0 0
        %2755 = vmatpush1.bf16.xpose.msra.mxu0 0
        %2756 = vmatprep.subr.bf16.mxu0 0
        %2757 = vmatpush1.bf16.xpose.msra.mxu0 0
        %2758 = vmatprep.mubr.bf16.mxu0 0
        %2759 = vmatmul.mubr.bf16.gmra.mrb[0].mxu0 %v2721
        %v2760 = vpop.f32.mrb[0].mxu0
        %v2761 = vadd.f32 %v1830, %v2760
        %v2762 = vpop.f32.mrb[0].mxu0
        %v2763 = vpop.f32.mrb[0].mxu0
        %v2764 = vadd.f32 %v1831, %v2763
        %v2765 = vpop.f32.mrb[0].mxu0
        %2766 = vdwg.mxu0
        %v2767 = vsel %vm2282, %v2710, -inf
        %2768 = vmax.xlane.f32.xlu0 %v2767
        %v2769 = vpop.xlane.xlu0 %2768
        %v2770 = vsel %vm2282, %v2713, -inf
        %2771 = vmax.xlane.f32.xlu0 %v2770
        %v2772 = vpop.xlane.xlu0 %2771
        %v2773 = vsel %vm2282, %v2761, -inf
        %2774 = vmax.xlane.f32.xlu0 %v2773
        %v2775 = vpop.xlane.xlu0 %2774
        %v2776 = vsel %vm2282, %v2764, -inf
        %2777 = vmax.xlane.f32.xlu0 %v2776
        %v2778 = vpop.xlane.xlu0 %2777
        %v2779 = vsub.f32 %v2710, %v2769
        %v2780 = vsub.f32 %v2713, %v2772
        %v2781 = vsub.f32 %v2761, %v2775
        %v2782 = vsub.f32 %v2764, %v2778
        %v2783 = vmul.f32 %v2779, 1.442695
        %v2784 = vpow.pop %v2783
        %v2785 = vmul.f32 %v2780, 1.442695
        %v2786 = vpow.pop %v2785
        %v2787 = vmul.f32 %v2781, 1.442695
        %v2788 = vpow.pop %v2787
        %v2789 = vmul.f32 %v2782, 1.442695
        %v2790 = vpow.pop %v2789
        %v2791 = vsel %vm2282, %v2784, 0.0
        %2792 = vadd.xlane.f32.xlu0 %v2791
        %v2793 = vpop.xlane.xlu0 %2792
        %v2794 = vsel %vm2282, %v2786, 0.0
        %2795 = vadd.xlane.f32.xlu0 %v2794
        %v2796 = vpop.xlane.xlu0 %2795
        %v2797 = vsel %vm2282, %v2788, 0.0
        %2798 = vadd.xlane.f32.xlu0 %v2797
        %v2799 = vpop.xlane.xlu0 %2798
        %v2800 = vsel %vm2282, %v2790, 0.0
        %2801 = vadd.xlane.f32.xlu0 %v2800
        %v2802 = vpop.xlane.xlu0 %2801
        %v2803 = vrcp.pop %v2793
        %v2804 = vrcp.pop %v2796
        %v2805 = vrcp.pop %v2799
        %v2806 = vrcp.pop %v2802
        %v2807 = vmul.f32 %v2784, %v2803
        %v2808 = vmul.f32 %v2786, %v2804
        %v2809 = vmul.f32 %v2788, %v2805
        %v2810 = vmul.f32 %v2790, %v2806
        %v2811 = vpack.c.bf16 %v2808, %v2807
        %v2812 = vpack.c.bf16 %v2810, %v2809
        %2813 = vrot.lane.b32.xlu0 %v2185, 64
        %v2814 = vpop.permute.xlu0 %2813
        %v2817 = vsel %vm2282, %v2811, 0
        %2819 = vmatprep.subr.bf16.mxu0 0
        %2820 = vmatpush1.bf16.msra.mxu0 %v2814
        %2821 = vmatprep.subr.bf16.mxu0 0
        %2822 = vmatpush1.bf16.msra.mxu0 0
        %2823 = vmatprep.subr.bf16.mxu0 0
        %2824 = vmatpush1.bf16.msra.mxu0 0
        %2825 = vmatprep.subr.bf16.mxu0 0
        %2826 = vmatpush1.bf16.msra.mxu0 0
        %2827 = vmatprep.subr.bf16.mxu0 0
        %2828 = vmatpush1.bf16.msra.mxu0 0
        %2829 = vmatprep.subr.bf16.mxu0 0
        %2830 = vmatpush1.bf16.msra.mxu0 0
        %2831 = vmatprep.subr.bf16.mxu0 0
        %2832 = vmatpush1.bf16.msra.mxu0 0
        %2833 = vmatprep.subr.bf16.mxu0 0
        %2834 = vmatpush1.bf16.msra.mxu0 0
        %2835 = vmatprep.subr.bf16.mxu0 0
        %2836 = vmatpush1.bf16.msra.mxu0 0
        %2837 = vmatprep.subr.bf16.mxu0 0
        %2838 = vmatpush1.bf16.msra.mxu0 0
        %2839 = vmatprep.subr.bf16.mxu0 0
        %2840 = vmatpush1.bf16.msra.mxu0 0
        %2841 = vmatprep.subr.bf16.mxu0 0
        %2842 = vmatpush1.bf16.msra.mxu0 0
        %2843 = vmatprep.subr.bf16.mxu0 0
        %2844 = vmatpush1.bf16.msra.mxu0 0
        %2845 = vmatprep.subr.bf16.mxu0 0
        %2846 = vmatpush1.bf16.msra.mxu0 0
        %2847 = vmatprep.subr.bf16.mxu0 0
        %2848 = vmatpush1.bf16.msra.mxu0 0
        %2849 = vmatprep.subr.bf16.mxu0 0
        %2850 = vmatpush1.bf16.msra.mxu0 0
        %2851 = vmatprep.mubr.bf16.mxu0 0
        %2852 = vmatmul.mubr.bf16.gmra.mrb[0].mxu0 %v2817
        %v2853 = vpop.f32.mrb[0].mxu0
        %v2854 = vadd.f32 0.0, %v2853
        %v2855 = vpop.f32.mrb[0].mxu0
        %v2856 = vpop.f32.mrb[0].mxu0
        %v2857 = vadd.f32 0.0, %v2856
        %v2858 = vpop.f32.mrb[0].mxu0
        %2859 = vdwg.mxu0
        %2860 = vrot.lane.b32.xlu0 %v2186, 64
        %v2861 = vpop.permute.xlu0 %2860
        %v2864 = vsel %vm2282, %v2812, 0
        %2866 = vmatprep.subr.bf16.mxu0 0
        %2867 = vmatpush1.bf16.msra.mxu0 %v2861
        %2868 = vmatprep.subr.bf16.mxu0 0
        %2869 = vmatpush1.bf16.msra.mxu0 0
        %2870 = vmatprep.subr.bf16.mxu0 0
        %2871 = vmatpush1.bf16.msra.mxu0 0
        %2872 = vmatprep.subr.bf16.mxu0 0
        %2873 = vmatpush1.bf16.msra.mxu0 0
        %2874 = vmatprep.subr.bf16.mxu0 0
        %2875 = vmatpush1.bf16.msra.mxu0 0
        %2876 = vmatprep.subr.bf16.mxu0 0
        %2877 = vmatpush1.bf16.msra.mxu0 0
        %2878 = vmatprep.subr.bf16.mxu0 0
        %2879 = vmatpush1.bf16.msra.mxu0 0
        %2880 = vmatprep.subr.bf16.mxu0 0
        %2881 = vmatpush1.bf16.msra.mxu0 0
        %2882 = vmatprep.subr.bf16.mxu0 0
        %2883 = vmatpush1.bf16.msra.mxu0 0
        %2884 = vmatprep.subr.bf16.mxu0 0
        %2885 = vmatpush1.bf16.msra.mxu0 0
        %2886 = vmatprep.subr.bf16.mxu0 0
        %2887 = vmatpush1.bf16.msra.mxu0 0
        %2888 = vmatprep.subr.bf16.mxu0 0
        %2889 = vmatpush1.bf16.msra.mxu0 0
        %2890 = vmatprep.subr.bf16.mxu0 0
        %2891 = vmatpush1.bf16.msra.mxu0 0
        %2892 = vmatprep.subr.bf16.mxu0 0
        %2893 = vmatpush1.bf16.msra.mxu0 0
        %2894 = vmatprep.subr.bf16.mxu0 0
        %2895 = vmatpush1.bf16.msra.mxu0 0
        %2896 = vmatprep.subr.bf16.mxu0 0
        %2897 = vmatpush1.bf16.msra.mxu0 0
        %2898 = vmatprep.mubr.bf16.mxu0 0
        %2899 = vmatmul.mubr.bf16.gmra.mrb[0].mxu0 %v2864
        %v2900 = vpop.f32.mrb[0].mxu0
        %v2901 = vadd.f32 0.0, %v2900
        %v2902 = vpop.f32.mrb[0].mxu0
        %v2903 = vpop.f32.mrb[0].mxu0
        %v2904 = vadd.f32 0.0, %v2903
        %v2905 = vpop.f32.mrb[0].mxu0
        %2906 = vdwg.mxu0
        %2907 = vrot.lane.b32.xlu0 %v2181, 32
        %v2908 = vpop.permute.xlu0 %2907
        %2909 = vrot.lane.b32.xlu0 %v2183, 32
        %v2910 = vpop.permute.xlu0 %2909
        %v2912 = vsel %vm2187, %v2908, 0
        %v2915 = vsel %vm2187, %v2910, 0
        %2917 = vmatprep.subr.bf16.mxu0 0
        %2918 = vmatpush1.bf16.xpose.msra.mxu0 %v2915
        %2919 = vmatprep.subr.bf16.mxu0 0
        %2920 = vmatpush1.bf16.xpose.msra.mxu0 0
        %2921 = vmatprep.subr.bf16.mxu0 0
        %2922 = vmatpush1.bf16.xpose.msra.mxu0 0
        %2923 = vmatprep.subr.bf16.mxu0 0
        %2924 = vmatpush1.bf16.xpose.msra.mxu0 0
        %2925 = vmatprep.subr.bf16.mxu0 0
        %2926 = vmatpush1.bf16.xpose.msra.mxu0 0
        %2927 = vmatprep.subr.bf16.mxu0 0
        %2928 = vmatpush1.bf16.xpose.msra.mxu0 0
        %2929 = vmatprep.subr.bf16.mxu0 0
        %2930 = vmatpush1.bf16.xpose.msra.mxu0 0
        %2931 = vmatprep.subr.bf16.mxu0 0
        %2932 = vmatpush1.bf16.xpose.msra.mxu0 0
        %2933 = vmatprep.subr.bf16.mxu0 0
        %2934 = vmatpush1.bf16.xpose.msra.mxu0 0
        %2935 = vmatprep.subr.bf16.mxu0 0
        %2936 = vmatpush1.bf16.xpose.msra.mxu0 0
        %2937 = vmatprep.subr.bf16.mxu0 0
        %2938 = vmatpush1.bf16.xpose.msra.mxu0 0
        %2939 = vmatprep.subr.bf16.mxu0 0
        %2940 = vmatpush1.bf16.xpose.msra.mxu0 0
        %2941 = vmatprep.subr.bf16.mxu0 0
        %2942 = vmatpush1.bf16.xpose.msra.mxu0 0
        %2943 = vmatprep.subr.bf16.mxu0 0
        %2944 = vmatpush1.bf16.xpose.msra.mxu0 0
        %2945 = vmatprep.subr.bf16.mxu0 0
        %2946 = vmatpush1.bf16.xpose.msra.mxu0 0
        %2947 = vmatprep.subr.bf16.mxu0 0
        %2948 = vmatpush1.bf16.xpose.msra.mxu0 0
        %2949 = vmatprep.mubr.bf16.mxu0 0
        %2950 = vmatmul.mubr.bf16.gmra.mrb[0].mxu0 %v2912
        %v2951 = vpop.f32.mrb[0].mxu0
        %v2952 = vadd.f32 %v1830, %v2951
        %v2953 = vpop.f32.mrb[0].mxu0
        %v2954 = vpop.f32.mrb[0].mxu0
        %v2955 = vadd.f32 %v1831, %v2954
        %v2956 = vpop.f32.mrb[0].mxu0
        %2957 = vdwg.mxu0
        %2958 = vrot.lane.b32.xlu0 %v2182, 32
        %v2959 = vpop.permute.xlu0 %2958
        %2960 = vrot.lane.b32.xlu0 %v2184, 32
        %v2961 = vpop.permute.xlu0 %2960
        %v2963 = vsel %vm2187, %v2959, 0
        %v2966 = vsel %vm2187, %v2961, 0
        %2968 = vmatprep.subr.bf16.mxu0 0
        %2969 = vmatpush1.bf16.xpose.msra.mxu0 %v2966
        %2970 = vmatprep.subr.bf16.mxu0 0
        %2971 = vmatpush1.bf16.xpose.msra.mxu0 0
        %2972 = vmatprep.subr.bf16.mxu0 0
        %2973 = vmatpush1.bf16.xpose.msra.mxu0 0
        %2974 = vmatprep.subr.bf16.mxu0 0
        %2975 = vmatpush1.bf16.xpose.msra.mxu0 0
        %2976 = vmatprep.subr.bf16.mxu0 0
        %2977 = vmatpush1.bf16.xpose.msra.mxu0 0
        %2978 = vmatprep.subr.bf16.mxu0 0
        %2979 = vmatpush1.bf16.xpose.msra.mxu0 0
        %2980 = vmatprep.subr.bf16.mxu0 0
        %2981 = vmatpush1.bf16.xpose.msra.mxu0 0
        %2982 = vmatprep.subr.bf16.mxu0 0
        %2983 = vmatpush1.bf16.xpose.msra.mxu0 0
        %2984 = vmatprep.subr.bf16.mxu0 0
        %2985 = vmatpush1.bf16.xpose.msra.mxu0 0
        %2986 = vmatprep.subr.bf16.mxu0 0
        %2987 = vmatpush1.bf16.xpose.msra.mxu0 0
        %2988 = vmatprep.subr.bf16.mxu0 0
        %2989 = vmatpush1.bf16.xpose.msra.mxu0 0
        %2990 = vmatprep.subr.bf16.mxu0 0
        %2991 = vmatpush1.bf16.xpose.msra.mxu0 0
        %2992 = vmatprep.subr.bf16.mxu0 0
        %2993 = vmatpush1.bf16.xpose.msra.mxu0 0
        %2994 = vmatprep.subr.bf16.mxu0 0
        %2995 = vmatpush1.bf16.xpose.msra.mxu0 0
        %2996 = vmatprep.subr.bf16.mxu0 0
        %2997 = vmatpush1.bf16.xpose.msra.mxu0 0
        %2998 = vmatprep.subr.bf16.mxu0 0
        %2999 = vmatpush1.bf16.xpose.msra.mxu0 0
        %3000 = vmatprep.mubr.bf16.mxu0 0
        %3001 = vmatmul.mubr.bf16.gmra.mrb[0].mxu0 %v2963
        %v3002 = vpop.f32.mrb[0].mxu0
        %v3003 = vadd.f32 %v1830, %v3002
        %v3004 = vpop.f32.mrb[0].mxu0
        %v3005 = vpop.f32.mrb[0].mxu0
        %v3006 = vadd.f32 %v1831, %v3005
        %v3007 = vpop.f32.mrb[0].mxu0
        %3008 = vdwg.mxu0
        %v3009 = vsel %vm2282, %v2952, -inf
        %3010 = vmax.xlane.f32.xlu0 %v3009
        %v3011 = vpop.xlane.xlu0 %3010
        %v3012 = vsel %vm2282, %v2955, -inf
        %3013 = vmax.xlane.f32.xlu0 %v3012
        %v3014 = vpop.xlane.xlu0 %3013
        %v3015 = vsel %vm2282, %v3003, -inf
        %3016 = vmax.xlane.f32.xlu0 %v3015
        %v3017 = vpop.xlane.xlu0 %3016
        %v3018 = vsel %vm2282, %v3006, -inf
        %3019 = vmax.xlane.f32.xlu0 %v3018
        %v3020 = vpop.xlane.xlu0 %3019
        %v3021 = vsub.f32 %v2952, %v3011
        %v3022 = vsub.f32 %v2955, %v3014
        %v3023 = vsub.f32 %v3003, %v3017
        %v3024 = vsub.f32 %v3006, %v3020
        %v3025 = vmul.f32 %v3021, 1.442695
        %v3026 = vpow.pop %v3025
        %v3027 = vmul.f32 %v3022, 1.442695
        %v3028 = vpow.pop %v3027
        %v3029 = vmul.f32 %v3023, 1.442695
        %v3030 = vpow.pop %v3029
        %v3031 = vmul.f32 %v3024, 1.442695
        %v3032 = vpow.pop %v3031
        %v3033 = vsel %vm2282, %v3026, 0.0
        %3034 = vadd.xlane.f32.xlu0 %v3033
        %v3035 = vpop.xlane.xlu0 %3034
        %v3036 = vsel %vm2282, %v3028, 0.0
        %3037 = vadd.xlane.f32.xlu0 %v3036
        %v3038 = vpop.xlane.xlu0 %3037
        %v3039 = vsel %vm2282, %v3030, 0.0
        %3040 = vadd.xlane.f32.xlu0 %v3039
        %v3041 = vpop.xlane.xlu0 %3040
        %v3042 = vsel %vm2282, %v3032, 0.0
        %3043 = vadd.xlane.f32.xlu0 %v3042
        %v3044 = vpop.xlane.xlu0 %3043
        %v3045 = vrcp.pop %v3035
        %v3046 = vrcp.pop %v3038
        %v3047 = vrcp.pop %v3041
        %v3048 = vrcp.pop %v3044
        %v3049 = vmul.f32 %v3026, %v3045
        %v3050 = vmul.f32 %v3028, %v3046
        %v3051 = vmul.f32 %v3030, %v3047
        %v3052 = vmul.f32 %v3032, %v3048
        %v3053 = vpack.c.bf16 %v3050, %v3049
        %v3054 = vpack.c.bf16 %v3052, %v3051
        %3055 = vrot.lane.b32.xlu0 %v2185, 32
        %v3056 = vpop.permute.xlu0 %3055
        %v3059 = vsel %vm2282, %v3053, 0
        %3061 = vmatprep.subr.bf16.mxu0 0
        %3062 = vmatpush1.bf16.msra.mxu0 %v3056
        %3063 = vmatprep.subr.bf16.mxu0 0
        %3064 = vmatpush1.bf16.msra.mxu0 0
        %3065 = vmatprep.subr.bf16.mxu0 0
        %3066 = vmatpush1.bf16.msra.mxu0 0
        %3067 = vmatprep.subr.bf16.mxu0 0
        %3068 = vmatpush1.bf16.msra.mxu0 0
        %3069 = vmatprep.subr.bf16.mxu0 0
        %3070 = vmatpush1.bf16.msra.mxu0 0
        %3071 = vmatprep.subr.bf16.mxu0 0
        %3072 = vmatpush1.bf16.msra.mxu0 0
        %3073 = vmatprep.subr.bf16.mxu0 0
        %3074 = vmatpush1.bf16.msra.mxu0 0
        %3075 = vmatprep.subr.bf16.mxu0 0
        %3076 = vmatpush1.bf16.msra.mxu0 0
        %3077 = vmatprep.subr.bf16.mxu0 0
        %3078 = vmatpush1.bf16.msra.mxu0 0
        %3079 = vmatprep.subr.bf16.mxu0 0
        %3080 = vmatpush1.bf16.msra.mxu0 0
        %3081 = vmatprep.subr.bf16.mxu0 0
        %3082 = vmatpush1.bf16.msra.mxu0 0
        %3083 = vmatprep.subr.bf16.mxu0 0
        %3084 = vmatpush1.bf16.msra.mxu0 0
        %3085 = vmatprep.subr.bf16.mxu0 0
        %3086 = vmatpush1.bf16.msra.mxu0 0
        %3087 = vmatprep.subr.bf16.mxu0 0
        %3088 = vmatpush1.bf16.msra.mxu0 0
        %3089 = vmatprep.subr.bf16.mxu0 0
        %3090 = vmatpush1.bf16.msra.mxu0 0
        %3091 = vmatprep.subr.bf16.mxu0 0
        %3092 = vmatpush1.bf16.msra.mxu0 0
        %3093 = vmatprep.mubr.bf16.mxu0 0
        %3094 = vmatmul.mubr.bf16.gmra.mrb[0].mxu0 %v3059
        %v3095 = vpop.f32.mrb[0].mxu0
        %v3096 = vadd.f32 0.0, %v3095
        %v3097 = vpop.f32.mrb[0].mxu0
        %v3098 = vpop.f32.mrb[0].mxu0
        %v3099 = vadd.f32 0.0, %v3098
        %v3100 = vpop.f32.mrb[0].mxu0
        %3101 = vdwg.mxu0
        %3102 = vrot.lane.b32.xlu0 %v2186, 32
        %v3103 = vpop.permute.xlu0 %3102
        %v3106 = vsel %vm2282, %v3054, 0
        %3108 = vmatprep.subr.bf16.mxu0 0
        %3109 = vmatpush1.bf16.msra.mxu0 %v3103
        %3110 = vmatprep.subr.bf16.mxu0 0
        %3111 = vmatpush1.bf16.msra.mxu0 0
        %3112 = vmatprep.subr.bf16.mxu0 0
        %3113 = vmatpush1.bf16.msra.mxu0 0
        %3114 = vmatprep.subr.bf16.mxu0 0
        %3115 = vmatpush1.bf16.msra.mxu0 0
        %3116 = vmatprep.subr.bf16.mxu0 0
        %3117 = vmatpush1.bf16.msra.mxu0 0
        %3118 = vmatprep.subr.bf16.mxu0 0
        %3119 = vmatpush1.bf16.msra.mxu0 0
        %3120 = vmatprep.subr.bf16.mxu0 0
        %3121 = vmatpush1.bf16.msra.mxu0 0
        %3122 = vmatprep.subr.bf16.mxu0 0
        %3123 = vmatpush1.bf16.msra.mxu0 0
        %3124 = vmatprep.subr.bf16.mxu0 0
        %3125 = vmatpush1.bf16.msra.mxu0 0
        %3126 = vmatprep.subr.bf16.mxu0 0
        %3127 = vmatpush1.bf16.msra.mxu0 0
        %3128 = vmatprep.subr.bf16.mxu0 0
        %3129 = vmatpush1.bf16.msra.mxu0 0
        %3130 = vmatprep.subr.bf16.mxu0 0
        %3131 = vmatpush1.bf16.msra.mxu0 0
        %3132 = vmatprep.subr.bf16.mxu0 0
        %3133 = vmatpush1.bf16.msra.mxu0 0
        %3134 = vmatprep.subr.bf16.mxu0 0
        %3135 = vmatpush1.bf16.msra.mxu0 0
        %3136 = vmatprep.subr.bf16.mxu0 0
        %3137 = vmatpush1.bf16.msra.mxu0 0
        %3138 = vmatprep.subr.bf16.mxu0 0
        %3139 = vmatpush1.bf16.msra.mxu0 0
        %3140 = vmatprep.mubr.bf16.mxu0 0
        %3141 = vmatmul.mubr.bf16.gmra.mrb[0].mxu0 %v3106
        %v3142 = vpop.f32.mrb[0].mxu0
        %v3143 = vadd.f32 0.0, %v3142
        %v3144 = vpop.f32.mrb[0].mxu0
        %v3145 = vpop.f32.mrb[0].mxu0
        %v3146 = vadd.f32 0.0, %v3145
        %v3147 = vpop.f32.mrb[0].mxu0
        %3148 = vdwg.mxu0
        %3153 = vrot.lane.b32.xlu0 %v2611, 32
        %v3154 = vpop.permute.xlu0 %3153
        %3155 = vrot.lane.b32.xlu0 %v2614, 32
        %v3156 = vpop.permute.xlu0 %3155
        %3157 = vrot.lane.b32.xlu0 %v2659, 32
        %v3158 = vpop.permute.xlu0 %3157
        %3159 = vrot.lane.b32.xlu0 %v2662, 32
        %v3160 = vpop.permute.xlu0 %3159
        %3169 = vrot.lane.b32.xlu0 %v2854, 64
        %v3170 = vpop.permute.xlu0 %3169
        %3171 = vrot.lane.b32.xlu0 %v2857, 64
        %v3172 = vpop.permute.xlu0 %3171
        %3173 = vrot.lane.b32.xlu0 %v2901, 64
        %v3174 = vpop.permute.xlu0 %3173
        %3175 = vrot.lane.b32.xlu0 %v2904, 64
        %v3176 = vpop.permute.xlu0 %3175
        %3185 = vrot.lane.b32.xlu0 %v3096, 96
        %v3186 = vpop.permute.xlu0 %3185
        %3187 = vrot.lane.b32.xlu0 %v3099, 96
        %v3188 = vpop.permute.xlu0 %3187
        %3189 = vrot.lane.b32.xlu0 %v3143, 96
        %v3190 = vpop.permute.xlu0 %3189
        %3191 = vrot.lane.b32.xlu0 %v3146, 96
        %v3192 = vpop.permute.xlu0 %3191
        %v3197 = vsel %vm2187, %v2367, %v3154
        %v3198 = vsel %vm2187, %v2370, %v3156
        %v3199 = vsel %vm2187, %v2411, %v3158
        %v3200 = vsel %vm2187, %v2414, %v3160
        %vm3201 = vcmask 523264
        %v3202 = vsel %vm3201, %v3197, %v3170
        %v3203 = vsel %vm3201, %v3198, %v3172
        %v3204 = vsel %vm3201, %v3199, %v3174
        %v3205 = vsel %vm3201, %v3200, %v3176
        %vm3206 = vcmask 785408
        %v3207 = vsel %vm3206, %v3202, %v3186
        %v3208 = vsel %vm3206, %v3203, %v3188
        %v3209 = vsel %vm3206, %v3204, %v3190
        %v3210 = vsel %vm3206, %v3205, %v3192
        %v3211 = vpack.c.bf16 %v3208, %v3207
        %v3212 = vpack.c.bf16 %v3210, %v3209
        %v3229 = vunpack.c.l.b16 %v1652
        %v3230 = vunpack.c.l.b16 %v1653
        %v3231 = vunpack.c.l.b16 %v1654
        %v3232 = vunpack.c.l.b16 %v1655
        %v3233 = vunpack.c.l.b16 %v1656
        %v3234 = vunpack.c.l.b16 %v1657
        %v3235 = vunpack.c.l.b16 %v1658
        %v3236 = vunpack.c.l.b16 %v1659
        %v3237 = vunpack.c.l.b16 %v1660
        %v3238 = vunpack.c.l.b16 %v1661
        %v3239 = vunpack.c.l.b16 %v1662
        %v3240 = vunpack.c.l.b16 %v1663
        %v3241 = vunpack.c.l.b16 %v1664
        %v3242 = vunpack.c.l.b16 %v1665
        %v3243 = vunpack.c.l.b16 %v1666
        %v3244 = vunpack.c.l.b16 %v1667
        %v3245 = vpack.c.b16 %v3230, %v3229
        %v3246 = vpack.c.b16 %v3232, %v3231
        %v3247 = vpack.c.b16 %v3234, %v3233
        %v3248 = vpack.c.b16 %v3236, %v3235
        %v3249 = vpack.c.b16 %v3238, %v3237
        %v3250 = vpack.c.b16 %v3240, %v3239
        %v3251 = vpack.c.b16 %v3242, %v3241
        %v3252 = vpack.c.b16 %v3244, %v3243
        %3261 = vmatprep.subr.bf16.mxu0 0
        %3262 = vmatpush1.bf16.msra.mxu0 %v3245
        %3263 = vmatprep.subr.bf16.mxu0 0
        %3264 = vmatpush1.bf16.msra.mxu0 %v3246
        %3265 = vmatprep.subr.bf16.mxu0 0
        %3266 = vmatpush1.bf16.msra.mxu0 %v3247
        %3267 = vmatprep.subr.bf16.mxu0 0
        %3268 = vmatpush1.bf16.msra.mxu0 %v3248
        %3269 = vmatprep.subr.bf16.mxu0 0
        %3270 = vmatpush1.bf16.msra.mxu0 %v3249
        %3271 = vmatprep.subr.bf16.mxu0 0
        %3272 = vmatpush1.bf16.msra.mxu0 %v3250
        %3273 = vmatprep.subr.bf16.mxu0 0
        %3274 = vmatpush1.bf16.msra.mxu0 %v3251
        %3275 = vmatprep.subr.bf16.mxu0 0
        %3276 = vmatpush1.bf16.msra.mxu0 %v3252
        %3277 = vmatprep.subr.bf16.mxu0 0
        %3278 = vmatpush1.bf16.msra.mxu0 0
        %3279 = vmatprep.subr.bf16.mxu0 0
        %3280 = vmatpush1.bf16.msra.mxu0 0
        %3281 = vmatprep.subr.bf16.mxu0 0
        %3282 = vmatpush1.bf16.msra.mxu0 0
        %3283 = vmatprep.subr.bf16.mxu0 0
        %3284 = vmatpush1.bf16.msra.mxu0 0
        %3285 = vmatprep.subr.bf16.mxu0 0
        %3286 = vmatpush1.bf16.msra.mxu0 0
        %3287 = vmatprep.subr.bf16.mxu0 0
        %3288 = vmatpush1.bf16.msra.mxu0 0
        %3289 = vmatprep.subr.bf16.mxu0 0
        %3290 = vmatpush1.bf16.msra.mxu0 0
        %3291 = vmatprep.subr.bf16.mxu0 0
        %3292 = vmatpush1.bf16.msra.mxu0 0
        %3293 = vmatprep.mubr.bf16.mxu0 0
        %3294 = vmatmul.mubr.bf16.gmra.mrb[0].mxu0 %v3211
        %v3295 = vpop.f32.mrb[0].mxu0
        %v3296 = vadd.f32 0.0, %v3295
        %v3297 = vpop.f32.mrb[0].mxu0
        %v3298 = vpop.f32.mrb[0].mxu0
        %v3299 = vadd.f32 0.0, %v3298
        %v3300 = vpop.f32.mrb[0].mxu0
        %3301 = vmatprep.mubr.bf16.mxu0 0
        %3302 = vmatmul.mubr.bf16.gmra.mrb[0].mxu0 %v3212
        %v3303 = vpop.f32.mrb[0].mxu0
        %v3304 = vadd.f32 0.0, %v3303
        %v3305 = vpop.f32.mrb[0].mxu0
        %v3306 = vpop.f32.mrb[0].mxu0
        %v3307 = vadd.f32 0.0, %v3306
        %v3308 = vpop.f32.mrb[0].mxu0
        %3309 = vdwg.mxu0
        %v3310 = vadd.f32 %v1826, %v3296
        %v3311 = vadd.f32 %v1827, %v3299
        %v3312 = vadd.f32 %v1828, %v3304
        %v3313 = vadd.f32 %v1829, %v3307
        %v3315 = vlaneseq
        %v3316 = vshrl.u32 %v3315, 7
        %v3317 = vsub.s32 0, %v3316
        %v3318 = vrot.slane %v1668, %v3317
        %v3320 = vadd.f32 %v3310, %v3318
        %v3321 = vadd.f32 %v3311, %v3318
        %v3322 = vadd.f32 %v3312, %v3318
        %v3323 = vadd.f32 %v3313, %v3318
        %3324 = vadd.xlane.f32.xlu0 %v3320
        %v3325 = vpop.xlane.xlu0 %3324
        %3326 = vadd.xlane.f32.xlu0 %v3321
        %v3327 = vpop.xlane.xlu0 %3326
        %3328 = vadd.xlane.f32.xlu0 %v3322
        %v3329 = vpop.xlane.xlu0 %3328
        %3330 = vadd.xlane.f32.xlu0 %v3323
        %v3331 = vpop.xlane.xlu0 %3330
        %v3332 = vmul.f32 %v3325, %v1844
        %v3333 = vmul.f32 %v3327, %v1844
        %v3334 = vmul.f32 %v3329, %v1844
        %v3335 = vmul.f32 %v3331, %v1844
        %v3336 = vsub.f32 %v3320, %v3332
        %v3337 = vsub.f32 %v3321, %v3333
        %v3338 = vsub.f32 %v3322, %v3334
        %v3339 = vsub.f32 %v3323, %v3335
        %v3340 = vmul.f32 %v3336, %v3336
        %v3341 = vmul.f32 %v3337, %v3337
        %v3342 = vmul.f32 %v3338, %v3338
        %v3343 = vmul.f32 %v3339, %v3339
        %3344 = vadd.xlane.f32.xlu0 %v3340
        %v3345 = vpop.xlane.xlu0 %3344
        %3346 = vadd.xlane.f32.xlu0 %v3341
        %v3347 = vpop.xlane.xlu0 %3346
        %3348 = vadd.xlane.f32.xlu0 %v3342
        %v3349 = vpop.xlane.xlu0 %3348
        %3350 = vadd.xlane.f32.xlu0 %v3343
        %v3351 = vpop.xlane.xlu0 %3350
        %v3352 = vmul.f32 %v3345, 0.007874016
        %v3353 = vmul.f32 %v3347, 0.007874016
        %v3354 = vmul.f32 %v3349, 0.007874016
        %v3355 = vmul.f32 %v3351, 0.007874016
        %v3356 = vrsqrt.pop %v3352
        %v3357 = vmul.f32 %v3352, %v3356
        %vm3358 = vcmp.eq.f32.partialorder %v3352, inf
        %v3359 = vsel %vm3358, %v3352, %v3357
        %vm3360 = vcmp.eq.f32.partialorder %v3352, 0.0
        %v3361 = vand.u32 %v3352, 2147483648
        %v3362 = vsel %vm3360, %v3361, %v3359
        %v3363 = vrsqrt.pop %v3353
        %v3364 = vmul.f32 %v3353, %v3363
        %vm3365 = vcmp.eq.f32.partialorder %v3353, inf
        %v3366 = vsel %vm3365, %v3353, %v3364
        %vm3367 = vcmp.eq.f32.partialorder %v3353, 0.0
        %v3368 = vand.u32 %v3353, 2147483648
        %v3369 = vsel %vm3367, %v3368, %v3366
        %v3370 = vrsqrt.pop %v3354
        %v3371 = vmul.f32 %v3354, %v3370
        %vm3372 = vcmp.eq.f32.partialorder %v3354, inf
        %v3373 = vsel %vm3372, %v3354, %v3371
        %vm3374 = vcmp.eq.f32.partialorder %v3354, 0.0
        %v3375 = vand.u32 %v3354, 2147483648
        %v3376 = vsel %vm3374, %v3375, %v3373
        %v3377 = vrsqrt.pop %v3355
        %v3378 = vmul.f32 %v3355, %v3377
        %vm3379 = vcmp.eq.f32.partialorder %v3355, inf
        %v3380 = vsel %vm3379, %v3355, %v3378
        %vm3381 = vcmp.eq.f32.partialorder %v3355, 0.0
        %v3382 = vand.u32 %v3355, 2147483648
        %v3383 = vsel %vm3381, %v3382, %v3380
        %v3385 = vlaneseq
        %v3386 = vshrl.u32 %v3385, 7
        %v3387 = vsub.s32 0, %v3386
        %v3388 = vrot.slane %v1669, %v3387
        %v3390 = vmul.f32 %v3388, %v3336
        %v3391 = vmul.f32 %v3388, %v3337
        %v3392 = vmul.f32 %v3388, %v3338
        %v3393 = vmul.f32 %v3388, %v3339
        %v3394 = vadd.f32 %v3362, 1e-05
        %v3395 = vadd.f32 %v3369, 1e-05
        %v3396 = vadd.f32 %v3376, 1e-05
        %v3397 = vadd.f32 %v3383, 1e-05
        %v3398 = vrcp.pop %v3394
        %v3399 = vmul.f32 %v3390, %v3398
        %v3400 = vrcp.pop %v3395
        %v3401 = vmul.f32 %v3391, %v3400
        %v3402 = vrcp.pop %v3396
        %v3403 = vmul.f32 %v3392, %v3402
        %v3404 = vrcp.pop %v3397
        %v3405 = vmul.f32 %v3393, %v3404
        %v3407 = vlaneseq
        %v3408 = vshrl.u32 %v3407, 7
        %v3409 = vsub.s32 0, %v3408
        %v3410 = vrot.slane %v1670, %v3409
        %v3412 = vadd.f32 %v3399, %v3410
        %v3413 = vadd.f32 %v3401, %v3410
        %v3414 = vadd.f32 %v3403, %v3410
        %v3415 = vadd.f32 %v3405, %v3410
        %v3416 = vpack.c.bf16 %v3413, %v3412
        %v3417 = vpack.c.bf16 %v3415, %v3414
        %v3419 = vlaneseq
        %v3420 = vshrl.u32 %v3419, 7
        %v3421 = vsub.s32 0, %v3420
        %v3422 = vrot.slane %v1687, %v3421
        %v3440 = vunpack.c.l.b16 %v1671
        %v3441 = vunpack.c.l.b16 %v1672
        %v3442 = vunpack.c.l.b16 %v1673
        %v3443 = vunpack.c.l.b16 %v1674
        %v3444 = vunpack.c.l.b16 %v1675
        %v3445 = vunpack.c.l.b16 %v1676
        %v3446 = vunpack.c.l.b16 %v1677
        %v3447 = vunpack.c.l.b16 %v1678
        %v3448 = vunpack.c.l.b16 %v1679
        %v3449 = vunpack.c.l.b16 %v1680
        %v3450 = vunpack.c.l.b16 %v1681
        %v3451 = vunpack.c.l.b16 %v1682
        %v3452 = vunpack.c.l.b16 %v1683
        %v3453 = vunpack.c.l.b16 %v1684
        %v3454 = vunpack.c.l.b16 %v1685
        %v3455 = vunpack.c.l.b16 %v1686
        %v3456 = vpack.c.b16 %v3441, %v3440
        %v3457 = vpack.c.b16 %v3443, %v3442
        %v3458 = vpack.c.b16 %v3445, %v3444
        %v3459 = vpack.c.b16 %v3447, %v3446
        %v3460 = vpack.c.b16 %v3449, %v3448
        %v3461 = vpack.c.b16 %v3451, %v3450
        %v3462 = vpack.c.b16 %v3453, %v3452
        %v3463 = vpack.c.b16 %v3455, %v3454
        %3472 = vmatprep.subr.bf16.mxu0 0
        %3473 = vmatpush1.bf16.msra.mxu0 %v3456
        %3474 = vmatprep.subr.bf16.mxu0 0
        %3475 = vmatpush1.bf16.msra.mxu0 %v3457
        %3476 = vmatprep.subr.bf16.mxu0 0
        %3477 = vmatpush1.bf16.msra.mxu0 %v3458
        %3478 = vmatprep.subr.bf16.mxu0 0
        %3479 = vmatpush1.bf16.msra.mxu0 %v3459
        %3480 = vmatprep.subr.bf16.mxu0 0
        %3481 = vmatpush1.bf16.msra.mxu0 %v3460
        %3482 = vmatprep.subr.bf16.mxu0 0
        %3483 = vmatpush1.bf16.msra.mxu0 %v3461
        %3484 = vmatprep.subr.bf16.mxu0 0
        %3485 = vmatpush1.bf16.msra.mxu0 %v3462
        %3486 = vmatprep.subr.bf16.mxu0 0
        %3487 = vmatpush1.bf16.msra.mxu0 %v3463
        %3488 = vmatprep.subr.bf16.mxu0 0
        %3489 = vmatpush1.bf16.msra.mxu0 0
        %3490 = vmatprep.subr.bf16.mxu0 0
        %3491 = vmatpush1.bf16.msra.mxu0 0
        %3492 = vmatprep.subr.bf16.mxu0 0
        %3493 = vmatpush1.bf16.msra.mxu0 0
        %3494 = vmatprep.subr.bf16.mxu0 0
        %3495 = vmatpush1.bf16.msra.mxu0 0
        %3496 = vmatprep.subr.bf16.mxu0 0
        %3497 = vmatpush1.bf16.msra.mxu0 0
        %3498 = vmatprep.subr.bf16.mxu0 0
        %3499 = vmatpush1.bf16.msra.mxu0 0
        %3500 = vmatprep.subr.bf16.mxu0 0
        %3501 = vmatpush1.bf16.msra.mxu0 0
        %3502 = vmatprep.subr.bf16.mxu0 0
        %3503 = vmatpush1.bf16.msra.mxu0 0
        %3504 = vmatprep.mubr.bf16.mxu0 0
        %3505 = vmatmul.mubr.bf16.gmra.mrb[0].mxu0 %v3416
        %v3506 = vpop.f32.mrb[0].mxu0
        %v3507 = vadd.f32 %v3422, %v3506
        %v3508 = vpop.f32.mrb[0].mxu0
        %v3509 = vpop.f32.mrb[0].mxu0
        %v3510 = vadd.f32 %v3422, %v3509
        %v3511 = vpop.f32.mrb[0].mxu0
        %3512 = vmatprep.mubr.bf16.mxu0 0
        %3513 = vmatmul.mubr.bf16.gmra.mrb[0].mxu0 %v3417
        %v3514 = vpop.f32.mrb[0].mxu0
        %v3515 = vadd.f32 %v3422, %v3514
        %v3516 = vpop.f32.mrb[0].mxu0
        %v3517 = vpop.f32.mrb[0].mxu0
        %v3518 = vadd.f32 %v3422, %v3517
        %v3519 = vpop.f32.mrb[0].mxu0
        %3520 = vdwg.mxu0
        %v3522 = vlaneseq
        %v3523 = vshrl.u32 %v3522, 7
        %v3524 = vsub.s32 0, %v3523
        %v3525 = vrot.slane %v1704, %v3524
        %v3526 = vlaneseq
        %v3527 = vshrl.u32 %v3526, 7
        %v3528 = vsub.s32 1, %v3527
        %v3529 = vrot.slane %v1704, %v3528
        %v3536 = vunpack.c.l.b16 %v1822
        %v3537 = vunpack.c.l.b16 %v1823
        %v3538 = vunpack.c.l.b16 %v1824
        %v3539 = vunpack.c.l.b16 %v1825
        %v3540 = vpack.c.b16 %v3537, %v3536
        %v3541 = vpack.c.b16 %v3539, %v3538
        %v3560 = vunpack.c.l.b16 %v1688
        %v3561 = vunpack.c.h.b16 %v1688
        %v3562 = vunpack.c.l.b16 %v1689
        %v3563 = vunpack.c.h.b16 %v1689
        %v3564 = vunpack.c.l.b16 %v1690
        %v3565 = vunpack.c.h.b16 %v1690
        %v3566 = vunpack.c.l.b16 %v1691
        %v3567 = vunpack.c.h.b16 %v1691
        %v3568 = vunpack.c.l.b16 %v1692
        %v3569 = vunpack.c.h.b16 %v1692
        %v3570 = vunpack.c.l.b16 %v1693
        %v3571 = vunpack.c.h.b16 %v1693
        %v3572 = vunpack.c.l.b16 %v1694
        %v3573 = vunpack.c.h.b16 %v1694
        %v3574 = vunpack.c.l.b16 %v1695
        %v3575 = vunpack.c.h.b16 %v1695
        %v3576 = vunpack.c.l.b16 %v1696
        %v3577 = vunpack.c.h.b16 %v1696
        %v3578 = vunpack.c.l.b16 %v1697
        %v3579 = vunpack.c.h.b16 %v1697
        %v3580 = vunpack.c.l.b16 %v1698
        %v3581 = vunpack.c.h.b16 %v1698
        %v3582 = vunpack.c.l.b16 %v1699
        %v3583 = vunpack.c.h.b16 %v1699
        %v3584 = vunpack.c.l.b16 %v1700
        %v3585 = vunpack.c.h.b16 %v1700
        %v3586 = vunpack.c.l.b16 %v1701
        %v3587 = vunpack.c.h.b16 %v1701
        %v3588 = vunpack.c.l.b16 %v1702
        %v3589 = vunpack.c.h.b16 %v1702
        %v3590 = vunpack.c.l.b16 %v1703
        %v3591 = vunpack.c.h.b16 %v1703
        %v3592 = vpack.c.b16 %v3562, %v3560
        %v3593 = vpack.c.b16 %v3563, %v3561
        %v3594 = vpack.c.b16 %v3566, %v3564
        %v3595 = vpack.c.b16 %v3567, %v3565
        %v3596 = vpack.c.b16 %v3570, %v3568
        %v3597 = vpack.c.b16 %v3571, %v3569
        %v3598 = vpack.c.b16 %v3574, %v3572
        %v3599 = vpack.c.b16 %v3575, %v3573
        %v3600 = vpack.c.b16 %v3578, %v3576
        %v3601 = vpack.c.b16 %v3579, %v3577
        %v3602 = vpack.c.b16 %v3582, %v3580
        %v3603 = vpack.c.b16 %v3583, %v3581
        %v3604 = vpack.c.b16 %v3586, %v3584
        %v3605 = vpack.c.b16 %v3587, %v3585
        %v3606 = vpack.c.b16 %v3590, %v3588
        %v3607 = vpack.c.b16 %v3591, %v3589
        %3624 = vmatprep.subr.bf16.mxu0 %v3593
        %3625 = vmatpush1.bf16.msra.mxu0 %v3592
        %3626 = vmatprep.subr.bf16.mxu0 %v3595
        %3627 = vmatpush1.bf16.msra.mxu0 %v3594
        %3628 = vmatprep.subr.bf16.mxu0 %v3597
        %3629 = vmatpush1.bf16.msra.mxu0 %v3596
        %3630 = vmatprep.subr.bf16.mxu0 %v3599
        %3631 = vmatpush1.bf16.msra.mxu0 %v3598
        %3632 = vmatprep.subr.bf16.mxu0 %v3601
        %3633 = vmatpush1.bf16.msra.mxu0 %v3600
        %3634 = vmatprep.subr.bf16.mxu0 %v3603
        %3635 = vmatpush1.bf16.msra.mxu0 %v3602
        %3636 = vmatprep.subr.bf16.mxu0 %v3605
        %3637 = vmatpush1.bf16.msra.mxu0 %v3604
        %3638 = vmatprep.subr.bf16.mxu0 %v3607
        %3639 = vmatpush1.bf16.msra.mxu0 %v3606
        %3640 = vmatprep.subr.bf16.mxu0 0
        %3641 = vmatpush1.bf16.msra.mxu0 0
        %3642 = vmatprep.subr.bf16.mxu0 0
        %3643 = vmatpush1.bf16.msra.mxu0 0
        %3644 = vmatprep.subr.bf16.mxu0 0
        %3645 = vmatpush1.bf16.msra.mxu0 0
        %3646 = vmatprep.subr.bf16.mxu0 0
        %3647 = vmatpush1.bf16.msra.mxu0 0
        %3648 = vmatprep.subr.bf16.mxu0 0
        %3649 = vmatpush1.bf16.msra.mxu0 0
        %3650 = vmatprep.subr.bf16.mxu0 0
        %3651 = vmatpush1.bf16.msra.mxu0 0
        %3652 = vmatprep.subr.bf16.mxu0 0
        %3653 = vmatpush1.bf16.msra.mxu0 0
        %3654 = vmatprep.subr.bf16.mxu0 0
        %3655 = vmatpush1.bf16.msra.mxu0 0
        %3656 = vmatprep.mubr.bf16.mxu0 0
        %3657 = vmatmul.mubr.bf16.gmra.mrb[0].mxu0 %v3540
        %v3658 = vpop.f32.mrb[0].mxu0
        %v3659 = vadd.f32 %v3525, %v3658
        %v3660 = vpop.f32.mrb[0].mxu0
        %v3661 = vadd.f32 %v3529, %v3660
        %v3662 = vpop.f32.mrb[0].mxu0
        %v3663 = vadd.f32 %v3525, %v3662
        %v3664 = vpop.f32.mrb[0].mxu0
        %v3665 = vadd.f32 %v3529, %v3664
        %3666 = vmatprep.mubr.bf16.mxu0 0
        %3667 = vmatmul.mubr.bf16.gmra.mrb[0].mxu0 %v3541
        %v3668 = vpop.f32.mrb[0].mxu0
        %v3669 = vadd.f32 %v3525, %v3668
        %v3670 = vpop.f32.mrb[0].mxu0
        %v3671 = vadd.f32 %v3529, %v3670
        %v3672 = vpop.f32.mrb[0].mxu0
        %v3673 = vadd.f32 %v3525, %v3672
        %v3674 = vpop.f32.mrb[0].mxu0
        %v3675 = vadd.f32 %v3529, %v3674
        %3676 = vdwg.mxu0
        %v3677 = vmul.f32 %v3507, 0.17677669
        %v3678 = vmul.f32 %v3510, 0.17677669
        %v3679 = vmul.f32 %v3515, 0.17677669
        %v3680 = vmul.f32 %v3518, 0.17677669
        %v3681 = vpack.c.bf16 %v3678, %v3677
        %v3682 = vpack.c.bf16 %v3680, %v3679
        %v3683 = vpack.c.bf16 %v3663, %v3659
        %v3684 = vpack.c.bf16 %v3673, %v3669
        %v3685 = vpack.c.bf16 %v3665, %v3661
        %v3686 = vpack.c.bf16 %v3675, %v3671
        %v3688 = vsel %vm2187, %v3681, 0
        %v3691 = vsel %vm2187, %v3683, 0
        %3693 = vmatprep.subr.bf16.mxu0 0
        %3694 = vmatpush1.bf16.xpose.msra.mxu0 %v3691
        %3695 = vmatprep.subr.bf16.mxu0 0
        %3696 = vmatpush1.bf16.xpose.msra.mxu0 0
        %3697 = vmatprep.subr.bf16.mxu0 0
        %3698 = vmatpush1.bf16.xpose.msra.mxu0 0
        %3699 = vmatprep.subr.bf16.mxu0 0
        %3700 = vmatpush1.bf16.xpose.msra.mxu0 0
        %3701 = vmatprep.subr.bf16.mxu0 0
        %3702 = vmatpush1.bf16.xpose.msra.mxu0 0
        %3703 = vmatprep.subr.bf16.mxu0 0
        %3704 = vmatpush1.bf16.xpose.msra.mxu0 0
        %3705 = vmatprep.subr.bf16.mxu0 0
        %3706 = vmatpush1.bf16.xpose.msra.mxu0 0
        %3707 = vmatprep.subr.bf16.mxu0 0
        %3708 = vmatpush1.bf16.xpose.msra.mxu0 0
        %3709 = vmatprep.subr.bf16.mxu0 0
        %3710 = vmatpush1.bf16.xpose.msra.mxu0 0
        %3711 = vmatprep.subr.bf16.mxu0 0
        %3712 = vmatpush1.bf16.xpose.msra.mxu0 0
        %3713 = vmatprep.subr.bf16.mxu0 0
        %3714 = vmatpush1.bf16.xpose.msra.mxu0 0
        %3715 = vmatprep.subr.bf16.mxu0 0
        %3716 = vmatpush1.bf16.xpose.msra.mxu0 0
        %3717 = vmatprep.subr.bf16.mxu0 0
        %3718 = vmatpush1.bf16.xpose.msra.mxu0 0
        %3719 = vmatprep.subr.bf16.mxu0 0
        %3720 = vmatpush1.bf16.xpose.msra.mxu0 0
        %3721 = vmatprep.subr.bf16.mxu0 0
        %3722 = vmatpush1.bf16.xpose.msra.mxu0 0
        %3723 = vmatprep.subr.bf16.mxu0 0
        %3724 = vmatpush1.bf16.xpose.msra.mxu0 0
        %3725 = vmatprep.mubr.bf16.mxu0 0
        %3726 = vmatmul.mubr.bf16.gmra.mrb[0].mxu0 %v3688
        %v3727 = vpop.f32.mrb[0].mxu0
        %v3728 = vadd.f32 %v1832, %v3727
        %v3729 = vpop.f32.mrb[0].mxu0
        %v3730 = vpop.f32.mrb[0].mxu0
        %v3731 = vadd.f32 %v1833, %v3730
        %v3732 = vpop.f32.mrb[0].mxu0
        %3733 = vdwg.mxu0
        %v3735 = vsel %vm2187, %v3682, 0
        %v3738 = vsel %vm2187, %v3684, 0
        %3740 = vmatprep.subr.bf16.mxu0 0
        %3741 = vmatpush1.bf16.xpose.msra.mxu0 %v3738
        %3742 = vmatprep.subr.bf16.mxu0 0
        %3743 = vmatpush1.bf16.xpose.msra.mxu0 0
        %3744 = vmatprep.subr.bf16.mxu0 0
        %3745 = vmatpush1.bf16.xpose.msra.mxu0 0
        %3746 = vmatprep.subr.bf16.mxu0 0
        %3747 = vmatpush1.bf16.xpose.msra.mxu0 0
        %3748 = vmatprep.subr.bf16.mxu0 0
        %3749 = vmatpush1.bf16.xpose.msra.mxu0 0
        %3750 = vmatprep.subr.bf16.mxu0 0
        %3751 = vmatpush1.bf16.xpose.msra.mxu0 0
        %3752 = vmatprep.subr.bf16.mxu0 0
        %3753 = vmatpush1.bf16.xpose.msra.mxu0 0
        %3754 = vmatprep.subr.bf16.mxu0 0
        %3755 = vmatpush1.bf16.xpose.msra.mxu0 0
        %3756 = vmatprep.subr.bf16.mxu0 0
        %3757 = vmatpush1.bf16.xpose.msra.mxu0 0
        %3758 = vmatprep.subr.bf16.mxu0 0
        %3759 = vmatpush1.bf16.xpose.msra.mxu0 0
        %3760 = vmatprep.subr.bf16.mxu0 0
        %3761 = vmatpush1.bf16.xpose.msra.mxu0 0
        %3762 = vmatprep.subr.bf16.mxu0 0
        %3763 = vmatpush1.bf16.xpose.msra.mxu0 0
        %3764 = vmatprep.subr.bf16.mxu0 0
        %3765 = vmatpush1.bf16.xpose.msra.mxu0 0
        %3766 = vmatprep.subr.bf16.mxu0 0
        %3767 = vmatpush1.bf16.xpose.msra.mxu0 0
        %3768 = vmatprep.subr.bf16.mxu0 0
        %3769 = vmatpush1.bf16.xpose.msra.mxu0 0
        %3770 = vmatprep.subr.bf16.mxu0 0
        %3771 = vmatpush1.bf16.xpose.msra.mxu0 0
        %3772 = vmatprep.mubr.bf16.mxu0 0
        %3773 = vmatmul.mubr.bf16.gmra.mrb[0].mxu0 %v3735
        %v3774 = vpop.f32.mrb[0].mxu0
        %v3775 = vadd.f32 %v1834, %v3774
        %v3776 = vpop.f32.mrb[0].mxu0
        %v3777 = vpop.f32.mrb[0].mxu0
        %v3778 = vadd.f32 %v1835, %v3777
        %v3779 = vpop.f32.mrb[0].mxu0
        %3780 = vdwg.mxu0
        %v3781 = vsel %vm2282, %v3728, -inf
        %3782 = vmax.xlane.f32.xlu0 %v3781
        %v3783 = vpop.xlane.xlu0 %3782
        %v3784 = vsel %vm2282, %v3731, -inf
        %3785 = vmax.xlane.f32.xlu0 %v3784
        %v3786 = vpop.xlane.xlu0 %3785
        %v3787 = vsel %vm2282, %v3775, -inf
        %3788 = vmax.xlane.f32.xlu0 %v3787
        %v3789 = vpop.xlane.xlu0 %3788
        %v3790 = vsel %vm2282, %v3778, -inf
        %3791 = vmax.xlane.f32.xlu0 %v3790
        %v3792 = vpop.xlane.xlu0 %3791
        %v3793 = vsub.f32 %v3728, %v3783
        %v3794 = vsub.f32 %v3731, %v3786
        %v3795 = vsub.f32 %v3775, %v3789
        %v3796 = vsub.f32 %v3778, %v3792
        %v3797 = vmul.f32 %v3793, 1.442695
        %v3798 = vpow.pop %v3797
        %v3799 = vmul.f32 %v3794, 1.442695
        %v3800 = vpow.pop %v3799
        %v3801 = vmul.f32 %v3795, 1.442695
        %v3802 = vpow.pop %v3801
        %v3803 = vmul.f32 %v3796, 1.442695
        %v3804 = vpow.pop %v3803
        %v3805 = vsel %vm2282, %v3798, 0.0
        %3806 = vadd.xlane.f32.xlu0 %v3805
        %v3807 = vpop.xlane.xlu0 %3806
        %v3808 = vsel %vm2282, %v3800, 0.0
        %3809 = vadd.xlane.f32.xlu0 %v3808
        %v3810 = vpop.xlane.xlu0 %3809
        %v3811 = vsel %vm2282, %v3802, 0.0
        %3812 = vadd.xlane.f32.xlu0 %v3811
        %v3813 = vpop.xlane.xlu0 %3812
        %v3814 = vsel %vm2282, %v3804, 0.0
        %3815 = vadd.xlane.f32.xlu0 %v3814
        %v3816 = vpop.xlane.xlu0 %3815
        %v3817 = vrcp.pop %v3807
        %v3818 = vrcp.pop %v3810
        %v3819 = vrcp.pop %v3813
        %v3820 = vrcp.pop %v3816
        %v3821 = vmul.f32 %v3798, %v3817
        %v3822 = vmul.f32 %v3800, %v3818
        %v3823 = vmul.f32 %v3802, %v3819
        %v3824 = vmul.f32 %v3804, %v3820
        %v3825 = vpack.c.bf16 %v3822, %v3821
        %v3826 = vpack.c.bf16 %v3824, %v3823
        %v3828 = vsel %vm2282, %v3825, 0
        %3830 = vmatprep.subr.bf16.mxu0 0
        %3831 = vmatpush1.bf16.msra.mxu0 %v3685
        %3832 = vmatprep.subr.bf16.mxu0 0
        %3833 = vmatpush1.bf16.msra.mxu0 0
        %3834 = vmatprep.subr.bf16.mxu0 0
        %3835 = vmatpush1.bf16.msra.mxu0 0
        %3836 = vmatprep.subr.bf16.mxu0 0
        %3837 = vmatpush1.bf16.msra.mxu0 0
        %3838 = vmatprep.subr.bf16.mxu0 0
        %3839 = vmatpush1.bf16.msra.mxu0 0
        %3840 = vmatprep.subr.bf16.mxu0 0
        %3841 = vmatpush1.bf16.msra.mxu0 0
        %3842 = vmatprep.subr.bf16.mxu0 0
        %3843 = vmatpush1.bf16.msra.mxu0 0
        %3844 = vmatprep.subr.bf16.mxu0 0
        %3845 = vmatpush1.bf16.msra.mxu0 0
        %3846 = vmatprep.subr.bf16.mxu0 0
        %3847 = vmatpush1.bf16.msra.mxu0 0
        %3848 = vmatprep.subr.bf16.mxu0 0
        %3849 = vmatpush1.bf16.msra.mxu0 0
        %3850 = vmatprep.subr.bf16.mxu0 0
        %3851 = vmatpush1.bf16.msra.mxu0 0
        %3852 = vmatprep.subr.bf16.mxu0 0
        %3853 = vmatpush1.bf16.msra.mxu0 0
        %3854 = vmatprep.subr.bf16.mxu0 0
        %3855 = vmatpush1.bf16.msra.mxu0 0
        %3856 = vmatprep.subr.bf16.mxu0 0
        %3857 = vmatpush1.bf16.msra.mxu0 0
        %3858 = vmatprep.subr.bf16.mxu0 0
        %3859 = vmatpush1.bf16.msra.mxu0 0
        %3860 = vmatprep.subr.bf16.mxu0 0
        %3861 = vmatpush1.bf16.msra.mxu0 0
        %3862 = vmatprep.mubr.bf16.mxu0 0
        %3863 = vmatmul.mubr.bf16.gmra.mrb[0].mxu0 %v3828
        %v3864 = vpop.f32.mrb[0].mxu0
        %v3865 = vadd.f32 0.0, %v3864
        %v3866 = vpop.f32.mrb[0].mxu0
        %v3867 = vpop.f32.mrb[0].mxu0
        %v3868 = vadd.f32 0.0, %v3867
        %v3869 = vpop.f32.mrb[0].mxu0
        %3870 = vdwg.mxu0
        %v3872 = vsel %vm2282, %v3826, 0
        %3874 = vmatprep.subr.bf16.mxu0 0
        %3875 = vmatpush1.bf16.msra.mxu0 %v3686
        %3876 = vmatprep.subr.bf16.mxu0 0
        %3877 = vmatpush1.bf16.msra.mxu0 0
        %3878 = vmatprep.subr.bf16.mxu0 0
        %3879 = vmatpush1.bf16.msra.mxu0 0
        %3880 = vmatprep.subr.bf16.mxu0 0
        %3881 = vmatpush1.bf16.msra.mxu0 0
        %3882 = vmatprep.subr.bf16.mxu0 0
        %3883 = vmatpush1.bf16.msra.mxu0 0
        %3884 = vmatprep.subr.bf16.mxu0 0
        %3885 = vmatpush1.bf16.msra.mxu0 0
        %3886 = vmatprep.subr.bf16.mxu0 0
        %3887 = vmatpush1.bf16.msra.mxu0 0
        %3888 = vmatprep.subr.bf16.mxu0 0
        %3889 = vmatpush1.bf16.msra.mxu0 0
        %3890 = vmatprep.subr.bf16.mxu0 0
        %3891 = vmatpush1.bf16.msra.mxu0 0
        %3892 = vmatprep.subr.bf16.mxu0 0
        %3893 = vmatpush1.bf16.msra.mxu0 0
        %3894 = vmatprep.subr.bf16.mxu0 0
        %3895 = vmatpush1.bf16.msra.mxu0 0
        %3896 = vmatprep.subr.bf16.mxu0 0
        %3897 = vmatpush1.bf16.msra.mxu0 0
        %3898 = vmatprep.subr.bf16.mxu0 0
        %3899 = vmatpush1.bf16.msra.mxu0 0
        %3900 = vmatprep.subr.bf16.mxu0 0
        %3901 = vmatpush1.bf16.msra.mxu0 0
        %3902 = vmatprep.subr.bf16.mxu0 0
        %3903 = vmatpush1.bf16.msra.mxu0 0
        %3904 = vmatprep.subr.bf16.mxu0 0
        %3905 = vmatpush1.bf16.msra.mxu0 0
        %3906 = vmatprep.mubr.bf16.mxu0 0
        %3907 = vmatmul.mubr.bf16.gmra.mrb[0].mxu0 %v3872
        %v3908 = vpop.f32.mrb[0].mxu0
        %v3909 = vadd.f32 0.0, %v3908
        %v3910 = vpop.f32.mrb[0].mxu0
        %v3911 = vpop.f32.mrb[0].mxu0
        %v3912 = vadd.f32 0.0, %v3911
        %v3913 = vpop.f32.mrb[0].mxu0
        %3914 = vdwg.mxu0
        %3916 = vrot.lane.b32.xlu0 %v3681, 96
        %v3917 = vpop.permute.xlu0 %3916
        %3919 = vrot.lane.b32.xlu0 %v3683, 96
        %v3920 = vpop.permute.xlu0 %3919
        %v3922 = vsel %vm2187, %v3917, 0
        %v3925 = vsel %vm2187, %v3920, 0
        %3927 = vmatprep.subr.bf16.mxu0 0
        %3928 = vmatpush1.bf16.xpose.msra.mxu0 %v3925
        %3929 = vmatprep.subr.bf16.mxu0 0
        %3930 = vmatpush1.bf16.xpose.msra.mxu0 0
        %3931 = vmatprep.subr.bf16.mxu0 0
        %3932 = vmatpush1.bf16.xpose.msra.mxu0 0
        %3933 = vmatprep.subr.bf16.mxu0 0
        %3934 = vmatpush1.bf16.xpose.msra.mxu0 0
        %3935 = vmatprep.subr.bf16.mxu0 0
        %3936 = vmatpush1.bf16.xpose.msra.mxu0 0
        %3937 = vmatprep.subr.bf16.mxu0 0
        %3938 = vmatpush1.bf16.xpose.msra.mxu0 0
        %3939 = vmatprep.subr.bf16.mxu0 0
        %3940 = vmatpush1.bf16.xpose.msra.mxu0 0
        %3941 = vmatprep.subr.bf16.mxu0 0
        %3942 = vmatpush1.bf16.xpose.msra.mxu0 0
        %3943 = vmatprep.subr.bf16.mxu0 0
        %3944 = vmatpush1.bf16.xpose.msra.mxu0 0
        %3945 = vmatprep.subr.bf16.mxu0 0
        %3946 = vmatpush1.bf16.xpose.msra.mxu0 0
        %3947 = vmatprep.subr.bf16.mxu0 0
        %3948 = vmatpush1.bf16.xpose.msra.mxu0 0
        %3949 = vmatprep.subr.bf16.mxu0 0
        %3950 = vmatpush1.bf16.xpose.msra.mxu0 0
        %3951 = vmatprep.subr.bf16.mxu0 0
        %3952 = vmatpush1.bf16.xpose.msra.mxu0 0
        %3953 = vmatprep.subr.bf16.mxu0 0
        %3954 = vmatpush1.bf16.xpose.msra.mxu0 0
        %3955 = vmatprep.subr.bf16.mxu0 0
        %3956 = vmatpush1.bf16.xpose.msra.mxu0 0
        %3957 = vmatprep.subr.bf16.mxu0 0
        %3958 = vmatpush1.bf16.xpose.msra.mxu0 0
        %3959 = vmatprep.mubr.bf16.mxu0 0
        %3960 = vmatmul.mubr.bf16.gmra.mrb[0].mxu0 %v3922
        %v3961 = vpop.f32.mrb[0].mxu0
        %v3962 = vadd.f32 %v1832, %v3961
        %v3963 = vpop.f32.mrb[0].mxu0
        %v3964 = vpop.f32.mrb[0].mxu0
        %v3965 = vadd.f32 %v1833, %v3964
        %v3966 = vpop.f32.mrb[0].mxu0
        %3967 = vdwg.mxu0
        %3969 = vrot.lane.b32.xlu0 %v3682, 96
        %v3970 = vpop.permute.xlu0 %3969
        %3972 = vrot.lane.b32.xlu0 %v3684, 96
        %v3973 = vpop.permute.xlu0 %3972
        %v3975 = vsel %vm2187, %v3970, 0
        %v3978 = vsel %vm2187, %v3973, 0
        %3980 = vmatprep.subr.bf16.mxu0 0
        %3981 = vmatpush1.bf16.xpose.msra.mxu0 %v3978
        %3982 = vmatprep.subr.bf16.mxu0 0
        %3983 = vmatpush1.bf16.xpose.msra.mxu0 0
        %3984 = vmatprep.subr.bf16.mxu0 0
        %3985 = vmatpush1.bf16.xpose.msra.mxu0 0
        %3986 = vmatprep.subr.bf16.mxu0 0
        %3987 = vmatpush1.bf16.xpose.msra.mxu0 0
        %3988 = vmatprep.subr.bf16.mxu0 0
        %3989 = vmatpush1.bf16.xpose.msra.mxu0 0
        %3990 = vmatprep.subr.bf16.mxu0 0
        %3991 = vmatpush1.bf16.xpose.msra.mxu0 0
        %3992 = vmatprep.subr.bf16.mxu0 0
        %3993 = vmatpush1.bf16.xpose.msra.mxu0 0
        %3994 = vmatprep.subr.bf16.mxu0 0
        %3995 = vmatpush1.bf16.xpose.msra.mxu0 0
        %3996 = vmatprep.subr.bf16.mxu0 0
        %3997 = vmatpush1.bf16.xpose.msra.mxu0 0
        %3998 = vmatprep.subr.bf16.mxu0 0
        %3999 = vmatpush1.bf16.xpose.msra.mxu0 0
        %4000 = vmatprep.subr.bf16.mxu0 0
        %4001 = vmatpush1.bf16.xpose.msra.mxu0 0
        %4002 = vmatprep.subr.bf16.mxu0 0
        %4003 = vmatpush1.bf16.xpose.msra.mxu0 0
        %4004 = vmatprep.subr.bf16.mxu0 0
        %4005 = vmatpush1.bf16.xpose.msra.mxu0 0
        %4006 = vmatprep.subr.bf16.mxu0 0
        %4007 = vmatpush1.bf16.xpose.msra.mxu0 0
        %4008 = vmatprep.subr.bf16.mxu0 0
        %4009 = vmatpush1.bf16.xpose.msra.mxu0 0
        %4010 = vmatprep.subr.bf16.mxu0 0
        %4011 = vmatpush1.bf16.xpose.msra.mxu0 0
        %4012 = vmatprep.mubr.bf16.mxu0 0
        %4013 = vmatmul.mubr.bf16.gmra.mrb[0].mxu0 %v3975
        %v4014 = vpop.f32.mrb[0].mxu0
        %v4015 = vadd.f32 %v1834, %v4014
        %v4016 = vpop.f32.mrb[0].mxu0
        %v4017 = vpop.f32.mrb[0].mxu0
        %v4018 = vadd.f32 %v1835, %v4017
        %v4019 = vpop.f32.mrb[0].mxu0
        %4020 = vdwg.mxu0
        %v4021 = vsel %vm2282, %v3962, -inf
        %4022 = vmax.xlane.f32.xlu0 %v4021
        %v4023 = vpop.xlane.xlu0 %4022
        %v4024 = vsel %vm2282, %v3965, -inf
        %4025 = vmax.xlane.f32.xlu0 %v4024
        %v4026 = vpop.xlane.xlu0 %4025
        %v4027 = vsel %vm2282, %v4015, -inf
        %4028 = vmax.xlane.f32.xlu0 %v4027
        %v4029 = vpop.xlane.xlu0 %4028
        %v4030 = vsel %vm2282, %v4018, -inf
        %4031 = vmax.xlane.f32.xlu0 %v4030
        %v4032 = vpop.xlane.xlu0 %4031
        %v4033 = vsub.f32 %v3962, %v4023
        %v4034 = vsub.f32 %v3965, %v4026
        %v4035 = vsub.f32 %v4015, %v4029
        %v4036 = vsub.f32 %v4018, %v4032
        %v4037 = vmul.f32 %v4033, 1.442695
        %v4038 = vpow.pop %v4037
        %v4039 = vmul.f32 %v4034, 1.442695
        %v4040 = vpow.pop %v4039
        %v4041 = vmul.f32 %v4035, 1.442695
        %v4042 = vpow.pop %v4041
        %v4043 = vmul.f32 %v4036, 1.442695
        %v4044 = vpow.pop %v4043
        %v4045 = vsel %vm2282, %v4038, 0.0
        %4046 = vadd.xlane.f32.xlu0 %v4045
        %v4047 = vpop.xlane.xlu0 %4046
        %v4048 = vsel %vm2282, %v4040, 0.0
        %4049 = vadd.xlane.f32.xlu0 %v4048
        %v4050 = vpop.xlane.xlu0 %4049
        %v4051 = vsel %vm2282, %v4042, 0.0
        %4052 = vadd.xlane.f32.xlu0 %v4051
        %v4053 = vpop.xlane.xlu0 %4052
        %v4054 = vsel %vm2282, %v4044, 0.0
        %4055 = vadd.xlane.f32.xlu0 %v4054
        %v4056 = vpop.xlane.xlu0 %4055
        %v4057 = vrcp.pop %v4047
        %v4058 = vrcp.pop %v4050
        %v4059 = vrcp.pop %v4053
        %v4060 = vrcp.pop %v4056
        %v4061 = vmul.f32 %v4038, %v4057
        %v4062 = vmul.f32 %v4040, %v4058
        %v4063 = vmul.f32 %v4042, %v4059
        %v4064 = vmul.f32 %v4044, %v4060
        %v4065 = vpack.c.bf16 %v4062, %v4061
        %v4066 = vpack.c.bf16 %v4064, %v4063
        %4068 = vrot.lane.b32.xlu0 %v3685, 96
        %v4069 = vpop.permute.xlu0 %4068
        %v4072 = vsel %vm2282, %v4065, 0
        %4074 = vmatprep.subr.bf16.mxu0 0
        %4075 = vmatpush1.bf16.msra.mxu0 %v4069
        %4076 = vmatprep.subr.bf16.mxu0 0
        %4077 = vmatpush1.bf16.msra.mxu0 0
        %4078 = vmatprep.subr.bf16.mxu0 0
        %4079 = vmatpush1.bf16.msra.mxu0 0
        %4080 = vmatprep.subr.bf16.mxu0 0
        %4081 = vmatpush1.bf16.msra.mxu0 0
        %4082 = vmatprep.subr.bf16.mxu0 0
        %4083 = vmatpush1.bf16.msra.mxu0 0
        %4084 = vmatprep.subr.bf16.mxu0 0
        %4085 = vmatpush1.bf16.msra.mxu0 0
        %4086 = vmatprep.subr.bf16.mxu0 0
        %4087 = vmatpush1.bf16.msra.mxu0 0
        %4088 = vmatprep.subr.bf16.mxu0 0
        %4089 = vmatpush1.bf16.msra.mxu0 0
        %4090 = vmatprep.subr.bf16.mxu0 0
        %4091 = vmatpush1.bf16.msra.mxu0 0
        %4092 = vmatprep.subr.bf16.mxu0 0
        %4093 = vmatpush1.bf16.msra.mxu0 0
        %4094 = vmatprep.subr.bf16.mxu0 0
        %4095 = vmatpush1.bf16.msra.mxu0 0
        %4096 = vmatprep.subr.bf16.mxu0 0
        %4097 = vmatpush1.bf16.msra.mxu0 0
        %4098 = vmatprep.subr.bf16.mxu0 0
        %4099 = vmatpush1.bf16.msra.mxu0 0
        %4100 = vmatprep.subr.bf16.mxu0 0
        %4101 = vmatpush1.bf16.msra.mxu0 0
        %4102 = vmatprep.subr.bf16.mxu0 0
        %4103 = vmatpush1.bf16.msra.mxu0 0
        %4104 = vmatprep.subr.bf16.mxu0 0
        %4105 = vmatpush1.bf16.msra.mxu0 0
        %4106 = vmatprep.mubr.bf16.mxu0 0
        %4107 = vmatmul.mubr.bf16.gmra.mrb[0].mxu0 %v4072
        %v4108 = vpop.f32.mrb[0].mxu0
        %v4109 = vadd.f32 0.0, %v4108
        %v4110 = vpop.f32.mrb[0].mxu0
        %v4111 = vpop.f32.mrb[0].mxu0
        %v4112 = vadd.f32 0.0, %v4111
        %v4113 = vpop.f32.mrb[0].mxu0
        %4114 = vdwg.mxu0
        %4116 = vrot.lane.b32.xlu0 %v3686, 96
        %v4117 = vpop.permute.xlu0 %4116
        %v4120 = vsel %vm2282, %v4066, 0
        %4122 = vmatprep.subr.bf16.mxu0 0
        %4123 = vmatpush1.bf16.msra.mxu0 %v4117
        %4124 = vmatprep.subr.bf16.mxu0 0
        %4125 = vmatpush1.bf16.msra.mxu0 0
        %4126 = vmatprep.subr.bf16.mxu0 0
        %4127 = vmatpush1.bf16.msra.mxu0 0
        %4128 = vmatprep.subr.bf16.mxu0 0
        %4129 = vmatpush1.bf16.msra.mxu0 0
        %4130 = vmatprep.subr.bf16.mxu0 0
        %4131 = vmatpush1.bf16.msra.mxu0 0
        %4132 = vmatprep.subr.bf16.mxu0 0
        %4133 = vmatpush1.bf16.msra.mxu0 0
        %4134 = vmatprep.subr.bf16.mxu0 0
        %4135 = vmatpush1.bf16.msra.mxu0 0
        %4136 = vmatprep.subr.bf16.mxu0 0
        %4137 = vmatpush1.bf16.msra.mxu0 0
        %4138 = vmatprep.subr.bf16.mxu0 0
        %4139 = vmatpush1.bf16.msra.mxu0 0
        %4140 = vmatprep.subr.bf16.mxu0 0
        %4141 = vmatpush1.bf16.msra.mxu0 0
        %4142 = vmatprep.subr.bf16.mxu0 0
        %4143 = vmatpush1.bf16.msra.mxu0 0
        %4144 = vmatprep.subr.bf16.mxu0 0
        %4145 = vmatpush1.bf16.msra.mxu0 0
        %4146 = vmatprep.subr.bf16.mxu0 0
        %4147 = vmatpush1.bf16.msra.mxu0 0
        %4148 = vmatprep.subr.bf16.mxu0 0
        %4149 = vmatpush1.bf16.msra.mxu0 0
        %4150 = vmatprep.subr.bf16.mxu0 0
        %4151 = vmatpush1.bf16.msra.mxu0 0
        %4152 = vmatprep.subr.bf16.mxu0 0
        %4153 = vmatpush1.bf16.msra.mxu0 0
        %4154 = vmatprep.mubr.bf16.mxu0 0
        %4155 = vmatmul.mubr.bf16.gmra.mrb[0].mxu0 %v4120
        %v4156 = vpop.f32.mrb[0].mxu0
        %v4157 = vadd.f32 0.0, %v4156
        %v4158 = vpop.f32.mrb[0].mxu0
        %v4159 = vpop.f32.mrb[0].mxu0
        %v4160 = vadd.f32 0.0, %v4159
        %v4161 = vpop.f32.mrb[0].mxu0
        %4162 = vdwg.mxu0
        %4163 = vrot.lane.b32.xlu0 %v3681, 64
        %v4164 = vpop.permute.xlu0 %4163
        %4165 = vrot.lane.b32.xlu0 %v3683, 64
        %v4166 = vpop.permute.xlu0 %4165
        %v4168 = vsel %vm2187, %v4164, 0
        %v4171 = vsel %vm2187, %v4166, 0
        %4173 = vmatprep.subr.bf16.mxu0 0
        %4174 = vmatpush1.bf16.xpose.msra.mxu0 %v4171
        %4175 = vmatprep.subr.bf16.mxu0 0
        %4176 = vmatpush1.bf16.xpose.msra.mxu0 0
        %4177 = vmatprep.subr.bf16.mxu0 0
        %4178 = vmatpush1.bf16.xpose.msra.mxu0 0
        %4179 = vmatprep.subr.bf16.mxu0 0
        %4180 = vmatpush1.bf16.xpose.msra.mxu0 0
        %4181 = vmatprep.subr.bf16.mxu0 0
        %4182 = vmatpush1.bf16.xpose.msra.mxu0 0
        %4183 = vmatprep.subr.bf16.mxu0 0
        %4184 = vmatpush1.bf16.xpose.msra.mxu0 0
        %4185 = vmatprep.subr.bf16.mxu0 0
        %4186 = vmatpush1.bf16.xpose.msra.mxu0 0
        %4187 = vmatprep.subr.bf16.mxu0 0
        %4188 = vmatpush1.bf16.xpose.msra.mxu0 0
        %4189 = vmatprep.subr.bf16.mxu0 0
        %4190 = vmatpush1.bf16.xpose.msra.mxu0 0
        %4191 = vmatprep.subr.bf16.mxu0 0
        %4192 = vmatpush1.bf16.xpose.msra.mxu0 0
        %4193 = vmatprep.subr.bf16.mxu0 0
        %4194 = vmatpush1.bf16.xpose.msra.mxu0 0
        %4195 = vmatprep.subr.bf16.mxu0 0
        %4196 = vmatpush1.bf16.xpose.msra.mxu0 0
        %4197 = vmatprep.subr.bf16.mxu0 0
        %4198 = vmatpush1.bf16.xpose.msra.mxu0 0
        %4199 = vmatprep.subr.bf16.mxu0 0
        %4200 = vmatpush1.bf16.xpose.msra.mxu0 0
        %4201 = vmatprep.subr.bf16.mxu0 0
        %4202 = vmatpush1.bf16.xpose.msra.mxu0 0
        %4203 = vmatprep.subr.bf16.mxu0 0
        %4204 = vmatpush1.bf16.xpose.msra.mxu0 0
        %4205 = vmatprep.mubr.bf16.mxu0 0
        %4206 = vmatmul.mubr.bf16.gmra.mrb[0].mxu0 %v4168
        %v4207 = vpop.f32.mrb[0].mxu0
        %v4208 = vadd.f32 %v1832, %v4207
        %v4209 = vpop.f32.mrb[0].mxu0
        %v4210 = vpop.f32.mrb[0].mxu0
        %v4211 = vadd.f32 %v1833, %v4210
        %v4212 = vpop.f32.mrb[0].mxu0
        %4213 = vdwg.mxu0
        %4214 = vrot.lane.b32.xlu0 %v3682, 64
        %v4215 = vpop.permute.xlu0 %4214
        %4216 = vrot.lane.b32.xlu0 %v3684, 64
        %v4217 = vpop.permute.xlu0 %4216
        %v4219 = vsel %vm2187, %v4215, 0
        %v4222 = vsel %vm2187, %v4217, 0
        %4224 = vmatprep.subr.bf16.mxu0 0
        %4225 = vmatpush1.bf16.xpose.msra.mxu0 %v4222
        %4226 = vmatprep.subr.bf16.mxu0 0
        %4227 = vmatpush1.bf16.xpose.msra.mxu0 0
        %4228 = vmatprep.subr.bf16.mxu0 0
        %4229 = vmatpush1.bf16.xpose.msra.mxu0 0
        %4230 = vmatprep.subr.bf16.mxu0 0
        %4231 = vmatpush1.bf16.xpose.msra.mxu0 0
        %4232 = vmatprep.subr.bf16.mxu0 0
        %4233 = vmatpush1.bf16.xpose.msra.mxu0 0
        %4234 = vmatprep.subr.bf16.mxu0 0
        %4235 = vmatpush1.bf16.xpose.msra.mxu0 0
        %4236 = vmatprep.subr.bf16.mxu0 0
        %4237 = vmatpush1.bf16.xpose.msra.mxu0 0
        %4238 = vmatprep.subr.bf16.mxu0 0
        %4239 = vmatpush1.bf16.xpose.msra.mxu0 0
        %4240 = vmatprep.subr.bf16.mxu0 0
        %4241 = vmatpush1.bf16.xpose.msra.mxu0 0
        %4242 = vmatprep.subr.bf16.mxu0 0
        %4243 = vmatpush1.bf16.xpose.msra.mxu0 0
        %4244 = vmatprep.subr.bf16.mxu0 0
        %4245 = vmatpush1.bf16.xpose.msra.mxu0 0
        %4246 = vmatprep.subr.bf16.mxu0 0
        %4247 = vmatpush1.bf16.xpose.msra.mxu0 0
        %4248 = vmatprep.subr.bf16.mxu0 0
        %4249 = vmatpush1.bf16.xpose.msra.mxu0 0
        %4250 = vmatprep.subr.bf16.mxu0 0
        %4251 = vmatpush1.bf16.xpose.msra.mxu0 0
        %4252 = vmatprep.subr.bf16.mxu0 0
        %4253 = vmatpush1.bf16.xpose.msra.mxu0 0
        %4254 = vmatprep.subr.bf16.mxu0 0
        %4255 = vmatpush1.bf16.xpose.msra.mxu0 0
        %4256 = vmatprep.mubr.bf16.mxu0 0
        %4257 = vmatmul.mubr.bf16.gmra.mrb[0].mxu0 %v4219
        %v4258 = vpop.f32.mrb[0].mxu0
        %v4259 = vadd.f32 %v1834, %v4258
        %v4260 = vpop.f32.mrb[0].mxu0
        %v4261 = vpop.f32.mrb[0].mxu0
        %v4262 = vadd.f32 %v1835, %v4261
        %v4263 = vpop.f32.mrb[0].mxu0
        %4264 = vdwg.mxu0
        %v4265 = vsel %vm2282, %v4208, -inf
        %4266 = vmax.xlane.f32.xlu0 %v4265
        %v4267 = vpop.xlane.xlu0 %4266
        %v4268 = vsel %vm2282, %v4211, -inf
        %4269 = vmax.xlane.f32.xlu0 %v4268
        %v4270 = vpop.xlane.xlu0 %4269
        %v4271 = vsel %vm2282, %v4259, -inf
        %4272 = vmax.xlane.f32.xlu0 %v4271
        %v4273 = vpop.xlane.xlu0 %4272
        %v4274 = vsel %vm2282, %v4262, -inf
        %4275 = vmax.xlane.f32.xlu0 %v4274
        %v4276 = vpop.xlane.xlu0 %4275
        %v4277 = vsub.f32 %v4208, %v4267
        %v4278 = vsub.f32 %v4211, %v4270
        %v4279 = vsub.f32 %v4259, %v4273
        %v4280 = vsub.f32 %v4262, %v4276
        %v4281 = vmul.f32 %v4277, 1.442695
        %v4282 = vpow.pop %v4281
        %v4283 = vmul.f32 %v4278, 1.442695
        %v4284 = vpow.pop %v4283
        %v4285 = vmul.f32 %v4279, 1.442695
        %v4286 = vpow.pop %v4285
        %v4287 = vmul.f32 %v4280, 1.442695
        %v4288 = vpow.pop %v4287
        %v4289 = vsel %vm2282, %v4282, 0.0
        %4290 = vadd.xlane.f32.xlu0 %v4289
        %v4291 = vpop.xlane.xlu0 %4290
        %v4292 = vsel %vm2282, %v4284, 0.0
        %4293 = vadd.xlane.f32.xlu0 %v4292
        %v4294 = vpop.xlane.xlu0 %4293
        %v4295 = vsel %vm2282, %v4286, 0.0
        %4296 = vadd.xlane.f32.xlu0 %v4295
        %v4297 = vpop.xlane.xlu0 %4296
        %v4298 = vsel %vm2282, %v4288, 0.0
        %4299 = vadd.xlane.f32.xlu0 %v4298
        %v4300 = vpop.xlane.xlu0 %4299
        %v4301 = vrcp.pop %v4291
        %v4302 = vrcp.pop %v4294
        %v4303 = vrcp.pop %v4297
        %v4304 = vrcp.pop %v4300
        %v4305 = vmul.f32 %v4282, %v4301
        %v4306 = vmul.f32 %v4284, %v4302
        %v4307 = vmul.f32 %v4286, %v4303
        %v4308 = vmul.f32 %v4288, %v4304
        %v4309 = vpack.c.bf16 %v4306, %v4305
        %v4310 = vpack.c.bf16 %v4308, %v4307
        %4311 = vrot.lane.b32.xlu0 %v3685, 64
        %v4312 = vpop.permute.xlu0 %4311
        %v4315 = vsel %vm2282, %v4309, 0
        %4317 = vmatprep.subr.bf16.mxu0 0
        %4318 = vmatpush1.bf16.msra.mxu0 %v4312
        %4319 = vmatprep.subr.bf16.mxu0 0
        %4320 = vmatpush1.bf16.msra.mxu0 0
        %4321 = vmatprep.subr.bf16.mxu0 0
        %4322 = vmatpush1.bf16.msra.mxu0 0
        %4323 = vmatprep.subr.bf16.mxu0 0
        %4324 = vmatpush1.bf16.msra.mxu0 0
        %4325 = vmatprep.subr.bf16.mxu0 0
        %4326 = vmatpush1.bf16.msra.mxu0 0
        %4327 = vmatprep.subr.bf16.mxu0 0
        %4328 = vmatpush1.bf16.msra.mxu0 0
        %4329 = vmatprep.subr.bf16.mxu0 0
        %4330 = vmatpush1.bf16.msra.mxu0 0
        %4331 = vmatprep.subr.bf16.mxu0 0
        %4332 = vmatpush1.bf16.msra.mxu0 0
        %4333 = vmatprep.subr.bf16.mxu0 0
        %4334 = vmatpush1.bf16.msra.mxu0 0
        %4335 = vmatprep.subr.bf16.mxu0 0
        %4336 = vmatpush1.bf16.msra.mxu0 0
        %4337 = vmatprep.subr.bf16.mxu0 0
        %4338 = vmatpush1.bf16.msra.mxu0 0
        %4339 = vmatprep.subr.bf16.mxu0 0
        %4340 = vmatpush1.bf16.msra.mxu0 0
        %4341 = vmatprep.subr.bf16.mxu0 0
        %4342 = vmatpush1.bf16.msra.mxu0 0
        %4343 = vmatprep.subr.bf16.mxu0 0
        %4344 = vmatpush1.bf16.msra.mxu0 0
        %4345 = vmatprep.subr.bf16.mxu0 0
        %4346 = vmatpush1.bf16.msra.mxu0 0
        %4347 = vmatprep.subr.bf16.mxu0 0
        %4348 = vmatpush1.bf16.msra.mxu0 0
        %4349 = vmatprep.mubr.bf16.mxu0 0
        %4350 = vmatmul.mubr.bf16.gmra.mrb[0].mxu0 %v4315
        %v4351 = vpop.f32.mrb[0].mxu0
        %v4352 = vadd.f32 0.0, %v4351
        %v4353 = vpop.f32.mrb[0].mxu0
        %v4354 = vpop.f32.mrb[0].mxu0
        %v4355 = vadd.f32 0.0, %v4354
        %v4356 = vpop.f32.mrb[0].mxu0
        %4357 = vdwg.mxu0
        %4358 = vrot.lane.b32.xlu0 %v3686, 64
        %v4359 = vpop.permute.xlu0 %4358
        %v4362 = vsel %vm2282, %v4310, 0
        %4364 = vmatprep.subr.bf16.mxu0 0
        %4365 = vmatpush1.bf16.msra.mxu0 %v4359
        %4366 = vmatprep.subr.bf16.mxu0 0
        %4367 = vmatpush1.bf16.msra.mxu0 0
        %4368 = vmatprep.subr.bf16.mxu0 0
        %4369 = vmatpush1.bf16.msra.mxu0 0
        %4370 = vmatprep.subr.bf16.mxu0 0
        %4371 = vmatpush1.bf16.msra.mxu0 0
        %4372 = vmatprep.subr.bf16.mxu0 0
        %4373 = vmatpush1.bf16.msra.mxu0 0
        %4374 = vmatprep.subr.bf16.mxu0 0
        %4375 = vmatpush1.bf16.msra.mxu0 0
        %4376 = vmatprep.subr.bf16.mxu0 0
        %4377 = vmatpush1.bf16.msra.mxu0 0
        %4378 = vmatprep.subr.bf16.mxu0 0
        %4379 = vmatpush1.bf16.msra.mxu0 0
        %4380 = vmatprep.subr.bf16.mxu0 0
        %4381 = vmatpush1.bf16.msra.mxu0 0
        %4382 = vmatprep.subr.bf16.mxu0 0
        %4383 = vmatpush1.bf16.msra.mxu0 0
        %4384 = vmatprep.subr.bf16.mxu0 0
        %4385 = vmatpush1.bf16.msra.mxu0 0
        %4386 = vmatprep.subr.bf16.mxu0 0
        %4387 = vmatpush1.bf16.msra.mxu0 0
        %4388 = vmatprep.subr.bf16.mxu0 0
        %4389 = vmatpush1.bf16.msra.mxu0 0
        %4390 = vmatprep.subr.bf16.mxu0 0
        %4391 = vmatpush1.bf16.msra.mxu0 0
        %4392 = vmatprep.subr.bf16.mxu0 0
        %4393 = vmatpush1.bf16.msra.mxu0 0
        %4394 = vmatprep.subr.bf16.mxu0 0
        %4395 = vmatpush1.bf16.msra.mxu0 0
        %4396 = vmatprep.mubr.bf16.mxu0 0
        %4397 = vmatmul.mubr.bf16.gmra.mrb[0].mxu0 %v4362
        %v4398 = vpop.f32.mrb[0].mxu0
        %v4399 = vadd.f32 0.0, %v4398
        %v4400 = vpop.f32.mrb[0].mxu0
        %v4401 = vpop.f32.mrb[0].mxu0
        %v4402 = vadd.f32 0.0, %v4401
        %v4403 = vpop.f32.mrb[0].mxu0
        %4404 = vdwg.mxu0
        %4405 = vrot.lane.b32.xlu0 %v3681, 32
        %v4406 = vpop.permute.xlu0 %4405
        %4407 = vrot.lane.b32.xlu0 %v3683, 32
        %v4408 = vpop.permute.xlu0 %4407
        %v4410 = vsel %vm2187, %v4406, 0
        %v4413 = vsel %vm2187, %v4408, 0
        %4415 = vmatprep.subr.bf16.mxu0 0
        %4416 = vmatpush1.bf16.xpose.msra.mxu0 %v4413
        %4417 = vmatprep.subr.bf16.mxu0 0
        %4418 = vmatpush1.bf16.xpose.msra.mxu0 0
        %4419 = vmatprep.subr.bf16.mxu0 0
        %4420 = vmatpush1.bf16.xpose.msra.mxu0 0
        %4421 = vmatprep.subr.bf16.mxu0 0
        %4422 = vmatpush1.bf16.xpose.msra.mxu0 0
        %4423 = vmatprep.subr.bf16.mxu0 0
        %4424 = vmatpush1.bf16.xpose.msra.mxu0 0
        %4425 = vmatprep.subr.bf16.mxu0 0
        %4426 = vmatpush1.bf16.xpose.msra.mxu0 0
        %4427 = vmatprep.subr.bf16.mxu0 0
        %4428 = vmatpush1.bf16.xpose.msra.mxu0 0
        %4429 = vmatprep.subr.bf16.mxu0 0
        %4430 = vmatpush1.bf16.xpose.msra.mxu0 0
        %4431 = vmatprep.subr.bf16.mxu0 0
        %4432 = vmatpush1.bf16.xpose.msra.mxu0 0
        %4433 = vmatprep.subr.bf16.mxu0 0
        %4434 = vmatpush1.bf16.xpose.msra.mxu0 0
        %4435 = vmatprep.subr.bf16.mxu0 0
        %4436 = vmatpush1.bf16.xpose.msra.mxu0 0
        %4437 = vmatprep.subr.bf16.mxu0 0
        %4438 = vmatpush1.bf16.xpose.msra.mxu0 0
        %4439 = vmatprep.subr.bf16.mxu0 0
        %4440 = vmatpush1.bf16.xpose.msra.mxu0 0
        %4441 = vmatprep.subr.bf16.mxu0 0
        %4442 = vmatpush1.bf16.xpose.msra.mxu0 0
        %4443 = vmatprep.subr.bf16.mxu0 0
        %4444 = vmatpush1.bf16.xpose.msra.mxu0 0
        %4445 = vmatprep.subr.bf16.mxu0 0
        %4446 = vmatpush1.bf16.xpose.msra.mxu0 0
        %4447 = vmatprep.mubr.bf16.mxu0 0
        %4448 = vmatmul.mubr.bf16.gmra.mrb[0].mxu0 %v4410
        %v4449 = vpop.f32.mrb[0].mxu0
        %v4450 = vadd.f32 %v1832, %v4449
        %v4451 = vpop.f32.mrb[0].mxu0
        %v4452 = vpop.f32.mrb[0].mxu0
        %v4453 = vadd.f32 %v1833, %v4452
        %v4454 = vpop.f32.mrb[0].mxu0
        %4455 = vdwg.mxu0
        %4456 = vrot.lane.b32.xlu0 %v3682, 32
        %v4457 = vpop.permute.xlu0 %4456
        %4458 = vrot.lane.b32.xlu0 %v3684, 32
        %v4459 = vpop.permute.xlu0 %4458
        %v4461 = vsel %vm2187, %v4457, 0
        %v4464 = vsel %vm2187, %v4459, 0
        %4466 = vmatprep.subr.bf16.mxu0 0
        %4467 = vmatpush1.bf16.xpose.msra.mxu0 %v4464
        %4468 = vmatprep.subr.bf16.mxu0 0
        %4469 = vmatpush1.bf16.xpose.msra.mxu0 0
        %4470 = vmatprep.subr.bf16.mxu0 0
        %4471 = vmatpush1.bf16.xpose.msra.mxu0 0
        %4472 = vmatprep.subr.bf16.mxu0 0
        %4473 = vmatpush1.bf16.xpose.msra.mxu0 0
        %4474 = vmatprep.subr.bf16.mxu0 0
        %4475 = vmatpush1.bf16.xpose.msra.mxu0 0
        %4476 = vmatprep.subr.bf16.mxu0 0
        %4477 = vmatpush1.bf16.xpose.msra.mxu0 0
        %4478 = vmatprep.subr.bf16.mxu0 0
        %4479 = vmatpush1.bf16.xpose.msra.mxu0 0
        %4480 = vmatprep.subr.bf16.mxu0 0
        %4481 = vmatpush1.bf16.xpose.msra.mxu0 0
        %4482 = vmatprep.subr.bf16.mxu0 0
        %4483 = vmatpush1.bf16.xpose.msra.mxu0 0
        %4484 = vmatprep.subr.bf16.mxu0 0
        %4485 = vmatpush1.bf16.xpose.msra.mxu0 0
        %4486 = vmatprep.subr.bf16.mxu0 0
        %4487 = vmatpush1.bf16.xpose.msra.mxu0 0
        %4488 = vmatprep.subr.bf16.mxu0 0
        %4489 = vmatpush1.bf16.xpose.msra.mxu0 0
        %4490 = vmatprep.subr.bf16.mxu0 0
        %4491 = vmatpush1.bf16.xpose.msra.mxu0 0
        %4492 = vmatprep.subr.bf16.mxu0 0
        %4493 = vmatpush1.bf16.xpose.msra.mxu0 0
        %4494 = vmatprep.subr.bf16.mxu0 0
        %4495 = vmatpush1.bf16.xpose.msra.mxu0 0
        %4496 = vmatprep.subr.bf16.mxu0 0
        %4497 = vmatpush1.bf16.xpose.msra.mxu0 0
        %4498 = vmatprep.mubr.bf16.mxu0 0
        %4499 = vmatmul.mubr.bf16.gmra.mrb[0].mxu0 %v4461
        %v4500 = vpop.f32.mrb[0].mxu0
        %v4501 = vadd.f32 %v1834, %v4500
        %v4502 = vpop.f32.mrb[0].mxu0
        %v4503 = vpop.f32.mrb[0].mxu0
        %v4504 = vadd.f32 %v1835, %v4503
        %v4505 = vpop.f32.mrb[0].mxu0
        %4506 = vdwg.mxu0
        %v4507 = vsel %vm2282, %v4450, -inf
        %4508 = vmax.xlane.f32.xlu0 %v4507
        %v4509 = vpop.xlane.xlu0 %4508
        %v4510 = vsel %vm2282, %v4453, -inf
        %4511 = vmax.xlane.f32.xlu0 %v4510
        %v4512 = vpop.xlane.xlu0 %4511
        %v4513 = vsel %vm2282, %v4501, -inf
        %4514 = vmax.xlane.f32.xlu0 %v4513
        %v4515 = vpop.xlane.xlu0 %4514
        %v4516 = vsel %vm2282, %v4504, -inf
        %4517 = vmax.xlane.f32.xlu0 %v4516
        %v4518 = vpop.xlane.xlu0 %4517
        %v4519 = vsub.f32 %v4450, %v4509
        %v4520 = vsub.f32 %v4453, %v4512
        %v4521 = vsub.f32 %v4501, %v4515
        %v4522 = vsub.f32 %v4504, %v4518
        %v4523 = vmul.f32 %v4519, 1.442695
        %v4524 = vpow.pop %v4523
        %v4525 = vmul.f32 %v4520, 1.442695
        %v4526 = vpow.pop %v4525
        %v4527 = vmul.f32 %v4521, 1.442695
        %v4528 = vpow.pop %v4527
        %v4529 = vmul.f32 %v4522, 1.442695
        %v4530 = vpow.pop %v4529
        %v4531 = vsel %vm2282, %v4524, 0.0
        %4532 = vadd.xlane.f32.xlu0 %v4531
        %v4533 = vpop.xlane.xlu0 %4532
        %v4534 = vsel %vm2282, %v4526, 0.0
        %4535 = vadd.xlane.f32.xlu0 %v4534
        %v4536 = vpop.xlane.xlu0 %4535
        %v4537 = vsel %vm2282, %v4528, 0.0
        %4538 = vadd.xlane.f32.xlu0 %v4537
        %v4539 = vpop.xlane.xlu0 %4538
        %v4540 = vsel %vm2282, %v4530, 0.0
        %4541 = vadd.xlane.f32.xlu0 %v4540
        %v4542 = vpop.xlane.xlu0 %4541
        %v4543 = vrcp.pop %v4533
        %v4544 = vrcp.pop %v4536
        %v4545 = vrcp.pop %v4539
        %v4546 = vrcp.pop %v4542
        %v4547 = vmul.f32 %v4524, %v4543
        %v4548 = vmul.f32 %v4526, %v4544
        %v4549 = vmul.f32 %v4528, %v4545
        %v4550 = vmul.f32 %v4530, %v4546
        %v4551 = vpack.c.bf16 %v4548, %v4547
        %v4552 = vpack.c.bf16 %v4550, %v4549
        %4553 = vrot.lane.b32.xlu0 %v3685, 32
        %v4554 = vpop.permute.xlu0 %4553
        %v4557 = vsel %vm2282, %v4551, 0
        %4559 = vmatprep.subr.bf16.mxu0 0
        %4560 = vmatpush1.bf16.msra.mxu0 %v4554
        %4561 = vmatprep.subr.bf16.mxu0 0
        %4562 = vmatpush1.bf16.msra.mxu0 0
        %4563 = vmatprep.subr.bf16.mxu0 0
        %4564 = vmatpush1.bf16.msra.mxu0 0
        %4565 = vmatprep.subr.bf16.mxu0 0
        %4566 = vmatpush1.bf16.msra.mxu0 0
        %4567 = vmatprep.subr.bf16.mxu0 0
        %4568 = vmatpush1.bf16.msra.mxu0 0
        %4569 = vmatprep.subr.bf16.mxu0 0
        %4570 = vmatpush1.bf16.msra.mxu0 0
        %4571 = vmatprep.subr.bf16.mxu0 0
        %4572 = vmatpush1.bf16.msra.mxu0 0
        %4573 = vmatprep.subr.bf16.mxu0 0
        %4574 = vmatpush1.bf16.msra.mxu0 0
        %4575 = vmatprep.subr.bf16.mxu0 0
        %4576 = vmatpush1.bf16.msra.mxu0 0
        %4577 = vmatprep.subr.bf16.mxu0 0
        %4578 = vmatpush1.bf16.msra.mxu0 0
        %4579 = vmatprep.subr.bf16.mxu0 0
        %4580 = vmatpush1.bf16.msra.mxu0 0
        %4581 = vmatprep.subr.bf16.mxu0 0
        %4582 = vmatpush1.bf16.msra.mxu0 0
        %4583 = vmatprep.subr.bf16.mxu0 0
        %4584 = vmatpush1.bf16.msra.mxu0 0
        %4585 = vmatprep.subr.bf16.mxu0 0
        %4586 = vmatpush1.bf16.msra.mxu0 0
        %4587 = vmatprep.subr.bf16.mxu0 0
        %4588 = vmatpush1.bf16.msra.mxu0 0
        %4589 = vmatprep.subr.bf16.mxu0 0
        %4590 = vmatpush1.bf16.msra.mxu0 0
        %4591 = vmatprep.mubr.bf16.mxu0 0
        %4592 = vmatmul.mubr.bf16.gmra.mrb[0].mxu0 %v4557
        %v4593 = vpop.f32.mrb[0].mxu0
        %v4594 = vadd.f32 0.0, %v4593
        %v4595 = vpop.f32.mrb[0].mxu0
        %v4596 = vpop.f32.mrb[0].mxu0
        %v4597 = vadd.f32 0.0, %v4596
        %v4598 = vpop.f32.mrb[0].mxu0
        %4599 = vdwg.mxu0
        %4600 = vrot.lane.b32.xlu0 %v3686, 32
        %v4601 = vpop.permute.xlu0 %4600
        %v4604 = vsel %vm2282, %v4552, 0
        %4606 = vmatprep.subr.bf16.mxu0 0
        %4607 = vmatpush1.bf16.msra.mxu0 %v4601
        %4608 = vmatprep.subr.bf16.mxu0 0
        %4609 = vmatpush1.bf16.msra.mxu0 0
        %4610 = vmatprep.subr.bf16.mxu0 0
        %4611 = vmatpush1.bf16.msra.mxu0 0
        %4612 = vmatprep.subr.bf16.mxu0 0
        %4613 = vmatpush1.bf16.msra.mxu0 0
        %4614 = vmatprep.subr.bf16.mxu0 0
        %4615 = vmatpush1.bf16.msra.mxu0 0
        %4616 = vmatprep.subr.bf16.mxu0 0
        %4617 = vmatpush1.bf16.msra.mxu0 0
        %4618 = vmatprep.subr.bf16.mxu0 0
        %4619 = vmatpush1.bf16.msra.mxu0 0
        %4620 = vmatprep.subr.bf16.mxu0 0
        %4621 = vmatpush1.bf16.msra.mxu0 0
        %4622 = vmatprep.subr.bf16.mxu0 0
        %4623 = vmatpush1.bf16.msra.mxu0 0
        %4624 = vmatprep.subr.bf16.mxu0 0
        %4625 = vmatpush1.bf16.msra.mxu0 0
        %4626 = vmatprep.subr.bf16.mxu0 0
        %4627 = vmatpush1.bf16.msra.mxu0 0
        %4628 = vmatprep.subr.bf16.mxu0 0
        %4629 = vmatpush1.bf16.msra.mxu0 0
        %4630 = vmatprep.subr.bf16.mxu0 0
        %4631 = vmatpush1.bf16.msra.mxu0 0
        %4632 = vmatprep.subr.bf16.mxu0 0
        %4633 = vmatpush1.bf16.msra.mxu0 0
        %4634 = vmatprep.subr.bf16.mxu0 0
        %4635 = vmatpush1.bf16.msra.mxu0 0
        %4636 = vmatprep.subr.bf16.mxu0 0
        %4637 = vmatpush1.bf16.msra.mxu0 0
        %4638 = vmatprep.mubr.bf16.mxu0 0
        %4639 = vmatmul.mubr.bf16.gmra.mrb[0].mxu0 %v4604
        %v4640 = vpop.f32.mrb[0].mxu0
        %v4641 = vadd.f32 0.0, %v4640
        %v4642 = vpop.f32.mrb[0].mxu0
        %v4643 = vpop.f32.mrb[0].mxu0
        %v4644 = vadd.f32 0.0, %v4643
        %v4645 = vpop.f32.mrb[0].mxu0
        %4646 = vdwg.mxu0
        %4651 = vrot.lane.b32.xlu0 %v4109, 32
        %v4652 = vpop.permute.xlu0 %4651
        %4653 = vrot.lane.b32.xlu0 %v4112, 32
        %v4654 = vpop.permute.xlu0 %4653
        %4655 = vrot.lane.b32.xlu0 %v4157, 32
        %v4656 = vpop.permute.xlu0 %4655
        %4657 = vrot.lane.b32.xlu0 %v4160, 32
        %v4658 = vpop.permute.xlu0 %4657
        %4667 = vrot.lane.b32.xlu0 %v4352, 64
        %v4668 = vpop.permute.xlu0 %4667
        %4669 = vrot.lane.b32.xlu0 %v4355, 64
        %v4670 = vpop.permute.xlu0 %4669
        %4671 = vrot.lane.b32.xlu0 %v4399, 64
        %v4672 = vpop.permute.xlu0 %4671
        %4673 = vrot.lane.b32.xlu0 %v4402, 64
        %v4674 = vpop.permute.xlu0 %4673
        %4683 = vrot.lane.b32.xlu0 %v4594, 96
        %v4684 = vpop.permute.xlu0 %4683
        %4685 = vrot.lane.b32.xlu0 %v4597, 96
        %v4686 = vpop.permute.xlu0 %4685
        %4687 = vrot.lane.b32.xlu0 %v4641, 96
        %v4688 = vpop.permute.xlu0 %4687
        %4689 = vrot.lane.b32.xlu0 %v4644, 96
        %v4690 = vpop.permute.xlu0 %4689
        %v4695 = vsel %vm2187, %v3865, %v4652
        %v4696 = vsel %vm2187, %v3868, %v4654
        %v4697 = vsel %vm2187, %v3909, %v4656
        %v4698 = vsel %vm2187, %v3912, %v4658
        %v4699 = vsel %vm3201, %v4695, %v4668
        %v4700 = vsel %vm3201, %v4696, %v4670
        %v4701 = vsel %vm3201, %v4697, %v4672
        %v4702 = vsel %vm3201, %v4698, %v4674
        %v4703 = vsel %vm3206, %v4699, %v4684
        %v4704 = vsel %vm3206, %v4700, %v4686
        %v4705 = vsel %vm3206, %v4701, %v4688
        %v4706 = vsel %vm3206, %v4702, %v4690
        %v4707 = vpack.c.bf16 %v4704, %v4703
        %v4708 = vpack.c.bf16 %v4706, %v4705
        %v4725 = vunpack.c.l.b16 %v1705
        %v4726 = vunpack.c.l.b16 %v1706
        %v4727 = vunpack.c.l.b16 %v1707
        %v4728 = vunpack.c.l.b16 %v1708
        %v4729 = vunpack.c.l.b16 %v1709
        %v4730 = vunpack.c.l.b16 %v1710
        %v4731 = vunpack.c.l.b16 %v1711
        %v4732 = vunpack.c.l.b16 %v1712
        %v4733 = vunpack.c.l.b16 %v1713
        %v4734 = vunpack.c.l.b16 %v1714
        %v4735 = vunpack.c.l.b16 %v1715
        %v4736 = vunpack.c.l.b16 %v1716
        %v4737 = vunpack.c.l.b16 %v1717
        %v4738 = vunpack.c.l.b16 %v1718
        %v4739 = vunpack.c.l.b16 %v1719
        %v4740 = vunpack.c.l.b16 %v1720
        %v4741 = vpack.c.b16 %v4726, %v4725
        %v4742 = vpack.c.b16 %v4728, %v4727
        %v4743 = vpack.c.b16 %v4730, %v4729
        %v4744 = vpack.c.b16 %v4732, %v4731
        %v4745 = vpack.c.b16 %v4734, %v4733
        %v4746 = vpack.c.b16 %v4736, %v4735
        %v4747 = vpack.c.b16 %v4738, %v4737
        %v4748 = vpack.c.b16 %v4740, %v4739
        %4757 = vmatprep.subr.bf16.mxu0 0
        %4758 = vmatpush1.bf16.msra.mxu0 %v4741
        %4759 = vmatprep.subr.bf16.mxu0 0
        %4760 = vmatpush1.bf16.msra.mxu0 %v4742
        %4761 = vmatprep.subr.bf16.mxu0 0
        %4762 = vmatpush1.bf16.msra.mxu0 %v4743
        %4763 = vmatprep.subr.bf16.mxu0 0
        %4764 = vmatpush1.bf16.msra.mxu0 %v4744
        %4765 = vmatprep.subr.bf16.mxu0 0
        %4766 = vmatpush1.bf16.msra.mxu0 %v4745
        %4767 = vmatprep.subr.bf16.mxu0 0
        %4768 = vmatpush1.bf16.msra.mxu0 %v4746
        %4769 = vmatprep.subr.bf16.mxu0 0
        %4770 = vmatpush1.bf16.msra.mxu0 %v4747
        %4771 = vmatprep.subr.bf16.mxu0 0
        %4772 = vmatpush1.bf16.msra.mxu0 %v4748
        %4773 = vmatprep.subr.bf16.mxu0 0
        %4774 = vmatpush1.bf16.msra.mxu0 0
        %4775 = vmatprep.subr.bf16.mxu0 0
        %4776 = vmatpush1.bf16.msra.mxu0 0
        %4777 = vmatprep.subr.bf16.mxu0 0
        %4778 = vmatpush1.bf16.msra.mxu0 0
        %4779 = vmatprep.subr.bf16.mxu0 0
        %4780 = vmatpush1.bf16.msra.mxu0 0
        %4781 = vmatprep.subr.bf16.mxu0 0
        %4782 = vmatpush1.bf16.msra.mxu0 0
        %4783 = vmatprep.subr.bf16.mxu0 0
        %4784 = vmatpush1.bf16.msra.mxu0 0
        %4785 = vmatprep.subr.bf16.mxu0 0
        %4786 = vmatpush1.bf16.msra.mxu0 0
        %4787 = vmatprep.subr.bf16.mxu0 0
        %4788 = vmatpush1.bf16.msra.mxu0 0
        %4789 = vmatprep.mubr.bf16.mxu0 0
        %4790 = vmatmul.mubr.bf16.gmra.mrb[0].mxu0 %v4707
        %v4791 = vpop.f32.mrb[0].mxu0
        %v4792 = vadd.f32 0.0, %v4791
        %v4793 = vpop.f32.mrb[0].mxu0
        %v4794 = vpop.f32.mrb[0].mxu0
        %v4795 = vadd.f32 0.0, %v4794
        %v4796 = vpop.f32.mrb[0].mxu0
        %4797 = vmatprep.mubr.bf16.mxu0 0
        %4798 = vmatmul.mubr.bf16.gmra.mrb[0].mxu0 %v4708
        %v4799 = vpop.f32.mrb[0].mxu0
        %v4800 = vadd.f32 0.0, %v4799
        %v4801 = vpop.f32.mrb[0].mxu0
        %v4802 = vpop.f32.mrb[0].mxu0
        %v4803 = vadd.f32 0.0, %v4802
        %v4804 = vpop.f32.mrb[0].mxu0
        %4805 = vdwg.mxu0
        %v4806 = vadd.f32 %v3320, %v4792
        %v4807 = vadd.f32 %v3321, %v4795
        %v4808 = vadd.f32 %v3322, %v4800
        %v4809 = vadd.f32 %v3323, %v4803
        %v4811 = vlaneseq
        %v4812 = vshrl.u32 %v4811, 7
        %v4813 = vsub.s32 0, %v4812
        %v4814 = vrot.slane %v1721, %v4813
        %v4816 = vadd.f32 %v4806, %v4814
        %v4817 = vadd.f32 %v4807, %v4814
        %v4818 = vadd.f32 %v4808, %v4814
        %v4819 = vadd.f32 %v4809, %v4814
        %4820 = vadd.xlane.f32.xlu0 %v4816
        %v4821 = vpop.xlane.xlu0 %4820
        %4822 = vadd.xlane.f32.xlu0 %v4817
        %v4823 = vpop.xlane.xlu0 %4822
        %4824 = vadd.xlane.f32.xlu0 %v4818
        %v4825 = vpop.xlane.xlu0 %4824
        %4826 = vadd.xlane.f32.xlu0 %v4819
        %v4827 = vpop.xlane.xlu0 %4826
        %v4828 = vmul.f32 %v4821, %v1844
        %v4829 = vmul.f32 %v4823, %v1844
        %v4830 = vmul.f32 %v4825, %v1844
        %v4831 = vmul.f32 %v4827, %v1844
        %v4832 = vsub.f32 %v4816, %v4828
        %v4833 = vsub.f32 %v4817, %v4829
        %v4834 = vsub.f32 %v4818, %v4830
        %v4835 = vsub.f32 %v4819, %v4831
        %v4836 = vmul.f32 %v4832, %v4832
        %v4837 = vmul.f32 %v4833, %v4833
        %v4838 = vmul.f32 %v4834, %v4834
        %v4839 = vmul.f32 %v4835, %v4835
        %4840 = vadd.xlane.f32.xlu0 %v4836
        %v4841 = vpop.xlane.xlu0 %4840
        %4842 = vadd.xlane.f32.xlu0 %v4837
        %v4843 = vpop.xlane.xlu0 %4842
        %4844 = vadd.xlane.f32.xlu0 %v4838
        %v4845 = vpop.xlane.xlu0 %4844
        %4846 = vadd.xlane.f32.xlu0 %v4839
        %v4847 = vpop.xlane.xlu0 %4846
        %v4848 = vmul.f32 %v4841, 0.007874016
        %v4849 = vmul.f32 %v4843, 0.007874016
        %v4850 = vmul.f32 %v4845, 0.007874016
        %v4851 = vmul.f32 %v4847, 0.007874016
        %v4852 = vrsqrt.pop %v4848
        %v4853 = vmul.f32 %v4848, %v4852
        %vm4854 = vcmp.eq.f32.partialorder %v4848, inf
        %v4855 = vsel %vm4854, %v4848, %v4853
        %vm4856 = vcmp.eq.f32.partialorder %v4848, 0.0
        %v4857 = vand.u32 %v4848, 2147483648
        %v4858 = vsel %vm4856, %v4857, %v4855
        %v4859 = vrsqrt.pop %v4849
        %v4860 = vmul.f32 %v4849, %v4859
        %vm4861 = vcmp.eq.f32.partialorder %v4849, inf
        %v4862 = vsel %vm4861, %v4849, %v4860
        %vm4863 = vcmp.eq.f32.partialorder %v4849, 0.0
        %v4864 = vand.u32 %v4849, 2147483648
        %v4865 = vsel %vm4863, %v4864, %v4862
        %v4866 = vrsqrt.pop %v4850
        %v4867 = vmul.f32 %v4850, %v4866
        %vm4868 = vcmp.eq.f32.partialorder %v4850, inf
        %v4869 = vsel %vm4868, %v4850, %v4867
        %vm4870 = vcmp.eq.f32.partialorder %v4850, 0.0
        %v4871 = vand.u32 %v4850, 2147483648
        %v4872 = vsel %vm4870, %v4871, %v4869
        %v4873 = vrsqrt.pop %v4851
        %v4874 = vmul.f32 %v4851, %v4873
        %vm4875 = vcmp.eq.f32.partialorder %v4851, inf
        %v4876 = vsel %vm4875, %v4851, %v4874
        %vm4877 = vcmp.eq.f32.partialorder %v4851, 0.0
        %v4878 = vand.u32 %v4851, 2147483648
        %v4879 = vsel %vm4877, %v4878, %v4876
        %v4881 = vlaneseq
        %v4882 = vshrl.u32 %v4881, 7
        %v4883 = vsub.s32 0, %v4882
        %v4884 = vrot.slane %v1722, %v4883
        %v4886 = vmul.f32 %v4884, %v4832
        %v4887 = vmul.f32 %v4884, %v4833
        %v4888 = vmul.f32 %v4884, %v4834
        %v4889 = vmul.f32 %v4884, %v4835
        %v4890 = vadd.f32 %v4858, 1e-05
        %v4891 = vadd.f32 %v4865, 1e-05
        %v4892 = vadd.f32 %v4872, 1e-05
        %v4893 = vadd.f32 %v4879, 1e-05
        %v4894 = vrcp.pop %v4890
        %v4895 = vmul.f32 %v4886, %v4894
        %v4896 = vrcp.pop %v4891
        %v4897 = vmul.f32 %v4887, %v4896
        %v4898 = vrcp.pop %v4892
        %v4899 = vmul.f32 %v4888, %v4898
        %v4900 = vrcp.pop %v4893
        %v4901 = vmul.f32 %v4889, %v4900
        %v4903 = vlaneseq
        %v4904 = vshrl.u32 %v4903, 7
        %v4905 = vsub.s32 0, %v4904
        %v4906 = vrot.slane %v1723, %v4905
        %v4908 = vadd.f32 %v4895, %v4906
        %v4909 = vadd.f32 %v4897, %v4906
        %v4910 = vadd.f32 %v4899, %v4906
        %v4911 = vadd.f32 %v4901, %v4906
        %v4912 = vpack.c.bf16 %v4909, %v4908
        %v4913 = vpack.c.bf16 %v4911, %v4910
        %v4915 = vlaneseq
        %v4916 = vshrl.u32 %v4915, 7
        %v4917 = vsub.s32 0, %v4916
        %v4918 = vrot.slane %v1756, %v4917
        %v4919 = vlaneseq
        %v4920 = vshrl.u32 %v4919, 7
        %v4921 = vsub.s32 1, %v4920
        %v4922 = vrot.slane %v1756, %v4921
        %v4923 = vlaneseq
        %v4924 = vshrl.u32 %v4923, 7
        %v4925 = vsub.s32 2, %v4924
        %v4926 = vrot.slane %v1756, %v4925
        %v4927 = vlaneseq
        %v4928 = vshrl.u32 %v4927, 7
        %v4929 = vsub.s32 3, %v4928
        %v4930 = vrot.slane %v1756, %v4929
        %v4967 = vunpack.c.l.b16 %v1724
        %v4968 = vunpack.c.h.b16 %v1724
        %v4969 = vunpack.c.l.b16 %v1725
        %v4970 = vunpack.c.h.b16 %v1725
        %v4971 = vunpack.c.l.b16 %v1726
        %v4972 = vunpack.c.h.b16 %v1726
        %v4973 = vunpack.c.l.b16 %v1727
        %v4974 = vunpack.c.h.b16 %v1727
        %v4975 = vunpack.c.l.b16 %v1728
        %v4976 = vunpack.c.h.b16 %v1728
        %v4977 = vunpack.c.l.b16 %v1729
        %v4978 = vunpack.c.h.b16 %v1729
        %v4979 = vunpack.c.l.b16 %v1730
        %v4980 = vunpack.c.h.b16 %v1730
        %v4981 = vunpack.c.l.b16 %v1731
        %v4982 = vunpack.c.h.b16 %v1731
        %v4983 = vunpack.c.l.b16 %v1732
        %v4984 = vunpack.c.h.b16 %v1732
        %v4985 = vunpack.c.l.b16 %v1733
        %v4986 = vunpack.c.h.b16 %v1733
        %v4987 = vunpack.c.l.b16 %v1734
        %v4988 = vunpack.c.h.b16 %v1734
        %v4989 = vunpack.c.l.b16 %v1735
        %v4990 = vunpack.c.h.b16 %v1735
        %v4991 = vunpack.c.l.b16 %v1736
        %v4992 = vunpack.c.h.b16 %v1736
        %v4993 = vunpack.c.l.b16 %v1737
        %v4994 = vunpack.c.h.b16 %v1737
        %v4995 = vunpack.c.l.b16 %v1738
        %v4996 = vunpack.c.h.b16 %v1738
        %v4997 = vunpack.c.l.b16 %v1739
        %v4998 = vunpack.c.h.b16 %v1739
        %v4999 = vunpack.c.l.b16 %v1740
        %v5000 = vunpack.c.h.b16 %v1740
        %v5001 = vunpack.c.l.b16 %v1741
        %v5002 = vunpack.c.h.b16 %v1741
        %v5003 = vunpack.c.l.b16 %v1742
        %v5004 = vunpack.c.h.b16 %v1742
        %v5005 = vunpack.c.l.b16 %v1743
        %v5006 = vunpack.c.h.b16 %v1743
        %v5007 = vunpack.c.l.b16 %v1744
        %v5008 = vunpack.c.h.b16 %v1744
        %v5009 = vunpack.c.l.b16 %v1745
        %v5010 = vunpack.c.h.b16 %v1745
        %v5011 = vunpack.c.l.b16 %v1746
        %v5012 = vunpack.c.h.b16 %v1746
        %v5013 = vunpack.c.l.b16 %v1747
        %v5014 = vunpack.c.h.b16 %v1747
        %v5015 = vunpack.c.l.b16 %v1748
        %v5016 = vunpack.c.h.b16 %v1748
        %v5017 = vunpack.c.l.b16 %v1749
        %v5018 = vunpack.c.h.b16 %v1749
        %v5019 = vunpack.c.l.b16 %v1750
        %v5020 = vunpack.c.h.b16 %v1750
        %v5021 = vunpack.c.l.b16 %v1751
        %v5022 = vunpack.c.h.b16 %v1751
        %v5023 = vunpack.c.l.b16 %v1752
        %v5024 = vunpack.c.h.b16 %v1752
        %v5025 = vunpack.c.l.b16 %v1753
        %v5026 = vunpack.c.h.b16 %v1753
        %v5027 = vunpack.c.l.b16 %v1754
        %v5028 = vunpack.c.h.b16 %v1754
        %v5029 = vunpack.c.l.b16 %v1755
        %v5030 = vunpack.c.h.b16 %v1755
        %v5031 = vpack.c.b16 %v4971, %v4967
        %v5032 = vpack.c.b16 %v4972, %v4968
        %v5033 = vpack.c.b16 %v4973, %v4969
        %v5034 = vpack.c.b16 %v4974, %v4970
        %v5035 = vpack.c.b16 %v4979, %v4975
        %v5036 = vpack.c.b16 %v4980, %v4976
        %v5037 = vpack.c.b16 %v4981, %v4977
        %v5038 = vpack.c.b16 %v4982, %v4978
        %v5039 = vpack.c.b16 %v4987, %v4983
        %v5040 = vpack.c.b16 %v4988, %v4984
        %v5041 = vpack.c.b16 %v4989, %v4985
        %v5042 = vpack.c.b16 %v4990, %v4986
        %v5043 = vpack.c.b16 %v4995, %v4991
        %v5044 = vpack.c.b16 %v4996, %v4992
        %v5045 = vpack.c.b16 %v4997, %v4993
        %v5046 = vpack.c.b16 %v4998, %v4994
        %v5047 = vpack.c.b16 %v5003, %v4999
        %v5048 = vpack.c.b16 %v5004, %v5000
        %v5049 = vpack.c.b16 %v5005, %v5001
        %v5050 = vpack.c.b16 %v5006, %v5002
        %v5051 = vpack.c.b16 %v5011, %v5007
        %v5052 = vpack.c.b16 %v5012, %v5008
        %v5053 = vpack.c.b16 %v5013, %v5009
        %v5054 = vpack.c.b16 %v5014, %v5010
        %v5055 = vpack.c.b16 %v5019, %v5015
        %v5056 = vpack.c.b16 %v5020, %v5016
        %v5057 = vpack.c.b16 %v5021, %v5017
        %v5058 = vpack.c.b16 %v5022, %v5018
        %v5059 = vpack.c.b16 %v5027, %v5023
        %v5060 = vpack.c.b16 %v5028, %v5024
        %v5061 = vpack.c.b16 %v5029, %v5025
        %v5062 = vpack.c.b16 %v5030, %v5026
        %5095 = vmatprep.subr.bf16.mxu0 %v5032
        %5096 = vmatpush1.bf16.msra.mxu0 %v5031
        %5097 = vmatprep.subr.bf16.mxu0 %v5036
        %5098 = vmatpush1.bf16.msra.mxu0 %v5035
        %5099 = vmatprep.subr.bf16.mxu0 %v5040
        %5100 = vmatpush1.bf16.msra.mxu0 %v5039
        %5101 = vmatprep.subr.bf16.mxu0 %v5044
        %5102 = vmatpush1.bf16.msra.mxu0 %v5043
        %5103 = vmatprep.subr.bf16.mxu0 %v5048
        %5104 = vmatpush1.bf16.msra.mxu0 %v5047
        %5105 = vmatprep.subr.bf16.mxu0 %v5052
        %5106 = vmatpush1.bf16.msra.mxu0 %v5051
        %5107 = vmatprep.subr.bf16.mxu0 %v5056
        %5108 = vmatpush1.bf16.msra.mxu0 %v5055
        %5109 = vmatprep.subr.bf16.mxu0 %v5060
        %5110 = vmatpush1.bf16.msra.mxu0 %v5059
        %5111 = vmatprep.subr.bf16.mxu0 0
        %5112 = vmatpush1.bf16.msra.mxu0 0
        %5113 = vmatprep.subr.bf16.mxu0 0
        %5114 = vmatpush1.bf16.msra.mxu0 0
        %5115 = vmatprep.subr.bf16.mxu0 0
        %5116 = vmatpush1.bf16.msra.mxu0 0
        %5117 = vmatprep.subr.bf16.mxu0 0
        %5118 = vmatpush1.bf16.msra.mxu0 0
        %5119 = vmatprep.subr.bf16.mxu0 0
        %5120 = vmatpush1.bf16.msra.mxu0 0
        %5121 = vmatprep.subr.bf16.mxu0 0
        %5122 = vmatpush1.bf16.msra.mxu0 0
        %5123 = vmatprep.subr.bf16.mxu0 0
        %5124 = vmatpush1.bf16.msra.mxu0 0
        %5125 = vmatprep.subr.bf16.mxu0 0
        %5126 = vmatpush1.bf16.msra.mxu0 0
        %5127 = vmatprep.mubr.bf16.mxu0 0
        %5128 = vmatmul.mubr.bf16.gmra.mrb[0].mxu0 %v4912
        %v5129 = vpop.f32.mrb[0].mxu0
        %v5130 = vadd.f32 %v4918, %v5129
        %v5131 = vpop.f32.mrb[0].mxu0
        %v5132 = vadd.f32 %v4922, %v5131
        %v5133 = vpop.f32.mrb[0].mxu0
        %v5134 = vadd.f32 %v4918, %v5133
        %v5135 = vpop.f32.mrb[0].mxu0
        %v5136 = vadd.f32 %v4922, %v5135
        %5137 = vmatprep.mubr.bf16.mxu0 0
        %5138 = vmatmul.mubr.bf16.gmra.mrb[0].mxu0 %v4913
        %v5139 = vpop.f32.mrb[0].mxu0
        %v5140 = vadd.f32 %v4918, %v5139
        %v5141 = vpop.f32.mrb[0].mxu0
        %v5142 = vadd.f32 %v4922, %v5141
        %v5143 = vpop.f32.mrb[0].mxu0
        %v5144 = vadd.f32 %v4918, %v5143
        %v5145 = vpop.f32.mrb[0].mxu0
        %v5146 = vadd.f32 %v4922, %v5145
        %5147 = vdwg.mxu0
        %5148 = vmatprep.subr.bf16.mxu0 %v5034
        %5149 = vmatpush1.bf16.msra.mxu0 %v5033
        %5150 = vmatprep.subr.bf16.mxu0 %v5038
        %5151 = vmatpush1.bf16.msra.mxu0 %v5037
        %5152 = vmatprep.subr.bf16.mxu0 %v5042
        %5153 = vmatpush1.bf16.msra.mxu0 %v5041
        %5154 = vmatprep.subr.bf16.mxu0 %v5046
        %5155 = vmatpush1.bf16.msra.mxu0 %v5045
        %5156 = vmatprep.subr.bf16.mxu0 %v5050
        %5157 = vmatpush1.bf16.msra.mxu0 %v5049
        %5158 = vmatprep.subr.bf16.mxu0 %v5054
        %5159 = vmatpush1.bf16.msra.mxu0 %v5053
        %5160 = vmatprep.subr.bf16.mxu0 %v5058
        %5161 = vmatpush1.bf16.msra.mxu0 %v5057
        %5162 = vmatprep.subr.bf16.mxu0 %v5062
        %5163 = vmatpush1.bf16.msra.mxu0 %v5061
        %5164 = vmatprep.subr.bf16.mxu0 0
        %5165 = vmatpush1.bf16.msra.mxu0 0
        %5166 = vmatprep.subr.bf16.mxu0 0
        %5167 = vmatpush1.bf16.msra.mxu0 0
        %5168 = vmatprep.subr.bf16.mxu0 0
        %5169 = vmatpush1.bf16.msra.mxu0 0
        %5170 = vmatprep.subr.bf16.mxu0 0
        %5171 = vmatpush1.bf16.msra.mxu0 0
        %5172 = vmatprep.subr.bf16.mxu0 0
        %5173 = vmatpush1.bf16.msra.mxu0 0
        %5174 = vmatprep.subr.bf16.mxu0 0
        %5175 = vmatpush1.bf16.msra.mxu0 0
        %5176 = vmatprep.subr.bf16.mxu0 0
        %5177 = vmatpush1.bf16.msra.mxu0 0
        %5178 = vmatprep.subr.bf16.mxu0 0
        %5179 = vmatpush1.bf16.msra.mxu0 0
        %5180 = vmatprep.mubr.bf16.mxu0 0
        %5181 = vmatmul.mubr.bf16.gmra.mrb[0].mxu0 %v4912
        %v5182 = vpop.f32.mrb[0].mxu0
        %v5183 = vadd.f32 %v4926, %v5182
        %v5184 = vpop.f32.mrb[0].mxu0
        %v5185 = vadd.f32 %v4930, %v5184
        %v5186 = vpop.f32.mrb[0].mxu0
        %v5187 = vadd.f32 %v4926, %v5186
        %v5188 = vpop.f32.mrb[0].mxu0
        %v5189 = vadd.f32 %v4930, %v5188
        %5190 = vmatprep.mubr.bf16.mxu0 0
        %5191 = vmatmul.mubr.bf16.gmra.mrb[0].mxu0 %v4913
        %v5192 = vpop.f32.mrb[0].mxu0
        %v5193 = vadd.f32 %v4926, %v5192
        %v5194 = vpop.f32.mrb[0].mxu0
        %v5195 = vadd.f32 %v4930, %v5194
        %v5196 = vpop.f32.mrb[0].mxu0
        %v5197 = vadd.f32 %v4926, %v5196
        %v5198 = vpop.f32.mrb[0].mxu0
        %v5199 = vadd.f32 %v4930, %v5198
        %5200 = vdwg.mxu0
        %v5201 = vmax.f32 %v5130, 0.0
        %v5202 = vmax.f32 %v5132, 0.0
        %v5203 = vmax.f32 %v5183, 0.0
        %v5204 = vmax.f32 %v5185, 0.0
        %v5205 = vmax.f32 %v5134, 0.0
        %v5206 = vmax.f32 %v5136, 0.0
        %v5207 = vmax.f32 %v5187, 0.0
        %v5208 = vmax.f32 %v5189, 0.0
        %v5209 = vmax.f32 %v5140, 0.0
        %v5210 = vmax.f32 %v5142, 0.0
        %v5211 = vmax.f32 %v5193, 0.0
        %v5212 = vmax.f32 %v5195, 0.0
        %v5213 = vmax.f32 %v5144, 0.0
        %v5214 = vmax.f32 %v5146, 0.0
        %v5215 = vmax.f32 %v5197, 0.0
        %v5216 = vmax.f32 %v5199, 0.0
        %v5217 = vpack.c.bf16 %v5205, %v5201
        %v5218 = vpack.c.bf16 %v5206, %v5202
        %v5219 = vpack.c.bf16 %v5207, %v5203
        %v5220 = vpack.c.bf16 %v5208, %v5204
        %v5221 = vpack.c.bf16 %v5213, %v5209
        %v5222 = vpack.c.bf16 %v5214, %v5210
        %v5223 = vpack.c.bf16 %v5215, %v5211
        %v5224 = vpack.c.bf16 %v5216, %v5212
        %v5289 = vunpack.c.l.b16 %v1757
        %v5290 = vunpack.c.l.b16 %v1758
        %v5291 = vunpack.c.l.b16 %v1759
        %v5292 = vunpack.c.l.b16 %v1760
        %v5293 = vunpack.c.l.b16 %v1761
        %v5294 = vunpack.c.l.b16 %v1762
        %v5295 = vunpack.c.l.b16 %v1763
        %v5296 = vunpack.c.l.b16 %v1764
        %v5297 = vunpack.c.l.b16 %v1765
        %v5298 = vunpack.c.l.b16 %v1766
        %v5299 = vunpack.c.l.b16 %v1767
        %v5300 = vunpack.c.l.b16 %v1768
        %v5301 = vunpack.c.l.b16 %v1769
        %v5302 = vunpack.c.l.b16 %v1770
        %v5303 = vunpack.c.l.b16 %v1771
        %v5304 = vunpack.c.l.b16 %v1772
        %v5305 = vunpack.c.l.b16 %v1773
        %v5306 = vunpack.c.l.b16 %v1774
        %v5307 = vunpack.c.l.b16 %v1775
        %v5308 = vunpack.c.l.b16 %v1776
        %v5309 = vunpack.c.l.b16 %v1777
        %v5310 = vunpack.c.l.b16 %v1778
        %v5311 = vunpack.c.l.b16 %v1779
        %v5312 = vunpack.c.l.b16 %v1780
        %v5313 = vunpack.c.l.b16 %v1781
        %v5314 = vunpack.c.l.b16 %v1782
        %v5315 = vunpack.c.l.b16 %v1783
        %v5316 = vunpack.c.l.b16 %v1784
        %v5317 = vunpack.c.l.b16 %v1785
        %v5318 = vunpack.c.l.b16 %v1786
        %v5319 = vunpack.c.l.b16 %v1787
        %v5320 = vunpack.c.l.b16 %v1788
        %v5321 = vunpack.c.l.b16 %v1789
        %v5322 = vunpack.c.l.b16 %v1790
        %v5323 = vunpack.c.l.b16 %v1791
        %v5324 = vunpack.c.l.b16 %v1792
        %v5325 = vunpack.c.l.b16 %v1793
        %v5326 = vunpack.c.l.b16 %v1794
        %v5327 = vunpack.c.l.b16 %v1795
        %v5328 = vunpack.c.l.b16 %v1796
        %v5329 = vunpack.c.l.b16 %v1797
        %v5330 = vunpack.c.l.b16 %v1798
        %v5331 = vunpack.c.l.b16 %v1799
        %v5332 = vunpack.c.l.b16 %v1800
        %v5333 = vunpack.c.l.b16 %v1801
        %v5334 = vunpack.c.l.b16 %v1802
        %v5335 = vunpack.c.l.b16 %v1803
        %v5336 = vunpack.c.l.b16 %v1804
        %v5337 = vunpack.c.l.b16 %v1805
        %v5338 = vunpack.c.l.b16 %v1806
        %v5339 = vunpack.c.l.b16 %v1807
        %v5340 = vunpack.c.l.b16 %v1808
        %v5341 = vunpack.c.l.b16 %v1809
        %v5342 = vunpack.c.l.b16 %v1810
        %v5343 = vunpack.c.l.b16 %v1811
        %v5344 = vunpack.c.l.b16 %v1812
        %v5345 = vunpack.c.l.b16 %v1813
        %v5346 = vunpack.c.l.b16 %v1814
        %v5347 = vunpack.c.l.b16 %v1815
        %v5348 = vunpack.c.l.b16 %v1816
        %v5349 = vunpack.c.l.b16 %v1817
        %v5350 = vunpack.c.l.b16 %v1818
        %v5351 = vunpack.c.l.b16 %v1819
        %v5352 = vunpack.c.l.b16 %v1820
        %v5353 = vpack.c.b16 %v5290, %v5289
        %v5354 = vpack.c.b16 %v5292, %v5291
        %v5355 = vpack.c.b16 %v5294, %v5293
        %v5356 = vpack.c.b16 %v5296, %v5295
        %v5357 = vpack.c.b16 %v5298, %v5297
        %v5358 = vpack.c.b16 %v5300, %v5299
        %v5359 = vpack.c.b16 %v5302, %v5301
        %v5360 = vpack.c.b16 %v5304, %v5303
        %v5361 = vpack.c.b16 %v5306, %v5305
        %v5362 = vpack.c.b16 %v5308, %v5307
        %v5363 = vpack.c.b16 %v5310, %v5309
        %v5364 = vpack.c.b16 %v5312, %v5311
        %v5365 = vpack.c.b16 %v5314, %v5313
        %v5366 = vpack.c.b16 %v5316, %v5315
        %v5367 = vpack.c.b16 %v5318, %v5317
        %v5368 = vpack.c.b16 %v5320, %v5319
        %v5369 = vpack.c.b16 %v5322, %v5321
        %v5370 = vpack.c.b16 %v5324, %v5323
        %v5371 = vpack.c.b16 %v5326, %v5325
        %v5372 = vpack.c.b16 %v5328, %v5327
        %v5373 = vpack.c.b16 %v5330, %v5329
        %v5374 = vpack.c.b16 %v5332, %v5331
        %v5375 = vpack.c.b16 %v5334, %v5333
        %v5376 = vpack.c.b16 %v5336, %v5335
        %v5377 = vpack.c.b16 %v5338, %v5337
        %v5378 = vpack.c.b16 %v5340, %v5339
        %v5379 = vpack.c.b16 %v5342, %v5341
        %v5380 = vpack.c.b16 %v5344, %v5343
        %v5381 = vpack.c.b16 %v5346, %v5345
        %v5382 = vpack.c.b16 %v5348, %v5347
        %v5383 = vpack.c.b16 %v5350, %v5349
        %v5384 = vpack.c.b16 %v5352, %v5351
        %5417 = vmatprep.subr.bf16.mxu0 0
        %5418 = vmatpush1.bf16.msra.mxu0 %v5353
        %5419 = vmatprep.subr.bf16.mxu0 0
        %5420 = vmatpush1.bf16.msra.mxu0 %v5354
        %5421 = vmatprep.subr.bf16.mxu0 0
        %5422 = vmatpush1.bf16.msra.mxu0 %v5355
        %5423 = vmatprep.subr.bf16.mxu0 0
        %5424 = vmatpush1.bf16.msra.mxu0 %v5356
        %5425 = vmatprep.subr.bf16.mxu0 0
        %5426 = vmatpush1.bf16.msra.mxu0 %v5357
        %5427 = vmatprep.subr.bf16.mxu0 0
        %5428 = vmatpush1.bf16.msra.mxu0 %v5358
        %5429 = vmatprep.subr.bf16.mxu0 0
        %5430 = vmatpush1.bf16.msra.mxu0 %v5359
        %5431 = vmatprep.subr.bf16.mxu0 0
        %5432 = vmatpush1.bf16.msra.mxu0 %v5360
        %5433 = vmatprep.subr.bf16.mxu0 0
        %5434 = vmatpush1.bf16.msra.mxu0 %v5361
        %5435 = vmatprep.subr.bf16.mxu0 0
        %5436 = vmatpush1.bf16.msra.mxu0 %v5362
        %5437 = vmatprep.subr.bf16.mxu0 0
        %5438 = vmatpush1.bf16.msra.mxu0 %v5363
        %5439 = vmatprep.subr.bf16.mxu0 0
        %5440 = vmatpush1.bf16.msra.mxu0 %v5364
        %5441 = vmatprep.subr.bf16.mxu0 0
        %5442 = vmatpush1.bf16.msra.mxu0 %v5365
        %5443 = vmatprep.subr.bf16.mxu0 0
        %5444 = vmatpush1.bf16.msra.mxu0 %v5366
        %5445 = vmatprep.subr.bf16.mxu0 0
        %5446 = vmatpush1.bf16.msra.mxu0 %v5367
        %5447 = vmatprep.subr.bf16.mxu0 0
        %5448 = vmatpush1.bf16.msra.mxu0 %v5368
        %5449 = vmatprep.mubr.bf16.mxu0 %v5218
        %5450 = vmatmul.mubr.bf16.gmra.mrb[0].mxu0 %v5217
        %v5451 = vpop.f32.mrb[0].mxu0
        %v5452 = vadd.f32 0.0, %v5451
        %v5453 = vpop.f32.mrb[0].mxu0
        %v5454 = vpop.f32.mrb[0].mxu0
        %v5455 = vadd.f32 0.0, %v5454
        %v5456 = vpop.f32.mrb[0].mxu0
        %5457 = vmatprep.mubr.bf16.mxu0 %v5222
        %5458 = vmatmul.mubr.bf16.gmra.mrb[0].mxu0 %v5221
        %v5459 = vpop.f32.mrb[0].mxu0
        %v5460 = vadd.f32 0.0, %v5459
        %v5461 = vpop.f32.mrb[0].mxu0
        %v5462 = vpop.f32.mrb[0].mxu0
        %v5463 = vadd.f32 0.0, %v5462
        %v5464 = vpop.f32.mrb[0].mxu0
        %5465 = vdwg.mxu0
        %5466 = vmatprep.subr.bf16.mxu0 0
        %5467 = vmatpush1.bf16.msra.mxu0 %v5369
        %5468 = vmatprep.subr.bf16.mxu0 0
        %5469 = vmatpush1.bf16.msra.mxu0 %v5370
        %5470 = vmatprep.subr.bf16.mxu0 0
        %5471 = vmatpush1.bf16.msra.mxu0 %v5371
        %5472 = vmatprep.subr.bf16.mxu0 0
        %5473 = vmatpush1.bf16.msra.mxu0 %v5372
        %5474 = vmatprep.subr.bf16.mxu0 0
        %5475 = vmatpush1.bf16.msra.mxu0 %v5373
        %5476 = vmatprep.subr.bf16.mxu0 0
        %5477 = vmatpush1.bf16.msra.mxu0 %v5374
        %5478 = vmatprep.subr.bf16.mxu0 0
        %5479 = vmatpush1.bf16.msra.mxu0 %v5375
        %5480 = vmatprep.subr.bf16.mxu0 0
        %5481 = vmatpush1.bf16.msra.mxu0 %v5376
        %5482 = vmatprep.subr.bf16.mxu0 0
        %5483 = vmatpush1.bf16.msra.mxu0 %v5377
        %5484 = vmatprep.subr.bf16.mxu0 0
        %5485 = vmatpush1.bf16.msra.mxu0 %v5378
        %5486 = vmatprep.subr.bf16.mxu0 0
        %5487 = vmatpush1.bf16.msra.mxu0 %v5379
        %5488 = vmatprep.subr.bf16.mxu0 0
        %5489 = vmatpush1.bf16.msra.mxu0 %v5380
        %5490 = vmatprep.subr.bf16.mxu0 0
        %5491 = vmatpush1.bf16.msra.mxu0 %v5381
        %5492 = vmatprep.subr.bf16.mxu0 0
        %5493 = vmatpush1.bf16.msra.mxu0 %v5382
        %5494 = vmatprep.subr.bf16.mxu0 0
        %5495 = vmatpush1.bf16.msra.mxu0 %v5383
        %5496 = vmatprep.subr.bf16.mxu0 0
        %5497 = vmatpush1.bf16.msra.mxu0 %v5384
        %5498 = vmatprep.mubr.bf16.mxu0 %v5220
        %5499 = vmatmul.mubr.bf16.gmra.mrb[0].mxu0 %v5219
        %v5500 = vpop.f32.mrb[0].mxu0
        %v5501 = vadd.f32 %v5452, %v5500
        %v5502 = vpop.f32.mrb[0].mxu0
        %v5503 = vpop.f32.mrb[0].mxu0
        %v5504 = vadd.f32 %v5455, %v5503
        %v5505 = vpop.f32.mrb[0].mxu0
        %5506 = vmatprep.mubr.bf16.mxu0 %v5224
        %5507 = vmatmul.mubr.bf16.gmra.mrb[0].mxu0 %v5223
        %v5508 = vpop.f32.mrb[0].mxu0
        %v5509 = vadd.f32 %v5460, %v5508
        %v5510 = vpop.f32.mrb[0].mxu0
        %v5511 = vpop.f32.mrb[0].mxu0
        %v5512 = vadd.f32 %v5463, %v5511
        %v5513 = vpop.f32.mrb[0].mxu0
        %5514 = vdwg.mxu0
        %v5515 = vadd.f32 %v4816, %v5501
        %v5516 = vadd.f32 %v4817, %v5504
        %v5517 = vadd.f32 %v4818, %v5509
        %v5518 = vadd.f32 %v4819, %v5512
        %v5520 = vlaneseq
        %v5521 = vshrl.u32 %v5520, 7
        %v5522 = vsub.s32 0, %v5521
        %v5523 = vrot.slane %v1821, %v5522
        %v5525 = vadd.f32 %v5515, %v5523
        %v5526 = vadd.f32 %v5516, %v5523
        %v5527 = vadd.f32 %v5517, %v5523
        %v5528 = vadd.f32 %v5518, %v5523
        %5529 = vst [vmem:[#allocation2] sm:$0xff] %v5525
        %5530 = vst [vmem:[#allocation2 + $0x8] sm:$0xff] %v5526
        %5531 = vst [vmem:[#allocation2 + $0x10] sm:$0xff] %v5527
        %5532 = vst [vmem:[#allocation2 + $0x18] sm:$0xff] %v5528
        %p5533 = scmp.eq.s32.totalorder %s46, 1
        // Predicated region
        $region233: #{tpu_custom_call.1} parent=123 // pred_check
          %p5534 = pneg %p5533
        $region234: #{tpu_custom_call.1} parent=123 // pred_check_branch
          %5536 = sbr.rel (%p5534) target = $region236
        $region235: #{tpu_custom_call.1} parent=123 // pred_region
          %v5537 = vld [vmem:[#allocation33] sm:$0x1]
          %v5538 = vld [vmem:[#allocation34] sm:$0x1]
          %5539 = vadd.xlane.f32.xlu0 %v5525
          %v5540 = vpop.xlane.xlu0 %5539
          %5541 = vadd.xlane.f32.xlu0 %v5526
          %v5542 = vpop.xlane.xlu0 %5541
          %5543 = vadd.xlane.f32.xlu0 %v5527
          %v5544 = vpop.xlane.xlu0 %5543
          %5545 = vadd.xlane.f32.xlu0 %v5528
          %v5546 = vpop.xlane.xlu0 %5545
          %v5547 = vmul.f32 %v5540, %v1844
          %v5548 = vmul.f32 %v5542, %v1844
          %v5549 = vmul.f32 %v5544, %v1844
          %v5550 = vmul.f32 %v5546, %v1844
          %v5551 = vsub.f32 %v5525, %v5547
          %v5552 = vsub.f32 %v5526, %v5548
          %v5553 = vsub.f32 %v5527, %v5549
          %v5554 = vsub.f32 %v5528, %v5550
          %v5555 = vmul.f32 %v5551, %v5551
          %v5556 = vmul.f32 %v5552, %v5552
          %v5557 = vmul.f32 %v5553, %v5553
          %v5558 = vmul.f32 %v5554, %v5554
          %5559 = vadd.xlane.f32.xlu0 %v5555
          %v5560 = vpop.xlane.xlu0 %5559
          %5561 = vadd.xlane.f32.xlu0 %v5556
          %v5562 = vpop.xlane.xlu0 %5561
          %5563 = vadd.xlane.f32.xlu0 %v5557
          %v5564 = vpop.xlane.xlu0 %5563
          %5565 = vadd.xlane.f32.xlu0 %v5558
          %v5566 = vpop.xlane.xlu0 %5565
          %v5567 = vmul.f32 %v5560, 0.007874016
          %v5568 = vmul.f32 %v5562, 0.007874016
          %v5569 = vmul.f32 %v5564, 0.007874016
          %v5570 = vmul.f32 %v5566, 0.007874016
          %v5571 = vrsqrt.pop %v5567
          %v5572 = vmul.f32 %v5567, %v5571
          %vm5573 = vcmp.eq.f32.partialorder %v5567, inf
          %v5574 = vsel %vm5573, %v5567, %v5572
          %vm5575 = vcmp.eq.f32.partialorder %v5567, 0.0
          %v5576 = vand.u32 %v5567, 2147483648
          %v5577 = vsel %vm5575, %v5576, %v5574
          %v5578 = vrsqrt.pop %v5568
          %v5579 = vmul.f32 %v5568, %v5578
          %vm5580 = vcmp.eq.f32.partialorder %v5568, inf
          %v5581 = vsel %vm5580, %v5568, %v5579
          %vm5582 = vcmp.eq.f32.partialorder %v5568, 0.0
          %v5583 = vand.u32 %v5568, 2147483648
          %v5584 = vsel %vm5582, %v5583, %v5581
          %v5585 = vrsqrt.pop %v5569
          %v5586 = vmul.f32 %v5569, %v5585
          %vm5587 = vcmp.eq.f32.partialorder %v5569, inf
          %v5588 = vsel %vm5587, %v5569, %v5586
          %vm5589 = vcmp.eq.f32.partialorder %v5569, 0.0
          %v5590 = vand.u32 %v5569, 2147483648
          %v5591 = vsel %vm5589, %v5590, %v5588
          %v5592 = vrsqrt.pop %v5570
          %v5593 = vmul.f32 %v5570, %v5592
          %vm5594 = vcmp.eq.f32.partialorder %v5570, inf
          %v5595 = vsel %vm5594, %v5570, %v5593
          %vm5596 = vcmp.eq.f32.partialorder %v5570, 0.0
          %v5597 = vand.u32 %v5570, 2147483648
          %v5598 = vsel %vm5596, %v5597, %v5595
          %v5600 = vlaneseq
          %v5601 = vshrl.u32 %v5600, 7
          %v5602 = vsub.s32 0, %v5601
          %v5603 = vrot.slane %v5537, %v5602
          %v5605 = vmul.f32 %v5603, %v5551
          %v5606 = vmul.f32 %v5603, %v5552
          %v5607 = vmul.f32 %v5603, %v5553
          %v5608 = vmul.f32 %v5603, %v5554
          %v5609 = vadd.f32 %v5577, 1e-05
          %v5610 = vadd.f32 %v5584, 1e-05
          %v5611 = vadd.f32 %v5591, 1e-05
          %v5612 = vadd.f32 %v5598, 1e-05
          %v5613 = vrcp.pop %v5609
          %v5614 = vmul.f32 %v5605, %v5613
          %v5615 = vrcp.pop %v5610
          %v5616 = vmul.f32 %v5606, %v5615
          %v5617 = vrcp.pop %v5611
          %v5618 = vmul.f32 %v5607, %v5617
          %v5619 = vrcp.pop %v5612
          %v5620 = vmul.f32 %v5608, %v5619
          %v5622 = vlaneseq
          %v5623 = vshrl.u32 %v5622, 7
          %v5624 = vsub.s32 0, %v5623
          %v5625 = vrot.slane %v5538, %v5624
          %v5627 = vadd.f32 %v5614, %v5625
          %v5628 = vadd.f32 %v5616, %v5625
          %v5629 = vadd.f32 %v5618, %v5625
          %v5630 = vadd.f32 %v5620, %v5625
          %v5631 = vpack.c.bf16 %v5628, %v5627
          %v5632 = vpack.c.bf16 %v5630, %v5629
          %v5635 = vunpack.c.l.b16 %v5631
          %v5636 = vunpack.c.h.b16 %v5631
          %v5637 = vunpack.c.l.b16 %v5632
          %v5638 = vunpack.c.h.b16 %v5632
          %v5639 = vpack.c.b16 %v5635, %v5635
          %v5640 = vpack.c.b16 %v5636, %v5636
          %v5641 = vpack.c.b16 %v5637, %v5637
          %v5642 = vpack.c.b16 %v5638, %v5638
          %5647 = vst [vmem:[#allocation35] sm:$0xf] %v5639
          %5648 = vst [vmem:[#allocation35 + $0x4] sm:$0xf] %v5640
          %5649 = vst [vmem:[#allocation35 + $0x8] sm:$0xf] %v5641
          %5650 = vst [vmem:[#allocation35 + $0xc] sm:$0xf] %v5642
        $region236: #{tpu_custom_call.1} parent=123 // pred_fallthru
          _
        // Predicated region
        $region237: #{tpu_custom_call.1} parent=123 // pred_check
          %p5651 = pneg %p732
        $region238: #{tpu_custom_call.1} parent=123 // pred_check_branch
          %5653 = sbr.rel (%p5651) target = $region240
        $region239: #{tpu_custom_call.1} parent=123 // pred_region
          %s5654 = smul.u32 2, %s45
          %s5656 = ssub.s32 256, 256
          %5657 = vsyncadd [#allocation7], %s5656
          %s5658 = smul.addr %s5654, 2
          %s5659 = smul.addr %s5658, 64
          %s5660 = scalar_lea.hbm %s26, %s5659
          %s5661 = sshll.u32 [#allocation35], 4
          %s5662 = int_to_ptr.vmem [resolvable:$true] %s5661
          %5667 = dma.vmem_to_hbm [thread:$0]  %s5662, 256, %s5660, [#allocation7], 64, 64, 4
        $region240: #{tpu_custom_call.1} parent=123 // pred_fallthru
          _
        // Predicated region
        $region241: #{tpu_custom_call.1} parent=123 // pred_check
          %p5668 = pneg %p732
        $region242: #{tpu_custom_call.1} parent=123 // pred_check_branch
          %5670 = sbr.rel (%p5668) target = $region244
        $region243: #{tpu_custom_call.1} parent=123 // pred_region
          %5671 = dma.done [#allocation7], 256
        $region244: #{tpu_custom_call.1} parent=123 // pred_fallthru
          _
      $region124: #{tpu_custom_call.1} parent=5 // pred_fallthru
        _
      %p5672 = scmp.le.s32.totalorder 2, %s36
      // Predicated region
      $region245: #{tpu_custom_call.1} parent=5 // pred_check
        %p5673 = pneg %p5672
      $region246: #{tpu_custom_call.1} parent=5 // pred_check_branch
        %5675 = sbr.rel (%p5673) target = $region248
      $region247: #{tpu_custom_call.1} parent=5 // pred_region
        %s5676 = ssub.s32 %s36, 2
      $region248: #{tpu_custom_call.1} parent=5 // pred_fallthru
        _
    $region6: #{tpu_custom_call.1} parent=1 // loop_footer
      %s40 = sadd.s32 1, %s36
    $region7: #{tpu_custom_call.1} parent=1 // loop_footer_branch
      %35 = sbr.rel target = $region3
    $region8: #{tpu_custom_call.1} parent=1 // loop_exit
      _
    %5677 = vsyncpa [#allocation6], 1
    %s5678 = scalar_lea.sflag [#allocation6], 1
    %5679 = vsyncpa %s5678, 1
    %5680 = vsyncpa [#allocation9], 1
    %5681 = vsyncpa [#allocation12], 1
    %5682 = vsyncpa [#allocation7], 1
    %s5683 = scalar_lea.sflag [#allocation7], 1
    %5684 = vsyncpa %s5683, 1

</llo_original>
